<compile_context>
chip_gen: v7x
topology: tpu7x:2x2x1
jax: 0.10.0
libtpu: 0.0.40
codegen_flags: <defaults>
</compile_context>

<pallas_src>
import functools
import math

import jax
import jax.numpy as jnp
from jax import lax
from jax.experimental import pallas as pl
from jax.experimental.pallas import tpu as pltpu

_VMEM = pl.BlockSpec(memory_space=pltpu.MemorySpace.VMEM)

# Matmul operand dtype.  float32 keeps bit-faithful semantics; flip to
# jnp.bfloat16 on v6e/v7x to use the fast bf16 MXU path (accumulation stays f32).
_MXU_DTYPE = jnp.float32


# ----------------------------- in-kernel helpers -----------------------------

def _mm(a, b):
    return jnp.dot(a.astype(_MXU_DTYPE), b.astype(_MXU_DTYPE),
                   preferred_element_type=jnp.float32)


def _mm_nt(a, b):
    # a (m,k) @ b (n,k)^T -> (m,n), contracting the last dim of both.
    return lax.dot_general(a.astype(_MXU_DTYPE), b.astype(_MXU_DTYPE),
                           (((1,), (1,)), ((), ())),
                           preferred_element_type=jnp.float32)


def _erf_approx(z):
    # Abramowitz & Stegun 7.1.26, |err| < 1.5e-7.
    a1, a2, a3, a4, a5 = 0.254829592, -0.284496736, 1.421413741, -1.453152027, 1.061405429
    p = 0.3275911
    s = jnp.where(z >= 0.0, 1.0, -1.0)
    az = jnp.abs(z)
    t = 1.0 / (1.0 + p * az)
    poly = ((((a5 * t + a4) * t + a3) * t + a2) * t + a1) * t
    return s * (1.0 - poly * jnp.exp(-az * az))


def _gelu_exact(x):
    return 0.5 * x * (1.0 + _erf_approx(x * 0.7071067811865476))


def _layer_norm(x, g, b, eps=1e-5):
    mu = jnp.mean(x, axis=-1, keepdims=True)
    d = x - mu
    var = jnp.mean(d * d, axis=-1, keepdims=True)
    return d * jax.lax.rsqrt(var + eps) * g + b


# ------------------------------ fused forward kernel -------------------------

def _forward_kernel(xcol_ref, w1_ref, b1_ref, w2_ref, b2_ref, w3_ref, b3_ref,
                    wfe_ref, bfe_ref, clspos_ref, pospatch_ref, abias_ref,
                    wqkv_ref, bqkv_ref, wo_ref, bo_ref, ln1g_ref, ln1b_ref,
                    wf1_ref, bf1_ref, wf2_ref, bf2_ref, ln2g_ref, ln2b_ref,
                    lng_ref, lnb_ref, wcls_ref, bcls_ref, out_ref,
                    *, B, N, P, E, H, L):
    M = B * N          # patches across the batch (sublane rows for the CNN)
    S = N + 1          # tokens per sequence (cls + patches)
    BS = B * S         # folded batch*seq rows (sublane rows for the encoder)
    Dh = E // H
    scale = 1.0 / math.sqrt(Dh)

    # ---------------- CNN patch embedding: im2col -> 3 big matmuls ------------
    def im2col(h, cin):
        # h: (T*M, cin), time-major (row = t*M + m); zero-padded kernel-3 window.
        z = jnp.zeros((M, cin), jnp.float32)
        prev = jnp.concatenate([z, h[:-M, :]], axis=0)     # value x[t-1]
        nxt = jnp.concatenate([h[M:, :], z], axis=0)       # value x[t+1]
        return jnp.concatenate([prev, h, nxt], axis=-1)    # (T*M, 3*cin)

    def maxpool2(h, T):
        # MaxPool1d(kernel=2, stride=2) over the time axis of a time-major slab.
        return jnp.concatenate(
            [jnp.maximum(h[(2 * t) * M:(2 * t + 1) * M, :],
                         h[(2 * t + 1) * M:(2 * t + 2) * M, :])
             for t in range(T // 2)], axis=0)

    b1 = b1_ref[...]
    b2 = b2_ref[...]
    b3 = b3_ref[...]

    T1 = P
    h1 = jnp.maximum(_mm(xcol_ref[...], w1_ref[...]) + b1, 0.0)       # (T1*M, 64)
    T2 = T1 // 2
    h1 = maxpool2(h1, T1)                                             # (T2*M, 64)
    h2 = jnp.maximum(_mm(im2col(h1, 64), w2_ref[...]) + b2, 0.0)      # (T2*M, 128)
    T3 = T2 // 2
    h2 = maxpool2(h2, T2)                                             # (T3*M, 128)
    h3 = jnp.maximum(_mm(im2col(h2, 128), w3_ref[...]) + b3, 0.0)     # (T3*M, 256)

    # adaptive_avg_pool1d(.., 1): mean over remaining time steps.
    avg = h3[0:M, :]
    for t in range(1, T3):
        avg = avg + h3[t * M:(t + 1) * M, :]
    avg = avg * (1.0 / T3)                                            # (M, 256)
    emb = _mm(avg, wfe_ref[...]) + bfe_ref[...]                       # (M, E)

    # ---------------- token slab: [cls | patches] + positional embedding -----
    clspos = clspos_ref[...]        # (1, E) = cls_token + pos_embed[0]
    pospatch = pospatch_ref[...]    # (N, E) = pos_embed[1:N+1]
    rows = []
    for b in range(B):
        rows.append(clspos)
        rows.append(emb[b * N:(b + 1) * N, :] + pospatch)
    h = jnp.concatenate(rows, axis=0)   # (BS, E); pos_drop = identity (inference)

    abias = abias_ref[...]              # (BS, BS) block-diagonal additive mask

    # ---------------- transformer encoder layers (post-norm, GELU) -----------
    for l in range(L):
        wqkv = wqkv_ref[l]
        bqkv = bqkv_ref[l]
        wo = wo_ref[l]
        bo = bo_ref[l]
        ln1g = ln1g_ref[l]
        ln1b = ln1b_ref[l]
        wf1 = wf1_ref[l]
        bf1 = bf1_ref[l]
        wf2 = wf2_ref[l]
        bf2 = bf2_ref[l]
        ln2g = ln2g_ref[l]
        ln2b = ln2b_ref[l]

        qkv = _mm(h, wqkv) + bqkv                                     # (BS, 3E)
        heads = []
        for hh in range(H):
            qh = qkv[:, hh * Dh:(hh + 1) * Dh]
            kh = qkv[:, E + hh * Dh:E + (hh + 1) * Dh]
            vh = qkv[:, 2 * E + hh * Dh:2 * E + (hh + 1) * Dh]
            sc = _mm_nt(qh, kh) * scale + abias                       # (BS, BS)
            sc = sc - jnp.max(sc, axis=-1, keepdims=True)
            p = jnp.exp(sc)
            p = p * pl.reciprocal(jnp.sum(p, axis=-1, keepdims=True), approx=True)
            heads.append(_mm(p, vh))                                  # (BS, Dh)
        attn = _mm(jnp.concatenate(heads, axis=-1), wo) + bo          # (BS, E)

        y = _layer_norm(h + attn, ln1g, ln1b)
        ff = _mm(_gelu_exact(_mm(y, wf1) + bf1), wf2) + bf2
        h = _layer_norm(y + ff, ln2g, ln2b)

    # ---------------- classification head (final LN + fc, lane-padded) -------
    cls = jnp.concatenate([h[b * S:b * S + 1, :] for b in range(B)], axis=0)   # (B, E)
    cls = _layer_norm(cls, lng_ref[...], lnb_ref[...])
    out_ref[...] = _mm(cls, wcls_ref[...]) + bcls_ref[...]            # (B, NC_pad)


# -------------------------------- parameters ---------------------------------

def init_params(key, *, num_channels, seq_length, patch_size, embed_dim,
                num_heads, num_layers, num_classes, dim_feedforward=2048):
    C, E = num_channels, embed_dim
    N = seq_length // patch_size
    F = dim_feedforward
    keys = iter(jax.random.split(key, 256))

    def nrm(shape, fan_in=None, std=0.02):
        s = std if fan_in is None else 1.0 / math.sqrt(fan_in)
        return (s * jax.random.normal(next(keys), shape)).astype(jnp.float32)

    params = {
        'cls_token': nrm((1, 1, E)),
        'pos_embed': nrm((1, N + 1, E)),
        'cnn': {
            'w1': nrm((3, C, 64), fan_in=3 * C),       'b1': nrm((1, 64)),
            'w2': nrm((3, 64, 128), fan_in=3 * 64),    'b2': nrm((1, 128)),
            'w3': nrm((3, 128, 256), fan_in=3 * 128),  'b3': nrm((1, 256)),
            'wfc': nrm((256, E), fan_in=256),          'bfc': nrm((1, E)),
        },
        'layers': [],
        'final_norm': {'g': jnp.ones((1, E), jnp.float32),
                       'b': jnp.zeros((1, E), jnp.float32)},
        'fc': {'w': nrm((E, num_classes)),
               'b': jnp.zeros((1, num_classes), jnp.float32)},
    }
    for _ in range(num_layers):
        params['layers'].append({
            'wqkv': nrm((E, 3 * E), fan_in=E), 'bqkv': nrm((1, 3 * E)),
            'wo': nrm((E, E), fan_in=E),       'bo': nrm((1, E)),
            'ln1g': jnp.ones((1, E), jnp.float32), 'ln1b': jnp.zeros((1, E), jnp.float32),
            'w1': nrm((E, F), fan_in=E),       'b1': nrm((1, F)),
            'w2': nrm((F, E), fan_in=F),       'b2': nrm((1, E)),
            'ln2g': jnp.ones((1, E), jnp.float32), 'ln2b': jnp.zeros((1, E), jnp.float32),
        })
    return params


# --------------------------------- forward -----------------------------------

def forward(params, x, cfg, task='classification'):
    # x: (B, C, L) float32   (matches PyTorch (batch, num_channels, seq_length))
    assert task == 'classification'
    # TODO(synk): 'pretext' task (boolean-mask gather + Linear decoder) has a
    # data-dependent output shape and is not implemented.
    B, C, L = x.shape
    P, E, H = cfg['patch_size'], cfg['embed_dim'], cfg['num_heads']
    N = L // P
    M = B * N
    S = N + 1
    BS = B * S
    nlayers = cfg['num_layers']
    nclass = cfg['num_classes']
    ncp = ((nclass + 127) // 128) * 128     # lane-dense classifier output

    # --- im2col of the raw input patches (pure layout glue) ------------------
    # Exactly the torch .view chain (row-major raw reinterpretation).
    xp = x[:, :, :N * P].reshape(B, C, N, P).reshape(B * N, C, P)     # (M, C, P)
    xt = jnp.transpose(xp, (2, 0, 1)).astype(jnp.float32)             # (P, M, C) time-major
    z = jnp.zeros((1, M, C), jnp.float32)
    xcol = jnp.concatenate([jnp.concatenate([z, xt[:-1]], axis=0),    # x[t-1]
                            xt,                                       # x[t]
                            jnp.concatenate([xt[1:], z], axis=0)],    # x[t+1]
                           axis=-1)
    xcol = xcol.reshape(P * M, 3 * C)                                 # (P*M, 3C)

    # --- pack parameters into kernel-friendly fused layouts ------------------
    cp = params['cnn']
    w1c = cp['w1'].reshape(3 * C, 64)
    w2c = cp['w2'].reshape(3 * 64, 128)
    w3c = cp['w3'].reshape(3 * 128, 256)

    clspos = params['cls_token'][0] + params['pos_embed'][0, 0:1, :]  # (1, E)
    pospatch = params['pos_embed'][0, 1:N + 1, :]                     # (N, E)

    bid = jnp.arange(BS) // S
    abias = jnp.where(bid[:, None] == bid[None, :], 0.0, -1e30).astype(jnp.float32)

    def stk(name):
        return jnp.stack([lp[name] for lp in params['layers']], axis=0)

    wqkv_all, bqkv_all = stk('wqkv'), stk('bqkv')
    wo_all, bo_all = stk('wo'), stk('bo')
    ln1g_all, ln1b_all = stk('ln1g'), stk('ln1b')
    wf1_all, bf1_all = stk('w1'), stk('b1')
    wf2_all, bf2_all = stk('w2'), stk('b2')
    ln2g_all, ln2b_all = stk('ln2g'), stk('ln2b')

    wcls = jnp.zeros((E, ncp), jnp.float32).at[:, :nclass].set(params['fc']['w'])
    bcls = jnp.zeros((1, ncp), jnp.float32).at[:, :nclass].set(params['fc']['b'])

    args = (xcol, w1c, cp['b1'], w2c, cp['b2'], w3c, cp['b3'], cp['wfc'], cp['bfc'],
            clspos, pospatch, abias,
            wqkv_all, bqkv_all, wo_all, bo_all, ln1g_all, ln1b_all,
            wf1_all, bf1_all, wf2_all, bf2_all, ln2g_all, ln2b_all,
            params['final_norm']['g'], params['final_norm']['b'], wcls, bcls)

    kernel = functools.partial(_forward_kernel, B=B, N=N, P=P, E=E, H=H, L=nlayers)
    logits_pad = pl.pallas_call(
        kernel,
        out_shape=jax.ShapeDtypeStruct((B, ncp), jnp.float32),
        in_specs=[_VMEM] * len(args),
        out_specs=_VMEM,
    )(*args)
    return logits_pad[:, :nclass]


# ----------------------------------- main -------------------------------------

if __name__ == "__main__":
    cfg = dict(num_channels=4, seq_length=64, patch_size=16, embed_dim=32,
               num_heads=4, num_layers=2, num_classes=2)
    key = jax.random.PRNGKey(0)
    pkey, xkey = jax.random.split(key)

    params = init_params(
        pkey,
        num_channels=cfg['num_channels'], seq_length=cfg['seq_length'],
        patch_size=cfg['patch_size'], embed_dim=cfg['embed_dim'],
        num_heads=cfg['num_heads'], num_layers=cfg['num_layers'],
        num_classes=cfg['num_classes'],
        dim_feedforward=2048,   # nn.TransformerEncoderLayer default
    )

    x = jax.random.normal(xkey, (2, cfg['num_channels'], cfg['seq_length']),
                          dtype=jnp.float32)

    out = forward(params, x, cfg, task='classification')
    out = jax.block_until_ready(out)
    assert out.shape == (2, cfg['num_classes'])
    assert bool(jnp.all(jnp.isfinite(out)))
    print("KERNEL_OK")
</pallas_src>

<mosaic_0001>
module attributes {stable_mosaic.version = 11 : i64} {
  func.func @_forward_kernel(%arg0: memref<128x12xf32, #tpu.memory_space<vmem>>, %arg1: memref<12x64xf32, #tpu.memory_space<vmem>>, %arg2: memref<1x64xf32, #tpu.memory_space<vmem>>, %arg3: memref<192x128xf32, #tpu.memory_space<vmem>>, %arg4: memref<1x128xf32, #tpu.memory_space<vmem>>, %arg5: memref<384x256xf32, #tpu.memory_space<vmem>>, %arg6: memref<1x256xf32, #tpu.memory_space<vmem>>, %arg7: memref<256x32xf32, #tpu.memory_space<vmem>>, %arg8: memref<1x32xf32, #tpu.memory_space<vmem>>, %arg9: memref<1x32xf32, #tpu.memory_space<vmem>>, %arg10: memref<4x32xf32, #tpu.memory_space<vmem>>, %arg11: memref<10x10xf32, #tpu.memory_space<vmem>>, %arg12: memref<2x32x96xf32, #tpu.memory_space<vmem>>, %arg13: memref<2x1x96xf32, #tpu.memory_space<vmem>>, %arg14: memref<2x32x32xf32, #tpu.memory_space<vmem>>, %arg15: memref<2x1x32xf32, #tpu.memory_space<vmem>>, %arg16: memref<2x1x32xf32, #tpu.memory_space<vmem>>, %arg17: memref<2x1x32xf32, #tpu.memory_space<vmem>>, %arg18: memref<2x32x2048xf32, #tpu.memory_space<vmem>>, %arg19: memref<2x1x2048xf32, #tpu.memory_space<vmem>>, %arg20: memref<2x2048x32xf32, #tpu.memory_space<vmem>>, %arg21: memref<2x1x32xf32, #tpu.memory_space<vmem>>, %arg22: memref<2x1x32xf32, #tpu.memory_space<vmem>>, %arg23: memref<2x1x32xf32, #tpu.memory_space<vmem>>, %arg24: memref<1x32xf32, #tpu.memory_space<vmem>>, %arg25: memref<1x32xf32, #tpu.memory_space<vmem>>, %arg26: memref<32x128xf32, #tpu.memory_space<vmem>>, %arg27: memref<1x128xf32, #tpu.memory_space<vmem>>, %arg28: memref<2x128xf32, #tpu.memory_space<vmem>>) attributes {dimension_semantics = [], scalar_prefetch = 0 : i64, scratch_operands = 0 : i64, tpu.core_type = #tpu.core_type<tc>} {
    %c0 = arith.constant 0 : index
    %c0_0 = arith.constant 0 : index
    %0 = vector.load %arg2[%c0, %c0_0] : memref<1x64xf32, #tpu.memory_space<vmem>>, vector<1x64xf32>
    %c0_1 = arith.constant 0 : index
    %c0_2 = arith.constant 0 : index
    %1 = vector.load %arg4[%c0_1, %c0_2] : memref<1x128xf32, #tpu.memory_space<vmem>>, vector<1x128xf32>
    %c0_3 = arith.constant 0 : index
    %c0_4 = arith.constant 0 : index
    %2 = vector.load %arg6[%c0_3, %c0_4] : memref<1x256xf32, #tpu.memory_space<vmem>>, vector<1x256xf32>
    %c0_5 = arith.constant 0 : index
    %c0_6 = arith.constant 0 : index
    %3 = vector.load %arg0[%c0_5, %c0_6] : memref<128x12xf32, #tpu.memory_space<vmem>>, vector<128x12xf32>
    %c0_7 = arith.constant 0 : index
    %c0_8 = arith.constant 0 : index
    %4 = vector.load %arg1[%c0_7, %c0_8] : memref<12x64xf32, #tpu.memory_space<vmem>>, vector<12x64xf32>
    %cst = arith.constant dense<0.000000e+00> : vector<128x64xf32>
    %5 = tpu.matmul %3, %4, %cst {dimension_numbers = #tpu.dot_dimension_numbers<[1], [0], [0], [1], [0, 0, 1, 1], [], []>} : vector<128x12xf32>, vector<12x64xf32>, vector<128x64xf32> -> vector<128x64xf32>
    %6 = vector.broadcast %0 : vector<1x64xf32> to vector<128x64xf32>
    %7 = arith.addf %5, %6 : vector<128x64xf32>
    %cst_9 = arith.constant 0.000000e+00 : f32
    %8 = vector.broadcast %cst_9 : f32 to vector<128x64xf32>
    %9 = arith.maximumf %7, %8 : vector<128x64xf32>
    %10 = vector.extract_strided_slice %9 {offsets = [0, 0], sizes = [8, 64], strides = [1, 1]} : vector<128x64xf32> to vector<8x64xf32>
    %11 = vector.extract_strided_slice %9 {offsets = [8, 0], sizes = [8, 64], strides = [1, 1]} : vector<128x64xf32> to vector<8x64xf32>
    %12 = arith.maximumf %10, %11 : vector<8x64xf32>
    %13 = vector.extract_strided_slice %9 {offsets = [16, 0], sizes = [8, 64], strides = [1, 1]} : vector<128x64xf32> to vector<8x64xf32>
    %14 = vector.extract_strided_slice %9 {offsets = [24, 0], sizes = [8, 64], strides = [1, 1]} : vector<128x64xf32> to vector<8x64xf32>
    %15 = arith.maximumf %13, %14 : vector<8x64xf32>
    %16 = vector.extract_strided_slice %9 {offsets = [32, 0], sizes = [8, 64], strides = [1, 1]} : vector<128x64xf32> to vector<8x64xf32>
    %17 = vector.extract_strided_slice %9 {offsets = [40, 0], sizes = [8, 64], strides = [1, 1]} : vector<128x64xf32> to vector<8x64xf32>
    %18 = arith.maximumf %16, %17 : vector<8x64xf32>
    %19 = vector.extract_strided_slice %9 {offsets = [48, 0], sizes = [8, 64], strides = [1, 1]} : vector<128x64xf32> to vector<8x64xf32>
    %20 = vector.extract_strided_slice %9 {offsets = [56, 0], sizes = [8, 64], strides = [1, 1]} : vector<128x64xf32> to vector<8x64xf32>
    %21 = arith.maximumf %19, %20 : vector<8x64xf32>
    %22 = vector.extract_strided_slice %9 {offsets = [64, 0], sizes = [8, 64], strides = [1, 1]} : vector<128x64xf32> to vector<8x64xf32>
    %23 = vector.extract_strided_slice %9 {offsets = [72, 0], sizes = [8, 64], strides = [1, 1]} : vector<128x64xf32> to vector<8x64xf32>
    %24 = arith.maximumf %22, %23 : vector<8x64xf32>
    %25 = vector.extract_strided_slice %9 {offsets = [80, 0], sizes = [8, 64], strides = [1, 1]} : vector<128x64xf32> to vector<8x64xf32>
    %26 = vector.extract_strided_slice %9 {offsets = [88, 0], sizes = [8, 64], strides = [1, 1]} : vector<128x64xf32> to vector<8x64xf32>
    %27 = arith.maximumf %25, %26 : vector<8x64xf32>
    %28 = vector.extract_strided_slice %9 {offsets = [96, 0], sizes = [8, 64], strides = [1, 1]} : vector<128x64xf32> to vector<8x64xf32>
    %29 = vector.extract_strided_slice %9 {offsets = [104, 0], sizes = [8, 64], strides = [1, 1]} : vector<128x64xf32> to vector<8x64xf32>
    %30 = arith.maximumf %28, %29 : vector<8x64xf32>
    %31 = vector.extract_strided_slice %9 {offsets = [112, 0], sizes = [8, 64], strides = [1, 1]} : vector<128x64xf32> to vector<8x64xf32>
    %32 = vector.extract_strided_slice %9 {offsets = [120, 0], sizes = [8, 64], strides = [1, 1]} : vector<128x64xf32> to vector<8x64xf32>
    %33 = arith.maximumf %31, %32 : vector<8x64xf32>
    %34 = tpu.concatenate %12, %15, %18, %21, %24, %27, %30, %33 in 0 : vector<8x64xf32>, vector<8x64xf32>, vector<8x64xf32>, vector<8x64xf32>, vector<8x64xf32>, vector<8x64xf32>, vector<8x64xf32>, vector<8x64xf32> -> vector<64x64xf32>
    %cst_10 = arith.constant 0.000000e+00 : f32
    %35 = vector.broadcast %cst_10 : f32 to vector<8x64xf32>
    %36 = vector.extract_strided_slice %34 {offsets = [0, 0], sizes = [56, 64], strides = [1, 1]} : vector<64x64xf32> to vector<56x64xf32>
    %37 = tpu.concatenate %35, %36 in 0 : vector<8x64xf32>, vector<56x64xf32> -> vector<64x64xf32>
    %38 = vector.extract_strided_slice %34 {offsets = [8, 0], sizes = [56, 64], strides = [1, 1]} : vector<64x64xf32> to vector<56x64xf32>
    %39 = tpu.concatenate %38, %35 in 0 : vector<56x64xf32>, vector<8x64xf32> -> vector<64x64xf32>
    %40 = tpu.concatenate %37, %34, %39 in 1 : vector<64x64xf32>, vector<64x64xf32>, vector<64x64xf32> -> vector<64x192xf32>
    %c0_11 = arith.constant 0 : index
    %c0_12 = arith.constant 0 : index
    %41 = vector.load %arg3[%c0_11, %c0_12] : memref<192x128xf32, #tpu.memory_space<vmem>>, vector<192x128xf32>
    %cst_13 = arith.constant dense<0.000000e+00> : vector<64x128xf32>
    %42 = tpu.matmul %40, %41, %cst_13 {dimension_numbers = #tpu.dot_dimension_numbers<[1], [0], [0], [1], [0, 0, 1, 1], [], []>} : vector<64x192xf32>, vector<192x128xf32>, vector<64x128xf32> -> vector<64x128xf32>
    %43 = vector.broadcast %1 : vector<1x128xf32> to vector<64x128xf32>
    %44 = arith.addf %42, %43 : vector<64x128xf32>
    %cst_14 = arith.constant 0.000000e+00 : f32
    %45 = vector.broadcast %cst_14 : f32 to vector<64x128xf32>
    %46 = arith.maximumf %44, %45 : vector<64x128xf32>
    %47 = vector.extract_strided_slice %46 {offsets = [0, 0], sizes = [8, 128], strides = [1, 1]} : vector<64x128xf32> to vector<8x128xf32>
    %48 = vector.extract_strided_slice %46 {offsets = [8, 0], sizes = [8, 128], strides = [1, 1]} : vector<64x128xf32> to vector<8x128xf32>
    %49 = arith.maximumf %47, %48 : vector<8x128xf32>
    %50 = vector.extract_strided_slice %46 {offsets = [16, 0], sizes = [8, 128], strides = [1, 1]} : vector<64x128xf32> to vector<8x128xf32>
    %51 = vector.extract_strided_slice %46 {offsets = [24, 0], sizes = [8, 128], strides = [1, 1]} : vector<64x128xf32> to vector<8x128xf32>
    %52 = arith.maximumf %50, %51 : vector<8x128xf32>
    %53 = vector.extract_strided_slice %46 {offsets = [32, 0], sizes = [8, 128], strides = [1, 1]} : vector<64x128xf32> to vector<8x128xf32>
    %54 = vector.extract_strided_slice %46 {offsets = [40, 0], sizes = [8, 128], strides = [1, 1]} : vector<64x128xf32> to vector<8x128xf32>
    %55 = arith.maximumf %53, %54 : vector<8x128xf32>
    %56 = vector.extract_strided_slice %46 {offsets = [48, 0], sizes = [8, 128], strides = [1, 1]} : vector<64x128xf32> to vector<8x128xf32>
    %57 = vector.extract_strided_slice %46 {offsets = [56, 0], sizes = [8, 128], strides = [1, 1]} : vector<64x128xf32> to vector<8x128xf32>
    %58 = arith.maximumf %56, %57 : vector<8x128xf32>
    %59 = tpu.concatenate %49, %52, %55, %58 in 0 : vector<8x128xf32>, vector<8x128xf32>, vector<8x128xf32>, vector<8x128xf32> -> vector<32x128xf32>
    %cst_15 = arith.constant 0.000000e+00 : f32
    %60 = vector.broadcast %cst_15 : f32 to vector<8x128xf32>
    %61 = vector.extract_strided_slice %59 {offsets = [0, 0], sizes = [24, 128], strides = [1, 1]} : vector<32x128xf32> to vector<24x128xf32>
    %62 = tpu.concatenate %60, %61 in 0 : vector<8x128xf32>, vector<24x128xf32> -> vector<32x128xf32>
    %63 = vector.extract_strided_slice %59 {offsets = [8, 0], sizes = [24, 128], strides = [1, 1]} : vector<32x128xf32> to vector<24x128xf32>
    %64 = tpu.concatenate %63, %60 in 0 : vector<24x128xf32>, vector<8x128xf32> -> vector<32x128xf32>
    %65 = tpu.concatenate %62, %59, %64 in 1 : vector<32x128xf32>, vector<32x128xf32>, vector<32x128xf32> -> vector<32x384xf32>
    %c0_16 = arith.constant 0 : index
    %c0_17 = arith.constant 0 : index
    %66 = vector.load %arg5[%c0_16, %c0_17] : memref<384x256xf32, #tpu.memory_space<vmem>>, vector<384x256xf32>
    %cst_18 = arith.constant dense<0.000000e+00> : vector<32x256xf32>
    %67 = tpu.matmul %65, %66, %cst_18 {dimension_numbers = #tpu.dot_dimension_numbers<[1], [0], [0], [1], [0, 0, 1, 1], [], []>} : vector<32x384xf32>, vector<384x256xf32>, vector<32x256xf32> -> vector<32x256xf32>
    %68 = vector.broadcast %2 : vector<1x256xf32> to vector<32x256xf32>
    %69 = arith.addf %67, %68 : vector<32x256xf32>
    %cst_19 = arith.constant 0.000000e+00 : f32
    %70 = vector.broadcast %cst_19 : f32 to vector<32x256xf32>
    %71 = arith.maximumf %69, %70 : vector<32x256xf32>
    %72 = vector.extract_strided_slice %71 {offsets = [0, 0], sizes = [8, 256], strides = [1, 1]} : vector<32x256xf32> to vector<8x256xf32>
    %73 = vector.extract_strided_slice %71 {offsets = [8, 0], sizes = [8, 256], strides = [1, 1]} : vector<32x256xf32> to vector<8x256xf32>
    %74 = arith.addf %72, %73 : vector<8x256xf32>
    %75 = vector.extract_strided_slice %71 {offsets = [16, 0], sizes = [8, 256], strides = [1, 1]} : vector<32x256xf32> to vector<8x256xf32>
    %76 = arith.addf %74, %75 : vector<8x256xf32>
    %77 = vector.extract_strided_slice %71 {offsets = [24, 0], sizes = [8, 256], strides = [1, 1]} : vector<32x256xf32> to vector<8x256xf32>
    %78 = arith.addf %76, %77 : vector<8x256xf32>
    %cst_20 = arith.constant 2.500000e-01 : f32
    %79 = vector.broadcast %cst_20 : f32 to vector<8x256xf32>
    %80 = arith.mulf %78, %79 : vector<8x256xf32>
    %c0_21 = arith.constant 0 : index
    %c0_22 = arith.constant 0 : index
    %81 = vector.load %arg7[%c0_21, %c0_22] : memref<256x32xf32, #tpu.memory_space<vmem>>, vector<256x32xf32>
    %cst_23 = arith.constant dense<0.000000e+00> : vector<8x32xf32>
    %82 = tpu.matmul %80, %81, %cst_23 {dimension_numbers = #tpu.dot_dimension_numbers<[1], [0], [0], [1], [0, 0, 1, 1], [], []>} : vector<8x256xf32>, vector<256x32xf32>, vector<8x32xf32> -> vector<8x32xf32>
    %c0_24 = arith.constant 0 : index
    %c0_25 = arith.constant 0 : index
    %83 = vector.load %arg8[%c0_24, %c0_25] : memref<1x32xf32, #tpu.memory_space<vmem>>, vector<1x32xf32>
    %84 = vector.broadcast %83 : vector<1x32xf32> to vector<8x32xf32>
    %85 = arith.addf %82, %84 : vector<8x32xf32>
    %c0_26 = arith.constant 0 : index
    %c0_27 = arith.constant 0 : index
    %86 = vector.load %arg9[%c0_26, %c0_27] : memref<1x32xf32, #tpu.memory_space<vmem>>, vector<1x32xf32>
    %c0_28 = arith.constant 0 : index
    %c0_29 = arith.constant 0 : index
    %87 = vector.load %arg10[%c0_28, %c0_29] : memref<4x32xf32, #tpu.memory_space<vmem>>, vector<4x32xf32>
    %88 = vector.extract_strided_slice %85 {offsets = [0, 0], sizes = [4, 32], strides = [1, 1]} : vector<8x32xf32> to vector<4x32xf32>
    %89 = arith.addf %88, %87 : vector<4x32xf32>
    %90 = vector.extract_strided_slice %85 {offsets = [4, 0], sizes = [4, 32], strides = [1, 1]} : vector<8x32xf32> to vector<4x32xf32>
    %91 = arith.addf %90, %87 : vector<4x32xf32>
    %92 = tpu.concatenate %86, %89, %86, %91 in 0 : vector<1x32xf32>, vector<4x32xf32>, vector<1x32xf32>, vector<4x32xf32> -> vector<10x32xf32>
    %c0_30 = arith.constant 0 : index
    %c0_31 = arith.constant 0 : index
    %93 = vector.load %arg11[%c0_30, %c0_31] : memref<10x10xf32, #tpu.memory_space<vmem>>, vector<10x10xf32>
    %c0_32 = arith.constant 0 : index
    %c0_33 = arith.constant 0 : index
    %c0_34 = arith.constant 0 : index
    %94 = vector.load %arg12[%c0_32, %c0_33, %c0_34] : memref<2x32x96xf32, #tpu.memory_space<vmem>>, vector<1x32x96xf32>
    %95 = vector.shape_cast %94 : vector<1x32x96xf32> to vector<32x96xf32>
    %c0_35 = arith.constant 0 : index
    %c0_36 = arith.constant 0 : index
    %c0_37 = arith.constant 0 : index
    %96 = vector.load %arg13[%c0_35, %c0_36, %c0_37] : memref<2x1x96xf32, #tpu.memory_space<vmem>>, vector<1x1x96xf32>
    %97 = vector.shape_cast %96 : vector<1x1x96xf32> to vector<1x96xf32>
    %c0_38 = arith.constant 0 : index
    %c0_39 = arith.constant 0 : index
    %c0_40 = arith.constant 0 : index
    %98 = vector.load %arg14[%c0_38, %c0_39, %c0_40] : memref<2x32x32xf32, #tpu.memory_space<vmem>>, vector<1x32x32xf32>
    %99 = vector.shape_cast %98 : vector<1x32x32xf32> to vector<32x32xf32>
    %c0_41 = arith.constant 0 : index
    %c0_42 = arith.constant 0 : index
    %c0_43 = arith.constant 0 : index
    %100 = vector.load %arg15[%c0_41, %c0_42, %c0_43] : memref<2x1x32xf32, #tpu.memory_space<vmem>>, vector<1x1x32xf32>
    %101 = vector.shape_cast %100 : vector<1x1x32xf32> to vector<1x32xf32>
    %c0_44 = arith.constant 0 : index
    %c0_45 = arith.constant 0 : index
    %c0_46 = arith.constant 0 : index
    %102 = vector.load %arg16[%c0_44, %c0_45, %c0_46] : memref<2x1x32xf32, #tpu.memory_space<vmem>>, vector<1x1x32xf32>
    %103 = vector.shape_cast %102 : vector<1x1x32xf32> to vector<1x32xf32>
    %c0_47 = arith.constant 0 : index
    %c0_48 = arith.constant 0 : index
    %c0_49 = arith.constant 0 : index
    %104 = vector.load %arg17[%c0_47, %c0_48, %c0_49] : memref<2x1x32xf32, #tpu.memory_space<vmem>>, vector<1x1x32xf32>
    %105 = vector.shape_cast %104 : vector<1x1x32xf32> to vector<1x32xf32>
    %c0_50 = arith.constant 0 : index
    %c0_51 = arith.constant 0 : index
    %c0_52 = arith.constant 0 : index
    %106 = vector.load %arg18[%c0_50, %c0_51, %c0_52] : memref<2x32x2048xf32, #tpu.memory_space<vmem>>, vector<1x32x2048xf32>
    %107 = vector.shape_cast %106 : vector<1x32x2048xf32> to vector<32x2048xf32>
    %c0_53 = arith.constant 0 : index
    %c0_54 = arith.constant 0 : index
    %c0_55 = arith.constant 0 : index
    %108 = vector.load %arg19[%c0_53, %c0_54, %c0_55] : memref<2x1x2048xf32, #tpu.memory_space<vmem>>, vector<1x1x2048xf32>
    %109 = vector.shape_cast %108 : vector<1x1x2048xf32> to vector<1x2048xf32>
    %c0_56 = arith.constant 0 : index
    %c0_57 = arith.constant 0 : index
    %c0_58 = arith.constant 0 : index
    %110 = vector.load %arg20[%c0_56, %c0_57, %c0_58] : memref<2x2048x32xf32, #tpu.memory_space<vmem>>, vector<1x2048x32xf32>
    %111 = vector.shape_cast %110 : vector<1x2048x32xf32> to vector<2048x32xf32>
    %c0_59 = arith.constant 0 : index
    %c0_60 = arith.constant 0 : index
    %c0_61 = arith.constant 0 : index
    %112 = vector.load %arg21[%c0_59, %c0_60, %c0_61] : memref<2x1x32xf32, #tpu.memory_space<vmem>>, vector<1x1x32xf32>
    %113 = vector.shape_cast %112 : vector<1x1x32xf32> to vector<1x32xf32>
    %c0_62 = arith.constant 0 : index
    %c0_63 = arith.constant 0 : index
    %c0_64 = arith.constant 0 : index
    %114 = vector.load %arg22[%c0_62, %c0_63, %c0_64] : memref<2x1x32xf32, #tpu.memory_space<vmem>>, vector<1x1x32xf32>
    %115 = vector.shape_cast %114 : vector<1x1x32xf32> to vector<1x32xf32>
    %c0_65 = arith.constant 0 : index
    %c0_66 = arith.constant 0 : index
    %c0_67 = arith.constant 0 : index
    %116 = vector.load %arg23[%c0_65, %c0_66, %c0_67] : memref<2x1x32xf32, #tpu.memory_space<vmem>>, vector<1x1x32xf32>
    %117 = vector.shape_cast %116 : vector<1x1x32xf32> to vector<1x32xf32>
    %cst_68 = arith.constant dense<0.000000e+00> : vector<10x96xf32>
    %118 = tpu.matmul %92, %95, %cst_68 {dimension_numbers = #tpu.dot_dimension_numbers<[1], [0], [0], [1], [0, 0, 1, 1], [], []>} : vector<10x32xf32>, vector<32x96xf32>, vector<10x96xf32> -> vector<10x96xf32>
    %119 = vector.broadcast %97 : vector<1x96xf32> to vector<10x96xf32>
    %120 = arith.addf %118, %119 : vector<10x96xf32>
    %121 = vector.extract_strided_slice %120 {offsets = [0, 0], sizes = [10, 8], strides = [1, 1]} : vector<10x96xf32> to vector<10x8xf32>
    %122 = vector.extract_strided_slice %120 {offsets = [0, 32], sizes = [10, 8], strides = [1, 1]} : vector<10x96xf32> to vector<10x8xf32>
    %123 = vector.extract_strided_slice %120 {offsets = [0, 64], sizes = [10, 8], strides = [1, 1]} : vector<10x96xf32> to vector<10x8xf32>
    %cst_69 = arith.constant dense<0.000000e+00> : vector<10x10xf32>
    %124 = tpu.matmul %121, %122, %cst_69 {dimension_numbers = #tpu.dot_dimension_numbers<[1], [1], [0], [0], [0, 0, 1, 0], [], []>} : vector<10x8xf32>, vector<10x8xf32>, vector<10x10xf32> -> vector<10x10xf32>
    %cst_70 = arith.constant 0.353553385 : f32
    %125 = vector.broadcast %cst_70 : f32 to vector<10x10xf32>
    %126 = arith.mulf %124, %125 : vector<10x10xf32>
    %127 = arith.addf %126, %93 : vector<10x10xf32>
    %cst_71 = arith.constant dense<0xFF800000> : vector<10xf32>
    %128 = vector.multi_reduction <maximumf>, %127, %cst_71 [1] : vector<10x10xf32> to vector<10xf32>
    %129 = vector.shape_cast %128 : vector<10xf32> to vector<10x1xf32>
    %130 = vector.broadcast %129 : vector<10x1xf32> to vector<10x10xf32>
    %131 = arith.subf %127, %130 : vector<10x10xf32>
    %132 = math.exp %131 : vector<10x10xf32>
    %cst_72 = arith.constant dense<0.000000e+00> : vector<10xf32>
    %133 = vector.multi_reduction <add>, %132, %cst_72 [1] : vector<10x10xf32> to vector<10xf32>
    %134 = vector.shape_cast %133 : vector<10xf32> to vector<10x1xf32>
    %135 = tpu.reciprocal %134 {approx = true} : vector<10x1xf32> -> vector<10x1xf32>
    %136 = vector.broadcast %135 : vector<10x1xf32> to vector<10x10xf32>
    %137 = arith.mulf %132, %136 : vector<10x10xf32>
    %cst_73 = arith.constant dense<0.000000e+00> : vector<10x8xf32>
    %138 = tpu.matmul %137, %123, %cst_73 {dimension_numbers = #tpu.dot_dimension_numbers<[1], [0], [0], [1], [0, 0, 1, 1], [], []>} : vector<10x10xf32>, vector<10x8xf32>, vector<10x8xf32> -> vector<10x8xf32>
    %139 = vector.extract_strided_slice %120 {offsets = [0, 8], sizes = [10, 8], strides = [1, 1]} : vector<10x96xf32> to vector<10x8xf32>
    %140 = vector.extract_strided_slice %120 {offsets = [0, 40], sizes = [10, 8], strides = [1, 1]} : vector<10x96xf32> to vector<10x8xf32>
    %141 = vector.extract_strided_slice %120 {offsets = [0, 72], sizes = [10, 8], strides = [1, 1]} : vector<10x96xf32> to vector<10x8xf32>
    %cst_74 = arith.constant dense<0.000000e+00> : vector<10x10xf32>
    %142 = tpu.matmul %139, %140, %cst_74 {dimension_numbers = #tpu.dot_dimension_numbers<[1], [1], [0], [0], [0, 0, 1, 0], [], []>} : vector<10x8xf32>, vector<10x8xf32>, vector<10x10xf32> -> vector<10x10xf32>
    %cst_75 = arith.constant 0.353553385 : f32
    %143 = vector.broadcast %cst_75 : f32 to vector<10x10xf32>
    %144 = arith.mulf %142, %143 : vector<10x10xf32>
    %145 = arith.addf %144, %93 : vector<10x10xf32>
    %cst_76 = arith.constant dense<0xFF800000> : vector<10xf32>
    %146 = vector.multi_reduction <maximumf>, %145, %cst_76 [1] : vector<10x10xf32> to vector<10xf32>
    %147 = vector.shape_cast %146 : vector<10xf32> to vector<10x1xf32>
    %148 = vector.broadcast %147 : vector<10x1xf32> to vector<10x10xf32>
    %149 = arith.subf %145, %148 : vector<10x10xf32>
    %150 = math.exp %149 : vector<10x10xf32>
    %cst_77 = arith.constant dense<0.000000e+00> : vector<10xf32>
    %151 = vector.multi_reduction <add>, %150, %cst_77 [1] : vector<10x10xf32> to vector<10xf32>
    %152 = vector.shape_cast %151 : vector<10xf32> to vector<10x1xf32>
    %153 = tpu.reciprocal %152 {approx = true} : vector<10x1xf32> -> vector<10x1xf32>
    %154 = vector.broadcast %153 : vector<10x1xf32> to vector<10x10xf32>
    %155 = arith.mulf %150, %154 : vector<10x10xf32>
    %cst_78 = arith.constant dense<0.000000e+00> : vector<10x8xf32>
    %156 = tpu.matmul %155, %141, %cst_78 {dimension_numbers = #tpu.dot_dimension_numbers<[1], [0], [0], [1], [0, 0, 1, 1], [], []>} : vector<10x10xf32>, vector<10x8xf32>, vector<10x8xf32> -> vector<10x8xf32>
    %157 = vector.extract_strided_slice %120 {offsets = [0, 16], sizes = [10, 8], strides = [1, 1]} : vector<10x96xf32> to vector<10x8xf32>
    %158 = vector.extract_strided_slice %120 {offsets = [0, 48], sizes = [10, 8], strides = [1, 1]} : vector<10x96xf32> to vector<10x8xf32>
    %159 = vector.extract_strided_slice %120 {offsets = [0, 80], sizes = [10, 8], strides = [1, 1]} : vector<10x96xf32> to vector<10x8xf32>
    %cst_79 = arith.constant dense<0.000000e+00> : vector<10x10xf32>
    %160 = tpu.matmul %157, %158, %cst_79 {dimension_numbers = #tpu.dot_dimension_numbers<[1], [1], [0], [0], [0, 0, 1, 0], [], []>} : vector<10x8xf32>, vector<10x8xf32>, vector<10x10xf32> -> vector<10x10xf32>
    %cst_80 = arith.constant 0.353553385 : f32
    %161 = vector.broadcast %cst_80 : f32 to vector<10x10xf32>
    %162 = arith.mulf %160, %161 : vector<10x10xf32>
    %163 = arith.addf %162, %93 : vector<10x10xf32>
    %cst_81 = arith.constant dense<0xFF800000> : vector<10xf32>
    %164 = vector.multi_reduction <maximumf>, %163, %cst_81 [1] : vector<10x10xf32> to vector<10xf32>
    %165 = vector.shape_cast %164 : vector<10xf32> to vector<10x1xf32>
    %166 = vector.broadcast %165 : vector<10x1xf32> to vector<10x10xf32>
    %167 = arith.subf %163, %166 : vector<10x10xf32>
    %168 = math.exp %167 : vector<10x10xf32>
    %cst_82 = arith.constant dense<0.000000e+00> : vector<10xf32>
    %169 = vector.multi_reduction <add>, %168, %cst_82 [1] : vector<10x10xf32> to vector<10xf32>
    %170 = vector.shape_cast %169 : vector<10xf32> to vector<10x1xf32>
    %171 = tpu.reciprocal %170 {approx = true} : vector<10x1xf32> -> vector<10x1xf32>
    %172 = vector.broadcast %171 : vector<10x1xf32> to vector<10x10xf32>
    %173 = arith.mulf %168, %172 : vector<10x10xf32>
    %cst_83 = arith.constant dense<0.000000e+00> : vector<10x8xf32>
    %174 = tpu.matmul %173, %159, %cst_83 {dimension_numbers = #tpu.dot_dimension_numbers<[1], [0], [0], [1], [0, 0, 1, 1], [], []>} : vector<10x10xf32>, vector<10x8xf32>, vector<10x8xf32> -> vector<10x8xf32>
    %175 = vector.extract_strided_slice %120 {offsets = [0, 24], sizes = [10, 8], strides = [1, 1]} : vector<10x96xf32> to vector<10x8xf32>
    %176 = vector.extract_strided_slice %120 {offsets = [0, 56], sizes = [10, 8], strides = [1, 1]} : vector<10x96xf32> to vector<10x8xf32>
    %177 = vector.extract_strided_slice %120 {offsets = [0, 88], sizes = [10, 8], strides = [1, 1]} : vector<10x96xf32> to vector<10x8xf32>
    %cst_84 = arith.constant dense<0.000000e+00> : vector<10x10xf32>
    %178 = tpu.matmul %175, %176, %cst_84 {dimension_numbers = #tpu.dot_dimension_numbers<[1], [1], [0], [0], [0, 0, 1, 0], [], []>} : vector<10x8xf32>, vector<10x8xf32>, vector<10x10xf32> -> vector<10x10xf32>
    %cst_85 = arith.constant 0.353553385 : f32
    %179 = vector.broadcast %cst_85 : f32 to vector<10x10xf32>
    %180 = arith.mulf %178, %179 : vector<10x10xf32>
    %181 = arith.addf %180, %93 : vector<10x10xf32>
    %cst_86 = arith.constant dense<0xFF800000> : vector<10xf32>
    %182 = vector.multi_reduction <maximumf>, %181, %cst_86 [1] : vector<10x10xf32> to vector<10xf32>
    %183 = vector.shape_cast %182 : vector<10xf32> to vector<10x1xf32>
    %184 = vector.broadcast %183 : vector<10x1xf32> to vector<10x10xf32>
    %185 = arith.subf %181, %184 : vector<10x10xf32>
    %186 = math.exp %185 : vector<10x10xf32>
    %cst_87 = arith.constant dense<0.000000e+00> : vector<10xf32>
    %187 = vector.multi_reduction <add>, %186, %cst_87 [1] : vector<10x10xf32> to vector<10xf32>
    %188 = vector.shape_cast %187 : vector<10xf32> to vector<10x1xf32>
    %189 = tpu.reciprocal %188 {approx = true} : vector<10x1xf32> -> vector<10x1xf32>
    %190 = vector.broadcast %189 : vector<10x1xf32> to vector<10x10xf32>
    %191 = arith.mulf %186, %190 : vector<10x10xf32>
    %cst_88 = arith.constant dense<0.000000e+00> : vector<10x8xf32>
    %192 = tpu.matmul %191, %177, %cst_88 {dimension_numbers = #tpu.dot_dimension_numbers<[1], [0], [0], [1], [0, 0, 1, 1], [], []>} : vector<10x10xf32>, vector<10x8xf32>, vector<10x8xf32> -> vector<10x8xf32>
    %193 = tpu.concatenate %138, %156, %174, %192 in 1 : vector<10x8xf32>, vector<10x8xf32>, vector<10x8xf32>, vector<10x8xf32> -> vector<10x32xf32>
    %cst_89 = arith.constant dense<0.000000e+00> : vector<10x32xf32>
    %194 = tpu.matmul %193, %99, %cst_89 {dimension_numbers = #tpu.dot_dimension_numbers<[1], [0], [0], [1], [0, 0, 1, 1], [], []>} : vector<10x32xf32>, vector<32x32xf32>, vector<10x32xf32> -> vector<10x32xf32>
    %195 = vector.broadcast %101 : vector<1x32xf32> to vector<10x32xf32>
    %196 = arith.addf %194, %195 : vector<10x32xf32>
    %197 = arith.addf %92, %196 : vector<10x32xf32>
    %cst_90 = arith.constant dense<0.000000e+00> : vector<10xf32>
    %198 = vector.multi_reduction <add>, %197, %cst_90 [1] : vector<10x32xf32> to vector<10xf32>
    %199 = vector.shape_cast %198 : vector<10xf32> to vector<10x1xf32>
    %cst_91 = arith.constant 3.200000e+01 : f32
    %200 = vector.broadcast %cst_91 : f32 to vector<10x1xf32>
    %201 = arith.divf %199, %200 : vector<10x1xf32>
    %202 = vector.broadcast %201 : vector<10x1xf32> to vector<10x32xf32>
    %203 = arith.subf %197, %202 : vector<10x32xf32>
    %204 = arith.mulf %203, %203 : vector<10x32xf32>
    %cst_92 = arith.constant dense<0.000000e+00> : vector<10xf32>
    %205 = vector.multi_reduction <add>, %204, %cst_92 [1] : vector<10x32xf32> to vector<10xf32>
    %206 = vector.shape_cast %205 : vector<10xf32> to vector<10x1xf32>
    %cst_93 = arith.constant 3.200000e+01 : f32
    %207 = vector.broadcast %cst_93 : f32 to vector<10x1xf32>
    %208 = arith.divf %206, %207 : vector<10x1xf32>
    %cst_94 = arith.constant 9.99999974E-6 : f32
    %209 = vector.broadcast %cst_94 : f32 to vector<10x1xf32>
    %210 = arith.addf %208, %209 : vector<10x1xf32>
    %211 = math.rsqrt %210 : vector<10x1xf32>
    %212 = vector.broadcast %211 : vector<10x1xf32> to vector<10x32xf32>
    %213 = arith.mulf %203, %212 : vector<10x32xf32>
    %214 = vector.broadcast %103 : vector<1x32xf32> to vector<10x32xf32>
    %215 = arith.mulf %213, %214 : vector<10x32xf32>
    %216 = vector.broadcast %105 : vector<1x32xf32> to vector<10x32xf32>
    %217 = arith.addf %215, %216 : vector<10x32xf32>
    %cst_95 = arith.constant dense<0.000000e+00> : vector<10x2048xf32>
    %218 = tpu.matmul %217, %107, %cst_95 {dimension_numbers = #tpu.dot_dimension_numbers<[1], [0], [0], [1], [0, 0, 1, 1], [], []>} : vector<10x32xf32>, vector<32x2048xf32>, vector<10x2048xf32> -> vector<10x2048xf32>
    %219 = vector.broadcast %109 : vector<1x2048xf32> to vector<10x2048xf32>
    %220 = arith.addf %218, %219 : vector<10x2048xf32>
    %cst_96 = arith.constant 5.000000e-01 : f32
    %221 = vector.broadcast %cst_96 : f32 to vector<10x2048xf32>
    %222 = arith.mulf %221, %220 : vector<10x2048xf32>
    %cst_97 = arith.constant 0.707106769 : f32
    %223 = vector.broadcast %cst_97 : f32 to vector<10x2048xf32>
    %224 = arith.mulf %220, %223 : vector<10x2048xf32>
    %cst_98 = arith.constant 0.000000e+00 : f32
    %225 = vector.broadcast %cst_98 : f32 to vector<10x2048xf32>
    %226 = arith.cmpf oge, %224, %225 : vector<10x2048xf32>
    %cst_99 = arith.constant 1.000000e+00 : f32
    %cst_100 = arith.constant -1.000000e+00 : f32
    %227 = vector.broadcast %cst_99 : f32 to vector<10x2048xf32>
    %228 = vector.broadcast %cst_100 : f32 to vector<10x2048xf32>
    %229 = arith.select %226, %227, %228 : vector<10x2048xi1>, vector<10x2048xf32>
    %230 = math.absf %224 : vector<10x2048xf32>
    %cst_101 = arith.constant 0.327591091 : f32
    %231 = vector.broadcast %cst_101 : f32 to vector<10x2048xf32>
    %232 = arith.mulf %231, %230 : vector<10x2048xf32>
    %cst_102 = arith.constant 1.000000e+00 : f32
    %233 = vector.broadcast %cst_102 : f32 to vector<10x2048xf32>
    %234 = arith.addf %233, %232 : vector<10x2048xf32>
    %cst_103 = arith.constant 1.000000e+00 : f32
    %235 = vector.broadcast %cst_103 : f32 to vector<10x2048xf32>
    %236 = arith.divf %235, %234 : vector<10x2048xf32>
    %cst_104 = arith.constant 1.06140542 : f32
    %237 = vector.broadcast %cst_104 : f32 to vector<10x2048xf32>
    %238 = arith.mulf %237, %236 : vector<10x2048xf32>
    %cst_105 = arith.constant -1.45315206 : f32
    %239 = vector.broadcast %cst_105 : f32 to vector<10x2048xf32>
    %240 = arith.addf %238, %239 : vector<10x2048xf32>
    %241 = arith.mulf %240, %236 : vector<10x2048xf32>
    %cst_106 = arith.constant 1.42141378 : f32
    %242 = vector.broadcast %cst_106 : f32 to vector<10x2048xf32>
    %243 = arith.addf %241, %242 : vector<10x2048xf32>
    %244 = arith.mulf %243, %236 : vector<10x2048xf32>
    %cst_107 = arith.constant -0.284496725 : f32
    %245 = vector.broadcast %cst_107 : f32 to vector<10x2048xf32>
    %246 = arith.addf %244, %245 : vector<10x2048xf32>
    %247 = arith.mulf %246, %236 : vector<10x2048xf32>
    %cst_108 = arith.constant 0.254829586 : f32
    %248 = vector.broadcast %cst_108 : f32 to vector<10x2048xf32>
    %249 = arith.addf %247, %248 : vector<10x2048xf32>
    %250 = arith.mulf %249, %236 : vector<10x2048xf32>
    %cst_109 = arith.constant 0.000000e+00 : f32
    %251 = vector.broadcast %cst_109 : f32 to vector<10x2048xf32>
    %252 = arith.subf %251, %230 : vector<10x2048xf32>
    %253 = arith.mulf %252, %230 : vector<10x2048xf32>
    %254 = math.exp %253 : vector<10x2048xf32>
    %255 = arith.mulf %250, %254 : vector<10x2048xf32>
    %cst_110 = arith.constant 1.000000e+00 : f32
    %256 = vector.broadcast %cst_110 : f32 to vector<10x2048xf32>
    %257 = arith.subf %256, %255 : vector<10x2048xf32>
    %258 = arith.mulf %229, %257 : vector<10x2048xf32>
    %cst_111 = arith.constant 1.000000e+00 : f32
    %259 = vector.broadcast %cst_111 : f32 to vector<10x2048xf32>
    %260 = arith.addf %259, %258 : vector<10x2048xf32>
    %261 = arith.mulf %222, %260 : vector<10x2048xf32>
    %cst_112 = arith.constant dense<0.000000e+00> : vector<10x32xf32>
    %262 = tpu.matmul %261, %111, %cst_112 {dimension_numbers = #tpu.dot_dimension_numbers<[1], [0], [0], [1], [0, 0, 1, 1], [], []>} : vector<10x2048xf32>, vector<2048x32xf32>, vector<10x32xf32> -> vector<10x32xf32>
    %263 = vector.broadcast %113 : vector<1x32xf32> to vector<10x32xf32>
    %264 = arith.addf %262, %263 : vector<10x32xf32>
    %265 = arith.addf %217, %264 : vector<10x32xf32>
    %cst_113 = arith.constant dense<0.000000e+00> : vector<10xf32>
    %266 = vector.multi_reduction <add>, %265, %cst_113 [1] : vector<10x32xf32> to vector<10xf32>
    %267 = vector.shape_cast %266 : vector<10xf32> to vector<10x1xf32>
    %cst_114 = arith.constant 3.200000e+01 : f32
    %268 = vector.broadcast %cst_114 : f32 to vector<10x1xf32>
    %269 = arith.divf %267, %268 : vector<10x1xf32>
    %270 = vector.broadcast %269 : vector<10x1xf32> to vector<10x32xf32>
    %271 = arith.subf %265, %270 : vector<10x32xf32>
    %272 = arith.mulf %271, %271 : vector<10x32xf32>
    %cst_115 = arith.constant dense<0.000000e+00> : vector<10xf32>
    %273 = vector.multi_reduction <add>, %272, %cst_115 [1] : vector<10x32xf32> to vector<10xf32>
    %274 = vector.shape_cast %273 : vector<10xf32> to vector<10x1xf32>
    %cst_116 = arith.constant 3.200000e+01 : f32
    %275 = vector.broadcast %cst_116 : f32 to vector<10x1xf32>
    %276 = arith.divf %274, %275 : vector<10x1xf32>
    %cst_117 = arith.constant 9.99999974E-6 : f32
    %277 = vector.broadcast %cst_117 : f32 to vector<10x1xf32>
    %278 = arith.addf %276, %277 : vector<10x1xf32>
    %279 = math.rsqrt %278 : vector<10x1xf32>
    %280 = vector.broadcast %279 : vector<10x1xf32> to vector<10x32xf32>
    %281 = arith.mulf %271, %280 : vector<10x32xf32>
    %282 = vector.broadcast %115 : vector<1x32xf32> to vector<10x32xf32>
    %283 = arith.mulf %281, %282 : vector<10x32xf32>
    %284 = vector.broadcast %117 : vector<1x32xf32> to vector<10x32xf32>
    %285 = arith.addf %283, %284 : vector<10x32xf32>
    %c1 = arith.constant 1 : index
    %c0_118 = arith.constant 0 : index
    %c0_119 = arith.constant 0 : index
    %286 = vector.load %arg12[%c1, %c0_118, %c0_119] : memref<2x32x96xf32, #tpu.memory_space<vmem>>, vector<1x32x96xf32>
    %287 = vector.shape_cast %286 : vector<1x32x96xf32> to vector<32x96xf32>
    %c1_120 = arith.constant 1 : index
    %c0_121 = arith.constant 0 : index
    %c0_122 = arith.constant 0 : index
    %288 = vector.load %arg13[%c1_120, %c0_121, %c0_122] : memref<2x1x96xf32, #tpu.memory_space<vmem>>, vector<1x1x96xf32>
    %289 = vector.shape_cast %288 : vector<1x1x96xf32> to vector<1x96xf32>
    %c1_123 = arith.constant 1 : index
    %c0_124 = arith.constant 0 : index
    %c0_125 = arith.constant 0 : index
    %290 = vector.load %arg14[%c1_123, %c0_124, %c0_125] : memref<2x32x32xf32, #tpu.memory_space<vmem>>, vector<1x32x32xf32>
    %291 = vector.shape_cast %290 : vector<1x32x32xf32> to vector<32x32xf32>
    %c1_126 = arith.constant 1 : index
    %c0_127 = arith.constant 0 : index
    %c0_128 = arith.constant 0 : index
    %292 = vector.load %arg15[%c1_126, %c0_127, %c0_128] : memref<2x1x32xf32, #tpu.memory_space<vmem>>, vector<1x1x32xf32>
    %293 = vector.shape_cast %292 : vector<1x1x32xf32> to vector<1x32xf32>
    %c1_129 = arith.constant 1 : index
    %c0_130 = arith.constant 0 : index
    %c0_131 = arith.constant 0 : index
    %294 = vector.load %arg16[%c1_129, %c0_130, %c0_131] : memref<2x1x32xf32, #tpu.memory_space<vmem>>, vector<1x1x32xf32>
    %295 = vector.shape_cast %294 : vector<1x1x32xf32> to vector<1x32xf32>
    %c1_132 = arith.constant 1 : index
    %c0_133 = arith.constant 0 : index
    %c0_134 = arith.constant 0 : index
    %296 = vector.load %arg17[%c1_132, %c0_133, %c0_134] : memref<2x1x32xf32, #tpu.memory_space<vmem>>, vector<1x1x32xf32>
    %297 = vector.shape_cast %296 : vector<1x1x32xf32> to vector<1x32xf32>
    %c1_135 = arith.constant 1 : index
    %c0_136 = arith.constant 0 : index
    %c0_137 = arith.constant 0 : index
    %298 = vector.load %arg18[%c1_135, %c0_136, %c0_137] : memref<2x32x2048xf32, #tpu.memory_space<vmem>>, vector<1x32x2048xf32>
    %299 = vector.shape_cast %298 : vector<1x32x2048xf32> to vector<32x2048xf32>
    %c1_138 = arith.constant 1 : index
    %c0_139 = arith.constant 0 : index
    %c0_140 = arith.constant 0 : index
    %300 = vector.load %arg19[%c1_138, %c0_139, %c0_140] : memref<2x1x2048xf32, #tpu.memory_space<vmem>>, vector<1x1x2048xf32>
    %301 = vector.shape_cast %300 : vector<1x1x2048xf32> to vector<1x2048xf32>
    %c1_141 = arith.constant 1 : index
    %c0_142 = arith.constant 0 : index
    %c0_143 = arith.constant 0 : index
    %302 = vector.load %arg20[%c1_141, %c0_142, %c0_143] : memref<2x2048x32xf32, #tpu.memory_space<vmem>>, vector<1x2048x32xf32>
    %303 = vector.shape_cast %302 : vector<1x2048x32xf32> to vector<2048x32xf32>
    %c1_144 = arith.constant 1 : index
    %c0_145 = arith.constant 0 : index
    %c0_146 = arith.constant 0 : index
    %304 = vector.load %arg21[%c1_144, %c0_145, %c0_146] : memref<2x1x32xf32, #tpu.memory_space<vmem>>, vector<1x1x32xf32>
    %305 = vector.shape_cast %304 : vector<1x1x32xf32> to vector<1x32xf32>
    %c1_147 = arith.constant 1 : index
    %c0_148 = arith.constant 0 : index
    %c0_149 = arith.constant 0 : index
    %306 = vector.load %arg22[%c1_147, %c0_148, %c0_149] : memref<2x1x32xf32, #tpu.memory_space<vmem>>, vector<1x1x32xf32>
    %307 = vector.shape_cast %306 : vector<1x1x32xf32> to vector<1x32xf32>
    %c1_150 = arith.constant 1 : index
    %c0_151 = arith.constant 0 : index
    %c0_152 = arith.constant 0 : index
    %308 = vector.load %arg23[%c1_150, %c0_151, %c0_152] : memref<2x1x32xf32, #tpu.memory_space<vmem>>, vector<1x1x32xf32>
    %309 = vector.shape_cast %308 : vector<1x1x32xf32> to vector<1x32xf32>
    %cst_153 = arith.constant dense<0.000000e+00> : vector<10x96xf32>
    %310 = tpu.matmul %285, %287, %cst_153 {dimension_numbers = #tpu.dot_dimension_numbers<[1], [0], [0], [1], [0, 0, 1, 1], [], []>} : vector<10x32xf32>, vector<32x96xf32>, vector<10x96xf32> -> vector<10x96xf32>
    %311 = vector.broadcast %289 : vector<1x96xf32> to vector<10x96xf32>
    %312 = arith.addf %310, %311 : vector<10x96xf32>
    %313 = vector.extract_strided_slice %312 {offsets = [0, 0], sizes = [10, 8], strides = [1, 1]} : vector<10x96xf32> to vector<10x8xf32>
    %314 = vector.extract_strided_slice %312 {offsets = [0, 32], sizes = [10, 8], strides = [1, 1]} : vector<10x96xf32> to vector<10x8xf32>
    %315 = vector.extract_strided_slice %312 {offsets = [0, 64], sizes = [10, 8], strides = [1, 1]} : vector<10x96xf32> to vector<10x8xf32>
    %cst_154 = arith.constant dense<0.000000e+00> : vector<10x10xf32>
    %316 = tpu.matmul %313, %314, %cst_154 {dimension_numbers = #tpu.dot_dimension_numbers<[1], [1], [0], [0], [0, 0, 1, 0], [], []>} : vector<10x8xf32>, vector<10x8xf32>, vector<10x10xf32> -> vector<10x10xf32>
    %cst_155 = arith.constant 0.353553385 : f32
    %317 = vector.broadcast %cst_155 : f32 to vector<10x10xf32>
    %318 = arith.mulf %316, %317 : vector<10x10xf32>
    %319 = arith.addf %318, %93 : vector<10x10xf32>
    %cst_156 = arith.constant dense<0xFF800000> : vector<10xf32>
    %320 = vector.multi_reduction <maximumf>, %319, %cst_156 [1] : vector<10x10xf32> to vector<10xf32>
    %321 = vector.shape_cast %320 : vector<10xf32> to vector<10x1xf32>
    %322 = vector.broadcast %321 : vector<10x1xf32> to vector<10x10xf32>
    %323 = arith.subf %319, %322 : vector<10x10xf32>
    %324 = math.exp %323 : vector<10x10xf32>
    %cst_157 = arith.constant dense<0.000000e+00> : vector<10xf32>
    %325 = vector.multi_reduction <add>, %324, %cst_157 [1] : vector<10x10xf32> to vector<10xf32>
    %326 = vector.shape_cast %325 : vector<10xf32> to vector<10x1xf32>
    %327 = tpu.reciprocal %326 {approx = true} : vector<10x1xf32> -> vector<10x1xf32>
    %328 = vector.broadcast %327 : vector<10x1xf32> to vector<10x10xf32>
    %329 = arith.mulf %324, %328 : vector<10x10xf32>
    %cst_158 = arith.constant dense<0.000000e+00> : vector<10x8xf32>
    %330 = tpu.matmul %329, %315, %cst_158 {dimension_numbers = #tpu.dot_dimension_numbers<[1], [0], [0], [1], [0, 0, 1, 1], [], []>} : vector<10x10xf32>, vector<10x8xf32>, vector<10x8xf32> -> vector<10x8xf32>
    %331 = vector.extract_strided_slice %312 {offsets = [0, 8], sizes = [10, 8], strides = [1, 1]} : vector<10x96xf32> to vector<10x8xf32>
    %332 = vector.extract_strided_slice %312 {offsets = [0, 40], sizes = [10, 8], strides = [1, 1]} : vector<10x96xf32> to vector<10x8xf32>
    %333 = vector.extract_strided_slice %312 {offsets = [0, 72], sizes = [10, 8], strides = [1, 1]} : vector<10x96xf32> to vector<10x8xf32>
    %cst_159 = arith.constant dense<0.000000e+00> : vector<10x10xf32>
    %334 = tpu.matmul %331, %332, %cst_159 {dimension_numbers = #tpu.dot_dimension_numbers<[1], [1], [0], [0], [0, 0, 1, 0], [], []>} : vector<10x8xf32>, vector<10x8xf32>, vector<10x10xf32> -> vector<10x10xf32>
    %cst_160 = arith.constant 0.353553385 : f32
    %335 = vector.broadcast %cst_160 : f32 to vector<10x10xf32>
    %336 = arith.mulf %334, %335 : vector<10x10xf32>
    %337 = arith.addf %336, %93 : vector<10x10xf32>
    %cst_161 = arith.constant dense<0xFF800000> : vector<10xf32>
    %338 = vector.multi_reduction <maximumf>, %337, %cst_161 [1] : vector<10x10xf32> to vector<10xf32>
    %339 = vector.shape_cast %338 : vector<10xf32> to vector<10x1xf32>
    %340 = vector.broadcast %339 : vector<10x1xf32> to vector<10x10xf32>
    %341 = arith.subf %337, %340 : vector<10x10xf32>
    %342 = math.exp %341 : vector<10x10xf32>
    %cst_162 = arith.constant dense<0.000000e+00> : vector<10xf32>
    %343 = vector.multi_reduction <add>, %342, %cst_162 [1] : vector<10x10xf32> to vector<10xf32>
    %344 = vector.shape_cast %343 : vector<10xf32> to vector<10x1xf32>
    %345 = tpu.reciprocal %344 {approx = true} : vector<10x1xf32> -> vector<10x1xf32>
    %346 = vector.broadcast %345 : vector<10x1xf32> to vector<10x10xf32>
    %347 = arith.mulf %342, %346 : vector<10x10xf32>
    %cst_163 = arith.constant dense<0.000000e+00> : vector<10x8xf32>
    %348 = tpu.matmul %347, %333, %cst_163 {dimension_numbers = #tpu.dot_dimension_numbers<[1], [0], [0], [1], [0, 0, 1, 1], [], []>} : vector<10x10xf32>, vector<10x8xf32>, vector<10x8xf32> -> vector<10x8xf32>
    %349 = vector.extract_strided_slice %312 {offsets = [0, 16], sizes = [10, 8], strides = [1, 1]} : vector<10x96xf32> to vector<10x8xf32>
    %350 = vector.extract_strided_slice %312 {offsets = [0, 48], sizes = [10, 8], strides = [1, 1]} : vector<10x96xf32> to vector<10x8xf32>
    %351 = vector.extract_strided_slice %312 {offsets = [0, 80], sizes = [10, 8], strides = [1, 1]} : vector<10x96xf32> to vector<10x8xf32>
    %cst_164 = arith.constant dense<0.000000e+00> : vector<10x10xf32>
    %352 = tpu.matmul %349, %350, %cst_164 {dimension_numbers = #tpu.dot_dimension_numbers<[1], [1], [0], [0], [0, 0, 1, 0], [], []>} : vector<10x8xf32>, vector<10x8xf32>, vector<10x10xf32> -> vector<10x10xf32>
    %cst_165 = arith.constant 0.353553385 : f32
    %353 = vector.broadcast %cst_165 : f32 to vector<10x10xf32>
    %354 = arith.mulf %352, %353 : vector<10x10xf32>
    %355 = arith.addf %354, %93 : vector<10x10xf32>
    %cst_166 = arith.constant dense<0xFF800000> : vector<10xf32>
    %356 = vector.multi_reduction <maximumf>, %355, %cst_166 [1] : vector<10x10xf32> to vector<10xf32>
    %357 = vector.shape_cast %356 : vector<10xf32> to vector<10x1xf32>
    %358 = vector.broadcast %357 : vector<10x1xf32> to vector<10x10xf32>
    %359 = arith.subf %355, %358 : vector<10x10xf32>
    %360 = math.exp %359 : vector<10x10xf32>
    %cst_167 = arith.constant dense<0.000000e+00> : vector<10xf32>
    %361 = vector.multi_reduction <add>, %360, %cst_167 [1] : vector<10x10xf32> to vector<10xf32>
    %362 = vector.shape_cast %361 : vector<10xf32> to vector<10x1xf32>
    %363 = tpu.reciprocal %362 {approx = true} : vector<10x1xf32> -> vector<10x1xf32>
    %364 = vector.broadcast %363 : vector<10x1xf32> to vector<10x10xf32>
    %365 = arith.mulf %360, %364 : vector<10x10xf32>
    %cst_168 = arith.constant dense<0.000000e+00> : vector<10x8xf32>
    %366 = tpu.matmul %365, %351, %cst_168 {dimension_numbers = #tpu.dot_dimension_numbers<[1], [0], [0], [1], [0, 0, 1, 1], [], []>} : vector<10x10xf32>, vector<10x8xf32>, vector<10x8xf32> -> vector<10x8xf32>
    %367 = vector.extract_strided_slice %312 {offsets = [0, 24], sizes = [10, 8], strides = [1, 1]} : vector<10x96xf32> to vector<10x8xf32>
    %368 = vector.extract_strided_slice %312 {offsets = [0, 56], sizes = [10, 8], strides = [1, 1]} : vector<10x96xf32> to vector<10x8xf32>
    %369 = vector.extract_strided_slice %312 {offsets = [0, 88], sizes = [10, 8], strides = [1, 1]} : vector<10x96xf32> to vector<10x8xf32>
    %cst_169 = arith.constant dense<0.000000e+00> : vector<10x10xf32>
    %370 = tpu.matmul %367, %368, %cst_169 {dimension_numbers = #tpu.dot_dimension_numbers<[1], [1], [0], [0], [0, 0, 1, 0], [], []>} : vector<10x8xf32>, vector<10x8xf32>, vector<10x10xf32> -> vector<10x10xf32>
    %cst_170 = arith.constant 0.353553385 : f32
    %371 = vector.broadcast %cst_170 : f32 to vector<10x10xf32>
    %372 = arith.mulf %370, %371 : vector<10x10xf32>
    %373 = arith.addf %372, %93 : vector<10x10xf32>
    %cst_171 = arith.constant dense<0xFF800000> : vector<10xf32>
    %374 = vector.multi_reduction <maximumf>, %373, %cst_171 [1] : vector<10x10xf32> to vector<10xf32>
    %375 = vector.shape_cast %374 : vector<10xf32> to vector<10x1xf32>
    %376 = vector.broadcast %375 : vector<10x1xf32> to vector<10x10xf32>
    %377 = arith.subf %373, %376 : vector<10x10xf32>
    %378 = math.exp %377 : vector<10x10xf32>
    %cst_172 = arith.constant dense<0.000000e+00> : vector<10xf32>
    %379 = vector.multi_reduction <add>, %378, %cst_172 [1] : vector<10x10xf32> to vector<10xf32>
    %380 = vector.shape_cast %379 : vector<10xf32> to vector<10x1xf32>
    %381 = tpu.reciprocal %380 {approx = true} : vector<10x1xf32> -> vector<10x1xf32>
    %382 = vector.broadcast %381 : vector<10x1xf32> to vector<10x10xf32>
    %383 = arith.mulf %378, %382 : vector<10x10xf32>
    %cst_173 = arith.constant dense<0.000000e+00> : vector<10x8xf32>
    %384 = tpu.matmul %383, %369, %cst_173 {dimension_numbers = #tpu.dot_dimension_numbers<[1], [0], [0], [1], [0, 0, 1, 1], [], []>} : vector<10x10xf32>, vector<10x8xf32>, vector<10x8xf32> -> vector<10x8xf32>
    %385 = tpu.concatenate %330, %348, %366, %384 in 1 : vector<10x8xf32>, vector<10x8xf32>, vector<10x8xf32>, vector<10x8xf32> -> vector<10x32xf32>
    %cst_174 = arith.constant dense<0.000000e+00> : vector<10x32xf32>
    %386 = tpu.matmul %385, %291, %cst_174 {dimension_numbers = #tpu.dot_dimension_numbers<[1], [0], [0], [1], [0, 0, 1, 1], [], []>} : vector<10x32xf32>, vector<32x32xf32>, vector<10x32xf32> -> vector<10x32xf32>
    %387 = vector.broadcast %293 : vector<1x32xf32> to vector<10x32xf32>
    %388 = arith.addf %386, %387 : vector<10x32xf32>
    %389 = arith.addf %285, %388 : vector<10x32xf32>
    %cst_175 = arith.constant dense<0.000000e+00> : vector<10xf32>
    %390 = vector.multi_reduction <add>, %389, %cst_175 [1] : vector<10x32xf32> to vector<10xf32>
    %391 = vector.shape_cast %390 : vector<10xf32> to vector<10x1xf32>
    %cst_176 = arith.constant 3.200000e+01 : f32
    %392 = vector.broadcast %cst_176 : f32 to vector<10x1xf32>
    %393 = arith.divf %391, %392 : vector<10x1xf32>
    %394 = vector.broadcast %393 : vector<10x1xf32> to vector<10x32xf32>
    %395 = arith.subf %389, %394 : vector<10x32xf32>
    %396 = arith.mulf %395, %395 : vector<10x32xf32>
    %cst_177 = arith.constant dense<0.000000e+00> : vector<10xf32>
    %397 = vector.multi_reduction <add>, %396, %cst_177 [1] : vector<10x32xf32> to vector<10xf32>
    %398 = vector.shape_cast %397 : vector<10xf32> to vector<10x1xf32>
    %cst_178 = arith.constant 3.200000e+01 : f32
    %399 = vector.broadcast %cst_178 : f32 to vector<10x1xf32>
    %400 = arith.divf %398, %399 : vector<10x1xf32>
    %cst_179 = arith.constant 9.99999974E-6 : f32
    %401 = vector.broadcast %cst_179 : f32 to vector<10x1xf32>
    %402 = arith.addf %400, %401 : vector<10x1xf32>
    %403 = math.rsqrt %402 : vector<10x1xf32>
    %404 = vector.broadcast %403 : vector<10x1xf32> to vector<10x32xf32>
    %405 = arith.mulf %395, %404 : vector<10x32xf32>
    %406 = vector.broadcast %295 : vector<1x32xf32> to vector<10x32xf32>
    %407 = arith.mulf %405, %406 : vector<10x32xf32>
    %408 = vector.broadcast %297 : vector<1x32xf32> to vector<10x32xf32>
    %409 = arith.addf %407, %408 : vector<10x32xf32>
    %cst_180 = arith.constant dense<0.000000e+00> : vector<10x2048xf32>
    %410 = tpu.matmul %409, %299, %cst_180 {dimension_numbers = #tpu.dot_dimension_numbers<[1], [0], [0], [1], [0, 0, 1, 1], [], []>} : vector<10x32xf32>, vector<32x2048xf32>, vector<10x2048xf32> -> vector<10x2048xf32>
    %411 = vector.broadcast %301 : vector<1x2048xf32> to vector<10x2048xf32>
    %412 = arith.addf %410, %411 : vector<10x2048xf32>
    %cst_181 = arith.constant 5.000000e-01 : f32
    %413 = vector.broadcast %cst_181 : f32 to vector<10x2048xf32>
    %414 = arith.mulf %413, %412 : vector<10x2048xf32>
    %cst_182 = arith.constant 0.707106769 : f32
    %415 = vector.broadcast %cst_182 : f32 to vector<10x2048xf32>
    %416 = arith.mulf %412, %415 : vector<10x2048xf32>
    %cst_183 = arith.constant 0.000000e+00 : f32
    %417 = vector.broadcast %cst_183 : f32 to vector<10x2048xf32>
    %418 = arith.cmpf oge, %416, %417 : vector<10x2048xf32>
    %cst_184 = arith.constant 1.000000e+00 : f32
    %cst_185 = arith.constant -1.000000e+00 : f32
    %419 = vector.broadcast %cst_184 : f32 to vector<10x2048xf32>
    %420 = vector.broadcast %cst_185 : f32 to vector<10x2048xf32>
    %421 = arith.select %418, %419, %420 : vector<10x2048xi1>, vector<10x2048xf32>
    %422 = math.absf %416 : vector<10x2048xf32>
    %cst_186 = arith.constant 0.327591091 : f32
    %423 = vector.broadcast %cst_186 : f32 to vector<10x2048xf32>
    %424 = arith.mulf %423, %422 : vector<10x2048xf32>
    %cst_187 = arith.constant 1.000000e+00 : f32
    %425 = vector.broadcast %cst_187 : f32 to vector<10x2048xf32>
    %426 = arith.addf %425, %424 : vector<10x2048xf32>
    %cst_188 = arith.constant 1.000000e+00 : f32
    %427 = vector.broadcast %cst_188 : f32 to vector<10x2048xf32>
    %428 = arith.divf %427, %426 : vector<10x2048xf32>
    %cst_189 = arith.constant 1.06140542 : f32
    %429 = vector.broadcast %cst_189 : f32 to vector<10x2048xf32>
    %430 = arith.mulf %429, %428 : vector<10x2048xf32>
    %cst_190 = arith.constant -1.45315206 : f32
    %431 = vector.broadcast %cst_190 : f32 to vector<10x2048xf32>
    %432 = arith.addf %430, %431 : vector<10x2048xf32>
    %433 = arith.mulf %432, %428 : vector<10x2048xf32>
    %cst_191 = arith.constant 1.42141378 : f32
    %434 = vector.broadcast %cst_191 : f32 to vector<10x2048xf32>
    %435 = arith.addf %433, %434 : vector<10x2048xf32>
    %436 = arith.mulf %435, %428 : vector<10x2048xf32>
    %cst_192 = arith.constant -0.284496725 : f32
    %437 = vector.broadcast %cst_192 : f32 to vector<10x2048xf32>
    %438 = arith.addf %436, %437 : vector<10x2048xf32>
    %439 = arith.mulf %438, %428 : vector<10x2048xf32>
    %cst_193 = arith.constant 0.254829586 : f32
    %440 = vector.broadcast %cst_193 : f32 to vector<10x2048xf32>
    %441 = arith.addf %439, %440 : vector<10x2048xf32>
    %442 = arith.mulf %441, %428 : vector<10x2048xf32>
    %cst_194 = arith.constant 0.000000e+00 : f32
    %443 = vector.broadcast %cst_194 : f32 to vector<10x2048xf32>
    %444 = arith.subf %443, %422 : vector<10x2048xf32>
    %445 = arith.mulf %444, %422 : vector<10x2048xf32>
    %446 = math.exp %445 : vector<10x2048xf32>
    %447 = arith.mulf %442, %446 : vector<10x2048xf32>
    %cst_195 = arith.constant 1.000000e+00 : f32
    %448 = vector.broadcast %cst_195 : f32 to vector<10x2048xf32>
    %449 = arith.subf %448, %447 : vector<10x2048xf32>
    %450 = arith.mulf %421, %449 : vector<10x2048xf32>
    %cst_196 = arith.constant 1.000000e+00 : f32
    %451 = vector.broadcast %cst_196 : f32 to vector<10x2048xf32>
    %452 = arith.addf %451, %450 : vector<10x2048xf32>
    %453 = arith.mulf %414, %452 : vector<10x2048xf32>
    %cst_197 = arith.constant dense<0.000000e+00> : vector<10x32xf32>
    %454 = tpu.matmul %453, %303, %cst_197 {dimension_numbers = #tpu.dot_dimension_numbers<[1], [0], [0], [1], [0, 0, 1, 1], [], []>} : vector<10x2048xf32>, vector<2048x32xf32>, vector<10x32xf32> -> vector<10x32xf32>
    %455 = vector.broadcast %305 : vector<1x32xf32> to vector<10x32xf32>
    %456 = arith.addf %454, %455 : vector<10x32xf32>
    %457 = arith.addf %409, %456 : vector<10x32xf32>
    %cst_198 = arith.constant dense<0.000000e+00> : vector<10xf32>
    %458 = vector.multi_reduction <add>, %457, %cst_198 [1] : vector<10x32xf32> to vector<10xf32>
    %459 = vector.shape_cast %458 : vector<10xf32> to vector<10x1xf32>
    %cst_199 = arith.constant 3.200000e+01 : f32
    %460 = vector.broadcast %cst_199 : f32 to vector<10x1xf32>
    %461 = arith.divf %459, %460 : vector<10x1xf32>
    %462 = vector.broadcast %461 : vector<10x1xf32> to vector<10x32xf32>
    %463 = arith.subf %457, %462 : vector<10x32xf32>
    %464 = arith.mulf %463, %463 : vector<10x32xf32>
    %cst_200 = arith.constant dense<0.000000e+00> : vector<10xf32>
    %465 = vector.multi_reduction <add>, %464, %cst_200 [1] : vector<10x32xf32> to vector<10xf32>
    %466 = vector.shape_cast %465 : vector<10xf32> to vector<10x1xf32>
    %cst_201 = arith.constant 3.200000e+01 : f32
    %467 = vector.broadcast %cst_201 : f32 to vector<10x1xf32>
    %468 = arith.divf %466, %467 : vector<10x1xf32>
    %cst_202 = arith.constant 9.99999974E-6 : f32
    %469 = vector.broadcast %cst_202 : f32 to vector<10x1xf32>
    %470 = arith.addf %468, %469 : vector<10x1xf32>
    %471 = math.rsqrt %470 : vector<10x1xf32>
    %472 = vector.broadcast %471 : vector<10x1xf32> to vector<10x32xf32>
    %473 = arith.mulf %463, %472 : vector<10x32xf32>
    %474 = vector.broadcast %307 : vector<1x32xf32> to vector<10x32xf32>
    %475 = arith.mulf %473, %474 : vector<10x32xf32>
    %476 = vector.broadcast %309 : vector<1x32xf32> to vector<10x32xf32>
    %477 = arith.addf %475, %476 : vector<10x32xf32>
    %478 = vector.extract_strided_slice %477 {offsets = [0, 0], sizes = [1, 32], strides = [1, 1]} : vector<10x32xf32> to vector<1x32xf32>
    %479 = vector.extract_strided_slice %477 {offsets = [5, 0], sizes = [1, 32], strides = [1, 1]} : vector<10x32xf32> to vector<1x32xf32>
    %480 = tpu.concatenate %478, %479 in 0 : vector<1x32xf32>, vector<1x32xf32> -> vector<2x32xf32>
    %c0_203 = arith.constant 0 : index
    %c0_204 = arith.constant 0 : index
    %481 = vector.load %arg24[%c0_203, %c0_204] : memref<1x32xf32, #tpu.memory_space<vmem>>, vector<1x32xf32>
    %c0_205 = arith.constant 0 : index
    %c0_206 = arith.constant 0 : index
    %482 = vector.load %arg25[%c0_205, %c0_206] : memref<1x32xf32, #tpu.memory_space<vmem>>, vector<1x32xf32>
    %cst_207 = arith.constant dense<0.000000e+00> : vector<2xf32>
    %483 = vector.multi_reduction <add>, %480, %cst_207 [1] : vector<2x32xf32> to vector<2xf32>
    %484 = vector.shape_cast %483 : vector<2xf32> to vector<2x1xf32>
    %cst_208 = arith.constant 3.200000e+01 : f32
    %485 = vector.broadcast %cst_208 : f32 to vector<2x1xf32>
    %486 = arith.divf %484, %485 : vector<2x1xf32>
    %487 = vector.broadcast %486 : vector<2x1xf32> to vector<2x32xf32>
    %488 = arith.subf %480, %487 : vector<2x32xf32>
    %489 = arith.mulf %488, %488 : vector<2x32xf32>
    %cst_209 = arith.constant dense<0.000000e+00> : vector<2xf32>
    %490 = vector.multi_reduction <add>, %489, %cst_209 [1] : vector<2x32xf32> to vector<2xf32>
    %491 = vector.shape_cast %490 : vector<2xf32> to vector<2x1xf32>
    %cst_210 = arith.constant 3.200000e+01 : f32
    %492 = vector.broadcast %cst_210 : f32 to vector<2x1xf32>
    %493 = arith.divf %491, %492 : vector<2x1xf32>
    %cst_211 = arith.constant 9.99999974E-6 : f32
    %494 = vector.broadcast %cst_211 : f32 to vector<2x1xf32>
    %495 = arith.addf %493, %494 : vector<2x1xf32>
    %496 = math.rsqrt %495 : vector<2x1xf32>
    %497 = vector.broadcast %496 : vector<2x1xf32> to vector<2x32xf32>
    %498 = arith.mulf %488, %497 : vector<2x32xf32>
    %499 = vector.broadcast %481 : vector<1x32xf32> to vector<2x32xf32>
    %500 = arith.mulf %498, %499 : vector<2x32xf32>
    %501 = vector.broadcast %482 : vector<1x32xf32> to vector<2x32xf32>
    %502 = arith.addf %500, %501 : vector<2x32xf32>
    %c0_212 = arith.constant 0 : index
    %c0_213 = arith.constant 0 : index
    %503 = vector.load %arg26[%c0_212, %c0_213] : memref<32x128xf32, #tpu.memory_space<vmem>>, vector<32x128xf32>
    %cst_214 = arith.constant dense<0.000000e+00> : vector<2x128xf32>
    %504 = tpu.matmul %502, %503, %cst_214 {dimension_numbers = #tpu.dot_dimension_numbers<[1], [0], [0], [1], [0, 0, 1, 1], [], []>} : vector<2x32xf32>, vector<32x128xf32>, vector<2x128xf32> -> vector<2x128xf32>
    %c0_215 = arith.constant 0 : index
    %c0_216 = arith.constant 0 : index
    %505 = vector.load %arg27[%c0_215, %c0_216] : memref<1x128xf32, #tpu.memory_space<vmem>>, vector<1x128xf32>
    %506 = vector.broadcast %505 : vector<1x128xf32> to vector<2x128xf32>
    %507 = arith.addf %504, %506 : vector<2x128xf32>
    %c0_217 = arith.constant 0 : index
    %c0_218 = arith.constant 0 : index
    %508 = vector.load %arg28[%c0_217, %c0_218] : memref<2x128xf32, #tpu.memory_space<vmem>>, vector<2x128xf32>
    tpu.vector_store %arg28[%c0_217, %c0_218], %507 {strides = array<i32>} : memref<2x128xf32, #tpu.memory_space<vmem>>, vector<2x128xf32>,
    return
  }
}

</mosaic_0001>

<llo_original>
// kernel: tpu_custom_call.1
$region0: #{tpu_custom_call.1}
  #allocation0 [shape = 'u32[]', space=smem, size = 0x4, offset = 0x4, fixed_abs, tag = 'smem constant byte address 0x4 - core index']
  #allocation1 [shape = 'u32[144,128]{1,0:T(1,128)}', space=vmem, size = 0x12000, scoped, tag = 'internal scratch']
  %s0 = inlined_call_operand.vmem [shape: f32[128,12], index: 0, kind: input, shape index: {}]
  %s1 = inlined_call_operand.vmem [shape: f32[12,64], index: 1, kind: input, shape index: {}]
  %s2 = inlined_call_operand.vmem [shape: f32[1,64], index: 2, kind: input, shape index: {}]
  %s3 = inlined_call_operand.vmem [shape: f32[192,128], index: 3, kind: input, shape index: {}]
  %s4 = inlined_call_operand.vmem [shape: f32[1,128], index: 4, kind: input, shape index: {}]
  %s5 = inlined_call_operand.vmem [shape: f32[384,256], index: 5, kind: input, shape index: {}]
  %s6 = inlined_call_operand.vmem [shape: f32[1,256], index: 6, kind: input, shape index: {}]
  %s7 = inlined_call_operand.vmem [shape: f32[256,32], index: 7, kind: input, shape index: {}]
  %s8 = inlined_call_operand.vmem [shape: f32[1,32], index: 8, kind: input, shape index: {}]
  %s9 = inlined_call_operand.vmem [shape: f32[1,32], index: 9, kind: input, shape index: {}]
  %s10 = inlined_call_operand.vmem [shape: f32[4,32], index: 10, kind: input, shape index: {}]
  %s11 = inlined_call_operand.vmem [shape: f32[10,10], index: 11, kind: input, shape index: {}]
  %s12 = inlined_call_operand.vmem [shape: f32[2,32,96], index: 12, kind: input, shape index: {}]
  %s13 = inlined_call_operand.vmem [shape: f32[2,1,96], index: 13, kind: input, shape index: {}]
  %s14 = inlined_call_operand.vmem [shape: f32[2,32,32], index: 14, kind: input, shape index: {}]
  %s15 = inlined_call_operand.vmem [shape: f32[2,1,32], index: 15, kind: input, shape index: {}]
  %s16 = inlined_call_operand.vmem [shape: f32[2,1,32], index: 16, kind: input, shape index: {}]
  %s17 = inlined_call_operand.vmem [shape: f32[2,1,32], index: 17, kind: input, shape index: {}]
  %s18 = inlined_call_operand.vmem [shape: f32[2,32,2048], index: 18, kind: input, shape index: {}]
  %s19 = inlined_call_operand.vmem [shape: f32[2,1,2048], index: 19, kind: input, shape index: {}]
  %s20 = inlined_call_operand.vmem [shape: f32[2,2048,32], index: 20, kind: input, shape index: {}]
  %s21 = inlined_call_operand.vmem [shape: f32[2,1,32], index: 21, kind: input, shape index: {}]
  %s22 = inlined_call_operand.vmem [shape: f32[2,1,32], index: 22, kind: input, shape index: {}]
  %s23 = inlined_call_operand.vmem [shape: f32[2,1,32], index: 23, kind: input, shape index: {}]
  %s24 = inlined_call_operand.vmem [shape: f32[1,32], index: 24, kind: input, shape index: {}]
  %s25 = inlined_call_operand.vmem [shape: f32[1,32], index: 25, kind: input, shape index: {}]
  %s26 = inlined_call_operand.vmem [shape: f32[32,128], index: 26, kind: input, shape index: {}]
  %s27 = inlined_call_operand.vmem [shape: f32[1,128], index: 27, kind: input, shape index: {}]
  %s28 = inlined_call_operand.hbm [shape: f32[2,128], index: 28, kind: output, shape index: {}]
  %s29 = sld [smem:[#allocation0]]
  $region122: #{tpu_custom_call.1} parent=0
    _
  %s31 = ssub.s32 1, %s29
  %s32 = scalar_select 0, %s31, %s29
  $region1: #{tpu_custom_call.1} parent=0
    #allocation2 [shape = 'u8[1024]{0}', space=vmem, size = 0x400, scoped, tag = 'output window, operand 0, single buffered']
    #allocation3 [shape = 's32[1]{0}', space=sflag, size = 0x4, scoped, tag = 'scoped memory for tpu_custom_call.1']
    %33 = vsyncpa [#allocation3], 0
    // Predicated region
    $region2: #{tpu_custom_call.1} parent=1 // pred_check
      _
    $region3: #{tpu_custom_call.1} parent=1 // pred_check_branch
      %35 = sbr.rel (0) target = $region5
    $region4: #{tpu_custom_call.1} parent=1 // pred_region
      _
    $region5: #{tpu_custom_call.1} parent=1 // pred_fallthru
      _
    // Predicated region
    $region6: #{tpu_custom_call.1} parent=1 // pred_check
      _
    $region7: #{tpu_custom_call.1} parent=1 // pred_check_branch
      %37 = sbr.rel (0) target = $region9
    $region8: #{tpu_custom_call.1} parent=1 // pred_region
      _
    $region9: #{tpu_custom_call.1} parent=1 // pred_fallthru
      _
    // Predicated region
    $region10: #{tpu_custom_call.1} parent=1 // pred_check
      _
    $region11: #{tpu_custom_call.1} parent=1 // pred_check_branch
      %39 = sbr.rel (0) target = $region13
    $region12: #{tpu_custom_call.1} parent=1 // pred_region
      _
    $region13: #{tpu_custom_call.1} parent=1 // pred_fallthru
      _
    // Predicated region
    $region14: #{tpu_custom_call.1} parent=1 // pred_check
      _
    $region15: #{tpu_custom_call.1} parent=1 // pred_check_branch
      %41 = sbr.rel (0) target = $region17
    $region16: #{tpu_custom_call.1} parent=1 // pred_region
      _
    $region17: #{tpu_custom_call.1} parent=1 // pred_fallthru
      _
    // Predicated region
    $region18: #{tpu_custom_call.1} parent=1 // pred_check
      _
    $region19: #{tpu_custom_call.1} parent=1 // pred_check_branch
      %43 = sbr.rel (0) target = $region21
    $region20: #{tpu_custom_call.1} parent=1 // pred_region
      _
    $region21: #{tpu_custom_call.1} parent=1 // pred_fallthru
      _
    // Predicated region
    $region22: #{tpu_custom_call.1} parent=1 // pred_check
      _
    $region23: #{tpu_custom_call.1} parent=1 // pred_check_branch
      %45 = sbr.rel (0) target = $region25
    $region24: #{tpu_custom_call.1} parent=1 // pred_region
      _
    $region25: #{tpu_custom_call.1} parent=1 // pred_fallthru
      _
    // Predicated region
    $region26: #{tpu_custom_call.1} parent=1 // pred_check
      _
    $region27: #{tpu_custom_call.1} parent=1 // pred_check_branch
      %47 = sbr.rel (0) target = $region29
    $region28: #{tpu_custom_call.1} parent=1 // pred_region
      _
    $region29: #{tpu_custom_call.1} parent=1 // pred_fallthru
      _
    // Predicated region
    $region30: #{tpu_custom_call.1} parent=1 // pred_check
      _
    $region31: #{tpu_custom_call.1} parent=1 // pred_check_branch
      %49 = sbr.rel (0) target = $region33
    $region32: #{tpu_custom_call.1} parent=1 // pred_region
      _
    $region33: #{tpu_custom_call.1} parent=1 // pred_fallthru
      _
    // Predicated region
    $region34: #{tpu_custom_call.1} parent=1 // pred_check
      _
    $region35: #{tpu_custom_call.1} parent=1 // pred_check_branch
      %51 = sbr.rel (0) target = $region37
    $region36: #{tpu_custom_call.1} parent=1 // pred_region
      _
    $region37: #{tpu_custom_call.1} parent=1 // pred_fallthru
      _
    // Predicated region
    $region38: #{tpu_custom_call.1} parent=1 // pred_check
      _
    $region39: #{tpu_custom_call.1} parent=1 // pred_check_branch
      %53 = sbr.rel (0) target = $region41
    $region40: #{tpu_custom_call.1} parent=1 // pred_region
      _
    $region41: #{tpu_custom_call.1} parent=1 // pred_fallthru
      _
    // Predicated region
    $region42: #{tpu_custom_call.1} parent=1 // pred_check
      _
    $region43: #{tpu_custom_call.1} parent=1 // pred_check_branch
      %55 = sbr.rel (0) target = $region45
    $region44: #{tpu_custom_call.1} parent=1 // pred_region
      _
    $region45: #{tpu_custom_call.1} parent=1 // pred_fallthru
      _
    // Predicated region
    $region46: #{tpu_custom_call.1} parent=1 // pred_check
      _
    $region47: #{tpu_custom_call.1} parent=1 // pred_check_branch
      %57 = sbr.rel (0) target = $region49
    $region48: #{tpu_custom_call.1} parent=1 // pred_region
      _
    $region49: #{tpu_custom_call.1} parent=1 // pred_fallthru
      _
    // Predicated region
    $region50: #{tpu_custom_call.1} parent=1 // pred_check
      _
    $region51: #{tpu_custom_call.1} parent=1 // pred_check_branch
      %59 = sbr.rel (0) target = $region53
    $region52: #{tpu_custom_call.1} parent=1 // pred_region
      _
    $region53: #{tpu_custom_call.1} parent=1 // pred_fallthru
      _
    // Predicated region
    $region54: #{tpu_custom_call.1} parent=1 // pred_check
      _
    $region55: #{tpu_custom_call.1} parent=1 // pred_check_branch
      %61 = sbr.rel (0) target = $region57
    $region56: #{tpu_custom_call.1} parent=1 // pred_region
      _
    $region57: #{tpu_custom_call.1} parent=1 // pred_fallthru
      _
    // Predicated region
    $region58: #{tpu_custom_call.1} parent=1 // pred_check
      _
    $region59: #{tpu_custom_call.1} parent=1 // pred_check_branch
      %63 = sbr.rel (0) target = $region61
    $region60: #{tpu_custom_call.1} parent=1 // pred_region
      _
    $region61: #{tpu_custom_call.1} parent=1 // pred_fallthru
      _
    // Predicated region
    $region62: #{tpu_custom_call.1} parent=1 // pred_check
      _
    $region63: #{tpu_custom_call.1} parent=1 // pred_check_branch
      %65 = sbr.rel (0) target = $region65
    $region64: #{tpu_custom_call.1} parent=1 // pred_region
      _
    $region65: #{tpu_custom_call.1} parent=1 // pred_fallthru
      _
    // Predicated region
    $region66: #{tpu_custom_call.1} parent=1 // pred_check
      _
    $region67: #{tpu_custom_call.1} parent=1 // pred_check_branch
      %67 = sbr.rel (0) target = $region69
    $region68: #{tpu_custom_call.1} parent=1 // pred_region
      _
    $region69: #{tpu_custom_call.1} parent=1 // pred_fallthru
      _
    // Predicated region
    $region70: #{tpu_custom_call.1} parent=1 // pred_check
      _
    $region71: #{tpu_custom_call.1} parent=1 // pred_check_branch
      %69 = sbr.rel (0) target = $region73
    $region72: #{tpu_custom_call.1} parent=1 // pred_region
      _
    $region73: #{tpu_custom_call.1} parent=1 // pred_fallthru
      _
    // Predicated region
    $region74: #{tpu_custom_call.1} parent=1 // pred_check
      _
    $region75: #{tpu_custom_call.1} parent=1 // pred_check_branch
      %71 = sbr.rel (0) target = $region77
    $region76: #{tpu_custom_call.1} parent=1 // pred_region
      _
    $region77: #{tpu_custom_call.1} parent=1 // pred_fallthru
      _
    // Predicated region
    $region78: #{tpu_custom_call.1} parent=1 // pred_check
      _
    $region79: #{tpu_custom_call.1} parent=1 // pred_check_branch
      %73 = sbr.rel (0) target = $region81
    $region80: #{tpu_custom_call.1} parent=1 // pred_region
      _
    $region81: #{tpu_custom_call.1} parent=1 // pred_fallthru
      _
    // Predicated region
    $region82: #{tpu_custom_call.1} parent=1 // pred_check
      _
    $region83: #{tpu_custom_call.1} parent=1 // pred_check_branch
      %75 = sbr.rel (0) target = $region85
    $region84: #{tpu_custom_call.1} parent=1 // pred_region
      _
    $region85: #{tpu_custom_call.1} parent=1 // pred_fallthru
      _
    // Predicated region
    $region86: #{tpu_custom_call.1} parent=1 // pred_check
      _
    $region87: #{tpu_custom_call.1} parent=1 // pred_check_branch
      %77 = sbr.rel (0) target = $region89
    $region88: #{tpu_custom_call.1} parent=1 // pred_region
      _
    $region89: #{tpu_custom_call.1} parent=1 // pred_fallthru
      _
    // Predicated region
    $region90: #{tpu_custom_call.1} parent=1 // pred_check
      _
    $region91: #{tpu_custom_call.1} parent=1 // pred_check_branch
      %79 = sbr.rel (0) target = $region93
    $region92: #{tpu_custom_call.1} parent=1 // pred_region
      _
    $region93: #{tpu_custom_call.1} parent=1 // pred_fallthru
      _
    // Predicated region
    $region94: #{tpu_custom_call.1} parent=1 // pred_check
      _
    $region95: #{tpu_custom_call.1} parent=1 // pred_check_branch
      %81 = sbr.rel (0) target = $region97
    $region96: #{tpu_custom_call.1} parent=1 // pred_region
      _
    $region97: #{tpu_custom_call.1} parent=1 // pred_fallthru
      _
    // Predicated region
    $region98: #{tpu_custom_call.1} parent=1 // pred_check
      _
    $region99: #{tpu_custom_call.1} parent=1 // pred_check_branch
      %83 = sbr.rel (0) target = $region101
    $region100: #{tpu_custom_call.1} parent=1 // pred_region
      _
    $region101: #{tpu_custom_call.1} parent=1 // pred_fallthru
      _
    // Predicated region
    $region102: #{tpu_custom_call.1} parent=1 // pred_check
      _
    $region103: #{tpu_custom_call.1} parent=1 // pred_check_branch
      %85 = sbr.rel (0) target = $region105
    $region104: #{tpu_custom_call.1} parent=1 // pred_region
      _
    $region105: #{tpu_custom_call.1} parent=1 // pred_fallthru
      _
    // Predicated region
    $region106: #{tpu_custom_call.1} parent=1 // pred_check
      _
    $region107: #{tpu_custom_call.1} parent=1 // pred_check_branch
      %87 = sbr.rel (0) target = $region109
    $region108: #{tpu_custom_call.1} parent=1 // pred_region
      _
    $region109: #{tpu_custom_call.1} parent=1 // pred_fallthru
      _
    // Predicated region
    $region110: #{tpu_custom_call.1} parent=1 // pred_check
      _
    $region111: #{tpu_custom_call.1} parent=1 // pred_check_branch
      %89 = sbr.rel (0) target = $region113
    $region112: #{tpu_custom_call.1} parent=1 // pred_region
      _
    $region113: #{tpu_custom_call.1} parent=1 // pred_fallthru
      _
    %v90 = vld [vmem:[%s2] sm:$0x1]
    %v91 = vld [vmem:[%s4] sm:$0x1]
    %v92 = vld [vmem:[%s6] sm:$0x3]
    %v93 = vld [vmem:[%s0] sm:$0xff]
    %v94 = vld [vmem:[%s0 + $0x8] sm:$0xff]
    %v95 = vld [vmem:[%s0 + $0x10] sm:$0xff]
    %v96 = vld [vmem:[%s0 + $0x18] sm:$0xff]
    %v97 = vld [vmem:[%s0 + $0x20] sm:$0xff]
    %v98 = vld [vmem:[%s0 + $0x28] sm:$0xff]
    %v99 = vld [vmem:[%s0 + $0x30] sm:$0xff]
    %v100 = vld [vmem:[%s0 + $0x38] sm:$0xff]
    %v101 = vld [vmem:[%s0 + $0x40] sm:$0xff]
    %v102 = vld [vmem:[%s0 + $0x48] sm:$0xff]
    %v103 = vld [vmem:[%s0 + $0x50] sm:$0xff]
    %v104 = vld [vmem:[%s0 + $0x58] sm:$0xff]
    %v105 = vld [vmem:[%s0 + $0x60] sm:$0xff]
    %v106 = vld [vmem:[%s0 + $0x68] sm:$0xff]
    %v107 = vld [vmem:[%s0 + $0x70] sm:$0xff]
    %v108 = vld [vmem:[%s0 + $0x78] sm:$0xff]
    %v109 = vld [vmem:[%s1] sm:$0xff]
    %v110 = vld [vmem:[%s1 + $0x8] sm:$0xf]
    %v112 = vlaneseq
    %v113 = vshrl.u32 %v112, 7
    %v114 = vsub.s32 0, %v113
    %v115 = vrot.slane %v90, %v114
    %vm117 = vcmask 97280
    %v119 = vsel %vm117, %v93, 0
    %v122 = vsel %vm117, %v94, 0
    %v125 = vsel %vm117, %v95, 0
    %v128 = vsel %vm117, %v96, 0
    %v131 = vsel %vm117, %v97, 0
    %v134 = vsel %vm117, %v98, 0
    %v137 = vsel %vm117, %v99, 0
    %v140 = vsel %vm117, %v100, 0
    %v143 = vsel %vm117, %v101, 0
    %v146 = vsel %vm117, %v102, 0
    %v149 = vsel %vm117, %v103, 0
    %v152 = vsel %vm117, %v104, 0
    %v155 = vsel %vm117, %v105, 0
    %v158 = vsel %vm117, %v106, 0
    %v161 = vsel %vm117, %v107, 0
    %v164 = vsel %vm117, %v108, 0
    %vm166 = vcmask 1043456
    %v168 = vsel %vm166, %v110, 0
    %170 = vmatprep.subr.mxu0 0.0
    %171 = vmatpush1.msra.mxu0 %v109
    %172 = vmatprep.subr.mxu0 0.0
    %173 = vmatpush1.msra.mxu0 %v168
    %174 = vmatprep.subr.mxu0 0.0
    %175 = vmatpush1.msra.mxu0 0.0
    %176 = vmatprep.subr.mxu0 0.0
    %177 = vmatpush1.msra.mxu0 0.0
    %178 = vmatprep.subr.mxu0 0.0
    %179 = vmatpush1.msra.mxu0 0.0
    %180 = vmatprep.subr.mxu0 0.0
    %181 = vmatpush1.msra.mxu0 0.0
    %182 = vmatprep.subr.mxu0 0.0
    %183 = vmatpush1.msra.mxu0 0.0
    %184 = vmatprep.subr.mxu0 0.0
    %185 = vmatpush1.msra.mxu0 0.0
    %186 = vmatprep.subr.mxu0 0.0
    %187 = vmatpush1.msra.mxu0 0.0
    %188 = vmatprep.subr.mxu0 0.0
    %189 = vmatpush1.msra.mxu0 0.0
    %190 = vmatprep.subr.mxu0 0.0
    %191 = vmatpush1.msra.mxu0 0.0
    %192 = vmatprep.subr.mxu0 0.0
    %193 = vmatpush1.msra.mxu0 0.0
    %194 = vmatprep.subr.mxu0 0.0
    %195 = vmatpush1.msra.mxu0 0.0
    %196 = vmatprep.subr.mxu0 0.0
    %197 = vmatpush1.msra.mxu0 0.0
    %198 = vmatprep.subr.mxu0 0.0
    %199 = vmatpush1.msra.mxu0 0.0
    %200 = vmatprep.subr.mxu0 0.0
    %201 = vmatpush1.msra.mxu0 0.0
    %202 = vmatprep.subr.mxu0 0.0
    %203 = vmatpush1.msra.mxu0 0.0
    %204 = vmatprep.subr.mxu0 0.0
    %205 = vmatpush1.msra.mxu0 0.0
    %206 = vmatprep.subr.mxu0 0.0
    %207 = vmatpush1.msra.mxu0 0.0
    %208 = vmatprep.subr.mxu0 0.0
    %209 = vmatpush1.msra.mxu0 0.0
    %210 = vmatprep.subr.mxu0 0.0
    %211 = vmatpush1.msra.mxu0 0.0
    %212 = vmatprep.subr.mxu0 0.0
    %213 = vmatpush1.msra.mxu0 0.0
    %214 = vmatprep.subr.mxu0 0.0
    %215 = vmatpush1.msra.mxu0 0.0
    %216 = vmatprep.subr.mxu0 0.0
    %217 = vmatpush1.msra.mxu0 0.0
    %218 = vmatprep.subr.mxu0 0.0
    %219 = vmatpush1.msra.mxu0 0.0
    %220 = vmatprep.subr.mxu0 0.0
    %221 = vmatpush1.msra.mxu0 0.0
    %222 = vmatprep.subr.mxu0 0.0
    %223 = vmatpush1.msra.mxu0 0.0
    %224 = vmatprep.subr.mxu0 0.0
    %225 = vmatpush1.msra.mxu0 0.0
    %226 = vmatprep.subr.mxu0 0.0
    %227 = vmatpush1.msra.mxu0 0.0
    %228 = vmatprep.subr.mxu0 0.0
    %229 = vmatpush1.msra.mxu0 0.0
    %230 = vmatprep.subr.mxu0 0.0
    %231 = vmatpush1.msra.mxu0 0.0
    %232 = vmatprep.subr.mxu0 0.0
    %233 = vmatpush1.msra.mxu0 0.0
    %234 = vmatprep.mubr.f32.mxu0 0.0
    %235 = vmatmul.mubr.f32.gmra.mrb[0].mxu0 %v119
    %v236 = vpop.f32.mrb[0].mxu0
    %v237 = vadd.f32 %v115, %v236
    %v238 = vpop.f32.mrb[0].mxu0
    %239 = vmatprep.mubr.f32.mxu0 0.0
    %240 = vmatmul.mubr.f32.gmra.mrb[0].mxu0 %v122
    %v241 = vpop.f32.mrb[0].mxu0
    %v242 = vadd.f32 %v115, %v241
    %v243 = vpop.f32.mrb[0].mxu0
    %244 = vmatprep.mubr.f32.mxu0 0.0
    %245 = vmatmul.mubr.f32.gmra.mrb[0].mxu0 %v125
    %v246 = vpop.f32.mrb[0].mxu0
    %v247 = vadd.f32 %v115, %v246
    %v248 = vpop.f32.mrb[0].mxu0
    %249 = vmatprep.mubr.f32.mxu0 0.0
    %250 = vmatmul.mubr.f32.gmra.mrb[0].mxu0 %v128
    %v251 = vpop.f32.mrb[0].mxu0
    %v252 = vadd.f32 %v115, %v251
    %v253 = vpop.f32.mrb[0].mxu0
    %254 = vmatprep.mubr.f32.mxu0 0.0
    %255 = vmatmul.mubr.f32.gmra.mrb[0].mxu0 %v131
    %v256 = vpop.f32.mrb[0].mxu0
    %v257 = vadd.f32 %v115, %v256
    %v258 = vpop.f32.mrb[0].mxu0
    %259 = vmatprep.mubr.f32.mxu0 0.0
    %260 = vmatmul.mubr.f32.gmra.mrb[0].mxu0 %v134
    %v261 = vpop.f32.mrb[0].mxu0
    %v262 = vadd.f32 %v115, %v261
    %v263 = vpop.f32.mrb[0].mxu0
    %264 = vmatprep.mubr.f32.mxu0 0.0
    %265 = vmatmul.mubr.f32.gmra.mrb[0].mxu0 %v137
    %v266 = vpop.f32.mrb[0].mxu0
    %v267 = vadd.f32 %v115, %v266
    %v268 = vpop.f32.mrb[0].mxu0
    %269 = vmatprep.mubr.f32.mxu0 0.0
    %270 = vmatmul.mubr.f32.gmra.mrb[0].mxu0 %v140
    %v271 = vpop.f32.mrb[0].mxu0
    %v272 = vadd.f32 %v115, %v271
    %v273 = vpop.f32.mrb[0].mxu0
    %274 = vmatprep.mubr.f32.mxu0 0.0
    %275 = vmatmul.mubr.f32.gmra.mrb[0].mxu0 %v143
    %v276 = vpop.f32.mrb[0].mxu0
    %v277 = vadd.f32 %v115, %v276
    %v278 = vpop.f32.mrb[0].mxu0
    %279 = vmatprep.mubr.f32.mxu0 0.0
    %280 = vmatmul.mubr.f32.gmra.mrb[0].mxu0 %v146
    %v281 = vpop.f32.mrb[0].mxu0
    %v282 = vadd.f32 %v115, %v281
    %v283 = vpop.f32.mrb[0].mxu0
    %284 = vmatprep.mubr.f32.mxu0 0.0
    %285 = vmatmul.mubr.f32.gmra.mrb[0].mxu0 %v149
    %v286 = vpop.f32.mrb[0].mxu0
    %v287 = vadd.f32 %v115, %v286
    %v288 = vpop.f32.mrb[0].mxu0
    %289 = vmatprep.mubr.f32.mxu0 0.0
    %290 = vmatmul.mubr.f32.gmra.mrb[0].mxu0 %v152
    %v291 = vpop.f32.mrb[0].mxu0
    %v292 = vadd.f32 %v115, %v291
    %v293 = vpop.f32.mrb[0].mxu0
    %294 = vmatprep.mubr.f32.mxu0 0.0
    %295 = vmatmul.mubr.f32.gmra.mrb[0].mxu0 %v155
    %v296 = vpop.f32.mrb[0].mxu0
    %v297 = vadd.f32 %v115, %v296
    %v298 = vpop.f32.mrb[0].mxu0
    %299 = vmatprep.mubr.f32.mxu0 0.0
    %300 = vmatmul.mubr.f32.gmra.mrb[0].mxu0 %v158
    %v301 = vpop.f32.mrb[0].mxu0
    %v302 = vadd.f32 %v115, %v301
    %v303 = vpop.f32.mrb[0].mxu0
    %304 = vmatprep.mubr.f32.mxu0 0.0
    %305 = vmatmul.mubr.f32.gmra.mrb[0].mxu0 %v161
    %v306 = vpop.f32.mrb[0].mxu0
    %v307 = vadd.f32 %v115, %v306
    %v308 = vpop.f32.mrb[0].mxu0
    %309 = vmatprep.mubr.f32.mxu0 0.0
    %310 = vmatmul.mubr.f32.gmra.mrb[0].mxu0 %v164
    %v311 = vpop.f32.mrb[0].mxu0
    %v312 = vadd.f32 %v115, %v311
    %v313 = vpop.f32.mrb[0].mxu0
    %314 = vdwg.mxu0
    %v315 = vmax.f32 %v237, 0.0
    %v316 = vmax.f32 %v242, 0.0
    %v317 = vmax.f32 %v247, 0.0
    %v318 = vmax.f32 %v252, 0.0
    %v319 = vmax.f32 %v257, 0.0
    %v320 = vmax.f32 %v262, 0.0
    %v321 = vmax.f32 %v267, 0.0
    %v322 = vmax.f32 %v272, 0.0
    %v323 = vmax.f32 %v277, 0.0
    %v324 = vmax.f32 %v282, 0.0
    %v325 = vmax.f32 %v287, 0.0
    %v326 = vmax.f32 %v292, 0.0
    %v327 = vmax.f32 %v297, 0.0
    %v328 = vmax.f32 %v302, 0.0
    %v329 = vmax.f32 %v307, 0.0
    %v330 = vmax.f32 %v312, 0.0
    %v331 = vmax.f32 %v315, %v316
    %v332 = vmax.f32 %v317, %v318
    %v333 = vmax.f32 %v319, %v320
    %v334 = vmax.f32 %v321, %v322
    %v335 = vmax.f32 %v323, %v324
    %v336 = vmax.f32 %v325, %v326
    %v337 = vmax.f32 %v327, %v328
    %v338 = vmax.f32 %v329, %v330
    %347 = vrot.lane.b32.xlu0 %v331, 64
    %v348 = vpop.permute.xlu0 %347
    %349 = vrot.lane.b32.xlu0 %v332, 64
    %v350 = vpop.permute.xlu0 %349
    %351 = vrot.lane.b32.xlu0 %v333, 64
    %v352 = vpop.permute.xlu0 %351
    %353 = vrot.lane.b32.xlu0 %v334, 64
    %v354 = vpop.permute.xlu0 %353
    %355 = vrot.lane.b32.xlu0 %v335, 64
    %v356 = vpop.permute.xlu0 %355
    %357 = vrot.lane.b32.xlu0 %v336, 64
    %v358 = vpop.permute.xlu0 %357
    %359 = vrot.lane.b32.xlu0 %v337, 64
    %v360 = vpop.permute.xlu0 %359
    %361 = vrot.lane.b32.xlu0 %v338, 64
    %v362 = vpop.permute.xlu0 %361
    %vm371 = vcmask 523264
    %v372 = vsel %vm371, 0.0, %v348
    %v373 = vsel %vm371, %v331, %v350
    %v374 = vsel %vm371, %v332, %v352
    %v375 = vsel %vm371, %v333, %v354
    %v376 = vsel %vm371, %v334, %v356
    %v377 = vsel %vm371, %v335, %v358
    %v378 = vsel %vm371, %v336, %v360
    %v379 = vsel %vm371, %v337, %v362
    %v380 = vld [vmem:[%s3] sm:$0xff]
    %v381 = vld [vmem:[%s3 + $0x8] sm:$0xff]
    %v382 = vld [vmem:[%s3 + $0x10] sm:$0xff]
    %v383 = vld [vmem:[%s3 + $0x18] sm:$0xff]
    %v384 = vld [vmem:[%s3 + $0x20] sm:$0xff]
    %v385 = vld [vmem:[%s3 + $0x28] sm:$0xff]
    %v386 = vld [vmem:[%s3 + $0x30] sm:$0xff]
    %v387 = vld [vmem:[%s3 + $0x38] sm:$0xff]
    %v388 = vld [vmem:[%s3 + $0x40] sm:$0xff]
    %v389 = vld [vmem:[%s3 + $0x48] sm:$0xff]
    %v390 = vld [vmem:[%s3 + $0x50] sm:$0xff]
    %v391 = vld [vmem:[%s3 + $0x58] sm:$0xff]
    %v392 = vld [vmem:[%s3 + $0x60] sm:$0xff]
    %v393 = vld [vmem:[%s3 + $0x68] sm:$0xff]
    %v394 = vld [vmem:[%s3 + $0x70] sm:$0xff]
    %v395 = vld [vmem:[%s3 + $0x78] sm:$0xff]
    %v396 = vld [vmem:[%s3 + $0x80] sm:$0xff]
    %v397 = vld [vmem:[%s3 + $0x88] sm:$0xff]
    %v398 = vld [vmem:[%s3 + $0x90] sm:$0xff]
    %v399 = vld [vmem:[%s3 + $0x98] sm:$0xff]
    %v400 = vld [vmem:[%s3 + $0xa0] sm:$0xff]
    %v401 = vld [vmem:[%s3 + $0xa8] sm:$0xff]
    %v402 = vld [vmem:[%s3 + $0xb0] sm:$0xff]
    %v403 = vld [vmem:[%s3 + $0xb8] sm:$0xff]
    %v405 = vlaneseq
    %v406 = vshrl.u32 %v405, 7
    %v407 = vsub.s32 0, %v406
    %v408 = vrot.slane %v91, %v407
    %v410 = vsel %vm371, %v332, 0
    %v412 = vsel %vm371, %v333, 0
    %v414 = vsel %vm371, %v334, 0
    %v416 = vsel %vm371, %v335, 0
    %v418 = vsel %vm371, %v336, 0
    %v420 = vsel %vm371, %v337, 0
    %v422 = vsel %vm371, %v338, 0
    %v425 = vsel %vm371, 0.0, 0
    %427 = vmatprep.subr.mxu0 0.0
    %428 = vmatpush1.msra.mxu0 %v380
    %429 = vmatprep.subr.mxu0 0.0
    %430 = vmatpush1.msra.mxu0 %v381
    %431 = vmatprep.subr.mxu0 0.0
    %432 = vmatpush1.msra.mxu0 %v382
    %433 = vmatprep.subr.mxu0 0.0
    %434 = vmatpush1.msra.mxu0 %v383
    %435 = vmatprep.subr.mxu0 0.0
    %436 = vmatpush1.msra.mxu0 %v384
    %437 = vmatprep.subr.mxu0 0.0
    %438 = vmatpush1.msra.mxu0 %v385
    %439 = vmatprep.subr.mxu0 0.0
    %440 = vmatpush1.msra.mxu0 %v386
    %441 = vmatprep.subr.mxu0 0.0
    %442 = vmatpush1.msra.mxu0 %v387
    %443 = vmatprep.subr.mxu0 0.0
    %444 = vmatpush1.msra.mxu0 %v388
    %445 = vmatprep.subr.mxu0 0.0
    %446 = vmatpush1.msra.mxu0 %v389
    %447 = vmatprep.subr.mxu0 0.0
    %448 = vmatpush1.msra.mxu0 %v390
    %449 = vmatprep.subr.mxu0 0.0
    %450 = vmatpush1.msra.mxu0 %v391
    %451 = vmatprep.subr.mxu0 0.0
    %452 = vmatpush1.msra.mxu0 %v392
    %453 = vmatprep.subr.mxu0 0.0
    %454 = vmatpush1.msra.mxu0 %v393
    %455 = vmatprep.subr.mxu0 0.0
    %456 = vmatpush1.msra.mxu0 %v394
    %457 = vmatprep.subr.mxu0 0.0
    %458 = vmatpush1.msra.mxu0 %v395
    %459 = vmatprep.subr.mxu0 0.0
    %460 = vmatpush1.msra.mxu0 %v396
    %461 = vmatprep.subr.mxu0 0.0
    %462 = vmatpush1.msra.mxu0 %v397
    %463 = vmatprep.subr.mxu0 0.0
    %464 = vmatpush1.msra.mxu0 %v398
    %465 = vmatprep.subr.mxu0 0.0
    %466 = vmatpush1.msra.mxu0 %v399
    %467 = vmatprep.subr.mxu0 0.0
    %468 = vmatpush1.msra.mxu0 %v400
    %469 = vmatprep.subr.mxu0 0.0
    %470 = vmatpush1.msra.mxu0 %v401
    %471 = vmatprep.subr.mxu0 0.0
    %472 = vmatpush1.msra.mxu0 %v402
    %473 = vmatprep.subr.mxu0 0.0
    %474 = vmatpush1.msra.mxu0 %v403
    %475 = vmatprep.subr.mxu0 0.0
    %476 = vmatpush1.msra.mxu0 0.0
    %477 = vmatprep.subr.mxu0 0.0
    %478 = vmatpush1.msra.mxu0 0.0
    %479 = vmatprep.subr.mxu0 0.0
    %480 = vmatpush1.msra.mxu0 0.0
    %481 = vmatprep.subr.mxu0 0.0
    %482 = vmatpush1.msra.mxu0 0.0
    %483 = vmatprep.subr.mxu0 0.0
    %484 = vmatpush1.msra.mxu0 0.0
    %485 = vmatprep.subr.mxu0 0.0
    %486 = vmatpush1.msra.mxu0 0.0
    %487 = vmatprep.subr.mxu0 0.0
    %488 = vmatpush1.msra.mxu0 0.0
    %489 = vmatprep.subr.mxu0 0.0
    %490 = vmatpush1.msra.mxu0 0.0
    %491 = vmatprep.mubr.f32.mxu0 %v410
    %492 = vmatmul.mubr.f32.gmra.mrb[0].mxu0 %v372
    %v493 = vpop.f32.mrb[0].mxu0
    %v494 = vadd.f32 %v408, %v493
    %v495 = vpop.f32.mrb[0].mxu0
    %496 = vmatprep.mubr.f32.mxu0 %v412
    %497 = vmatmul.mubr.f32.gmra.mrb[0].mxu0 %v373
    %v498 = vpop.f32.mrb[0].mxu0
    %v499 = vadd.f32 %v408, %v498
    %v500 = vpop.f32.mrb[0].mxu0
    %501 = vmatprep.mubr.f32.mxu0 %v414
    %502 = vmatmul.mubr.f32.gmra.mrb[0].mxu0 %v374
    %v503 = vpop.f32.mrb[0].mxu0
    %v504 = vadd.f32 %v408, %v503
    %v505 = vpop.f32.mrb[0].mxu0
    %506 = vmatprep.mubr.f32.mxu0 %v416
    %507 = vmatmul.mubr.f32.gmra.mrb[0].mxu0 %v375
    %v508 = vpop.f32.mrb[0].mxu0
    %v509 = vadd.f32 %v408, %v508
    %v510 = vpop.f32.mrb[0].mxu0
    %511 = vmatprep.mubr.f32.mxu0 %v418
    %512 = vmatmul.mubr.f32.gmra.mrb[0].mxu0 %v376
    %v513 = vpop.f32.mrb[0].mxu0
    %v514 = vadd.f32 %v408, %v513
    %v515 = vpop.f32.mrb[0].mxu0
    %516 = vmatprep.mubr.f32.mxu0 %v420
    %517 = vmatmul.mubr.f32.gmra.mrb[0].mxu0 %v377
    %v518 = vpop.f32.mrb[0].mxu0
    %v519 = vadd.f32 %v408, %v518
    %v520 = vpop.f32.mrb[0].mxu0
    %521 = vmatprep.mubr.f32.mxu0 %v422
    %522 = vmatmul.mubr.f32.gmra.mrb[0].mxu0 %v378
    %v523 = vpop.f32.mrb[0].mxu0
    %v524 = vadd.f32 %v408, %v523
    %v525 = vpop.f32.mrb[0].mxu0
    %526 = vmatprep.mubr.f32.mxu0 %v425
    %527 = vmatmul.mubr.f32.gmra.mrb[0].mxu0 %v379
    %v528 = vpop.f32.mrb[0].mxu0
    %v529 = vadd.f32 %v408, %v528
    %v530 = vpop.f32.mrb[0].mxu0
    %531 = vdwg.mxu0
    %v532 = vmax.f32 %v494, 0.0
    %v533 = vmax.f32 %v499, 0.0
    %v534 = vmax.f32 %v504, 0.0
    %v535 = vmax.f32 %v509, 0.0
    %v536 = vmax.f32 %v514, 0.0
    %v537 = vmax.f32 %v519, 0.0
    %v538 = vmax.f32 %v524, 0.0
    %v539 = vmax.f32 %v529, 0.0
    %v540 = vmax.f32 %v532, %v533
    %v541 = vmax.f32 %v534, %v535
    %v542 = vmax.f32 %v536, %v537
    %v543 = vmax.f32 %v538, %v539
    %v544 = vld [vmem:[%s5] sm:$0xff]
    %v545 = vld [vmem:[%s5 + $0x8] sm:$0xff]
    %v546 = vld [vmem:[%s5 + $0x10] sm:$0xff]
    %v547 = vld [vmem:[%s5 + $0x18] sm:$0xff]
    %v548 = vld [vmem:[%s5 + $0x20] sm:$0xff]
    %v549 = vld [vmem:[%s5 + $0x28] sm:$0xff]
    %v550 = vld [vmem:[%s5 + $0x30] sm:$0xff]
    %v551 = vld [vmem:[%s5 + $0x38] sm:$0xff]
    %v552 = vld [vmem:[%s5 + $0x40] sm:$0xff]
    %v553 = vld [vmem:[%s5 + $0x48] sm:$0xff]
    %v554 = vld [vmem:[%s5 + $0x50] sm:$0xff]
    %v555 = vld [vmem:[%s5 + $0x58] sm:$0xff]
    %v556 = vld [vmem:[%s5 + $0x60] sm:$0xff]
    %v557 = vld [vmem:[%s5 + $0x68] sm:$0xff]
    %v558 = vld [vmem:[%s5 + $0x70] sm:$0xff]
    %v559 = vld [vmem:[%s5 + $0x78] sm:$0xff]
    %v560 = vld [vmem:[%s5 + $0x80] sm:$0xff]
    %v561 = vld [vmem:[%s5 + $0x88] sm:$0xff]
    %v562 = vld [vmem:[%s5 + $0x90] sm:$0xff]
    %v563 = vld [vmem:[%s5 + $0x98] sm:$0xff]
    %v564 = vld [vmem:[%s5 + $0xa0] sm:$0xff]
    %v565 = vld [vmem:[%s5 + $0xa8] sm:$0xff]
    %v566 = vld [vmem:[%s5 + $0xb0] sm:$0xff]
    %v567 = vld [vmem:[%s5 + $0xb8] sm:$0xff]
    %v568 = vld [vmem:[%s5 + $0xc0] sm:$0xff]
    %v569 = vld [vmem:[%s5 + $0xc8] sm:$0xff]
    %v570 = vld [vmem:[%s5 + $0xd0] sm:$0xff]
    %v571 = vld [vmem:[%s5 + $0xd8] sm:$0xff]
    %v572 = vld [vmem:[%s5 + $0xe0] sm:$0xff]
    %v573 = vld [vmem:[%s5 + $0xe8] sm:$0xff]
    %v574 = vld [vmem:[%s5 + $0xf0] sm:$0xff]
    %v575 = vld [vmem:[%s5 + $0xf8] sm:$0xff]
    %v576 = vld [vmem:[%s5 + $0x100] sm:$0xff]
    %v577 = vld [vmem:[%s5 + $0x108] sm:$0xff]
    %v578 = vld [vmem:[%s5 + $0x110] sm:$0xff]
    %v579 = vld [vmem:[%s5 + $0x118] sm:$0xff]
    %v580 = vld [vmem:[%s5 + $0x120] sm:$0xff]
    %v581 = vld [vmem:[%s5 + $0x128] sm:$0xff]
    %v582 = vld [vmem:[%s5 + $0x130] sm:$0xff]
    %v583 = vld [vmem:[%s5 + $0x138] sm:$0xff]
    %v584 = vld [vmem:[%s5 + $0x140] sm:$0xff]
    %v585 = vld [vmem:[%s5 + $0x148] sm:$0xff]
    %v586 = vld [vmem:[%s5 + $0x150] sm:$0xff]
    %v587 = vld [vmem:[%s5 + $0x158] sm:$0xff]
    %v588 = vld [vmem:[%s5 + $0x160] sm:$0xff]
    %v589 = vld [vmem:[%s5 + $0x168] sm:$0xff]
    %v590 = vld [vmem:[%s5 + $0x170] sm:$0xff]
    %v591 = vld [vmem:[%s5 + $0x178] sm:$0xff]
    %v592 = vld [vmem:[%s5 + $0x180] sm:$0xff]
    %v593 = vld [vmem:[%s5 + $0x188] sm:$0xff]
    %v594 = vld [vmem:[%s5 + $0x190] sm:$0xff]
    %v595 = vld [vmem:[%s5 + $0x198] sm:$0xff]
    %v596 = vld [vmem:[%s5 + $0x1a0] sm:$0xff]
    %v597 = vld [vmem:[%s5 + $0x1a8] sm:$0xff]
    %v598 = vld [vmem:[%s5 + $0x1b0] sm:$0xff]
    %v599 = vld [vmem:[%s5 + $0x1b8] sm:$0xff]
    %v600 = vld [vmem:[%s5 + $0x1c0] sm:$0xff]
    %v601 = vld [vmem:[%s5 + $0x1c8] sm:$0xff]
    %v602 = vld [vmem:[%s5 + $0x1d0] sm:$0xff]
    %v603 = vld [vmem:[%s5 + $0x1d8] sm:$0xff]
    %v604 = vld [vmem:[%s5 + $0x1e0] sm:$0xff]
    %v605 = vld [vmem:[%s5 + $0x1e8] sm:$0xff]
    %v606 = vld [vmem:[%s5 + $0x1f0] sm:$0xff]
    %v607 = vld [vmem:[%s5 + $0x1f8] sm:$0xff]
    %v608 = vld [vmem:[%s5 + $0x200] sm:$0xff]
    %v609 = vld [vmem:[%s5 + $0x208] sm:$0xff]
    %v610 = vld [vmem:[%s5 + $0x210] sm:$0xff]
    %v611 = vld [vmem:[%s5 + $0x218] sm:$0xff]
    %v612 = vld [vmem:[%s5 + $0x220] sm:$0xff]
    %v613 = vld [vmem:[%s5 + $0x228] sm:$0xff]
    %v614 = vld [vmem:[%s5 + $0x230] sm:$0xff]
    %v615 = vld [vmem:[%s5 + $0x238] sm:$0xff]
    %v616 = vld [vmem:[%s5 + $0x240] sm:$0xff]
    %v617 = vld [vmem:[%s5 + $0x248] sm:$0xff]
    %v618 = vld [vmem:[%s5 + $0x250] sm:$0xff]
    %v619 = vld [vmem:[%s5 + $0x258] sm:$0xff]
    %v620 = vld [vmem:[%s5 + $0x260] sm:$0xff]
    %v621 = vld [vmem:[%s5 + $0x268] sm:$0xff]
    %v622 = vld [vmem:[%s5 + $0x270] sm:$0xff]
    %v623 = vld [vmem:[%s5 + $0x278] sm:$0xff]
    %v624 = vld [vmem:[%s5 + $0x280] sm:$0xff]
    %v625 = vld [vmem:[%s5 + $0x288] sm:$0xff]
    %v626 = vld [vmem:[%s5 + $0x290] sm:$0xff]
    %v627 = vld [vmem:[%s5 + $0x298] sm:$0xff]
    %v628 = vld [vmem:[%s5 + $0x2a0] sm:$0xff]
    %v629 = vld [vmem:[%s5 + $0x2a8] sm:$0xff]
    %v630 = vld [vmem:[%s5 + $0x2b0] sm:$0xff]
    %v631 = vld [vmem:[%s5 + $0x2b8] sm:$0xff]
    %v632 = vld [vmem:[%s5 + $0x2c0] sm:$0xff]
    %v633 = vld [vmem:[%s5 + $0x2c8] sm:$0xff]
    %v634 = vld [vmem:[%s5 + $0x2d0] sm:$0xff]
    %v635 = vld [vmem:[%s5 + $0x2d8] sm:$0xff]
    %v636 = vld [vmem:[%s5 + $0x2e0] sm:$0xff]
    %v637 = vld [vmem:[%s5 + $0x2e8] sm:$0xff]
    %v638 = vld [vmem:[%s5 + $0x2f0] sm:$0xff]
    %v639 = vld [vmem:[%s5 + $0x2f8] sm:$0xff]
    %v641 = vlaneseq
    %v642 = vshrl.u32 %v641, 7
    %v643 = vsub.s32 0, %v642
    %v644 = vrot.slane %v92, %v643
    %v645 = vlaneseq
    %v646 = vshrl.u32 %v645, 7
    %v647 = vsub.s32 1, %v646
    %v648 = vrot.slane %v92, %v647
    %651 = vmatprep.subr.mxu0 %v545
    %652 = vmatpush1.msra.mxu0 %v544
    %653 = vmatprep.subr.mxu0 %v547
    %654 = vmatpush1.msra.mxu0 %v546
    %655 = vmatprep.subr.mxu0 %v549
    %656 = vmatpush1.msra.mxu0 %v548
    %657 = vmatprep.subr.mxu0 %v551
    %658 = vmatpush1.msra.mxu0 %v550
    %659 = vmatprep.subr.mxu0 %v553
    %660 = vmatpush1.msra.mxu0 %v552
    %661 = vmatprep.subr.mxu0 %v555
    %662 = vmatpush1.msra.mxu0 %v554
    %663 = vmatprep.subr.mxu0 %v557
    %664 = vmatpush1.msra.mxu0 %v556
    %665 = vmatprep.subr.mxu0 %v559
    %666 = vmatpush1.msra.mxu0 %v558
    %667 = vmatprep.subr.mxu0 %v561
    %668 = vmatpush1.msra.mxu0 %v560
    %669 = vmatprep.subr.mxu0 %v563
    %670 = vmatpush1.msra.mxu0 %v562
    %671 = vmatprep.subr.mxu0 %v565
    %672 = vmatpush1.msra.mxu0 %v564
    %673 = vmatprep.subr.mxu0 %v567
    %674 = vmatpush1.msra.mxu0 %v566
    %675 = vmatprep.subr.mxu0 %v569
    %676 = vmatpush1.msra.mxu0 %v568
    %677 = vmatprep.subr.mxu0 %v571
    %678 = vmatpush1.msra.mxu0 %v570
    %679 = vmatprep.subr.mxu0 %v573
    %680 = vmatpush1.msra.mxu0 %v572
    %681 = vmatprep.subr.mxu0 %v575
    %682 = vmatpush1.msra.mxu0 %v574
    %683 = vmatprep.subr.mxu0 %v577
    %684 = vmatpush1.msra.mxu0 %v576
    %685 = vmatprep.subr.mxu0 %v579
    %686 = vmatpush1.msra.mxu0 %v578
    %687 = vmatprep.subr.mxu0 %v581
    %688 = vmatpush1.msra.mxu0 %v580
    %689 = vmatprep.subr.mxu0 %v583
    %690 = vmatpush1.msra.mxu0 %v582
    %691 = vmatprep.subr.mxu0 %v585
    %692 = vmatpush1.msra.mxu0 %v584
    %693 = vmatprep.subr.mxu0 %v587
    %694 = vmatpush1.msra.mxu0 %v586
    %695 = vmatprep.subr.mxu0 %v589
    %696 = vmatpush1.msra.mxu0 %v588
    %697 = vmatprep.subr.mxu0 %v591
    %698 = vmatpush1.msra.mxu0 %v590
    %699 = vmatprep.subr.mxu0 %v593
    %700 = vmatpush1.msra.mxu0 %v592
    %701 = vmatprep.subr.mxu0 %v595
    %702 = vmatpush1.msra.mxu0 %v594
    %703 = vmatprep.subr.mxu0 %v597
    %704 = vmatpush1.msra.mxu0 %v596
    %705 = vmatprep.subr.mxu0 %v599
    %706 = vmatpush1.msra.mxu0 %v598
    %707 = vmatprep.subr.mxu0 %v601
    %708 = vmatpush1.msra.mxu0 %v600
    %709 = vmatprep.subr.mxu0 %v603
    %710 = vmatpush1.msra.mxu0 %v602
    %711 = vmatprep.subr.mxu0 %v605
    %712 = vmatpush1.msra.mxu0 %v604
    %713 = vmatprep.subr.mxu0 %v607
    %714 = vmatpush1.msra.mxu0 %v606
    %715 = vmatprep.mubr.f32.mxu0 %v540
    %716 = vmatmul.mubr.f32.gmra.mrb[0].mxu0 0.0
    %v717 = vpop.f32.mrb[0].mxu0
    %v718 = vadd.f32 %v644, %v717
    %v719 = vpop.f32.mrb[0].mxu0
    %v720 = vadd.f32 %v648, %v719
    %721 = vmatprep.mubr.f32.mxu0 %v541
    %722 = vmatmul.mubr.f32.gmra.mrb[0].mxu0 %v540
    %v723 = vpop.f32.mrb[0].mxu0
    %v724 = vadd.f32 %v644, %v723
    %v725 = vpop.f32.mrb[0].mxu0
    %v726 = vadd.f32 %v648, %v725
    %727 = vmatprep.mubr.f32.mxu0 %v542
    %728 = vmatmul.mubr.f32.gmra.mrb[0].mxu0 %v541
    %v729 = vpop.f32.mrb[0].mxu0
    %v730 = vadd.f32 %v644, %v729
    %v731 = vpop.f32.mrb[0].mxu0
    %v732 = vadd.f32 %v648, %v731
    %733 = vmatprep.mubr.f32.mxu0 %v543
    %734 = vmatmul.mubr.f32.gmra.mrb[0].mxu0 %v542
    %v735 = vpop.f32.mrb[0].mxu0
    %v736 = vadd.f32 %v644, %v735
    %v737 = vpop.f32.mrb[0].mxu0
    %v738 = vadd.f32 %v648, %v737
    %739 = vdwg.mxu0
    %740 = vmatprep.subr.mxu0 %v609
    %741 = vmatpush1.msra.mxu0 %v608
    %742 = vmatprep.subr.mxu0 %v611
    %743 = vmatpush1.msra.mxu0 %v610
    %744 = vmatprep.subr.mxu0 %v613
    %745 = vmatpush1.msra.mxu0 %v612
    %746 = vmatprep.subr.mxu0 %v615
    %747 = vmatpush1.msra.mxu0 %v614
    %748 = vmatprep.subr.mxu0 %v617
    %749 = vmatpush1.msra.mxu0 %v616
    %750 = vmatprep.subr.mxu0 %v619
    %751 = vmatpush1.msra.mxu0 %v618
    %752 = vmatprep.subr.mxu0 %v621
    %753 = vmatpush1.msra.mxu0 %v620
    %754 = vmatprep.subr.mxu0 %v623
    %755 = vmatpush1.msra.mxu0 %v622
    %756 = vmatprep.subr.mxu0 %v625
    %757 = vmatpush1.msra.mxu0 %v624
    %758 = vmatprep.subr.mxu0 %v627
    %759 = vmatpush1.msra.mxu0 %v626
    %760 = vmatprep.subr.mxu0 %v629
    %761 = vmatpush1.msra.mxu0 %v628
    %762 = vmatprep.subr.mxu0 %v631
    %763 = vmatpush1.msra.mxu0 %v630
    %764 = vmatprep.subr.mxu0 %v633
    %765 = vmatpush1.msra.mxu0 %v632
    %766 = vmatprep.subr.mxu0 %v635
    %767 = vmatpush1.msra.mxu0 %v634
    %768 = vmatprep.subr.mxu0 %v637
    %769 = vmatpush1.msra.mxu0 %v636
    %770 = vmatprep.subr.mxu0 %v639
    %771 = vmatpush1.msra.mxu0 %v638
    %772 = vmatprep.subr.mxu0 0.0
    %773 = vmatpush1.msra.mxu0 0.0
    %774 = vmatprep.subr.mxu0 0.0
    %775 = vmatpush1.msra.mxu0 0.0
    %776 = vmatprep.subr.mxu0 0.0
    %777 = vmatpush1.msra.mxu0 0.0
    %778 = vmatprep.subr.mxu0 0.0
    %779 = vmatpush1.msra.mxu0 0.0
    %780 = vmatprep.subr.mxu0 0.0
    %781 = vmatpush1.msra.mxu0 0.0
    %782 = vmatprep.subr.mxu0 0.0
    %783 = vmatpush1.msra.mxu0 0.0
    %784 = vmatprep.subr.mxu0 0.0
    %785 = vmatpush1.msra.mxu0 0.0
    %786 = vmatprep.subr.mxu0 0.0
    %787 = vmatpush1.msra.mxu0 0.0
    %788 = vmatprep.subr.mxu0 0.0
    %789 = vmatpush1.msra.mxu0 0.0
    %790 = vmatprep.subr.mxu0 0.0
    %791 = vmatpush1.msra.mxu0 0.0
    %792 = vmatprep.subr.mxu0 0.0
    %793 = vmatpush1.msra.mxu0 0.0
    %794 = vmatprep.subr.mxu0 0.0
    %795 = vmatpush1.msra.mxu0 0.0
    %796 = vmatprep.subr.mxu0 0.0
    %797 = vmatpush1.msra.mxu0 0.0
    %798 = vmatprep.subr.mxu0 0.0
    %799 = vmatpush1.msra.mxu0 0.0
    %800 = vmatprep.subr.mxu0 0.0
    %801 = vmatpush1.msra.mxu0 0.0
    %802 = vmatprep.subr.mxu0 0.0
    %803 = vmatpush1.msra.mxu0 0.0
    %804 = vmatprep.mubr.f32.mxu0 0.0
    %805 = vmatmul.mubr.f32.gmra.mrb[0].mxu0 %v541
    %v806 = vpop.f32.mrb[0].mxu0
    %v807 = vadd.f32 %v718, %v806
    %v808 = vpop.f32.mrb[0].mxu0
    %v809 = vadd.f32 %v720, %v808
    %810 = vmatprep.mubr.f32.mxu0 0.0
    %811 = vmatmul.mubr.f32.gmra.mrb[0].mxu0 %v542
    %v812 = vpop.f32.mrb[0].mxu0
    %v813 = vadd.f32 %v724, %v812
    %v814 = vpop.f32.mrb[0].mxu0
    %v815 = vadd.f32 %v726, %v814
    %816 = vmatprep.mubr.f32.mxu0 0.0
    %817 = vmatmul.mubr.f32.gmra.mrb[0].mxu0 %v543
    %v818 = vpop.f32.mrb[0].mxu0
    %v819 = vadd.f32 %v730, %v818
    %v820 = vpop.f32.mrb[0].mxu0
    %v821 = vadd.f32 %v732, %v820
    %822 = vmatprep.mubr.f32.mxu0 0.0
    %823 = vmatmul.mubr.f32.gmra.mrb[0].mxu0 0.0
    %v824 = vpop.f32.mrb[0].mxu0
    %v825 = vadd.f32 %v736, %v824
    %v826 = vpop.f32.mrb[0].mxu0
    %v827 = vadd.f32 %v738, %v826
    %828 = vdwg.mxu0
    %v829 = vmax.f32 %v807, 0.0
    %v830 = vmax.f32 %v809, 0.0
    %v831 = vmax.f32 %v813, 0.0
    %v832 = vmax.f32 %v815, 0.0
    %v833 = vmax.f32 %v819, 0.0
    %v834 = vmax.f32 %v821, 0.0
    %v835 = vmax.f32 %v825, 0.0
    %v836 = vmax.f32 %v827, 0.0
    %v837 = vadd.f32 %v829, %v831
    %v838 = vadd.f32 %v830, %v832
    %v839 = vadd.f32 %v837, %v833
    %v840 = vadd.f32 %v838, %v834
    %v841 = vadd.f32 %v839, %v835
    %v842 = vadd.f32 %v840, %v836
    %v843 = vmul.f32 %v841, 0.25
    %v844 = vmul.f32 %v842, 0.25
    %v845 = vld [vmem:[%s7] sm:$0xff]
    %v846 = vld [vmem:[%s7 + $0x8] sm:$0xff]
    %v847 = vld [vmem:[%s7 + $0x10] sm:$0xff]
    %v848 = vld [vmem:[%s7 + $0x18] sm:$0xff]
    %v849 = vld [vmem:[%s7 + $0x20] sm:$0xff]
    %v850 = vld [vmem:[%s7 + $0x28] sm:$0xff]
    %v851 = vld [vmem:[%s7 + $0x30] sm:$0xff]
    %v852 = vld [vmem:[%s7 + $0x38] sm:$0xff]
    %v853 = vld [vmem:[%s7 + $0x40] sm:$0xff]
    %v854 = vld [vmem:[%s7 + $0x48] sm:$0xff]
    %v855 = vld [vmem:[%s7 + $0x50] sm:$0xff]
    %v856 = vld [vmem:[%s7 + $0x58] sm:$0xff]
    %v857 = vld [vmem:[%s7 + $0x60] sm:$0xff]
    %v858 = vld [vmem:[%s7 + $0x68] sm:$0xff]
    %v859 = vld [vmem:[%s7 + $0x70] sm:$0xff]
    %v860 = vld [vmem:[%s7 + $0x78] sm:$0xff]
    %v861 = vld [vmem:[%s7 + $0x80] sm:$0xff]
    %v862 = vld [vmem:[%s7 + $0x88] sm:$0xff]
    %v863 = vld [vmem:[%s7 + $0x90] sm:$0xff]
    %v864 = vld [vmem:[%s7 + $0x98] sm:$0xff]
    %v865 = vld [vmem:[%s7 + $0xa0] sm:$0xff]
    %v866 = vld [vmem:[%s7 + $0xa8] sm:$0xff]
    %v867 = vld [vmem:[%s7 + $0xb0] sm:$0xff]
    %v868 = vld [vmem:[%s7 + $0xb8] sm:$0xff]
    %v869 = vld [vmem:[%s7 + $0xc0] sm:$0xff]
    %v870 = vld [vmem:[%s7 + $0xc8] sm:$0xff]
    %v871 = vld [vmem:[%s7 + $0xd0] sm:$0xff]
    %v872 = vld [vmem:[%s7 + $0xd8] sm:$0xff]
    %v873 = vld [vmem:[%s7 + $0xe0] sm:$0xff]
    %v874 = vld [vmem:[%s7 + $0xe8] sm:$0xff]
    %v875 = vld [vmem:[%s7 + $0xf0] sm:$0xff]
    %v876 = vld [vmem:[%s7 + $0xf8] sm:$0xff]
    %v877 = vld [vmem:[%s8] sm:$0x1]
    %v879 = vlaneseq
    %v880 = vshrl.u32 %v879, 7
    %v881 = vsub.s32 0, %v880
    %v882 = vrot.slane %v877, %v881
    %884 = vmatprep.subr.mxu0 0.0
    %885 = vmatpush1.msra.mxu0 %v845
    %886 = vmatprep.subr.mxu0 0.0
    %887 = vmatpush1.msra.mxu0 %v846
    %888 = vmatprep.subr.mxu0 0.0
    %889 = vmatpush1.msra.mxu0 %v847
    %890 = vmatprep.subr.mxu0 0.0
    %891 = vmatpush1.msra.mxu0 %v848
    %892 = vmatprep.subr.mxu0 0.0
    %893 = vmatpush1.msra.mxu0 %v849
    %894 = vmatprep.subr.mxu0 0.0
    %895 = vmatpush1.msra.mxu0 %v850
    %896 = vmatprep.subr.mxu0 0.0
    %897 = vmatpush1.msra.mxu0 %v851
    %898 = vmatprep.subr.mxu0 0.0
    %899 = vmatpush1.msra.mxu0 %v852
    %900 = vmatprep.subr.mxu0 0.0
    %901 = vmatpush1.msra.mxu0 %v853
    %902 = vmatprep.subr.mxu0 0.0
    %903 = vmatpush1.msra.mxu0 %v854
    %904 = vmatprep.subr.mxu0 0.0
    %905 = vmatpush1.msra.mxu0 %v855
    %906 = vmatprep.subr.mxu0 0.0
    %907 = vmatpush1.msra.mxu0 %v856
    %908 = vmatprep.subr.mxu0 0.0
    %909 = vmatpush1.msra.mxu0 %v857
    %910 = vmatprep.subr.mxu0 0.0
    %911 = vmatpush1.msra.mxu0 %v858
    %912 = vmatprep.subr.mxu0 0.0
    %913 = vmatpush1.msra.mxu0 %v859
    %914 = vmatprep.subr.mxu0 0.0
    %915 = vmatpush1.msra.mxu0 %v860
    %916 = vmatprep.subr.mxu0 0.0
    %917 = vmatpush1.msra.mxu0 %v861
    %918 = vmatprep.subr.mxu0 0.0
    %919 = vmatpush1.msra.mxu0 %v862
    %920 = vmatprep.subr.mxu0 0.0
    %921 = vmatpush1.msra.mxu0 %v863
    %922 = vmatprep.subr.mxu0 0.0
    %923 = vmatpush1.msra.mxu0 %v864
    %924 = vmatprep.subr.mxu0 0.0
    %925 = vmatpush1.msra.mxu0 %v865
    %926 = vmatprep.subr.mxu0 0.0
    %927 = vmatpush1.msra.mxu0 %v866
    %928 = vmatprep.subr.mxu0 0.0
    %929 = vmatpush1.msra.mxu0 %v867
    %930 = vmatprep.subr.mxu0 0.0
    %931 = vmatpush1.msra.mxu0 %v868
    %932 = vmatprep.subr.mxu0 0.0
    %933 = vmatpush1.msra.mxu0 %v869
    %934 = vmatprep.subr.mxu0 0.0
    %935 = vmatpush1.msra.mxu0 %v870
    %936 = vmatprep.subr.mxu0 0.0
    %937 = vmatpush1.msra.mxu0 %v871
    %938 = vmatprep.subr.mxu0 0.0
    %939 = vmatpush1.msra.mxu0 %v872
    %940 = vmatprep.subr.mxu0 0.0
    %941 = vmatpush1.msra.mxu0 %v873
    %942 = vmatprep.subr.mxu0 0.0
    %943 = vmatpush1.msra.mxu0 %v874
    %944 = vmatprep.subr.mxu0 0.0
    %945 = vmatpush1.msra.mxu0 %v875
    %946 = vmatprep.subr.mxu0 0.0
    %947 = vmatpush1.msra.mxu0 %v876
    %948 = vmatprep.mubr.f32.mxu0 %v844
    %949 = vmatmul.mubr.f32.gmra.mrb[0].mxu0 %v843
    %v950 = vpop.f32.mrb[0].mxu0
    %v951 = vadd.f32 %v882, %v950
    %v952 = vpop.f32.mrb[0].mxu0
    %953 = vdwg.mxu0
    %v954 = vld [vmem:[%s9] sm:$0x1]
    %v955 = vld [vmem:[%s10] sm:$0xf]
    %v956 = vadd.f32 %v951, %v955
    %v958 = vrot.slane %v955, 4
    %v960 = vadd.f32 %v951, %v958
    %v962 = vrot.slane %v956, 7
    %v965 = vlaneseq
    %v966 = vshrl.u32 %v965, 7
    %v967 = vsub.s32 0, %v966
    %v968 = vrot.slane %v954, %v967
    %v971 = vrot.slane %v960, 6
    %vm973 = vcmask 1040384
    %v974 = vsel %vm973, %v954, %v962
    %vm975 = vcmask 1044480
    %v976 = vsel %vm975, %v974, %v968
    %vm977 = vcmask 1045504
    %v978 = vsel %vm977, %v976, %v971
    %v979 = vld [vmem:[%s11] sm:$0xff]
    %v980 = vld [vmem:[%s11 + $0x8] sm:$0x3]
    %v981 = vld [vmem:[%s12] sm:$0xff]
    %v982 = vld [vmem:[%s12 + $0x8] sm:$0xff]
    %v983 = vld [vmem:[%s12 + $0x10] sm:$0xff]
    %v984 = vld [vmem:[%s12 + $0x18] sm:$0xff]
    %v985 = vld [vmem:[%s13] sm:$0x1]
    %v986 = vld [vmem:[%s14] sm:$0xff]
    %v987 = vld [vmem:[%s14 + $0x8] sm:$0xff]
    %v988 = vld [vmem:[%s14 + $0x10] sm:$0xff]
    %v989 = vld [vmem:[%s14 + $0x18] sm:$0xff]
    %v990 = vld [vmem:[%s15] sm:$0x1]
    %v991 = vld [vmem:[%s16] sm:$0x1]
    %v992 = vld [vmem:[%s17] sm:$0x1]
    %v993 = vld [vmem:[%s18] sm:$0xff]
    %v994 = vld [vmem:[%s18 + $0x8] sm:$0xff]
    %v995 = vld [vmem:[%s18 + $0x10] sm:$0xff]
    %v996 = vld [vmem:[%s18 + $0x18] sm:$0xff]
    %v997 = vld [vmem:[%s18 + $0x20] sm:$0xff]
    %v998 = vld [vmem:[%s18 + $0x28] sm:$0xff]
    %v999 = vld [vmem:[%s18 + $0x30] sm:$0xff]
    %v1000 = vld [vmem:[%s18 + $0x38] sm:$0xff]
    %v1001 = vld [vmem:[%s18 + $0x40] sm:$0xff]
    %v1002 = vld [vmem:[%s18 + $0x48] sm:$0xff]
    %v1003 = vld [vmem:[%s18 + $0x50] sm:$0xff]
    %v1004 = vld [vmem:[%s18 + $0x58] sm:$0xff]
    %v1005 = vld [vmem:[%s18 + $0x60] sm:$0xff]
    %v1006 = vld [vmem:[%s18 + $0x68] sm:$0xff]
    %v1007 = vld [vmem:[%s18 + $0x70] sm:$0xff]
    %v1008 = vld [vmem:[%s18 + $0x78] sm:$0xff]
    %v1009 = vld [vmem:[%s18 + $0x80] sm:$0xff]
    %v1010 = vld [vmem:[%s18 + $0x88] sm:$0xff]
    %v1011 = vld [vmem:[%s18 + $0x90] sm:$0xff]
    %v1012 = vld [vmem:[%s18 + $0x98] sm:$0xff]
    %v1013 = vld [vmem:[%s18 + $0xa0] sm:$0xff]
    %v1014 = vld [vmem:[%s18 + $0xa8] sm:$0xff]
    %v1015 = vld [vmem:[%s18 + $0xb0] sm:$0xff]
    %v1016 = vld [vmem:[%s18 + $0xb8] sm:$0xff]
    %v1017 = vld [vmem:[%s18 + $0xc0] sm:$0xff]
    %v1018 = vld [vmem:[%s18 + $0xc8] sm:$0xff]
    %v1019 = vld [vmem:[%s18 + $0xd0] sm:$0xff]
    %v1020 = vld [vmem:[%s18 + $0xd8] sm:$0xff]
    %v1021 = vld [vmem:[%s18 + $0xe0] sm:$0xff]
    %v1022 = vld [vmem:[%s18 + $0xe8] sm:$0xff]
    %v1023 = vld [vmem:[%s18 + $0xf0] sm:$0xff]
    %v1024 = vld [vmem:[%s18 + $0xf8] sm:$0xff]
    %v1025 = vld [vmem:[%s18 + $0x100] sm:$0xff]
    %v1026 = vld [vmem:[%s18 + $0x108] sm:$0xff]
    %v1027 = vld [vmem:[%s18 + $0x110] sm:$0xff]
    %v1028 = vld [vmem:[%s18 + $0x118] sm:$0xff]
    %v1029 = vld [vmem:[%s18 + $0x120] sm:$0xff]
    %v1030 = vld [vmem:[%s18 + $0x128] sm:$0xff]
    %v1031 = vld [vmem:[%s18 + $0x130] sm:$0xff]
    %v1032 = vld [vmem:[%s18 + $0x138] sm:$0xff]
    %v1033 = vld [vmem:[%s18 + $0x140] sm:$0xff]
    %v1034 = vld [vmem:[%s18 + $0x148] sm:$0xff]
    %v1035 = vld [vmem:[%s18 + $0x150] sm:$0xff]
    %v1036 = vld [vmem:[%s18 + $0x158] sm:$0xff]
    %v1037 = vld [vmem:[%s18 + $0x160] sm:$0xff]
    %v1038 = vld [vmem:[%s18 + $0x168] sm:$0xff]
    %v1039 = vld [vmem:[%s18 + $0x170] sm:$0xff]
    %v1040 = vld [vmem:[%s18 + $0x178] sm:$0xff]
    %v1041 = vld [vmem:[%s18 + $0x180] sm:$0xff]
    %v1042 = vld [vmem:[%s18 + $0x188] sm:$0xff]
    %v1043 = vld [vmem:[%s18 + $0x190] sm:$0xff]
    %v1044 = vld [vmem:[%s18 + $0x198] sm:$0xff]
    %v1045 = vld [vmem:[%s18 + $0x1a0] sm:$0xff]
    %v1046 = vld [vmem:[%s18 + $0x1a8] sm:$0xff]
    %v1047 = vld [vmem:[%s18 + $0x1b0] sm:$0xff]
    %v1048 = vld [vmem:[%s18 + $0x1b8] sm:$0xff]
    %v1049 = vld [vmem:[%s18 + $0x1c0] sm:$0xff]
    %v1050 = vld [vmem:[%s18 + $0x1c8] sm:$0xff]
    %v1051 = vld [vmem:[%s18 + $0x1d0] sm:$0xff]
    %v1052 = vld [vmem:[%s18 + $0x1d8] sm:$0xff]
    %v1053 = vld [vmem:[%s18 + $0x1e0] sm:$0xff]
    %v1054 = vld [vmem:[%s18 + $0x1e8] sm:$0xff]
    %v1055 = vld [vmem:[%s18 + $0x1f0] sm:$0xff]
    %v1056 = vld [vmem:[%s18 + $0x1f8] sm:$0xff]
    %v1057 = vld [vmem:[%s19] sm:$0xff]
    %v1058 = vld [vmem:[%s19 + $0x8] sm:$0xff]
    %v1059 = vld [vmem:[%s20] sm:$0xff]
    %v1060 = vld [vmem:[%s20 + $0x8] sm:$0xff]
    %v1061 = vld [vmem:[%s20 + $0x10] sm:$0xff]
    %v1062 = vld [vmem:[%s20 + $0x18] sm:$0xff]
    %v1063 = vld [vmem:[%s20 + $0x20] sm:$0xff]
    %v1064 = vld [vmem:[%s20 + $0x28] sm:$0xff]
    %v1065 = vld [vmem:[%s20 + $0x30] sm:$0xff]
    %v1066 = vld [vmem:[%s20 + $0x38] sm:$0xff]
    %v1067 = vld [vmem:[%s20 + $0x40] sm:$0xff]
    %v1068 = vld [vmem:[%s20 + $0x48] sm:$0xff]
    %v1069 = vld [vmem:[%s20 + $0x50] sm:$0xff]
    %v1070 = vld [vmem:[%s20 + $0x58] sm:$0xff]
    %v1071 = vld [vmem:[%s20 + $0x60] sm:$0xff]
    %v1072 = vld [vmem:[%s20 + $0x68] sm:$0xff]
    %v1073 = vld [vmem:[%s20 + $0x70] sm:$0xff]
    %v1074 = vld [vmem:[%s20 + $0x78] sm:$0xff]
    %v1075 = vld [vmem:[%s20 + $0x80] sm:$0xff]
    %v1076 = vld [vmem:[%s20 + $0x88] sm:$0xff]
    %v1077 = vld [vmem:[%s20 + $0x90] sm:$0xff]
    %v1078 = vld [vmem:[%s20 + $0x98] sm:$0xff]
    %v1079 = vld [vmem:[%s20 + $0xa0] sm:$0xff]
    %v1080 = vld [vmem:[%s20 + $0xa8] sm:$0xff]
    %v1081 = vld [vmem:[%s20 + $0xb0] sm:$0xff]
    %v1082 = vld [vmem:[%s20 + $0xb8] sm:$0xff]
    %v1083 = vld [vmem:[%s20 + $0xc0] sm:$0xff]
    %v1084 = vld [vmem:[%s20 + $0xc8] sm:$0xff]
    %v1085 = vld [vmem:[%s20 + $0xd0] sm:$0xff]
    %v1086 = vld [vmem:[%s20 + $0xd8] sm:$0xff]
    %v1087 = vld [vmem:[%s20 + $0xe0] sm:$0xff]
    %v1088 = vld [vmem:[%s20 + $0xe8] sm:$0xff]
    %v1089 = vld [vmem:[%s20 + $0xf0] sm:$0xff]
    %v1090 = vld [vmem:[%s20 + $0xf8] sm:$0xff]
    %v1091 = vld [vmem:[%s20 + $0x100] sm:$0xff]
    %v1092 = vld [vmem:[%s20 + $0x108] sm:$0xff]
    %v1093 = vld [vmem:[%s20 + $0x110] sm:$0xff]
    %v1094 = vld [vmem:[%s20 + $0x118] sm:$0xff]
    %v1095 = vld [vmem:[%s20 + $0x120] sm:$0xff]
    %v1096 = vld [vmem:[%s20 + $0x128] sm:$0xff]
    %v1097 = vld [vmem:[%s20 + $0x130] sm:$0xff]
    %v1098 = vld [vmem:[%s20 + $0x138] sm:$0xff]
    %v1099 = vld [vmem:[%s20 + $0x140] sm:$0xff]
    %v1100 = vld [vmem:[%s20 + $0x148] sm:$0xff]
    %v1101 = vld [vmem:[%s20 + $0x150] sm:$0xff]
    %v1102 = vld [vmem:[%s20 + $0x158] sm:$0xff]
    %v1103 = vld [vmem:[%s20 + $0x160] sm:$0xff]
    %v1104 = vld [vmem:[%s20 + $0x168] sm:$0xff]
    %v1105 = vld [vmem:[%s20 + $0x170] sm:$0xff]
    %v1106 = vld [vmem:[%s20 + $0x178] sm:$0xff]
    %v1107 = vld [vmem:[%s20 + $0x180] sm:$0xff]
    %v1108 = vld [vmem:[%s20 + $0x188] sm:$0xff]
    %v1109 = vld [vmem:[%s20 + $0x190] sm:$0xff]
    %v1110 = vld [vmem:[%s20 + $0x198] sm:$0xff]
    %v1111 = vld [vmem:[%s20 + $0x1a0] sm:$0xff]
    %v1112 = vld [vmem:[%s20 + $0x1a8] sm:$0xff]
    %v1113 = vld [vmem:[%s20 + $0x1b0] sm:$0xff]
    %v1114 = vld [vmem:[%s20 + $0x1b8] sm:$0xff]
    %v1115 = vld [vmem:[%s20 + $0x1c0] sm:$0xff]
    %v1116 = vld [vmem:[%s20 + $0x1c8] sm:$0xff]
    %v1117 = vld [vmem:[%s20 + $0x1d0] sm:$0xff]
    %v1118 = vld [vmem:[%s20 + $0x1d8] sm:$0xff]
    %v1119 = vld [vmem:[%s20 + $0x1e0] sm:$0xff]
    %v1120 = vld [vmem:[%s20 + $0x1e8] sm:$0xff]
    %v1121 = vld [vmem:[%s20 + $0x1f0] sm:$0xff]
    %v1122 = vld [vmem:[%s20 + $0x1f8] sm:$0xff]
    %v1123 = vld [vmem:[%s20 + $0x200] sm:$0xff]
    %v1124 = vld [vmem:[%s20 + $0x208] sm:$0xff]
    %v1125 = vld [vmem:[%s20 + $0x210] sm:$0xff]
    %v1126 = vld [vmem:[%s20 + $0x218] sm:$0xff]
    %v1127 = vld [vmem:[%s20 + $0x220] sm:$0xff]
    %v1128 = vld [vmem:[%s20 + $0x228] sm:$0xff]
    %v1129 = vld [vmem:[%s20 + $0x230] sm:$0xff]
    %v1130 = vld [vmem:[%s20 + $0x238] sm:$0xff]
    %v1131 = vld [vmem:[%s20 + $0x240] sm:$0xff]
    %v1132 = vld [vmem:[%s20 + $0x248] sm:$0xff]
    %v1133 = vld [vmem:[%s20 + $0x250] sm:$0xff]
    %v1134 = vld [vmem:[%s20 + $0x258] sm:$0xff]
    %v1135 = vld [vmem:[%s20 + $0x260] sm:$0xff]
    %v1136 = vld [vmem:[%s20 + $0x268] sm:$0xff]
    %v1137 = vld [vmem:[%s20 + $0x270] sm:$0xff]
    %v1138 = vld [vmem:[%s20 + $0x278] sm:$0xff]
    %v1139 = vld [vmem:[%s20 + $0x280] sm:$0xff]
    %v1140 = vld [vmem:[%s20 + $0x288] sm:$0xff]
    %v1141 = vld [vmem:[%s20 + $0x290] sm:$0xff]
    %v1142 = vld [vmem:[%s20 + $0x298] sm:$0xff]
    %v1143 = vld [vmem:[%s20 + $0x2a0] sm:$0xff]
    %v1144 = vld [vmem:[%s20 + $0x2a8] sm:$0xff]
    %v1145 = vld [vmem:[%s20 + $0x2b0] sm:$0xff]
    %v1146 = vld [vmem:[%s20 + $0x2b8] sm:$0xff]
    %v1147 = vld [vmem:[%s20 + $0x2c0] sm:$0xff]
    %v1148 = vld [vmem:[%s20 + $0x2c8] sm:$0xff]
    %v1149 = vld [vmem:[%s20 + $0x2d0] sm:$0xff]
    %v1150 = vld [vmem:[%s20 + $0x2d8] sm:$0xff]
    %v1151 = vld [vmem:[%s20 + $0x2e0] sm:$0xff]
    %v1152 = vld [vmem:[%s20 + $0x2e8] sm:$0xff]
    %v1153 = vld [vmem:[%s20 + $0x2f0] sm:$0xff]
    %v1154 = vld [vmem:[%s20 + $0x2f8] sm:$0xff]
    %v1155 = vld [vmem:[%s20 + $0x300] sm:$0xff]
    %v1156 = vld [vmem:[%s20 + $0x308] sm:$0xff]
    %v1157 = vld [vmem:[%s20 + $0x310] sm:$0xff]
    %v1158 = vld [vmem:[%s20 + $0x318] sm:$0xff]
    %v1159 = vld [vmem:[%s20 + $0x320] sm:$0xff]
    %v1160 = vld [vmem:[%s20 + $0x328] sm:$0xff]
    %v1161 = vld [vmem:[%s20 + $0x330] sm:$0xff]
    %v1162 = vld [vmem:[%s20 + $0x338] sm:$0xff]
    %v1163 = vld [vmem:[%s20 + $0x340] sm:$0xff]
    %v1164 = vld [vmem:[%s20 + $0x348] sm:$0xff]
    %v1165 = vld [vmem:[%s20 + $0x350] sm:$0xff]
    %v1166 = vld [vmem:[%s20 + $0x358] sm:$0xff]
    %v1167 = vld [vmem:[%s20 + $0x360] sm:$0xff]
    %v1168 = vld [vmem:[%s20 + $0x368] sm:$0xff]
    %v1169 = vld [vmem:[%s20 + $0x370] sm:$0xff]
    %v1170 = vld [vmem:[%s20 + $0x378] sm:$0xff]
    %v1171 = vld [vmem:[%s20 + $0x380] sm:$0xff]
    %v1172 = vld [vmem:[%s20 + $0x388] sm:$0xff]
    %v1173 = vld [vmem:[%s20 + $0x390] sm:$0xff]
    %v1174 = vld [vmem:[%s20 + $0x398] sm:$0xff]
    %v1175 = vld [vmem:[%s20 + $0x3a0] sm:$0xff]
    %v1176 = vld [vmem:[%s20 + $0x3a8] sm:$0xff]
    %v1177 = vld [vmem:[%s20 + $0x3b0] sm:$0xff]
    %v1178 = vld [vmem:[%s20 + $0x3b8] sm:$0xff]
    %v1179 = vld [vmem:[%s20 + $0x3c0] sm:$0xff]
    %v1180 = vld [vmem:[%s20 + $0x3c8] sm:$0xff]
    %v1181 = vld [vmem:[%s20 + $0x3d0] sm:$0xff]
    %v1182 = vld [vmem:[%s20 + $0x3d8] sm:$0xff]
    %v1183 = vld [vmem:[%s20 + $0x3e0] sm:$0xff]
    %v1184 = vld [vmem:[%s20 + $0x3e8] sm:$0xff]
    %v1185 = vld [vmem:[%s20 + $0x3f0] sm:$0xff]
    %v1186 = vld [vmem:[%s20 + $0x3f8] sm:$0xff]
    %v1187 = vld [vmem:[%s20 + $0x400] sm:$0xff]
    %v1188 = vld [vmem:[%s20 + $0x408] sm:$0xff]
    %v1189 = vld [vmem:[%s20 + $0x410] sm:$0xff]
    %v1190 = vld [vmem:[%s20 + $0x418] sm:$0xff]
    %v1191 = vld [vmem:[%s20 + $0x420] sm:$0xff]
    %v1192 = vld [vmem:[%s20 + $0x428] sm:$0xff]
    %v1193 = vld [vmem:[%s20 + $0x430] sm:$0xff]
    %v1194 = vld [vmem:[%s20 + $0x438] sm:$0xff]
    %v1195 = vld [vmem:[%s20 + $0x440] sm:$0xff]
    %v1196 = vld [vmem:[%s20 + $0x448] sm:$0xff]
    %v1197 = vld [vmem:[%s20 + $0x450] sm:$0xff]
    %v1198 = vld [vmem:[%s20 + $0x458] sm:$0xff]
    %v1199 = vld [vmem:[%s20 + $0x460] sm:$0xff]
    %v1200 = vld [vmem:[%s20 + $0x468] sm:$0xff]
    %v1201 = vld [vmem:[%s20 + $0x470] sm:$0xff]
    %v1202 = vld [vmem:[%s20 + $0x478] sm:$0xff]
    %v1203 = vld [vmem:[%s20 + $0x480] sm:$0xff]
    %v1204 = vld [vmem:[%s20 + $0x488] sm:$0xff]
    %v1205 = vld [vmem:[%s20 + $0x490] sm:$0xff]
    %v1206 = vld [vmem:[%s20 + $0x498] sm:$0xff]
    %v1207 = vld [vmem:[%s20 + $0x4a0] sm:$0xff]
    %v1208 = vld [vmem:[%s20 + $0x4a8] sm:$0xff]
    %v1209 = vld [vmem:[%s20 + $0x4b0] sm:$0xff]
    %v1210 = vld [vmem:[%s20 + $0x4b8] sm:$0xff]
    %v1211 = vld [vmem:[%s20 + $0x4c0] sm:$0xff]
    %v1212 = vld [vmem:[%s20 + $0x4c8] sm:$0xff]
    %v1213 = vld [vmem:[%s20 + $0x4d0] sm:$0xff]
    %v1214 = vld [vmem:[%s20 + $0x4d8] sm:$0xff]
    %v1215 = vld [vmem:[%s20 + $0x4e0] sm:$0xff]
    %v1216 = vld [vmem:[%s20 + $0x4e8] sm:$0xff]
    %v1217 = vld [vmem:[%s20 + $0x4f0] sm:$0xff]
    %v1218 = vld [vmem:[%s20 + $0x4f8] sm:$0xff]
    %v1219 = vld [vmem:[%s20 + $0x500] sm:$0xff]
    %v1220 = vld [vmem:[%s20 + $0x508] sm:$0xff]
    %v1221 = vld [vmem:[%s20 + $0x510] sm:$0xff]
    %v1222 = vld [vmem:[%s20 + $0x518] sm:$0xff]
    %v1223 = vld [vmem:[%s20 + $0x520] sm:$0xff]
    %v1224 = vld [vmem:[%s20 + $0x528] sm:$0xff]
    %v1225 = vld [vmem:[%s20 + $0x530] sm:$0xff]
    %v1226 = vld [vmem:[%s20 + $0x538] sm:$0xff]
    %v1227 = vld [vmem:[%s20 + $0x540] sm:$0xff]
    %v1228 = vld [vmem:[%s20 + $0x548] sm:$0xff]
    %v1229 = vld [vmem:[%s20 + $0x550] sm:$0xff]
    %v1230 = vld [vmem:[%s20 + $0x558] sm:$0xff]
    %v1231 = vld [vmem:[%s20 + $0x560] sm:$0xff]
    %v1232 = vld [vmem:[%s20 + $0x568] sm:$0xff]
    %v1233 = vld [vmem:[%s20 + $0x570] sm:$0xff]
    %v1234 = vld [vmem:[%s20 + $0x578] sm:$0xff]
    %v1235 = vld [vmem:[%s20 + $0x580] sm:$0xff]
    %v1236 = vld [vmem:[%s20 + $0x588] sm:$0xff]
    %v1237 = vld [vmem:[%s20 + $0x590] sm:$0xff]
    %v1238 = vld [vmem:[%s20 + $0x598] sm:$0xff]
    %v1239 = vld [vmem:[%s20 + $0x5a0] sm:$0xff]
    %v1240 = vld [vmem:[%s20 + $0x5a8] sm:$0xff]
    %v1241 = vld [vmem:[%s20 + $0x5b0] sm:$0xff]
    %v1242 = vld [vmem:[%s20 + $0x5b8] sm:$0xff]
    %v1243 = vld [vmem:[%s20 + $0x5c0] sm:$0xff]
    %v1244 = vld [vmem:[%s20 + $0x5c8] sm:$0xff]
    %v1245 = vld [vmem:[%s20 + $0x5d0] sm:$0xff]
    %v1246 = vld [vmem:[%s20 + $0x5d8] sm:$0xff]
    %v1247 = vld [vmem:[%s20 + $0x5e0] sm:$0xff]
    %v1248 = vld [vmem:[%s20 + $0x5e8] sm:$0xff]
    %v1249 = vld [vmem:[%s20 + $0x5f0] sm:$0xff]
    %v1250 = vld [vmem:[%s20 + $0x5f8] sm:$0xff]
    %v1251 = vld [vmem:[%s20 + $0x600] sm:$0xff]
    %v1252 = vld [vmem:[%s20 + $0x608] sm:$0xff]
    %v1253 = vld [vmem:[%s20 + $0x610] sm:$0xff]
    %v1254 = vld [vmem:[%s20 + $0x618] sm:$0xff]
    %v1255 = vld [vmem:[%s20 + $0x620] sm:$0xff]
    %v1256 = vld [vmem:[%s20 + $0x628] sm:$0xff]
    %v1257 = vld [vmem:[%s20 + $0x630] sm:$0xff]
    %v1258 = vld [vmem:[%s20 + $0x638] sm:$0xff]
    %v1259 = vld [vmem:[%s20 + $0x640] sm:$0xff]
    %v1260 = vld [vmem:[%s20 + $0x648] sm:$0xff]
    %v1261 = vld [vmem:[%s20 + $0x650] sm:$0xff]
    %v1262 = vld [vmem:[%s20 + $0x658] sm:$0xff]
    %v1263 = vld [vmem:[%s20 + $0x660] sm:$0xff]
    %v1264 = vld [vmem:[%s20 + $0x668] sm:$0xff]
    %v1265 = vld [vmem:[%s20 + $0x670] sm:$0xff]
    %v1266 = vld [vmem:[%s20 + $0x678] sm:$0xff]
    %v1267 = vld [vmem:[%s20 + $0x680] sm:$0xff]
    %v1268 = vld [vmem:[%s20 + $0x688] sm:$0xff]
    %v1269 = vld [vmem:[%s20 + $0x690] sm:$0xff]
    %v1270 = vld [vmem:[%s20 + $0x698] sm:$0xff]
    %v1271 = vld [vmem:[%s20 + $0x6a0] sm:$0xff]
    %v1272 = vld [vmem:[%s20 + $0x6a8] sm:$0xff]
    %v1273 = vld [vmem:[%s20 + $0x6b0] sm:$0xff]
    %v1274 = vld [vmem:[%s20 + $0x6b8] sm:$0xff]
    %v1275 = vld [vmem:[%s20 + $0x6c0] sm:$0xff]
    %v1276 = vld [vmem:[%s20 + $0x6c8] sm:$0xff]
    %v1277 = vld [vmem:[%s20 + $0x6d0] sm:$0xff]
    %v1278 = vld [vmem:[%s20 + $0x6d8] sm:$0xff]
    %v1279 = vld [vmem:[%s20 + $0x6e0] sm:$0xff]
    %v1280 = vld [vmem:[%s20 + $0x6e8] sm:$0xff]
    %v1281 = vld [vmem:[%s20 + $0x6f0] sm:$0xff]
    %v1282 = vld [vmem:[%s20 + $0x6f8] sm:$0xff]
    %v1283 = vld [vmem:[%s20 + $0x700] sm:$0xff]
    %v1284 = vld [vmem:[%s20 + $0x708] sm:$0xff]
    %v1285 = vld [vmem:[%s20 + $0x710] sm:$0xff]
    %v1286 = vld [vmem:[%s20 + $0x718] sm:$0xff]
    %v1287 = vld [vmem:[%s20 + $0x720] sm:$0xff]
    %v1288 = vld [vmem:[%s20 + $0x728] sm:$0xff]
    %v1289 = vld [vmem:[%s20 + $0x730] sm:$0xff]
    %v1290 = vld [vmem:[%s20 + $0x738] sm:$0xff]
    %v1291 = vld [vmem:[%s20 + $0x740] sm:$0xff]
    %v1292 = vld [vmem:[%s20 + $0x748] sm:$0xff]
    %v1293 = vld [vmem:[%s20 + $0x750] sm:$0xff]
    %v1294 = vld [vmem:[%s20 + $0x758] sm:$0xff]
    %v1295 = vld [vmem:[%s20 + $0x760] sm:$0xff]
    %v1296 = vld [vmem:[%s20 + $0x768] sm:$0xff]
    %v1297 = vld [vmem:[%s20 + $0x770] sm:$0xff]
    %v1298 = vld [vmem:[%s20 + $0x778] sm:$0xff]
    %v1299 = vld [vmem:[%s20 + $0x780] sm:$0xff]
    %v1300 = vld [vmem:[%s20 + $0x788] sm:$0xff]
    %v1301 = vld [vmem:[%s20 + $0x790] sm:$0xff]
    %v1302 = vld [vmem:[%s20 + $0x798] sm:$0xff]
    %v1303 = vld [vmem:[%s20 + $0x7a0] sm:$0xff]
    %v1304 = vld [vmem:[%s20 + $0x7a8] sm:$0xff]
    %v1305 = vld [vmem:[%s20 + $0x7b0] sm:$0xff]
    %v1306 = vld [vmem:[%s20 + $0x7b8] sm:$0xff]
    %v1307 = vld [vmem:[%s20 + $0x7c0] sm:$0xff]
    %v1308 = vld [vmem:[%s20 + $0x7c8] sm:$0xff]
    %v1309 = vld [vmem:[%s20 + $0x7d0] sm:$0xff]
    %v1310 = vld [vmem:[%s20 + $0x7d8] sm:$0xff]
    %v1311 = vld [vmem:[%s20 + $0x7e0] sm:$0xff]
    %v1312 = vld [vmem:[%s20 + $0x7e8] sm:$0xff]
    %v1313 = vld [vmem:[%s20 + $0x7f0] sm:$0xff]
    %v1314 = vld [vmem:[%s20 + $0x7f8] sm:$0xff]
    %v1315 = vld [vmem:[%s21] sm:$0x1]
    %v1316 = vld [vmem:[%s22] sm:$0x1]
    %v1317 = vld [vmem:[%s23] sm:$0x1]
    %v1319 = vlaneseq
    %v1320 = vshrl.u32 %v1319, 7
    %v1321 = vsub.s32 0, %v1320
    %v1322 = vrot.slane %v985, %v1321
    %vm1324 = vcmask 261120
    %v1326 = vsel %vm1324, %v978, 0
    %v1328 = vsel %vm1324, %v971, 0
    %1330 = vmatprep.subr.mxu0 0.0
    %1331 = vmatpush1.msra.mxu0 %v981
    %1332 = vmatprep.subr.mxu0 0.0
    %1333 = vmatpush1.msra.mxu0 %v982
    %1334 = vmatprep.subr.mxu0 0.0
    %1335 = vmatpush1.msra.mxu0 %v983
    %1336 = vmatprep.subr.mxu0 0.0
    %1337 = vmatpush1.msra.mxu0 %v984
    %1338 = vmatprep.subr.mxu0 0.0
    %1339 = vmatpush1.msra.mxu0 0.0
    %1340 = vmatprep.subr.mxu0 0.0
    %1341 = vmatpush1.msra.mxu0 0.0
    %1342 = vmatprep.subr.mxu0 0.0
    %1343 = vmatpush1.msra.mxu0 0.0
    %1344 = vmatprep.subr.mxu0 0.0
    %1345 = vmatpush1.msra.mxu0 0.0
    %1346 = vmatprep.subr.mxu0 0.0
    %1347 = vmatpush1.msra.mxu0 0.0
    %1348 = vmatprep.subr.mxu0 0.0
    %1349 = vmatpush1.msra.mxu0 0.0
    %1350 = vmatprep.subr.mxu0 0.0
    %1351 = vmatpush1.msra.mxu0 0.0
    %1352 = vmatprep.subr.mxu0 0.0
    %1353 = vmatpush1.msra.mxu0 0.0
    %1354 = vmatprep.subr.mxu0 0.0
    %1355 = vmatpush1.msra.mxu0 0.0
    %1356 = vmatprep.subr.mxu0 0.0
    %1357 = vmatpush1.msra.mxu0 0.0
    %1358 = vmatprep.subr.mxu0 0.0
    %1359 = vmatpush1.msra.mxu0 0.0
    %1360 = vmatprep.subr.mxu0 0.0
    %1361 = vmatpush1.msra.mxu0 0.0
    %1362 = vmatprep.subr.mxu0 0.0
    %1363 = vmatpush1.msra.mxu0 0.0
    %1364 = vmatprep.subr.mxu0 0.0
    %1365 = vmatpush1.msra.mxu0 0.0
    %1366 = vmatprep.subr.mxu0 0.0
    %1367 = vmatpush1.msra.mxu0 0.0
    %1368 = vmatprep.subr.mxu0 0.0
    %1369 = vmatpush1.msra.mxu0 0.0
    %1370 = vmatprep.subr.mxu0 0.0
    %1371 = vmatpush1.msra.mxu0 0.0
    %1372 = vmatprep.subr.mxu0 0.0
    %1373 = vmatpush1.msra.mxu0 0.0
    %1374 = vmatprep.subr.mxu0 0.0
    %1375 = vmatpush1.msra.mxu0 0.0
    %1376 = vmatprep.subr.mxu0 0.0
    %1377 = vmatpush1.msra.mxu0 0.0
    %1378 = vmatprep.subr.mxu0 0.0
    %1379 = vmatpush1.msra.mxu0 0.0
    %1380 = vmatprep.subr.mxu0 0.0
    %1381 = vmatpush1.msra.mxu0 0.0
    %1382 = vmatprep.subr.mxu0 0.0
    %1383 = vmatpush1.msra.mxu0 0.0
    %1384 = vmatprep.subr.mxu0 0.0
    %1385 = vmatpush1.msra.mxu0 0.0
    %1386 = vmatprep.subr.mxu0 0.0
    %1387 = vmatpush1.msra.mxu0 0.0
    %1388 = vmatprep.subr.mxu0 0.0
    %1389 = vmatpush1.msra.mxu0 0.0
    %1390 = vmatprep.subr.mxu0 0.0
    %1391 = vmatpush1.msra.mxu0 0.0
    %1392 = vmatprep.subr.mxu0 0.0
    %1393 = vmatpush1.msra.mxu0 0.0
    %1394 = vmatprep.mubr.f32.mxu0 0.0
    %1395 = vmatmul.mubr.f32.gmra.mrb[0].mxu0 %v1326
    %v1396 = vpop.f32.mrb[0].mxu0
    %v1397 = vadd.f32 %v1322, %v1396
    %v1398 = vpop.f32.mrb[0].mxu0
    %1399 = vmatprep.mubr.f32.mxu0 0.0
    %1400 = vmatmul.mubr.f32.gmra.mrb[0].mxu0 %v1328
    %v1401 = vpop.f32.mrb[0].mxu0
    %v1402 = vadd.f32 %v1322, %v1401
    %v1403 = vpop.f32.mrb[0].mxu0
    %1404 = vdwg.mxu0
    %1407 = vrot.lane.b32.xlu0 %v1397, 96
    %v1408 = vpop.permute.xlu0 %1407
    %1409 = vrot.lane.b32.xlu0 %v1402, 96
    %v1410 = vpop.permute.xlu0 %1409
    %vm1411 = vcmask 64512
    %v1412 = vsel %vm1411, %v1397, 0
    %v1414 = vsel %vm1411, %v1402, 0
    %v1416 = vsel %vm1411, %v1408, 0
    %v1418 = vsel %vm1411, %v1410, 0
    %1420 = vmatprep.subr.mxu0 0.0
    %1421 = vmatpush1.xpose.msra.mxu0 %v1416
    %1422 = vmatprep.subr.mxu0 0.0
    %1423 = vmatpush1.xpose.msra.mxu0 %v1418
    %1424 = vmatprep.subr.mxu0 0.0
    %1425 = vmatpush1.xpose.msra.mxu0 0.0
    %1426 = vmatprep.subr.mxu0 0.0
    %1427 = vmatpush1.xpose.msra.mxu0 0.0
    %1428 = vmatprep.subr.mxu0 0.0
    %1429 = vmatpush1.xpose.msra.mxu0 0.0
    %1430 = vmatprep.subr.mxu0 0.0
    %1431 = vmatpush1.xpose.msra.mxu0 0.0
    %1432 = vmatprep.subr.mxu0 0.0
    %1433 = vmatpush1.xpose.msra.mxu0 0.0
    %1434 = vmatprep.subr.mxu0 0.0
    %1435 = vmatpush1.xpose.msra.mxu0 0.0
    %1436 = vmatprep.subr.mxu0 0.0
    %1437 = vmatpush1.xpose.msra.mxu0 0.0
    %1438 = vmatprep.subr.mxu0 0.0
    %1439 = vmatpush1.xpose.msra.mxu0 0.0
    %1440 = vmatprep.subr.mxu0 0.0
    %1441 = vmatpush1.xpose.msra.mxu0 0.0
    %1442 = vmatprep.subr.mxu0 0.0
    %1443 = vmatpush1.xpose.msra.mxu0 0.0
    %1444 = vmatprep.subr.mxu0 0.0
    %1445 = vmatpush1.xpose.msra.mxu0 0.0
    %1446 = vmatprep.subr.mxu0 0.0
    %1447 = vmatpush1.xpose.msra.mxu0 0.0
    %1448 = vmatprep.subr.mxu0 0.0
    %1449 = vmatpush1.xpose.msra.mxu0 0.0
    %1450 = vmatprep.subr.mxu0 0.0
    %1451 = vmatpush1.xpose.msra.mxu0 0.0
    %1452 = vmatprep.subr.mxu0 0.0
    %1453 = vmatpush1.xpose.msra.mxu0 0.0
    %1454 = vmatprep.subr.mxu0 0.0
    %1455 = vmatpush1.xpose.msra.mxu0 0.0
    %1456 = vmatprep.subr.mxu0 0.0
    %1457 = vmatpush1.xpose.msra.mxu0 0.0
    %1458 = vmatprep.subr.mxu0 0.0
    %1459 = vmatpush1.xpose.msra.mxu0 0.0
    %1460 = vmatprep.subr.mxu0 0.0
    %1461 = vmatpush1.xpose.msra.mxu0 0.0
    %1462 = vmatprep.subr.mxu0 0.0
    %1463 = vmatpush1.xpose.msra.mxu0 0.0
    %1464 = vmatprep.subr.mxu0 0.0
    %1465 = vmatpush1.xpose.msra.mxu0 0.0
    %1466 = vmatprep.subr.mxu0 0.0
    %1467 = vmatpush1.xpose.msra.mxu0 0.0
    %1468 = vmatprep.subr.mxu0 0.0
    %1469 = vmatpush1.xpose.msra.mxu0 0.0
    %1470 = vmatprep.subr.mxu0 0.0
    %1471 = vmatpush1.xpose.msra.mxu0 0.0
    %1472 = vmatprep.subr.mxu0 0.0
    %1473 = vmatpush1.xpose.msra.mxu0 0.0
    %1474 = vmatprep.subr.mxu0 0.0
    %1475 = vmatpush1.xpose.msra.mxu0 0.0
    %1476 = vmatprep.subr.mxu0 0.0
    %1477 = vmatpush1.xpose.msra.mxu0 0.0
    %1478 = vmatprep.subr.mxu0 0.0
    %1479 = vmatpush1.xpose.msra.mxu0 0.0
    %1480 = vmatprep.subr.mxu0 0.0
    %1481 = vmatpush1.xpose.msra.mxu0 0.0
    %1482 = vmatprep.subr.mxu0 0.0
    %1483 = vmatpush1.xpose.msra.mxu0 0.0
    %1484 = vmatprep.mubr.f32.mxu0 0.0
    %1485 = vmatmul.mubr.f32.gmra.mrb[0].mxu0 %v1412
    %v1486 = vpop.f32.mrb[0].mxu0
    %v1487 = vadd.f32 0.0, %v1486
    %v1488 = vpop.f32.mrb[0].mxu0
    %1489 = vmatprep.mubr.f32.mxu0 0.0
    %1490 = vmatmul.mubr.f32.gmra.mrb[0].mxu0 %v1414
    %v1491 = vpop.f32.mrb[0].mxu0
    %v1492 = vadd.f32 0.0, %v1491
    %v1493 = vpop.f32.mrb[0].mxu0
    %1494 = vdwg.mxu0
    %v1495 = vmul.f32 %v1487, 0.35355338
    %v1496 = vmul.f32 %v1492, 0.35355338
    %v1497 = vadd.f32 %v1495, %v979
    %v1498 = vadd.f32 %v1496, %v980
    %vm1499 = vcmask 80896
    %v1500 = vsel %vm1499, %v1497, -inf
    %1501 = vmax.xlane.f32.xlu0 %v1500
    %v1502 = vpop.xlane.xlu0 %1501
    %vm1503 = vcmask 74752
    %v1504 = vsel %vm1503, %v1498, -inf
    %1505 = vmax.xlane.f32.xlu0 %v1504
    %v1506 = vpop.xlane.xlu0 %1505
    %v1507 = vsub.f32 %v1497, %v1502
    %v1508 = vsub.f32 %v1498, %v1506
    %v1509 = vmul.f32 %v1507, 1.442695
    %v1510 = vpow.pop %v1509
    %v1511 = vmul.f32 %v1508, 1.442695
    %v1512 = vpow.pop %v1511
    %v1513 = vsel %vm1499, %v1510, 0.0
    %1514 = vadd.xlane.f32.xlu0 %v1513
    %v1515 = vpop.xlane.xlu0 %1514
    %v1516 = vsel %vm1503, %v1512, 0.0
    %1517 = vadd.xlane.f32.xlu0 %v1516
    %v1518 = vpop.xlane.xlu0 %1517
    %v1519 = vrcp.pop %v1515
    %v1520 = vrcp.pop %v1518
    %v1521 = vmul.f32 %v1510, %v1519
    %v1522 = vmul.f32 %v1512, %v1520
    %1523 = vrot.lane.b32.xlu0 %v1397, 64
    %v1524 = vpop.permute.xlu0 %1523
    %1525 = vrot.lane.b32.xlu0 %v1402, 64
    %v1526 = vpop.permute.xlu0 %1525
    %v1529 = vsel %vm1499, %v1521, 0
    %v1532 = vsel %vm1499, %v1522, 0
    %vm1534 = vcmask 1041408
    %v1535 = vsel %vm1534, %v1526, 0
    %1537 = vmatprep.subr.mxu0 0.0
    %1538 = vmatpush1.msra.mxu0 %v1524
    %1539 = vmatprep.subr.mxu0 0.0
    %1540 = vmatpush1.msra.mxu0 %v1535
    %1541 = vmatprep.subr.mxu0 0.0
    %1542 = vmatpush1.msra.mxu0 0.0
    %1543 = vmatprep.subr.mxu0 0.0
    %1544 = vmatpush1.msra.mxu0 0.0
    %1545 = vmatprep.subr.mxu0 0.0
    %1546 = vmatpush1.msra.mxu0 0.0
    %1547 = vmatprep.subr.mxu0 0.0
    %1548 = vmatpush1.msra.mxu0 0.0
    %1549 = vmatprep.subr.mxu0 0.0
    %1550 = vmatpush1.msra.mxu0 0.0
    %1551 = vmatprep.subr.mxu0 0.0
    %1552 = vmatpush1.msra.mxu0 0.0
    %1553 = vmatprep.subr.mxu0 0.0
    %1554 = vmatpush1.msra.mxu0 0.0
    %1555 = vmatprep.subr.mxu0 0.0
    %1556 = vmatpush1.msra.mxu0 0.0
    %1557 = vmatprep.subr.mxu0 0.0
    %1558 = vmatpush1.msra.mxu0 0.0
    %1559 = vmatprep.subr.mxu0 0.0
    %1560 = vmatpush1.msra.mxu0 0.0
    %1561 = vmatprep.subr.mxu0 0.0
    %1562 = vmatpush1.msra.mxu0 0.0
    %1563 = vmatprep.subr.mxu0 0.0
    %1564 = vmatpush1.msra.mxu0 0.0
    %1565 = vmatprep.subr.mxu0 0.0
    %1566 = vmatpush1.msra.mxu0 0.0
    %1567 = vmatprep.subr.mxu0 0.0
    %1568 = vmatpush1.msra.mxu0 0.0
    %1569 = vmatprep.subr.mxu0 0.0
    %1570 = vmatpush1.msra.mxu0 0.0
    %1571 = vmatprep.subr.mxu0 0.0
    %1572 = vmatpush1.msra.mxu0 0.0
    %1573 = vmatprep.subr.mxu0 0.0
    %1574 = vmatpush1.msra.mxu0 0.0
    %1575 = vmatprep.subr.mxu0 0.0
    %1576 = vmatpush1.msra.mxu0 0.0
    %1577 = vmatprep.subr.mxu0 0.0
    %1578 = vmatpush1.msra.mxu0 0.0
    %1579 = vmatprep.subr.mxu0 0.0
    %1580 = vmatpush1.msra.mxu0 0.0
    %1581 = vmatprep.subr.mxu0 0.0
    %1582 = vmatpush1.msra.mxu0 0.0
    %1583 = vmatprep.subr.mxu0 0.0
    %1584 = vmatpush1.msra.mxu0 0.0
    %1585 = vmatprep.subr.mxu0 0.0
    %1586 = vmatpush1.msra.mxu0 0.0
    %1587 = vmatprep.subr.mxu0 0.0
    %1588 = vmatpush1.msra.mxu0 0.0
    %1589 = vmatprep.subr.mxu0 0.0
    %1590 = vmatpush1.msra.mxu0 0.0
    %1591 = vmatprep.subr.mxu0 0.0
    %1592 = vmatpush1.msra.mxu0 0.0
    %1593 = vmatprep.subr.mxu0 0.0
    %1594 = vmatpush1.msra.mxu0 0.0
    %1595 = vmatprep.subr.mxu0 0.0
    %1596 = vmatpush1.msra.mxu0 0.0
    %1597 = vmatprep.subr.mxu0 0.0
    %1598 = vmatpush1.msra.mxu0 0.0
    %1599 = vmatprep.subr.mxu0 0.0
    %1600 = vmatpush1.msra.mxu0 0.0
    %1601 = vmatprep.mubr.f32.mxu0 0.0
    %1602 = vmatmul.mubr.f32.gmra.mrb[0].mxu0 %v1529
    %v1603 = vpop.f32.mrb[0].mxu0
    %v1604 = vadd.f32 0.0, %v1603
    %v1605 = vpop.f32.mrb[0].mxu0
    %1606 = vmatprep.mubr.f32.mxu0 0.0
    %1607 = vmatmul.mubr.f32.gmra.mrb[0].mxu0 %v1532
    %v1608 = vpop.f32.mrb[0].mxu0
    %v1609 = vadd.f32 0.0, %v1608
    %v1610 = vpop.f32.mrb[0].mxu0
    %1611 = vdwg.mxu0
    %1612 = vrot.lane.b32.xlu0 %v1397, 120
    %v1613 = vpop.permute.xlu0 %1612
    %1614 = vrot.lane.b32.xlu0 %v1402, 120
    %v1615 = vpop.permute.xlu0 %1614
    %1616 = vrot.lane.b32.xlu0 %v1397, 88
    %v1617 = vpop.permute.xlu0 %1616
    %1618 = vrot.lane.b32.xlu0 %v1402, 88
    %v1619 = vpop.permute.xlu0 %1618
    %v1620 = vsel %vm1411, %v1613, 0
    %v1622 = vsel %vm1411, %v1615, 0
    %v1624 = vsel %vm1411, %v1617, 0
    %v1626 = vsel %vm1411, %v1619, 0
    %1628 = vmatprep.subr.mxu0 0.0
    %1629 = vmatpush1.xpose.msra.mxu0 %v1624
    %1630 = vmatprep.subr.mxu0 0.0
    %1631 = vmatpush1.xpose.msra.mxu0 %v1626
    %1632 = vmatprep.subr.mxu0 0.0
    %1633 = vmatpush1.xpose.msra.mxu0 0.0
    %1634 = vmatprep.subr.mxu0 0.0
    %1635 = vmatpush1.xpose.msra.mxu0 0.0
    %1636 = vmatprep.subr.mxu0 0.0
    %1637 = vmatpush1.xpose.msra.mxu0 0.0
    %1638 = vmatprep.subr.mxu0 0.0
    %1639 = vmatpush1.xpose.msra.mxu0 0.0
    %1640 = vmatprep.subr.mxu0 0.0
    %1641 = vmatpush1.xpose.msra.mxu0 0.0
    %1642 = vmatprep.subr.mxu0 0.0
    %1643 = vmatpush1.xpose.msra.mxu0 0.0
    %1644 = vmatprep.subr.mxu0 0.0
    %1645 = vmatpush1.xpose.msra.mxu0 0.0
    %1646 = vmatprep.subr.mxu0 0.0
    %1647 = vmatpush1.xpose.msra.mxu0 0.0
    %1648 = vmatprep.subr.mxu0 0.0
    %1649 = vmatpush1.xpose.msra.mxu0 0.0
    %1650 = vmatprep.subr.mxu0 0.0
    %1651 = vmatpush1.xpose.msra.mxu0 0.0
    %1652 = vmatprep.subr.mxu0 0.0
    %1653 = vmatpush1.xpose.msra.mxu0 0.0
    %1654 = vmatprep.subr.mxu0 0.0
    %1655 = vmatpush1.xpose.msra.mxu0 0.0
    %1656 = vmatprep.subr.mxu0 0.0
    %1657 = vmatpush1.xpose.msra.mxu0 0.0
    %1658 = vmatprep.subr.mxu0 0.0
    %1659 = vmatpush1.xpose.msra.mxu0 0.0
    %1660 = vmatprep.subr.mxu0 0.0
    %1661 = vmatpush1.xpose.msra.mxu0 0.0
    %1662 = vmatprep.subr.mxu0 0.0
    %1663 = vmatpush1.xpose.msra.mxu0 0.0
    %1664 = vmatprep.subr.mxu0 0.0
    %1665 = vmatpush1.xpose.msra.mxu0 0.0
    %1666 = vmatprep.subr.mxu0 0.0
    %1667 = vmatpush1.xpose.msra.mxu0 0.0
    %1668 = vmatprep.subr.mxu0 0.0
    %1669 = vmatpush1.xpose.msra.mxu0 0.0
    %1670 = vmatprep.subr.mxu0 0.0
    %1671 = vmatpush1.xpose.msra.mxu0 0.0
    %1672 = vmatprep.subr.mxu0 0.0
    %1673 = vmatpush1.xpose.msra.mxu0 0.0
    %1674 = vmatprep.subr.mxu0 0.0
    %1675 = vmatpush1.xpose.msra.mxu0 0.0
    %1676 = vmatprep.subr.mxu0 0.0
    %1677 = vmatpush1.xpose.msra.mxu0 0.0
    %1678 = vmatprep.subr.mxu0 0.0
    %1679 = vmatpush1.xpose.msra.mxu0 0.0
    %1680 = vmatprep.subr.mxu0 0.0
    %1681 = vmatpush1.xpose.msra.mxu0 0.0
    %1682 = vmatprep.subr.mxu0 0.0
    %1683 = vmatpush1.xpose.msra.mxu0 0.0
    %1684 = vmatprep.subr.mxu0 0.0
    %1685 = vmatpush1.xpose.msra.mxu0 0.0
    %1686 = vmatprep.subr.mxu0 0.0
    %1687 = vmatpush1.xpose.msra.mxu0 0.0
    %1688 = vmatprep.subr.mxu0 0.0
    %1689 = vmatpush1.xpose.msra.mxu0 0.0
    %1690 = vmatprep.subr.mxu0 0.0
    %1691 = vmatpush1.xpose.msra.mxu0 0.0
    %1692 = vmatprep.mubr.f32.mxu0 0.0
    %1693 = vmatmul.mubr.f32.gmra.mrb[0].mxu0 %v1620
    %v1694 = vpop.f32.mrb[0].mxu0
    %v1695 = vadd.f32 0.0, %v1694
    %v1696 = vpop.f32.mrb[0].mxu0
    %1697 = vmatprep.mubr.f32.mxu0 0.0
    %1698 = vmatmul.mubr.f32.gmra.mrb[0].mxu0 %v1622
    %v1699 = vpop.f32.mrb[0].mxu0
    %v1700 = vadd.f32 0.0, %v1699
    %v1701 = vpop.f32.mrb[0].mxu0
    %1702 = vdwg.mxu0
    %v1703 = vmul.f32 %v1695, 0.35355338
    %v1704 = vmul.f32 %v1700, 0.35355338
    %v1705 = vadd.f32 %v1703, %v979
    %v1706 = vadd.f32 %v1704, %v980
    %v1707 = vsel %vm1499, %v1705, -inf
    %1708 = vmax.xlane.f32.xlu0 %v1707
    %v1709 = vpop.xlane.xlu0 %1708
    %v1710 = vsel %vm1503, %v1706, -inf
    %1711 = vmax.xlane.f32.xlu0 %v1710
    %v1712 = vpop.xlane.xlu0 %1711
    %v1713 = vsub.f32 %v1705, %v1709
    %v1714 = vsub.f32 %v1706, %v1712
    %v1715 = vmul.f32 %v1713, 1.442695
    %v1716 = vpow.pop %v1715
    %v1717 = vmul.f32 %v1714, 1.442695
    %v1718 = vpow.pop %v1717
    %v1719 = vsel %vm1499, %v1716, 0.0
    %1720 = vadd.xlane.f32.xlu0 %v1719
    %v1721 = vpop.xlane.xlu0 %1720
    %v1722 = vsel %vm1503, %v1718, 0.0
    %1723 = vadd.xlane.f32.xlu0 %v1722
    %v1724 = vpop.xlane.xlu0 %1723
    %v1725 = vrcp.pop %v1721
    %v1726 = vrcp.pop %v1724
    %v1727 = vmul.f32 %v1716, %v1725
    %v1728 = vmul.f32 %v1718, %v1726
    %1729 = vrot.lane.b32.xlu0 %v1397, 56
    %v1730 = vpop.permute.xlu0 %1729
    %1731 = vrot.lane.b32.xlu0 %v1402, 56
    %v1732 = vpop.permute.xlu0 %1731
    %v1735 = vsel %vm1499, %v1727, 0
    %v1738 = vsel %vm1499, %v1728, 0
    %v1740 = vsel %vm1534, %v1732, 0
    %1742 = vmatprep.subr.mxu0 0.0
    %1743 = vmatpush1.msra.mxu0 %v1730
    %1744 = vmatprep.subr.mxu0 0.0
    %1745 = vmatpush1.msra.mxu0 %v1740
    %1746 = vmatprep.subr.mxu0 0.0
    %1747 = vmatpush1.msra.mxu0 0.0
    %1748 = vmatprep.subr.mxu0 0.0
    %1749 = vmatpush1.msra.mxu0 0.0
    %1750 = vmatprep.subr.mxu0 0.0
    %1751 = vmatpush1.msra.mxu0 0.0
    %1752 = vmatprep.subr.mxu0 0.0
    %1753 = vmatpush1.msra.mxu0 0.0
    %1754 = vmatprep.subr.mxu0 0.0
    %1755 = vmatpush1.msra.mxu0 0.0
    %1756 = vmatprep.subr.mxu0 0.0
    %1757 = vmatpush1.msra.mxu0 0.0
    %1758 = vmatprep.subr.mxu0 0.0
    %1759 = vmatpush1.msra.mxu0 0.0
    %1760 = vmatprep.subr.mxu0 0.0
    %1761 = vmatpush1.msra.mxu0 0.0
    %1762 = vmatprep.subr.mxu0 0.0
    %1763 = vmatpush1.msra.mxu0 0.0
    %1764 = vmatprep.subr.mxu0 0.0
    %1765 = vmatpush1.msra.mxu0 0.0
    %1766 = vmatprep.subr.mxu0 0.0
    %1767 = vmatpush1.msra.mxu0 0.0
    %1768 = vmatprep.subr.mxu0 0.0
    %1769 = vmatpush1.msra.mxu0 0.0
    %1770 = vmatprep.subr.mxu0 0.0
    %1771 = vmatpush1.msra.mxu0 0.0
    %1772 = vmatprep.subr.mxu0 0.0
    %1773 = vmatpush1.msra.mxu0 0.0
    %1774 = vmatprep.subr.mxu0 0.0
    %1775 = vmatpush1.msra.mxu0 0.0
    %1776 = vmatprep.subr.mxu0 0.0
    %1777 = vmatpush1.msra.mxu0 0.0
    %1778 = vmatprep.subr.mxu0 0.0
    %1779 = vmatpush1.msra.mxu0 0.0
    %1780 = vmatprep.subr.mxu0 0.0
    %1781 = vmatpush1.msra.mxu0 0.0
    %1782 = vmatprep.subr.mxu0 0.0
    %1783 = vmatpush1.msra.mxu0 0.0
    %1784 = vmatprep.subr.mxu0 0.0
    %1785 = vmatpush1.msra.mxu0 0.0
    %1786 = vmatprep.subr.mxu0 0.0
    %1787 = vmatpush1.msra.mxu0 0.0
    %1788 = vmatprep.subr.mxu0 0.0
    %1789 = vmatpush1.msra.mxu0 0.0
    %1790 = vmatprep.subr.mxu0 0.0
    %1791 = vmatpush1.msra.mxu0 0.0
    %1792 = vmatprep.subr.mxu0 0.0
    %1793 = vmatpush1.msra.mxu0 0.0
    %1794 = vmatprep.subr.mxu0 0.0
    %1795 = vmatpush1.msra.mxu0 0.0
    %1796 = vmatprep.subr.mxu0 0.0
    %1797 = vmatpush1.msra.mxu0 0.0
    %1798 = vmatprep.subr.mxu0 0.0
    %1799 = vmatpush1.msra.mxu0 0.0
    %1800 = vmatprep.subr.mxu0 0.0
    %1801 = vmatpush1.msra.mxu0 0.0
    %1802 = vmatprep.subr.mxu0 0.0
    %1803 = vmatpush1.msra.mxu0 0.0
    %1804 = vmatprep.subr.mxu0 0.0
    %1805 = vmatpush1.msra.mxu0 0.0
    %1806 = vmatprep.mubr.f32.mxu0 0.0
    %1807 = vmatmul.mubr.f32.gmra.mrb[0].mxu0 %v1735
    %v1808 = vpop.f32.mrb[0].mxu0
    %v1809 = vadd.f32 0.0, %v1808
    %v1810 = vpop.f32.mrb[0].mxu0
    %1811 = vmatprep.mubr.f32.mxu0 0.0
    %1812 = vmatmul.mubr.f32.gmra.mrb[0].mxu0 %v1738
    %v1813 = vpop.f32.mrb[0].mxu0
    %v1814 = vadd.f32 0.0, %v1813
    %v1815 = vpop.f32.mrb[0].mxu0
    %1816 = vdwg.mxu0
    %1817 = vrot.lane.b32.xlu0 %v1397, 112
    %v1818 = vpop.permute.xlu0 %1817
    %1819 = vrot.lane.b32.xlu0 %v1402, 112
    %v1820 = vpop.permute.xlu0 %1819
    %1821 = vrot.lane.b32.xlu0 %v1397, 80
    %v1822 = vpop.permute.xlu0 %1821
    %1823 = vrot.lane.b32.xlu0 %v1402, 80
    %v1824 = vpop.permute.xlu0 %1823
    %v1825 = vsel %vm1411, %v1818, 0
    %v1827 = vsel %vm1411, %v1820, 0
    %v1829 = vsel %vm1411, %v1822, 0
    %v1831 = vsel %vm1411, %v1824, 0
    %1833 = vmatprep.subr.mxu0 0.0
    %1834 = vmatpush1.xpose.msra.mxu0 %v1829
    %1835 = vmatprep.subr.mxu0 0.0
    %1836 = vmatpush1.xpose.msra.mxu0 %v1831
    %1837 = vmatprep.subr.mxu0 0.0
    %1838 = vmatpush1.xpose.msra.mxu0 0.0
    %1839 = vmatprep.subr.mxu0 0.0
    %1840 = vmatpush1.xpose.msra.mxu0 0.0
    %1841 = vmatprep.subr.mxu0 0.0
    %1842 = vmatpush1.xpose.msra.mxu0 0.0
    %1843 = vmatprep.subr.mxu0 0.0
    %1844 = vmatpush1.xpose.msra.mxu0 0.0
    %1845 = vmatprep.subr.mxu0 0.0
    %1846 = vmatpush1.xpose.msra.mxu0 0.0
    %1847 = vmatprep.subr.mxu0 0.0
    %1848 = vmatpush1.xpose.msra.mxu0 0.0
    %1849 = vmatprep.subr.mxu0 0.0
    %1850 = vmatpush1.xpose.msra.mxu0 0.0
    %1851 = vmatprep.subr.mxu0 0.0
    %1852 = vmatpush1.xpose.msra.mxu0 0.0
    %1853 = vmatprep.subr.mxu0 0.0
    %1854 = vmatpush1.xpose.msra.mxu0 0.0
    %1855 = vmatprep.subr.mxu0 0.0
    %1856 = vmatpush1.xpose.msra.mxu0 0.0
    %1857 = vmatprep.subr.mxu0 0.0
    %1858 = vmatpush1.xpose.msra.mxu0 0.0
    %1859 = vmatprep.subr.mxu0 0.0
    %1860 = vmatpush1.xpose.msra.mxu0 0.0
    %1861 = vmatprep.subr.mxu0 0.0
    %1862 = vmatpush1.xpose.msra.mxu0 0.0
    %1863 = vmatprep.subr.mxu0 0.0
    %1864 = vmatpush1.xpose.msra.mxu0 0.0
    %1865 = vmatprep.subr.mxu0 0.0
    %1866 = vmatpush1.xpose.msra.mxu0 0.0
    %1867 = vmatprep.subr.mxu0 0.0
    %1868 = vmatpush1.xpose.msra.mxu0 0.0
    %1869 = vmatprep.subr.mxu0 0.0
    %1870 = vmatpush1.xpose.msra.mxu0 0.0
    %1871 = vmatprep.subr.mxu0 0.0
    %1872 = vmatpush1.xpose.msra.mxu0 0.0
    %1873 = vmatprep.subr.mxu0 0.0
    %1874 = vmatpush1.xpose.msra.mxu0 0.0
    %1875 = vmatprep.subr.mxu0 0.0
    %1876 = vmatpush1.xpose.msra.mxu0 0.0
    %1877 = vmatprep.subr.mxu0 0.0
    %1878 = vmatpush1.xpose.msra.mxu0 0.0
    %1879 = vmatprep.subr.mxu0 0.0
    %1880 = vmatpush1.xpose.msra.mxu0 0.0
    %1881 = vmatprep.subr.mxu0 0.0
    %1882 = vmatpush1.xpose.msra.mxu0 0.0
    %1883 = vmatprep.subr.mxu0 0.0
    %1884 = vmatpush1.xpose.msra.mxu0 0.0
    %1885 = vmatprep.subr.mxu0 0.0
    %1886 = vmatpush1.xpose.msra.mxu0 0.0
    %1887 = vmatprep.subr.mxu0 0.0
    %1888 = vmatpush1.xpose.msra.mxu0 0.0
    %1889 = vmatprep.subr.mxu0 0.0
    %1890 = vmatpush1.xpose.msra.mxu0 0.0
    %1891 = vmatprep.subr.mxu0 0.0
    %1892 = vmatpush1.xpose.msra.mxu0 0.0
    %1893 = vmatprep.subr.mxu0 0.0
    %1894 = vmatpush1.xpose.msra.mxu0 0.0
    %1895 = vmatprep.subr.mxu0 0.0
    %1896 = vmatpush1.xpose.msra.mxu0 0.0
    %1897 = vmatprep.mubr.f32.mxu0 0.0
    %1898 = vmatmul.mubr.f32.gmra.mrb[0].mxu0 %v1825
    %v1899 = vpop.f32.mrb[0].mxu0
    %v1900 = vadd.f32 0.0, %v1899
    %v1901 = vpop.f32.mrb[0].mxu0
    %1902 = vmatprep.mubr.f32.mxu0 0.0
    %1903 = vmatmul.mubr.f32.gmra.mrb[0].mxu0 %v1827
    %v1904 = vpop.f32.mrb[0].mxu0
    %v1905 = vadd.f32 0.0, %v1904
    %v1906 = vpop.f32.mrb[0].mxu0
    %1907 = vdwg.mxu0
    %v1908 = vmul.f32 %v1900, 0.35355338
    %v1909 = vmul.f32 %v1905, 0.35355338
    %v1910 = vadd.f32 %v1908, %v979
    %v1911 = vadd.f32 %v1909, %v980
    %v1912 = vsel %vm1499, %v1910, -inf
    %1913 = vmax.xlane.f32.xlu0 %v1912
    %v1914 = vpop.xlane.xlu0 %1913
    %v1915 = vsel %vm1503, %v1911, -inf
    %1916 = vmax.xlane.f32.xlu0 %v1915
    %v1917 = vpop.xlane.xlu0 %1916
    %v1918 = vsub.f32 %v1910, %v1914
    %v1919 = vsub.f32 %v1911, %v1917
    %v1920 = vmul.f32 %v1918, 1.442695
    %v1921 = vpow.pop %v1920
    %v1922 = vmul.f32 %v1919, 1.442695
    %v1923 = vpow.pop %v1922
    %v1924 = vsel %vm1499, %v1921, 0.0
    %1925 = vadd.xlane.f32.xlu0 %v1924
    %v1926 = vpop.xlane.xlu0 %1925
    %v1927 = vsel %vm1503, %v1923, 0.0
    %1928 = vadd.xlane.f32.xlu0 %v1927
    %v1929 = vpop.xlane.xlu0 %1928
    %v1930 = vrcp.pop %v1926
    %v1931 = vrcp.pop %v1929
    %v1932 = vmul.f32 %v1921, %v1930
    %v1933 = vmul.f32 %v1923, %v1931
    %1934 = vrot.lane.b32.xlu0 %v1397, 48
    %v1935 = vpop.permute.xlu0 %1934
    %1936 = vrot.lane.b32.xlu0 %v1402, 48
    %v1937 = vpop.permute.xlu0 %1936
    %v1940 = vsel %vm1499, %v1932, 0
    %v1943 = vsel %vm1499, %v1933, 0
    %v1945 = vsel %vm1534, %v1937, 0
    %1947 = vmatprep.subr.mxu0 0.0
    %1948 = vmatpush1.msra.mxu0 %v1935
    %1949 = vmatprep.subr.mxu0 0.0
    %1950 = vmatpush1.msra.mxu0 %v1945
    %1951 = vmatprep.subr.mxu0 0.0
    %1952 = vmatpush1.msra.mxu0 0.0
    %1953 = vmatprep.subr.mxu0 0.0
    %1954 = vmatpush1.msra.mxu0 0.0
    %1955 = vmatprep.subr.mxu0 0.0
    %1956 = vmatpush1.msra.mxu0 0.0
    %1957 = vmatprep.subr.mxu0 0.0
    %1958 = vmatpush1.msra.mxu0 0.0
    %1959 = vmatprep.subr.mxu0 0.0
    %1960 = vmatpush1.msra.mxu0 0.0
    %1961 = vmatprep.subr.mxu0 0.0
    %1962 = vmatpush1.msra.mxu0 0.0
    %1963 = vmatprep.subr.mxu0 0.0
    %1964 = vmatpush1.msra.mxu0 0.0
    %1965 = vmatprep.subr.mxu0 0.0
    %1966 = vmatpush1.msra.mxu0 0.0
    %1967 = vmatprep.subr.mxu0 0.0
    %1968 = vmatpush1.msra.mxu0 0.0
    %1969 = vmatprep.subr.mxu0 0.0
    %1970 = vmatpush1.msra.mxu0 0.0
    %1971 = vmatprep.subr.mxu0 0.0
    %1972 = vmatpush1.msra.mxu0 0.0
    %1973 = vmatprep.subr.mxu0 0.0
    %1974 = vmatpush1.msra.mxu0 0.0
    %1975 = vmatprep.subr.mxu0 0.0
    %1976 = vmatpush1.msra.mxu0 0.0
    %1977 = vmatprep.subr.mxu0 0.0
    %1978 = vmatpush1.msra.mxu0 0.0
    %1979 = vmatprep.subr.mxu0 0.0
    %1980 = vmatpush1.msra.mxu0 0.0
    %1981 = vmatprep.subr.mxu0 0.0
    %1982 = vmatpush1.msra.mxu0 0.0
    %1983 = vmatprep.subr.mxu0 0.0
    %1984 = vmatpush1.msra.mxu0 0.0
    %1985 = vmatprep.subr.mxu0 0.0
    %1986 = vmatpush1.msra.mxu0 0.0
    %1987 = vmatprep.subr.mxu0 0.0
    %1988 = vmatpush1.msra.mxu0 0.0
    %1989 = vmatprep.subr.mxu0 0.0
    %1990 = vmatpush1.msra.mxu0 0.0
    %1991 = vmatprep.subr.mxu0 0.0
    %1992 = vmatpush1.msra.mxu0 0.0
    %1993 = vmatprep.subr.mxu0 0.0
    %1994 = vmatpush1.msra.mxu0 0.0
    %1995 = vmatprep.subr.mxu0 0.0
    %1996 = vmatpush1.msra.mxu0 0.0
    %1997 = vmatprep.subr.mxu0 0.0
    %1998 = vmatpush1.msra.mxu0 0.0
    %1999 = vmatprep.subr.mxu0 0.0
    %2000 = vmatpush1.msra.mxu0 0.0
    %2001 = vmatprep.subr.mxu0 0.0
    %2002 = vmatpush1.msra.mxu0 0.0
    %2003 = vmatprep.subr.mxu0 0.0
    %2004 = vmatpush1.msra.mxu0 0.0
    %2005 = vmatprep.subr.mxu0 0.0
    %2006 = vmatpush1.msra.mxu0 0.0
    %2007 = vmatprep.subr.mxu0 0.0
    %2008 = vmatpush1.msra.mxu0 0.0
    %2009 = vmatprep.subr.mxu0 0.0
    %2010 = vmatpush1.msra.mxu0 0.0
    %2011 = vmatprep.mubr.f32.mxu0 0.0
    %2012 = vmatmul.mubr.f32.gmra.mrb[0].mxu0 %v1940
    %v2013 = vpop.f32.mrb[0].mxu0
    %v2014 = vadd.f32 0.0, %v2013
    %v2015 = vpop.f32.mrb[0].mxu0
    %2016 = vmatprep.mubr.f32.mxu0 0.0
    %2017 = vmatmul.mubr.f32.gmra.mrb[0].mxu0 %v1943
    %v2018 = vpop.f32.mrb[0].mxu0
    %v2019 = vadd.f32 0.0, %v2018
    %v2020 = vpop.f32.mrb[0].mxu0
    %2021 = vdwg.mxu0
    %2022 = vrot.lane.b32.xlu0 %v1397, 104
    %v2023 = vpop.permute.xlu0 %2022
    %2024 = vrot.lane.b32.xlu0 %v1402, 104
    %v2025 = vpop.permute.xlu0 %2024
    %2026 = vrot.lane.b32.xlu0 %v1397, 72
    %v2027 = vpop.permute.xlu0 %2026
    %2028 = vrot.lane.b32.xlu0 %v1402, 72
    %v2029 = vpop.permute.xlu0 %2028
    %v2030 = vsel %vm1411, %v2023, 0
    %v2032 = vsel %vm1411, %v2025, 0
    %v2034 = vsel %vm1411, %v2027, 0
    %v2036 = vsel %vm1411, %v2029, 0
    %2038 = vmatprep.subr.mxu0 0.0
    %2039 = vmatpush1.xpose.msra.mxu0 %v2034
    %2040 = vmatprep.subr.mxu0 0.0
    %2041 = vmatpush1.xpose.msra.mxu0 %v2036
    %2042 = vmatprep.subr.mxu0 0.0
    %2043 = vmatpush1.xpose.msra.mxu0 0.0
    %2044 = vmatprep.subr.mxu0 0.0
    %2045 = vmatpush1.xpose.msra.mxu0 0.0
    %2046 = vmatprep.subr.mxu0 0.0
    %2047 = vmatpush1.xpose.msra.mxu0 0.0
    %2048 = vmatprep.subr.mxu0 0.0
    %2049 = vmatpush1.xpose.msra.mxu0 0.0
    %2050 = vmatprep.subr.mxu0 0.0
    %2051 = vmatpush1.xpose.msra.mxu0 0.0
    %2052 = vmatprep.subr.mxu0 0.0
    %2053 = vmatpush1.xpose.msra.mxu0 0.0
    %2054 = vmatprep.subr.mxu0 0.0
    %2055 = vmatpush1.xpose.msra.mxu0 0.0
    %2056 = vmatprep.subr.mxu0 0.0
    %2057 = vmatpush1.xpose.msra.mxu0 0.0
    %2058 = vmatprep.subr.mxu0 0.0
    %2059 = vmatpush1.xpose.msra.mxu0 0.0
    %2060 = vmatprep.subr.mxu0 0.0
    %2061 = vmatpush1.xpose.msra.mxu0 0.0
    %2062 = vmatprep.subr.mxu0 0.0
    %2063 = vmatpush1.xpose.msra.mxu0 0.0
    %2064 = vmatprep.subr.mxu0 0.0
    %2065 = vmatpush1.xpose.msra.mxu0 0.0
    %2066 = vmatprep.subr.mxu0 0.0
    %2067 = vmatpush1.xpose.msra.mxu0 0.0
    %2068 = vmatprep.subr.mxu0 0.0
    %2069 = vmatpush1.xpose.msra.mxu0 0.0
    %2070 = vmatprep.subr.mxu0 0.0
    %2071 = vmatpush1.xpose.msra.mxu0 0.0
    %2072 = vmatprep.subr.mxu0 0.0
    %2073 = vmatpush1.xpose.msra.mxu0 0.0
    %2074 = vmatprep.subr.mxu0 0.0
    %2075 = vmatpush1.xpose.msra.mxu0 0.0
    %2076 = vmatprep.subr.mxu0 0.0
    %2077 = vmatpush1.xpose.msra.mxu0 0.0
    %2078 = vmatprep.subr.mxu0 0.0
    %2079 = vmatpush1.xpose.msra.mxu0 0.0
    %2080 = vmatprep.subr.mxu0 0.0
    %2081 = vmatpush1.xpose.msra.mxu0 0.0
    %2082 = vmatprep.subr.mxu0 0.0
    %2083 = vmatpush1.xpose.msra.mxu0 0.0
    %2084 = vmatprep.subr.mxu0 0.0
    %2085 = vmatpush1.xpose.msra.mxu0 0.0
    %2086 = vmatprep.subr.mxu0 0.0
    %2087 = vmatpush1.xpose.msra.mxu0 0.0
    %2088 = vmatprep.subr.mxu0 0.0
    %2089 = vmatpush1.xpose.msra.mxu0 0.0
    %2090 = vmatprep.subr.mxu0 0.0
    %2091 = vmatpush1.xpose.msra.mxu0 0.0
    %2092 = vmatprep.subr.mxu0 0.0
    %2093 = vmatpush1.xpose.msra.mxu0 0.0
    %2094 = vmatprep.subr.mxu0 0.0
    %2095 = vmatpush1.xpose.msra.mxu0 0.0
    %2096 = vmatprep.subr.mxu0 0.0
    %2097 = vmatpush1.xpose.msra.mxu0 0.0
    %2098 = vmatprep.subr.mxu0 0.0
    %2099 = vmatpush1.xpose.msra.mxu0 0.0
    %2100 = vmatprep.subr.mxu0 0.0
    %2101 = vmatpush1.xpose.msra.mxu0 0.0
    %2102 = vmatprep.mubr.f32.mxu0 0.0
    %2103 = vmatmul.mubr.f32.gmra.mrb[0].mxu0 %v2030
    %v2104 = vpop.f32.mrb[0].mxu0
    %v2105 = vadd.f32 0.0, %v2104
    %v2106 = vpop.f32.mrb[0].mxu0
    %2107 = vmatprep.mubr.f32.mxu0 0.0
    %2108 = vmatmul.mubr.f32.gmra.mrb[0].mxu0 %v2032
    %v2109 = vpop.f32.mrb[0].mxu0
    %v2110 = vadd.f32 0.0, %v2109
    %v2111 = vpop.f32.mrb[0].mxu0
    %2112 = vdwg.mxu0
    %v2113 = vmul.f32 %v2105, 0.35355338
    %v2114 = vmul.f32 %v2110, 0.35355338
    %v2115 = vadd.f32 %v2113, %v979
    %v2116 = vadd.f32 %v2114, %v980
    %v2117 = vsel %vm1499, %v2115, -inf
    %2118 = vmax.xlane.f32.xlu0 %v2117
    %v2119 = vpop.xlane.xlu0 %2118
    %v2120 = vsel %vm1503, %v2116, -inf
    %2121 = vmax.xlane.f32.xlu0 %v2120
    %v2122 = vpop.xlane.xlu0 %2121
    %v2123 = vsub.f32 %v2115, %v2119
    %v2124 = vsub.f32 %v2116, %v2122
    %v2125 = vmul.f32 %v2123, 1.442695
    %v2126 = vpow.pop %v2125
    %v2127 = vmul.f32 %v2124, 1.442695
    %v2128 = vpow.pop %v2127
    %v2129 = vsel %vm1499, %v2126, 0.0
    %2130 = vadd.xlane.f32.xlu0 %v2129
    %v2131 = vpop.xlane.xlu0 %2130
    %v2132 = vsel %vm1503, %v2128, 0.0
    %2133 = vadd.xlane.f32.xlu0 %v2132
    %v2134 = vpop.xlane.xlu0 %2133
    %v2135 = vrcp.pop %v2131
    %v2136 = vrcp.pop %v2134
    %v2137 = vmul.f32 %v2126, %v2135
    %v2138 = vmul.f32 %v2128, %v2136
    %2139 = vrot.lane.b32.xlu0 %v1397, 40
    %v2140 = vpop.permute.xlu0 %2139
    %2141 = vrot.lane.b32.xlu0 %v1402, 40
    %v2142 = vpop.permute.xlu0 %2141
    %v2145 = vsel %vm1499, %v2137, 0
    %v2148 = vsel %vm1499, %v2138, 0
    %v2150 = vsel %vm1534, %v2142, 0
    %2152 = vmatprep.subr.mxu0 0.0
    %2153 = vmatpush1.msra.mxu0 %v2140
    %2154 = vmatprep.subr.mxu0 0.0
    %2155 = vmatpush1.msra.mxu0 %v2150
    %2156 = vmatprep.subr.mxu0 0.0
    %2157 = vmatpush1.msra.mxu0 0.0
    %2158 = vmatprep.subr.mxu0 0.0
    %2159 = vmatpush1.msra.mxu0 0.0
    %2160 = vmatprep.subr.mxu0 0.0
    %2161 = vmatpush1.msra.mxu0 0.0
    %2162 = vmatprep.subr.mxu0 0.0
    %2163 = vmatpush1.msra.mxu0 0.0
    %2164 = vmatprep.subr.mxu0 0.0
    %2165 = vmatpush1.msra.mxu0 0.0
    %2166 = vmatprep.subr.mxu0 0.0
    %2167 = vmatpush1.msra.mxu0 0.0
    %2168 = vmatprep.subr.mxu0 0.0
    %2169 = vmatpush1.msra.mxu0 0.0
    %2170 = vmatprep.subr.mxu0 0.0
    %2171 = vmatpush1.msra.mxu0 0.0
    %2172 = vmatprep.subr.mxu0 0.0
    %2173 = vmatpush1.msra.mxu0 0.0
    %2174 = vmatprep.subr.mxu0 0.0
    %2175 = vmatpush1.msra.mxu0 0.0
    %2176 = vmatprep.subr.mxu0 0.0
    %2177 = vmatpush1.msra.mxu0 0.0
    %2178 = vmatprep.subr.mxu0 0.0
    %2179 = vmatpush1.msra.mxu0 0.0
    %2180 = vmatprep.subr.mxu0 0.0
    %2181 = vmatpush1.msra.mxu0 0.0
    %2182 = vmatprep.subr.mxu0 0.0
    %2183 = vmatpush1.msra.mxu0 0.0
    %2184 = vmatprep.subr.mxu0 0.0
    %2185 = vmatpush1.msra.mxu0 0.0
    %2186 = vmatprep.subr.mxu0 0.0
    %2187 = vmatpush1.msra.mxu0 0.0
    %2188 = vmatprep.subr.mxu0 0.0
    %2189 = vmatpush1.msra.mxu0 0.0
    %2190 = vmatprep.subr.mxu0 0.0
    %2191 = vmatpush1.msra.mxu0 0.0
    %2192 = vmatprep.subr.mxu0 0.0
    %2193 = vmatpush1.msra.mxu0 0.0
    %2194 = vmatprep.subr.mxu0 0.0
    %2195 = vmatpush1.msra.mxu0 0.0
    %2196 = vmatprep.subr.mxu0 0.0
    %2197 = vmatpush1.msra.mxu0 0.0
    %2198 = vmatprep.subr.mxu0 0.0
    %2199 = vmatpush1.msra.mxu0 0.0
    %2200 = vmatprep.subr.mxu0 0.0
    %2201 = vmatpush1.msra.mxu0 0.0
    %2202 = vmatprep.subr.mxu0 0.0
    %2203 = vmatpush1.msra.mxu0 0.0
    %2204 = vmatprep.subr.mxu0 0.0
    %2205 = vmatpush1.msra.mxu0 0.0
    %2206 = vmatprep.subr.mxu0 0.0
    %2207 = vmatpush1.msra.mxu0 0.0
    %2208 = vmatprep.subr.mxu0 0.0
    %2209 = vmatpush1.msra.mxu0 0.0
    %2210 = vmatprep.subr.mxu0 0.0
    %2211 = vmatpush1.msra.mxu0 0.0
    %2212 = vmatprep.subr.mxu0 0.0
    %2213 = vmatpush1.msra.mxu0 0.0
    %2214 = vmatprep.subr.mxu0 0.0
    %2215 = vmatpush1.msra.mxu0 0.0
    %2216 = vmatprep.mubr.f32.mxu0 0.0
    %2217 = vmatmul.mubr.f32.gmra.mrb[0].mxu0 %v2145
    %v2218 = vpop.f32.mrb[0].mxu0
    %v2219 = vadd.f32 0.0, %v2218
    %v2220 = vpop.f32.mrb[0].mxu0
    %2221 = vmatprep.mubr.f32.mxu0 0.0
    %2222 = vmatmul.mubr.f32.gmra.mrb[0].mxu0 %v2148
    %v2223 = vpop.f32.mrb[0].mxu0
    %v2224 = vadd.f32 0.0, %v2223
    %v2225 = vpop.f32.mrb[0].mxu0
    %2226 = vdwg.mxu0
    %2229 = vrot.lane.b32.xlu0 %v1809, 8
    %v2230 = vpop.permute.xlu0 %2229
    %2231 = vrot.lane.b32.xlu0 %v1814, 8
    %v2232 = vpop.permute.xlu0 %2231
    %2237 = vrot.lane.b32.xlu0 %v2014, 16
    %v2238 = vpop.permute.xlu0 %2237
    %2239 = vrot.lane.b32.xlu0 %v2019, 16
    %v2240 = vpop.permute.xlu0 %2239
    %2245 = vrot.lane.b32.xlu0 %v2219, 24
    %v2246 = vpop.permute.xlu0 %2245
    %2247 = vrot.lane.b32.xlu0 %v2224, 24
    %v2248 = vpop.permute.xlu0 %2247
    %v2251 = vsel %vm1411, %v1604, %v2230
    %v2252 = vsel %vm1411, %v1609, %v2232
    %vm2253 = vcmask 130048
    %v2254 = vsel %vm2253, %v2251, %v2238
    %v2255 = vsel %vm2253, %v2252, %v2240
    %vm2256 = vcmask 195584
    %v2257 = vsel %vm2256, %v2254, %v2246
    %v2258 = vsel %vm2256, %v2255, %v2248
    %v2260 = vlaneseq
    %v2261 = vshrl.u32 %v2260, 7
    %v2262 = vsub.s32 0, %v2261
    %v2263 = vrot.slane %v990, %v2262
    %v2266 = vsel %vm1324, %v2257, 0
    %v2269 = vsel %vm1324, %v2258, 0
    %2271 = vmatprep.subr.mxu0 0.0
    %2272 = vmatpush1.msra.mxu0 %v986
    %2273 = vmatprep.subr.mxu0 0.0
    %2274 = vmatpush1.msra.mxu0 %v987
    %2275 = vmatprep.subr.mxu0 0.0
    %2276 = vmatpush1.msra.mxu0 %v988
    %2277 = vmatprep.subr.mxu0 0.0
    %2278 = vmatpush1.msra.mxu0 %v989
    %2279 = vmatprep.subr.mxu0 0.0
    %2280 = vmatpush1.msra.mxu0 0.0
    %2281 = vmatprep.subr.mxu0 0.0
    %2282 = vmatpush1.msra.mxu0 0.0
    %2283 = vmatprep.subr.mxu0 0.0
    %2284 = vmatpush1.msra.mxu0 0.0
    %2285 = vmatprep.subr.mxu0 0.0
    %2286 = vmatpush1.msra.mxu0 0.0
    %2287 = vmatprep.subr.mxu0 0.0
    %2288 = vmatpush1.msra.mxu0 0.0
    %2289 = vmatprep.subr.mxu0 0.0
    %2290 = vmatpush1.msra.mxu0 0.0
    %2291 = vmatprep.subr.mxu0 0.0
    %2292 = vmatpush1.msra.mxu0 0.0
    %2293 = vmatprep.subr.mxu0 0.0
    %2294 = vmatpush1.msra.mxu0 0.0
    %2295 = vmatprep.subr.mxu0 0.0
    %2296 = vmatpush1.msra.mxu0 0.0
    %2297 = vmatprep.subr.mxu0 0.0
    %2298 = vmatpush1.msra.mxu0 0.0
    %2299 = vmatprep.subr.mxu0 0.0
    %2300 = vmatpush1.msra.mxu0 0.0
    %2301 = vmatprep.subr.mxu0 0.0
    %2302 = vmatpush1.msra.mxu0 0.0
    %2303 = vmatprep.subr.mxu0 0.0
    %2304 = vmatpush1.msra.mxu0 0.0
    %2305 = vmatprep.subr.mxu0 0.0
    %2306 = vmatpush1.msra.mxu0 0.0
    %2307 = vmatprep.subr.mxu0 0.0
    %2308 = vmatpush1.msra.mxu0 0.0
    %2309 = vmatprep.subr.mxu0 0.0
    %2310 = vmatpush1.msra.mxu0 0.0
    %2311 = vmatprep.subr.mxu0 0.0
    %2312 = vmatpush1.msra.mxu0 0.0
    %2313 = vmatprep.subr.mxu0 0.0
    %2314 = vmatpush1.msra.mxu0 0.0
    %2315 = vmatprep.subr.mxu0 0.0
    %2316 = vmatpush1.msra.mxu0 0.0
    %2317 = vmatprep.subr.mxu0 0.0
    %2318 = vmatpush1.msra.mxu0 0.0
    %2319 = vmatprep.subr.mxu0 0.0
    %2320 = vmatpush1.msra.mxu0 0.0
    %2321 = vmatprep.subr.mxu0 0.0
    %2322 = vmatpush1.msra.mxu0 0.0
    %2323 = vmatprep.subr.mxu0 0.0
    %2324 = vmatpush1.msra.mxu0 0.0
    %2325 = vmatprep.subr.mxu0 0.0
    %2326 = vmatpush1.msra.mxu0 0.0
    %2327 = vmatprep.subr.mxu0 0.0
    %2328 = vmatpush1.msra.mxu0 0.0
    %2329 = vmatprep.subr.mxu0 0.0
    %2330 = vmatpush1.msra.mxu0 0.0
    %2331 = vmatprep.subr.mxu0 0.0
    %2332 = vmatpush1.msra.mxu0 0.0
    %2333 = vmatprep.subr.mxu0 0.0
    %2334 = vmatpush1.msra.mxu0 0.0
    %2335 = vmatprep.mubr.f32.mxu0 0.0
    %2336 = vmatmul.mubr.f32.gmra.mrb[0].mxu0 %v2266
    %v2337 = vpop.f32.mrb[0].mxu0
    %v2338 = vadd.f32 %v2263, %v2337
    %v2339 = vpop.f32.mrb[0].mxu0
    %2340 = vmatprep.mubr.f32.mxu0 0.0
    %2341 = vmatmul.mubr.f32.gmra.mrb[0].mxu0 %v2269
    %v2342 = vpop.f32.mrb[0].mxu0
    %v2343 = vadd.f32 %v2263, %v2342
    %v2344 = vpop.f32.mrb[0].mxu0
    %2345 = vdwg.mxu0
    %v2346 = vadd.f32 %v978, %v2338
    %v2347 = vadd.f32 %v971, %v2343
    %v2348 = vsel %vm1324, %v2346, 0.0
    %2349 = vadd.xlane.f32.xlu0 %v2348
    %v2350 = vpop.xlane.xlu0 %2349
    %vm2351 = vcmask 254976
    %v2352 = vsel %vm2351, %v2347, 0.0
    %2353 = vadd.xlane.f32.xlu0 %v2352
    %v2354 = vpop.xlane.xlu0 %2353
    %v2355 = vrcp.pop 32.0
    %v2356 = vmul.f32 %v2350, %v2355
    %v2357 = vmul.f32 %v2354, %v2355
    %v2358 = vsub.f32 %v2346, %v2356
    %v2359 = vsub.f32 %v2347, %v2357
    %v2360 = vmul.f32 %v2358, %v2358
    %v2361 = vmul.f32 %v2359, %v2359
    %v2362 = vsel %vm1324, %v2360, 0.0
    %2363 = vadd.xlane.f32.xlu0 %v2362
    %v2364 = vpop.xlane.xlu0 %2363
    %v2365 = vsel %vm2351, %v2361, 0.0
    %2366 = vadd.xlane.f32.xlu0 %v2365
    %v2367 = vpop.xlane.xlu0 %2366
    %v2368 = vmul.f32 %v2364, %v2355
    %v2369 = vmul.f32 %v2367, %v2355
    %v2370 = vadd.f32 %v2368, 1e-05
    %v2371 = vadd.f32 %v2369, 1e-05
    %v2372 = vrsqrt.pop %v2370
    %v2373 = vrsqrt.pop %v2371
    %v2374 = vmul.f32 %v2358, %v2372
    %v2375 = vmul.f32 %v2359, %v2373
    %v2377 = vlaneseq
    %v2378 = vshrl.u32 %v2377, 7
    %v2379 = vsub.s32 0, %v2378
    %v2380 = vrot.slane %v991, %v2379
    %v2382 = vmul.f32 %v2374, %v2380
    %v2383 = vmul.f32 %v2375, %v2380
    %v2385 = vlaneseq
    %v2386 = vshrl.u32 %v2385, 7
    %v2387 = vsub.s32 0, %v2386
    %v2388 = vrot.slane %v992, %v2387
    %v2390 = vadd.f32 %v2382, %v2388
    %v2391 = vadd.f32 %v2383, %v2388
    %v2394 = vlaneseq
    %v2395 = vshrl.u32 %v2394, 7
    %v2396 = vsub.s32 0, %v2395
    %v2397 = vrot.slane %v1057, %v2396
    %v2398 = vlaneseq
    %v2399 = vshrl.u32 %v2398, 7
    %v2400 = vsub.s32 1, %v2399
    %v2401 = vrot.slane %v1057, %v2400
    %v2402 = vlaneseq
    %v2403 = vshrl.u32 %v2402, 7
    %v2404 = vsub.s32 2, %v2403
    %v2405 = vrot.slane %v1057, %v2404
    %v2406 = vlaneseq
    %v2407 = vshrl.u32 %v2406, 7
    %v2408 = vsub.s32 3, %v2407
    %v2409 = vrot.slane %v1057, %v2408
    %v2410 = vlaneseq
    %v2411 = vshrl.u32 %v2410, 7
    %v2412 = vsub.s32 4, %v2411
    %v2413 = vrot.slane %v1057, %v2412
    %v2414 = vlaneseq
    %v2415 = vshrl.u32 %v2414, 7
    %v2416 = vsub.s32 5, %v2415
    %v2417 = vrot.slane %v1057, %v2416
    %v2418 = vlaneseq
    %v2419 = vshrl.u32 %v2418, 7
    %v2420 = vsub.s32 6, %v2419
    %v2421 = vrot.slane %v1057, %v2420
    %v2422 = vlaneseq
    %v2423 = vshrl.u32 %v2422, 7
    %v2424 = vsub.s32 7, %v2423
    %v2425 = vrot.slane %v1057, %v2424
    %v2426 = vlaneseq
    %v2427 = vshrl.u32 %v2426, 7
    %v2428 = vsub.s32 0, %v2427
    %v2429 = vrot.slane %v1058, %v2428
    %v2430 = vlaneseq
    %v2431 = vshrl.u32 %v2430, 7
    %v2432 = vsub.s32 1, %v2431
    %v2433 = vrot.slane %v1058, %v2432
    %v2434 = vlaneseq
    %v2435 = vshrl.u32 %v2434, 7
    %v2436 = vsub.s32 2, %v2435
    %v2437 = vrot.slane %v1058, %v2436
    %v2438 = vlaneseq
    %v2439 = vshrl.u32 %v2438, 7
    %v2440 = vsub.s32 3, %v2439
    %v2441 = vrot.slane %v1058, %v2440
    %v2442 = vlaneseq
    %v2443 = vshrl.u32 %v2442, 7
    %v2444 = vsub.s32 4, %v2443
    %v2445 = vrot.slane %v1058, %v2444
    %v2446 = vlaneseq
    %v2447 = vshrl.u32 %v2446, 7
    %v2448 = vsub.s32 5, %v2447
    %v2449 = vrot.slane %v1058, %v2448
    %v2450 = vlaneseq
    %v2451 = vshrl.u32 %v2450, 7
    %v2452 = vsub.s32 6, %v2451
    %v2453 = vrot.slane %v1058, %v2452
    %v2454 = vlaneseq
    %v2455 = vshrl.u32 %v2454, 7
    %v2456 = vsub.s32 7, %v2455
    %v2457 = vrot.slane %v1058, %v2456
    %v2475 = vsel %vm1324, %v2390, 0
    %v2478 = vsel %vm1324, %v2391, 0
    %2480 = vmatprep.subr.mxu0 %v994
    %2481 = vmatpush1.msra.mxu0 %v993
    %2482 = vmatprep.subr.mxu0 %v1010
    %2483 = vmatpush1.msra.mxu0 %v1009
    %2484 = vmatprep.subr.mxu0 %v1026
    %2485 = vmatpush1.msra.mxu0 %v1025
    %2486 = vmatprep.subr.mxu0 %v1042
    %2487 = vmatpush1.msra.mxu0 %v1041
    %2488 = vmatprep.subr.mxu0 0.0
    %2489 = vmatpush1.msra.mxu0 0.0
    %2490 = vmatprep.subr.mxu0 0.0
    %2491 = vmatpush1.msra.mxu0 0.0
    %2492 = vmatprep.subr.mxu0 0.0
    %2493 = vmatpush1.msra.mxu0 0.0
    %2494 = vmatprep.subr.mxu0 0.0
    %2495 = vmatpush1.msra.mxu0 0.0
    %2496 = vmatprep.subr.mxu0 0.0
    %2497 = vmatpush1.msra.mxu0 0.0
    %2498 = vmatprep.subr.mxu0 0.0
    %2499 = vmatpush1.msra.mxu0 0.0
    %2500 = vmatprep.subr.mxu0 0.0
    %2501 = vmatpush1.msra.mxu0 0.0
    %2502 = vmatprep.subr.mxu0 0.0
    %2503 = vmatpush1.msra.mxu0 0.0
    %2504 = vmatprep.subr.mxu0 0.0
    %2505 = vmatpush1.msra.mxu0 0.0
    %2506 = vmatprep.subr.mxu0 0.0
    %2507 = vmatpush1.msra.mxu0 0.0
    %2508 = vmatprep.subr.mxu0 0.0
    %2509 = vmatpush1.msra.mxu0 0.0
    %2510 = vmatprep.subr.mxu0 0.0
    %2511 = vmatpush1.msra.mxu0 0.0
    %2512 = vmatprep.subr.mxu0 0.0
    %2513 = vmatpush1.msra.mxu0 0.0
    %2514 = vmatprep.subr.mxu0 0.0
    %2515 = vmatpush1.msra.mxu0 0.0
    %2516 = vmatprep.subr.mxu0 0.0
    %2517 = vmatpush1.msra.mxu0 0.0
    %2518 = vmatprep.subr.mxu0 0.0
    %2519 = vmatpush1.msra.mxu0 0.0
    %2520 = vmatprep.subr.mxu0 0.0
    %2521 = vmatpush1.msra.mxu0 0.0
    %2522 = vmatprep.subr.mxu0 0.0
    %2523 = vmatpush1.msra.mxu0 0.0
    %2524 = vmatprep.subr.mxu0 0.0
    %2525 = vmatpush1.msra.mxu0 0.0
    %2526 = vmatprep.subr.mxu0 0.0
    %2527 = vmatpush1.msra.mxu0 0.0
    %2528 = vmatprep.subr.mxu0 0.0
    %2529 = vmatpush1.msra.mxu0 0.0
    %2530 = vmatprep.subr.mxu0 0.0
    %2531 = vmatpush1.msra.mxu0 0.0
    %2532 = vmatprep.subr.mxu0 0.0
    %2533 = vmatpush1.msra.mxu0 0.0
    %2534 = vmatprep.subr.mxu0 0.0
    %2535 = vmatpush1.msra.mxu0 0.0
    %2536 = vmatprep.subr.mxu0 0.0
    %2537 = vmatpush1.msra.mxu0 0.0
    %2538 = vmatprep.subr.mxu0 0.0
    %2539 = vmatpush1.msra.mxu0 0.0
    %2540 = vmatprep.subr.mxu0 0.0
    %2541 = vmatpush1.msra.mxu0 0.0
    %2542 = vmatprep.subr.mxu0 0.0
    %2543 = vmatpush1.msra.mxu0 0.0
    %2544 = vmatprep.mubr.f32.mxu0 0.0
    %2545 = vmatmul.mubr.f32.gmra.mrb[0].mxu0 %v2475
    %v2546 = vpop.f32.mrb[0].mxu0
    %v2547 = vadd.f32 %v2397, %v2546
    %v2548 = vpop.f32.mrb[0].mxu0
    %v2549 = vadd.f32 %v2401, %v2548
    %2550 = vmatprep.mubr.f32.mxu0 0.0
    %2551 = vmatmul.mubr.f32.gmra.mrb[0].mxu0 %v2478
    %v2552 = vpop.f32.mrb[0].mxu0
    %v2553 = vadd.f32 %v2397, %v2552
    %v2554 = vpop.f32.mrb[0].mxu0
    %v2555 = vadd.f32 %v2401, %v2554
    %2556 = vdwg.mxu0
    %2557 = vmatprep.subr.mxu0 %v996
    %2558 = vmatpush1.msra.mxu0 %v995
    %2559 = vmatprep.subr.mxu0 %v1012
    %2560 = vmatpush1.msra.mxu0 %v1011
    %2561 = vmatprep.subr.mxu0 %v1028
    %2562 = vmatpush1.msra.mxu0 %v1027
    %2563 = vmatprep.subr.mxu0 %v1044
    %2564 = vmatpush1.msra.mxu0 %v1043
    %2565 = vmatprep.subr.mxu0 0.0
    %2566 = vmatpush1.msra.mxu0 0.0
    %2567 = vmatprep.subr.mxu0 0.0
    %2568 = vmatpush1.msra.mxu0 0.0
    %2569 = vmatprep.subr.mxu0 0.0
    %2570 = vmatpush1.msra.mxu0 0.0
    %2571 = vmatprep.subr.mxu0 0.0
    %2572 = vmatpush1.msra.mxu0 0.0
    %2573 = vmatprep.subr.mxu0 0.0
    %2574 = vmatpush1.msra.mxu0 0.0
    %2575 = vmatprep.subr.mxu0 0.0
    %2576 = vmatpush1.msra.mxu0 0.0
    %2577 = vmatprep.subr.mxu0 0.0
    %2578 = vmatpush1.msra.mxu0 0.0
    %2579 = vmatprep.subr.mxu0 0.0
    %2580 = vmatpush1.msra.mxu0 0.0
    %2581 = vmatprep.subr.mxu0 0.0
    %2582 = vmatpush1.msra.mxu0 0.0
    %2583 = vmatprep.subr.mxu0 0.0
    %2584 = vmatpush1.msra.mxu0 0.0
    %2585 = vmatprep.subr.mxu0 0.0
    %2586 = vmatpush1.msra.mxu0 0.0
    %2587 = vmatprep.subr.mxu0 0.0
    %2588 = vmatpush1.msra.mxu0 0.0
    %2589 = vmatprep.subr.mxu0 0.0
    %2590 = vmatpush1.msra.mxu0 0.0
    %2591 = vmatprep.subr.mxu0 0.0
    %2592 = vmatpush1.msra.mxu0 0.0
    %2593 = vmatprep.subr.mxu0 0.0
    %2594 = vmatpush1.msra.mxu0 0.0
    %2595 = vmatprep.subr.mxu0 0.0
    %2596 = vmatpush1.msra.mxu0 0.0
    %2597 = vmatprep.subr.mxu0 0.0
    %2598 = vmatpush1.msra.mxu0 0.0
    %2599 = vmatprep.subr.mxu0 0.0
    %2600 = vmatpush1.msra.mxu0 0.0
    %2601 = vmatprep.subr.mxu0 0.0
    %2602 = vmatpush1.msra.mxu0 0.0
    %2603 = vmatprep.subr.mxu0 0.0
    %2604 = vmatpush1.msra.mxu0 0.0
    %2605 = vmatprep.subr.mxu0 0.0
    %2606 = vmatpush1.msra.mxu0 0.0
    %2607 = vmatprep.subr.mxu0 0.0
    %2608 = vmatpush1.msra.mxu0 0.0
    %2609 = vmatprep.subr.mxu0 0.0
    %2610 = vmatpush1.msra.mxu0 0.0
    %2611 = vmatprep.subr.mxu0 0.0
    %2612 = vmatpush1.msra.mxu0 0.0
    %2613 = vmatprep.subr.mxu0 0.0
    %2614 = vmatpush1.msra.mxu0 0.0
    %2615 = vmatprep.subr.mxu0 0.0
    %2616 = vmatpush1.msra.mxu0 0.0
    %2617 = vmatprep.subr.mxu0 0.0
    %2618 = vmatpush1.msra.mxu0 0.0
    %2619 = vmatprep.subr.mxu0 0.0
    %2620 = vmatpush1.msra.mxu0 0.0
    %2621 = vmatprep.mubr.f32.mxu0 0.0
    %2622 = vmatmul.mubr.f32.gmra.mrb[0].mxu0 %v2475
    %v2623 = vpop.f32.mrb[0].mxu0
    %v2624 = vadd.f32 %v2405, %v2623
    %v2625 = vpop.f32.mrb[0].mxu0
    %v2626 = vadd.f32 %v2409, %v2625
    %2627 = vmatprep.mubr.f32.mxu0 0.0
    %2628 = vmatmul.mubr.f32.gmra.mrb[0].mxu0 %v2478
    %v2629 = vpop.f32.mrb[0].mxu0
    %v2630 = vadd.f32 %v2405, %v2629
    %v2631 = vpop.f32.mrb[0].mxu0
    %v2632 = vadd.f32 %v2409, %v2631
    %2633 = vdwg.mxu0
    %2634 = vmatprep.subr.mxu0 %v998
    %2635 = vmatpush1.msra.mxu0 %v997
    %2636 = vmatprep.subr.mxu0 %v1014
    %2637 = vmatpush1.msra.mxu0 %v1013
    %2638 = vmatprep.subr.mxu0 %v1030
    %2639 = vmatpush1.msra.mxu0 %v1029
    %2640 = vmatprep.subr.mxu0 %v1046
    %2641 = vmatpush1.msra.mxu0 %v1045
    %2642 = vmatprep.subr.mxu0 0.0
    %2643 = vmatpush1.msra.mxu0 0.0
    %2644 = vmatprep.subr.mxu0 0.0
    %2645 = vmatpush1.msra.mxu0 0.0
    %2646 = vmatprep.subr.mxu0 0.0
    %2647 = vmatpush1.msra.mxu0 0.0
    %2648 = vmatprep.subr.mxu0 0.0
    %2649 = vmatpush1.msra.mxu0 0.0
    %2650 = vmatprep.subr.mxu0 0.0
    %2651 = vmatpush1.msra.mxu0 0.0
    %2652 = vmatprep.subr.mxu0 0.0
    %2653 = vmatpush1.msra.mxu0 0.0
    %2654 = vmatprep.subr.mxu0 0.0
    %2655 = vmatpush1.msra.mxu0 0.0
    %2656 = vmatprep.subr.mxu0 0.0
    %2657 = vmatpush1.msra.mxu0 0.0
    %2658 = vmatprep.subr.mxu0 0.0
    %2659 = vmatpush1.msra.mxu0 0.0
    %2660 = vmatprep.subr.mxu0 0.0
    %2661 = vmatpush1.msra.mxu0 0.0
    %2662 = vmatprep.subr.mxu0 0.0
    %2663 = vmatpush1.msra.mxu0 0.0
    %2664 = vmatprep.subr.mxu0 0.0
    %2665 = vmatpush1.msra.mxu0 0.0
    %2666 = vmatprep.subr.mxu0 0.0
    %2667 = vmatpush1.msra.mxu0 0.0
    %2668 = vmatprep.subr.mxu0 0.0
    %2669 = vmatpush1.msra.mxu0 0.0
    %2670 = vmatprep.subr.mxu0 0.0
    %2671 = vmatpush1.msra.mxu0 0.0
    %2672 = vmatprep.subr.mxu0 0.0
    %2673 = vmatpush1.msra.mxu0 0.0
    %2674 = vmatprep.subr.mxu0 0.0
    %2675 = vmatpush1.msra.mxu0 0.0
    %2676 = vmatprep.subr.mxu0 0.0
    %2677 = vmatpush1.msra.mxu0 0.0
    %2678 = vmatprep.subr.mxu0 0.0
    %2679 = vmatpush1.msra.mxu0 0.0
    %2680 = vmatprep.subr.mxu0 0.0
    %2681 = vmatpush1.msra.mxu0 0.0
    %2682 = vmatprep.subr.mxu0 0.0
    %2683 = vmatpush1.msra.mxu0 0.0
    %2684 = vmatprep.subr.mxu0 0.0
    %2685 = vmatpush1.msra.mxu0 0.0
    %2686 = vmatprep.subr.mxu0 0.0
    %2687 = vmatpush1.msra.mxu0 0.0
    %2688 = vmatprep.subr.mxu0 0.0
    %2689 = vmatpush1.msra.mxu0 0.0
    %2690 = vmatprep.subr.mxu0 0.0
    %2691 = vmatpush1.msra.mxu0 0.0
    %2692 = vmatprep.subr.mxu0 0.0
    %2693 = vmatpush1.msra.mxu0 0.0
    %2694 = vmatprep.subr.mxu0 0.0
    %2695 = vmatpush1.msra.mxu0 0.0
    %2696 = vmatprep.subr.mxu0 0.0
    %2697 = vmatpush1.msra.mxu0 0.0
    %2698 = vmatprep.mubr.f32.mxu0 0.0
    %2699 = vmatmul.mubr.f32.gmra.mrb[0].mxu0 %v2475
    %v2700 = vpop.f32.mrb[0].mxu0
    %v2701 = vadd.f32 %v2413, %v2700
    %v2702 = vpop.f32.mrb[0].mxu0
    %v2703 = vadd.f32 %v2417, %v2702
    %2704 = vmatprep.mubr.f32.mxu0 0.0
    %2705 = vmatmul.mubr.f32.gmra.mrb[0].mxu0 %v2478
    %v2706 = vpop.f32.mrb[0].mxu0
    %v2707 = vadd.f32 %v2413, %v2706
    %v2708 = vpop.f32.mrb[0].mxu0
    %v2709 = vadd.f32 %v2417, %v2708
    %2710 = vdwg.mxu0
    %2711 = vmatprep.subr.mxu0 %v1000
    %2712 = vmatpush1.msra.mxu0 %v999
    %2713 = vmatprep.subr.mxu0 %v1016
    %2714 = vmatpush1.msra.mxu0 %v1015
    %2715 = vmatprep.subr.mxu0 %v1032
    %2716 = vmatpush1.msra.mxu0 %v1031
    %2717 = vmatprep.subr.mxu0 %v1048
    %2718 = vmatpush1.msra.mxu0 %v1047
    %2719 = vmatprep.subr.mxu0 0.0
    %2720 = vmatpush1.msra.mxu0 0.0
    %2721 = vmatprep.subr.mxu0 0.0
    %2722 = vmatpush1.msra.mxu0 0.0
    %2723 = vmatprep.subr.mxu0 0.0
    %2724 = vmatpush1.msra.mxu0 0.0
    %2725 = vmatprep.subr.mxu0 0.0
    %2726 = vmatpush1.msra.mxu0 0.0
    %2727 = vmatprep.subr.mxu0 0.0
    %2728 = vmatpush1.msra.mxu0 0.0
    %2729 = vmatprep.subr.mxu0 0.0
    %2730 = vmatpush1.msra.mxu0 0.0
    %2731 = vmatprep.subr.mxu0 0.0
    %2732 = vmatpush1.msra.mxu0 0.0
    %2733 = vmatprep.subr.mxu0 0.0
    %2734 = vmatpush1.msra.mxu0 0.0
    %2735 = vmatprep.subr.mxu0 0.0
    %2736 = vmatpush1.msra.mxu0 0.0
    %2737 = vmatprep.subr.mxu0 0.0
    %2738 = vmatpush1.msra.mxu0 0.0
    %2739 = vmatprep.subr.mxu0 0.0
    %2740 = vmatpush1.msra.mxu0 0.0
    %2741 = vmatprep.subr.mxu0 0.0
    %2742 = vmatpush1.msra.mxu0 0.0
    %2743 = vmatprep.subr.mxu0 0.0
    %2744 = vmatpush1.msra.mxu0 0.0
    %2745 = vmatprep.subr.mxu0 0.0
    %2746 = vmatpush1.msra.mxu0 0.0
    %2747 = vmatprep.subr.mxu0 0.0
    %2748 = vmatpush1.msra.mxu0 0.0
    %2749 = vmatprep.subr.mxu0 0.0
    %2750 = vmatpush1.msra.mxu0 0.0
    %2751 = vmatprep.subr.mxu0 0.0
    %2752 = vmatpush1.msra.mxu0 0.0
    %2753 = vmatprep.subr.mxu0 0.0
    %2754 = vmatpush1.msra.mxu0 0.0
    %2755 = vmatprep.subr.mxu0 0.0
    %2756 = vmatpush1.msra.mxu0 0.0
    %2757 = vmatprep.subr.mxu0 0.0
    %2758 = vmatpush1.msra.mxu0 0.0
    %2759 = vmatprep.subr.mxu0 0.0
    %2760 = vmatpush1.msra.mxu0 0.0
    %2761 = vmatprep.subr.mxu0 0.0
    %2762 = vmatpush1.msra.mxu0 0.0
    %2763 = vmatprep.subr.mxu0 0.0
    %2764 = vmatpush1.msra.mxu0 0.0
    %2765 = vmatprep.subr.mxu0 0.0
    %2766 = vmatpush1.msra.mxu0 0.0
    %2767 = vmatprep.subr.mxu0 0.0
    %2768 = vmatpush1.msra.mxu0 0.0
    %2769 = vmatprep.subr.mxu0 0.0
    %2770 = vmatpush1.msra.mxu0 0.0
    %2771 = vmatprep.subr.mxu0 0.0
    %2772 = vmatpush1.msra.mxu0 0.0
    %2773 = vmatprep.subr.mxu0 0.0
    %2774 = vmatpush1.msra.mxu0 0.0
    %2775 = vmatprep.mubr.f32.mxu0 0.0
    %2776 = vmatmul.mubr.f32.gmra.mrb[0].mxu0 %v2475
    %v2777 = vpop.f32.mrb[0].mxu0
    %v2778 = vadd.f32 %v2421, %v2777
    %v2779 = vpop.f32.mrb[0].mxu0
    %v2780 = vadd.f32 %v2425, %v2779
    %2781 = vmatprep.mubr.f32.mxu0 0.0
    %2782 = vmatmul.mubr.f32.gmra.mrb[0].mxu0 %v2478
    %v2783 = vpop.f32.mrb[0].mxu0
    %v2784 = vadd.f32 %v2421, %v2783
    %v2785 = vpop.f32.mrb[0].mxu0
    %v2786 = vadd.f32 %v2425, %v2785
    %2787 = vdwg.mxu0
    %2788 = vmatprep.subr.mxu0 %v1002
    %2789 = vmatpush1.msra.mxu0 %v1001
    %2790 = vmatprep.subr.mxu0 %v1018
    %2791 = vmatpush1.msra.mxu0 %v1017
    %2792 = vmatprep.subr.mxu0 %v1034
    %2793 = vmatpush1.msra.mxu0 %v1033
    %2794 = vmatprep.subr.mxu0 %v1050
    %2795 = vmatpush1.msra.mxu0 %v1049
    %2796 = vmatprep.subr.mxu0 0.0
    %2797 = vmatpush1.msra.mxu0 0.0
    %2798 = vmatprep.subr.mxu0 0.0
    %2799 = vmatpush1.msra.mxu0 0.0
    %2800 = vmatprep.subr.mxu0 0.0
    %2801 = vmatpush1.msra.mxu0 0.0
    %2802 = vmatprep.subr.mxu0 0.0
    %2803 = vmatpush1.msra.mxu0 0.0
    %2804 = vmatprep.subr.mxu0 0.0
    %2805 = vmatpush1.msra.mxu0 0.0
    %2806 = vmatprep.subr.mxu0 0.0
    %2807 = vmatpush1.msra.mxu0 0.0
    %2808 = vmatprep.subr.mxu0 0.0
    %2809 = vmatpush1.msra.mxu0 0.0
    %2810 = vmatprep.subr.mxu0 0.0
    %2811 = vmatpush1.msra.mxu0 0.0
    %2812 = vmatprep.subr.mxu0 0.0
    %2813 = vmatpush1.msra.mxu0 0.0
    %2814 = vmatprep.subr.mxu0 0.0
    %2815 = vmatpush1.msra.mxu0 0.0
    %2816 = vmatprep.subr.mxu0 0.0
    %2817 = vmatpush1.msra.mxu0 0.0
    %2818 = vmatprep.subr.mxu0 0.0
    %2819 = vmatpush1.msra.mxu0 0.0
    %2820 = vmatprep.subr.mxu0 0.0
    %2821 = vmatpush1.msra.mxu0 0.0
    %2822 = vmatprep.subr.mxu0 0.0
    %2823 = vmatpush1.msra.mxu0 0.0
    %2824 = vmatprep.subr.mxu0 0.0
    %2825 = vmatpush1.msra.mxu0 0.0
    %2826 = vmatprep.subr.mxu0 0.0
    %2827 = vmatpush1.msra.mxu0 0.0
    %2828 = vmatprep.subr.mxu0 0.0
    %2829 = vmatpush1.msra.mxu0 0.0
    %2830 = vmatprep.subr.mxu0 0.0
    %2831 = vmatpush1.msra.mxu0 0.0
    %2832 = vmatprep.subr.mxu0 0.0
    %2833 = vmatpush1.msra.mxu0 0.0
    %2834 = vmatprep.subr.mxu0 0.0
    %2835 = vmatpush1.msra.mxu0 0.0
    %2836 = vmatprep.subr.mxu0 0.0
    %2837 = vmatpush1.msra.mxu0 0.0
    %2838 = vmatprep.subr.mxu0 0.0
    %2839 = vmatpush1.msra.mxu0 0.0
    %2840 = vmatprep.subr.mxu0 0.0
    %2841 = vmatpush1.msra.mxu0 0.0
    %2842 = vmatprep.subr.mxu0 0.0
    %2843 = vmatpush1.msra.mxu0 0.0
    %2844 = vmatprep.subr.mxu0 0.0
    %2845 = vmatpush1.msra.mxu0 0.0
    %2846 = vmatprep.subr.mxu0 0.0
    %2847 = vmatpush1.msra.mxu0 0.0
    %2848 = vmatprep.subr.mxu0 0.0
    %2849 = vmatpush1.msra.mxu0 0.0
    %2850 = vmatprep.subr.mxu0 0.0
    %2851 = vmatpush1.msra.mxu0 0.0
    %2852 = vmatprep.mubr.f32.mxu0 0.0
    %2853 = vmatmul.mubr.f32.gmra.mrb[0].mxu0 %v2475
    %v2854 = vpop.f32.mrb[0].mxu0
    %v2855 = vadd.f32 %v2429, %v2854
    %v2856 = vpop.f32.mrb[0].mxu0
    %v2857 = vadd.f32 %v2433, %v2856
    %2858 = vmatprep.mubr.f32.mxu0 0.0
    %2859 = vmatmul.mubr.f32.gmra.mrb[0].mxu0 %v2478
    %v2860 = vpop.f32.mrb[0].mxu0
    %v2861 = vadd.f32 %v2429, %v2860
    %v2862 = vpop.f32.mrb[0].mxu0
    %v2863 = vadd.f32 %v2433, %v2862
    %2864 = vdwg.mxu0
    %2865 = vmatprep.subr.mxu0 %v1004
    %2866 = vmatpush1.msra.mxu0 %v1003
    %2867 = vmatprep.subr.mxu0 %v1020
    %2868 = vmatpush1.msra.mxu0 %v1019
    %2869 = vmatprep.subr.mxu0 %v1036
    %2870 = vmatpush1.msra.mxu0 %v1035
    %2871 = vmatprep.subr.mxu0 %v1052
    %2872 = vmatpush1.msra.mxu0 %v1051
    %2873 = vmatprep.subr.mxu0 0.0
    %2874 = vmatpush1.msra.mxu0 0.0
    %2875 = vmatprep.subr.mxu0 0.0
    %2876 = vmatpush1.msra.mxu0 0.0
    %2877 = vmatprep.subr.mxu0 0.0
    %2878 = vmatpush1.msra.mxu0 0.0
    %2879 = vmatprep.subr.mxu0 0.0
    %2880 = vmatpush1.msra.mxu0 0.0
    %2881 = vmatprep.subr.mxu0 0.0
    %2882 = vmatpush1.msra.mxu0 0.0
    %2883 = vmatprep.subr.mxu0 0.0
    %2884 = vmatpush1.msra.mxu0 0.0
    %2885 = vmatprep.subr.mxu0 0.0
    %2886 = vmatpush1.msra.mxu0 0.0
    %2887 = vmatprep.subr.mxu0 0.0
    %2888 = vmatpush1.msra.mxu0 0.0
    %2889 = vmatprep.subr.mxu0 0.0
    %2890 = vmatpush1.msra.mxu0 0.0
    %2891 = vmatprep.subr.mxu0 0.0
    %2892 = vmatpush1.msra.mxu0 0.0
    %2893 = vmatprep.subr.mxu0 0.0
    %2894 = vmatpush1.msra.mxu0 0.0
    %2895 = vmatprep.subr.mxu0 0.0
    %2896 = vmatpush1.msra.mxu0 0.0
    %2897 = vmatprep.subr.mxu0 0.0
    %2898 = vmatpush1.msra.mxu0 0.0
    %2899 = vmatprep.subr.mxu0 0.0
    %2900 = vmatpush1.msra.mxu0 0.0
    %2901 = vmatprep.subr.mxu0 0.0
    %2902 = vmatpush1.msra.mxu0 0.0
    %2903 = vmatprep.subr.mxu0 0.0
    %2904 = vmatpush1.msra.mxu0 0.0
    %2905 = vmatprep.subr.mxu0 0.0
    %2906 = vmatpush1.msra.mxu0 0.0
    %2907 = vmatprep.subr.mxu0 0.0
    %2908 = vmatpush1.msra.mxu0 0.0
    %2909 = vmatprep.subr.mxu0 0.0
    %2910 = vmatpush1.msra.mxu0 0.0
    %2911 = vmatprep.subr.mxu0 0.0
    %2912 = vmatpush1.msra.mxu0 0.0
    %2913 = vmatprep.subr.mxu0 0.0
    %2914 = vmatpush1.msra.mxu0 0.0
    %2915 = vmatprep.subr.mxu0 0.0
    %2916 = vmatpush1.msra.mxu0 0.0
    %2917 = vmatprep.subr.mxu0 0.0
    %2918 = vmatpush1.msra.mxu0 0.0
    %2919 = vmatprep.subr.mxu0 0.0
    %2920 = vmatpush1.msra.mxu0 0.0
    %2921 = vmatprep.subr.mxu0 0.0
    %2922 = vmatpush1.msra.mxu0 0.0
    %2923 = vmatprep.subr.mxu0 0.0
    %2924 = vmatpush1.msra.mxu0 0.0
    %2925 = vmatprep.subr.mxu0 0.0
    %2926 = vmatpush1.msra.mxu0 0.0
    %2927 = vmatprep.subr.mxu0 0.0
    %2928 = vmatpush1.msra.mxu0 0.0
    %2929 = vmatprep.mubr.f32.mxu0 0.0
    %2930 = vmatmul.mubr.f32.gmra.mrb[0].mxu0 %v2475
    %v2931 = vpop.f32.mrb[0].mxu0
    %v2932 = vadd.f32 %v2437, %v2931
    %v2933 = vpop.f32.mrb[0].mxu0
    %v2934 = vadd.f32 %v2441, %v2933
    %2935 = vmatprep.mubr.f32.mxu0 0.0
    %2936 = vmatmul.mubr.f32.gmra.mrb[0].mxu0 %v2478
    %v2937 = vpop.f32.mrb[0].mxu0
    %v2938 = vadd.f32 %v2437, %v2937
    %v2939 = vpop.f32.mrb[0].mxu0
    %v2940 = vadd.f32 %v2441, %v2939
    %2941 = vdwg.mxu0
    %2942 = vmatprep.subr.mxu0 %v1006
    %2943 = vmatpush1.msra.mxu0 %v1005
    %2944 = vmatprep.subr.mxu0 %v1022
    %2945 = vmatpush1.msra.mxu0 %v1021
    %2946 = vmatprep.subr.mxu0 %v1038
    %2947 = vmatpush1.msra.mxu0 %v1037
    %2948 = vmatprep.subr.mxu0 %v1054
    %2949 = vmatpush1.msra.mxu0 %v1053
    %2950 = vmatprep.subr.mxu0 0.0
    %2951 = vmatpush1.msra.mxu0 0.0
    %2952 = vmatprep.subr.mxu0 0.0
    %2953 = vmatpush1.msra.mxu0 0.0
    %2954 = vmatprep.subr.mxu0 0.0
    %2955 = vmatpush1.msra.mxu0 0.0
    %2956 = vmatprep.subr.mxu0 0.0
    %2957 = vmatpush1.msra.mxu0 0.0
    %2958 = vmatprep.subr.mxu0 0.0
    %2959 = vmatpush1.msra.mxu0 0.0
    %2960 = vmatprep.subr.mxu0 0.0
    %2961 = vmatpush1.msra.mxu0 0.0
    %2962 = vmatprep.subr.mxu0 0.0
    %2963 = vmatpush1.msra.mxu0 0.0
    %2964 = vmatprep.subr.mxu0 0.0
    %2965 = vmatpush1.msra.mxu0 0.0
    %2966 = vmatprep.subr.mxu0 0.0
    %2967 = vmatpush1.msra.mxu0 0.0
    %2968 = vmatprep.subr.mxu0 0.0
    %2969 = vmatpush1.msra.mxu0 0.0
    %2970 = vmatprep.subr.mxu0 0.0
    %2971 = vmatpush1.msra.mxu0 0.0
    %2972 = vmatprep.subr.mxu0 0.0
    %2973 = vmatpush1.msra.mxu0 0.0
    %2974 = vmatprep.subr.mxu0 0.0
    %2975 = vmatpush1.msra.mxu0 0.0
    %2976 = vmatprep.subr.mxu0 0.0
    %2977 = vmatpush1.msra.mxu0 0.0
    %2978 = vmatprep.subr.mxu0 0.0
    %2979 = vmatpush1.msra.mxu0 0.0
    %2980 = vmatprep.subr.mxu0 0.0
    %2981 = vmatpush1.msra.mxu0 0.0
    %2982 = vmatprep.subr.mxu0 0.0
    %2983 = vmatpush1.msra.mxu0 0.0
    %2984 = vmatprep.subr.mxu0 0.0
    %2985 = vmatpush1.msra.mxu0 0.0
    %2986 = vmatprep.subr.mxu0 0.0
    %2987 = vmatpush1.msra.mxu0 0.0
    %2988 = vmatprep.subr.mxu0 0.0
    %2989 = vmatpush1.msra.mxu0 0.0
    %2990 = vmatprep.subr.mxu0 0.0
    %2991 = vmatpush1.msra.mxu0 0.0
    %2992 = vmatprep.subr.mxu0 0.0
    %2993 = vmatpush1.msra.mxu0 0.0
    %2994 = vmatprep.subr.mxu0 0.0
    %2995 = vmatpush1.msra.mxu0 0.0
    %2996 = vmatprep.subr.mxu0 0.0
    %2997 = vmatpush1.msra.mxu0 0.0
    %2998 = vmatprep.subr.mxu0 0.0
    %2999 = vmatpush1.msra.mxu0 0.0
    %3000 = vmatprep.subr.mxu0 0.0
    %3001 = vmatpush1.msra.mxu0 0.0
    %3002 = vmatprep.subr.mxu0 0.0
    %3003 = vmatpush1.msra.mxu0 0.0
    %3004 = vmatprep.subr.mxu0 0.0
    %3005 = vmatpush1.msra.mxu0 0.0
    %3006 = vmatprep.mubr.f32.mxu0 0.0
    %3007 = vmatmul.mubr.f32.gmra.mrb[0].mxu0 %v2475
    %v3008 = vpop.f32.mrb[0].mxu0
    %v3009 = vadd.f32 %v2445, %v3008
    %v3010 = vpop.f32.mrb[0].mxu0
    %v3011 = vadd.f32 %v2449, %v3010
    %3012 = vmatprep.mubr.f32.mxu0 0.0
    %3013 = vmatmul.mubr.f32.gmra.mrb[0].mxu0 %v2478
    %v3014 = vpop.f32.mrb[0].mxu0
    %v3015 = vadd.f32 %v2445, %v3014
    %v3016 = vpop.f32.mrb[0].mxu0
    %v3017 = vadd.f32 %v2449, %v3016
    %3018 = vdwg.mxu0
    %3019 = vmatprep.subr.mxu0 %v1008
    %3020 = vmatpush1.msra.mxu0 %v1007
    %3021 = vmatprep.subr.mxu0 %v1024
    %3022 = vmatpush1.msra.mxu0 %v1023
    %3023 = vmatprep.subr.mxu0 %v1040
    %3024 = vmatpush1.msra.mxu0 %v1039
    %3025 = vmatprep.subr.mxu0 %v1056
    %3026 = vmatpush1.msra.mxu0 %v1055
    %3027 = vmatprep.subr.mxu0 0.0
    %3028 = vmatpush1.msra.mxu0 0.0
    %3029 = vmatprep.subr.mxu0 0.0
    %3030 = vmatpush1.msra.mxu0 0.0
    %3031 = vmatprep.subr.mxu0 0.0
    %3032 = vmatpush1.msra.mxu0 0.0
    %3033 = vmatprep.subr.mxu0 0.0
    %3034 = vmatpush1.msra.mxu0 0.0
    %3035 = vmatprep.subr.mxu0 0.0
    %3036 = vmatpush1.msra.mxu0 0.0
    %3037 = vmatprep.subr.mxu0 0.0
    %3038 = vmatpush1.msra.mxu0 0.0
    %3039 = vmatprep.subr.mxu0 0.0
    %3040 = vmatpush1.msra.mxu0 0.0
    %3041 = vmatprep.subr.mxu0 0.0
    %3042 = vmatpush1.msra.mxu0 0.0
    %3043 = vmatprep.subr.mxu0 0.0
    %3044 = vmatpush1.msra.mxu0 0.0
    %3045 = vmatprep.subr.mxu0 0.0
    %3046 = vmatpush1.msra.mxu0 0.0
    %3047 = vmatprep.subr.mxu0 0.0
    %3048 = vmatpush1.msra.mxu0 0.0
    %3049 = vmatprep.subr.mxu0 0.0
    %3050 = vmatpush1.msra.mxu0 0.0
    %3051 = vmatprep.subr.mxu0 0.0
    %3052 = vmatpush1.msra.mxu0 0.0
    %3053 = vmatprep.subr.mxu0 0.0
    %3054 = vmatpush1.msra.mxu0 0.0
    %3055 = vmatprep.subr.mxu0 0.0
    %3056 = vmatpush1.msra.mxu0 0.0
    %3057 = vmatprep.subr.mxu0 0.0
    %3058 = vmatpush1.msra.mxu0 0.0
    %3059 = vmatprep.subr.mxu0 0.0
    %3060 = vmatpush1.msra.mxu0 0.0
    %3061 = vmatprep.subr.mxu0 0.0
    %3062 = vmatpush1.msra.mxu0 0.0
    %3063 = vmatprep.subr.mxu0 0.0
    %3064 = vmatpush1.msra.mxu0 0.0
    %3065 = vmatprep.subr.mxu0 0.0
    %3066 = vmatpush1.msra.mxu0 0.0
    %3067 = vmatprep.subr.mxu0 0.0
    %3068 = vmatpush1.msra.mxu0 0.0
    %3069 = vmatprep.subr.mxu0 0.0
    %3070 = vmatpush1.msra.mxu0 0.0
    %3071 = vmatprep.subr.mxu0 0.0
    %3072 = vmatpush1.msra.mxu0 0.0
    %3073 = vmatprep.subr.mxu0 0.0
    %3074 = vmatpush1.msra.mxu0 0.0
    %3075 = vmatprep.subr.mxu0 0.0
    %3076 = vmatpush1.msra.mxu0 0.0
    %3077 = vmatprep.subr.mxu0 0.0
    %3078 = vmatpush1.msra.mxu0 0.0
    %3079 = vmatprep.subr.mxu0 0.0
    %3080 = vmatpush1.msra.mxu0 0.0
    %3081 = vmatprep.subr.mxu0 0.0
    %3082 = vmatpush1.msra.mxu0 0.0
    %3083 = vmatprep.mubr.f32.mxu0 0.0
    %3084 = vmatmul.mubr.f32.gmra.mrb[0].mxu0 %v2475
    %v3085 = vpop.f32.mrb[0].mxu0
    %v3086 = vadd.f32 %v2453, %v3085
    %v3087 = vpop.f32.mrb[0].mxu0
    %v3088 = vadd.f32 %v2457, %v3087
    %3089 = vmatprep.mubr.f32.mxu0 0.0
    %3090 = vmatmul.mubr.f32.gmra.mrb[0].mxu0 %v2478
    %v3091 = vpop.f32.mrb[0].mxu0
    %v3092 = vadd.f32 %v2453, %v3091
    %v3093 = vpop.f32.mrb[0].mxu0
    %v3094 = vadd.f32 %v2457, %v3093
    %3095 = vdwg.mxu0
    %v3096 = vmul.f32 %v2547, 0.5
    %v3097 = vmul.f32 %v2549, 0.5
    %v3098 = vmul.f32 %v2624, 0.5
    %v3099 = vmul.f32 %v2626, 0.5
    %v3100 = vmul.f32 %v2701, 0.5
    %v3101 = vmul.f32 %v2703, 0.5
    %v3102 = vmul.f32 %v2778, 0.5
    %v3103 = vmul.f32 %v2780, 0.5
    %v3104 = vmul.f32 %v2855, 0.5
    %v3105 = vmul.f32 %v2857, 0.5
    %v3106 = vmul.f32 %v2932, 0.5
    %v3107 = vmul.f32 %v2934, 0.5
    %v3108 = vmul.f32 %v3009, 0.5
    %v3109 = vmul.f32 %v3011, 0.5
    %v3110 = vmul.f32 %v3086, 0.5
    %v3111 = vmul.f32 %v3088, 0.5
    %v3112 = vmul.f32 %v2553, 0.5
    %v3113 = vmul.f32 %v2555, 0.5
    %v3114 = vmul.f32 %v2630, 0.5
    %v3115 = vmul.f32 %v2632, 0.5
    %v3116 = vmul.f32 %v2707, 0.5
    %v3117 = vmul.f32 %v2709, 0.5
    %v3118 = vmul.f32 %v2784, 0.5
    %v3119 = vmul.f32 %v2786, 0.5
    %v3120 = vmul.f32 %v2861, 0.5
    %v3121 = vmul.f32 %v2863, 0.5
    %v3122 = vmul.f32 %v2938, 0.5
    %v3123 = vmul.f32 %v2940, 0.5
    %v3124 = vmul.f32 %v3015, 0.5
    %v3125 = vmul.f32 %v3017, 0.5
    %v3126 = vmul.f32 %v3092, 0.5
    %v3127 = vmul.f32 %v3094, 0.5
    %v3128 = vmul.f32 %v2547, 0.70710677
    %v3129 = vmul.f32 %v2549, 0.70710677
    %v3130 = vmul.f32 %v2624, 0.70710677
    %v3131 = vmul.f32 %v2626, 0.70710677
    %v3132 = vmul.f32 %v2701, 0.70710677
    %v3133 = vmul.f32 %v2703, 0.70710677
    %v3134 = vmul.f32 %v2778, 0.70710677
    %v3135 = vmul.f32 %v2780, 0.70710677
    %v3136 = vmul.f32 %v2855, 0.70710677
    %v3137 = vmul.f32 %v2857, 0.70710677
    %v3138 = vmul.f32 %v2932, 0.70710677
    %v3139 = vmul.f32 %v2934, 0.70710677
    %v3140 = vmul.f32 %v3009, 0.70710677
    %v3141 = vmul.f32 %v3011, 0.70710677
    %v3142 = vmul.f32 %v3086, 0.70710677
    %v3143 = vmul.f32 %v3088, 0.70710677
    %v3144 = vmul.f32 %v2553, 0.70710677
    %v3145 = vmul.f32 %v2555, 0.70710677
    %v3146 = vmul.f32 %v2630, 0.70710677
    %v3147 = vmul.f32 %v2632, 0.70710677
    %v3148 = vmul.f32 %v2707, 0.70710677
    %v3149 = vmul.f32 %v2709, 0.70710677
    %v3150 = vmul.f32 %v2784, 0.70710677
    %v3151 = vmul.f32 %v2786, 0.70710677
    %v3152 = vmul.f32 %v2861, 0.70710677
    %v3153 = vmul.f32 %v2863, 0.70710677
    %v3154 = vmul.f32 %v2938, 0.70710677
    %v3155 = vmul.f32 %v2940, 0.70710677
    %v3156 = vmul.f32 %v3015, 0.70710677
    %v3157 = vmul.f32 %v3017, 0.70710677
    %v3158 = vmul.f32 %v3092, 0.70710677
    %v3159 = vmul.f32 %v3094, 0.70710677
    %vm3160 = vcmp.ge.f32.partialorder %v3128, 0.0
    %vm3161 = vcmp.ge.f32.partialorder %v3129, 0.0
    %vm3162 = vcmp.ge.f32.partialorder %v3130, 0.0
    %vm3163 = vcmp.ge.f32.partialorder %v3131, 0.0
    %vm3164 = vcmp.ge.f32.partialorder %v3132, 0.0
    %vm3165 = vcmp.ge.f32.partialorder %v3133, 0.0
    %vm3166 = vcmp.ge.f32.partialorder %v3134, 0.0
    %vm3167 = vcmp.ge.f32.partialorder %v3135, 0.0
    %vm3168 = vcmp.ge.f32.partialorder %v3136, 0.0
    %vm3169 = vcmp.ge.f32.partialorder %v3137, 0.0
    %vm3170 = vcmp.ge.f32.partialorder %v3138, 0.0
    %vm3171 = vcmp.ge.f32.partialorder %v3139, 0.0
    %vm3172 = vcmp.ge.f32.partialorder %v3140, 0.0
    %vm3173 = vcmp.ge.f32.partialorder %v3141, 0.0
    %vm3174 = vcmp.ge.f32.partialorder %v3142, 0.0
    %vm3175 = vcmp.ge.f32.partialorder %v3143, 0.0
    %vm3176 = vcmp.ge.f32.partialorder %v3144, 0.0
    %vm3177 = vcmp.ge.f32.partialorder %v3145, 0.0
    %vm3178 = vcmp.ge.f32.partialorder %v3146, 0.0
    %vm3179 = vcmp.ge.f32.partialorder %v3147, 0.0
    %vm3180 = vcmp.ge.f32.partialorder %v3148, 0.0
    %vm3181 = vcmp.ge.f32.partialorder %v3149, 0.0
    %vm3182 = vcmp.ge.f32.partialorder %v3150, 0.0
    %vm3183 = vcmp.ge.f32.partialorder %v3151, 0.0
    %vm3184 = vcmp.ge.f32.partialorder %v3152, 0.0
    %vm3185 = vcmp.ge.f32.partialorder %v3153, 0.0
    %vm3186 = vcmp.ge.f32.partialorder %v3154, 0.0
    %vm3187 = vcmp.ge.f32.partialorder %v3155, 0.0
    %vm3188 = vcmp.ge.f32.partialorder %v3156, 0.0
    %vm3189 = vcmp.ge.f32.partialorder %v3157, 0.0
    %vm3190 = vcmp.ge.f32.partialorder %v3158, 0.0
    %vm3191 = vcmp.ge.f32.partialorder %v3159, 0.0
    %v3192 = vsel %vm3160, 1.0, -1.0
    %v3193 = vsel %vm3161, 1.0, -1.0
    %v3194 = vsel %vm3162, 1.0, -1.0
    %v3195 = vsel %vm3163, 1.0, -1.0
    %v3196 = vsel %vm3164, 1.0, -1.0
    %v3197 = vsel %vm3165, 1.0, -1.0
    %v3198 = vsel %vm3166, 1.0, -1.0
    %v3199 = vsel %vm3167, 1.0, -1.0
    %v3200 = vsel %vm3168, 1.0, -1.0
    %v3201 = vsel %vm3169, 1.0, -1.0
    %v3202 = vsel %vm3170, 1.0, -1.0
    %v3203 = vsel %vm3171, 1.0, -1.0
    %v3204 = vsel %vm3172, 1.0, -1.0
    %v3205 = vsel %vm3173, 1.0, -1.0
    %v3206 = vsel %vm3174, 1.0, -1.0
    %v3207 = vsel %vm3175, 1.0, -1.0
    %v3208 = vsel %vm3176, 1.0, -1.0
    %v3209 = vsel %vm3177, 1.0, -1.0
    %v3210 = vsel %vm3178, 1.0, -1.0
    %v3211 = vsel %vm3179, 1.0, -1.0
    %v3212 = vsel %vm3180, 1.0, -1.0
    %v3213 = vsel %vm3181, 1.0, -1.0
    %v3214 = vsel %vm3182, 1.0, -1.0
    %v3215 = vsel %vm3183, 1.0, -1.0
    %v3216 = vsel %vm3184, 1.0, -1.0
    %v3217 = vsel %vm3185, 1.0, -1.0
    %v3218 = vsel %vm3186, 1.0, -1.0
    %v3219 = vsel %vm3187, 1.0, -1.0
    %v3220 = vsel %vm3188, 1.0, -1.0
    %v3221 = vsel %vm3189, 1.0, -1.0
    %v3222 = vsel %vm3190, 1.0, -1.0
    %v3223 = vsel %vm3191, 1.0, -1.0
    %v3224 = vand.u32 2147483647, %v3128
    %v3225 = vand.u32 2147483647, %v3129
    %v3226 = vand.u32 2147483647, %v3130
    %v3227 = vand.u32 2147483647, %v3131
    %v3228 = vand.u32 2147483647, %v3132
    %v3229 = vand.u32 2147483647, %v3133
    %v3230 = vand.u32 2147483647, %v3134
    %v3231 = vand.u32 2147483647, %v3135
    %v3232 = vand.u32 2147483647, %v3136
    %v3233 = vand.u32 2147483647, %v3137
    %v3234 = vand.u32 2147483647, %v3138
    %v3235 = vand.u32 2147483647, %v3139
    %v3236 = vand.u32 2147483647, %v3140
    %v3237 = vand.u32 2147483647, %v3141
    %v3238 = vand.u32 2147483647, %v3142
    %v3239 = vand.u32 2147483647, %v3143
    %v3240 = vand.u32 2147483647, %v3144
    %v3241 = vand.u32 2147483647, %v3145
    %v3242 = vand.u32 2147483647, %v3146
    %v3243 = vand.u32 2147483647, %v3147
    %v3244 = vand.u32 2147483647, %v3148
    %v3245 = vand.u32 2147483647, %v3149
    %v3246 = vand.u32 2147483647, %v3150
    %v3247 = vand.u32 2147483647, %v3151
    %v3248 = vand.u32 2147483647, %v3152
    %v3249 = vand.u32 2147483647, %v3153
    %v3250 = vand.u32 2147483647, %v3154
    %v3251 = vand.u32 2147483647, %v3155
    %v3252 = vand.u32 2147483647, %v3156
    %v3253 = vand.u32 2147483647, %v3157
    %v3254 = vand.u32 2147483647, %v3158
    %v3255 = vand.u32 2147483647, %v3159
    %v3256 = vmul.f32 %v3224, 0.3275911
    %v3257 = vmul.f32 %v3225, 0.3275911
    %v3258 = vmul.f32 %v3226, 0.3275911
    %v3259 = vmul.f32 %v3227, 0.3275911
    %v3260 = vmul.f32 %v3228, 0.3275911
    %v3261 = vmul.f32 %v3229, 0.3275911
    %v3262 = vmul.f32 %v3230, 0.3275911
    %v3263 = vmul.f32 %v3231, 0.3275911
    %v3264 = vmul.f32 %v3232, 0.3275911
    %v3265 = vmul.f32 %v3233, 0.3275911
    %v3266 = vmul.f32 %v3234, 0.3275911
    %v3267 = vmul.f32 %v3235, 0.3275911
    %v3268 = vmul.f32 %v3236, 0.3275911
    %v3269 = vmul.f32 %v3237, 0.3275911
    %v3270 = vmul.f32 %v3238, 0.3275911
    %v3271 = vmul.f32 %v3239, 0.3275911
    %v3272 = vmul.f32 %v3240, 0.3275911
    %v3273 = vmul.f32 %v3241, 0.3275911
    %v3274 = vmul.f32 %v3242, 0.3275911
    %v3275 = vmul.f32 %v3243, 0.3275911
    %v3276 = vmul.f32 %v3244, 0.3275911
    %v3277 = vmul.f32 %v3245, 0.3275911
    %v3278 = vmul.f32 %v3246, 0.3275911
    %v3279 = vmul.f32 %v3247, 0.3275911
    %v3280 = vmul.f32 %v3248, 0.3275911
    %v3281 = vmul.f32 %v3249, 0.3275911
    %v3282 = vmul.f32 %v3250, 0.3275911
    %v3283 = vmul.f32 %v3251, 0.3275911
    %v3284 = vmul.f32 %v3252, 0.3275911
    %v3285 = vmul.f32 %v3253, 0.3275911
    %v3286 = vmul.f32 %v3254, 0.3275911
    %v3287 = vmul.f32 %v3255, 0.3275911
    %v3288 = vadd.f32 %v3256, 1.0
    %v3289 = vadd.f32 %v3257, 1.0
    %v3290 = vadd.f32 %v3258, 1.0
    %v3291 = vadd.f32 %v3259, 1.0
    %v3292 = vadd.f32 %v3260, 1.0
    %v3293 = vadd.f32 %v3261, 1.0
    %v3294 = vadd.f32 %v3262, 1.0
    %v3295 = vadd.f32 %v3263, 1.0
    %v3296 = vadd.f32 %v3264, 1.0
    %v3297 = vadd.f32 %v3265, 1.0
    %v3298 = vadd.f32 %v3266, 1.0
    %v3299 = vadd.f32 %v3267, 1.0
    %v3300 = vadd.f32 %v3268, 1.0
    %v3301 = vadd.f32 %v3269, 1.0
    %v3302 = vadd.f32 %v3270, 1.0
    %v3303 = vadd.f32 %v3271, 1.0
    %v3304 = vadd.f32 %v3272, 1.0
    %v3305 = vadd.f32 %v3273, 1.0
    %v3306 = vadd.f32 %v3274, 1.0
    %v3307 = vadd.f32 %v3275, 1.0
    %v3308 = vadd.f32 %v3276, 1.0
    %v3309 = vadd.f32 %v3277, 1.0
    %v3310 = vadd.f32 %v3278, 1.0
    %v3311 = vadd.f32 %v3279, 1.0
    %v3312 = vadd.f32 %v3280, 1.0
    %v3313 = vadd.f32 %v3281, 1.0
    %v3314 = vadd.f32 %v3282, 1.0
    %v3315 = vadd.f32 %v3283, 1.0
    %v3316 = vadd.f32 %v3284, 1.0
    %v3317 = vadd.f32 %v3285, 1.0
    %v3318 = vadd.f32 %v3286, 1.0
    %v3319 = vadd.f32 %v3287, 1.0
    %v3320 = vrcp.pop %v3288
    %v3321 = vmul.f32 1.0, %v3320
    %v3322 = vrcp.pop %v3289
    %v3323 = vmul.f32 1.0, %v3322
    %v3324 = vrcp.pop %v3290
    %v3325 = vmul.f32 1.0, %v3324
    %v3326 = vrcp.pop %v3291
    %v3327 = vmul.f32 1.0, %v3326
    %v3328 = vrcp.pop %v3292
    %v3329 = vmul.f32 1.0, %v3328
    %v3330 = vrcp.pop %v3293
    %v3331 = vmul.f32 1.0, %v3330
    %v3332 = vrcp.pop %v3294
    %v3333 = vmul.f32 1.0, %v3332
    %v3334 = vrcp.pop %v3295
    %v3335 = vmul.f32 1.0, %v3334
    %v3336 = vrcp.pop %v3296
    %v3337 = vmul.f32 1.0, %v3336
    %v3338 = vrcp.pop %v3297
    %v3339 = vmul.f32 1.0, %v3338
    %v3340 = vrcp.pop %v3298
    %v3341 = vmul.f32 1.0, %v3340
    %v3342 = vrcp.pop %v3299
    %v3343 = vmul.f32 1.0, %v3342
    %v3344 = vrcp.pop %v3300
    %v3345 = vmul.f32 1.0, %v3344
    %v3346 = vrcp.pop %v3301
    %v3347 = vmul.f32 1.0, %v3346
    %v3348 = vrcp.pop %v3302
    %v3349 = vmul.f32 1.0, %v3348
    %v3350 = vrcp.pop %v3303
    %v3351 = vmul.f32 1.0, %v3350
    %v3352 = vrcp.pop %v3304
    %v3353 = vmul.f32 1.0, %v3352
    %v3354 = vrcp.pop %v3305
    %v3355 = vmul.f32 1.0, %v3354
    %v3356 = vrcp.pop %v3306
    %v3357 = vmul.f32 1.0, %v3356
    %v3358 = vrcp.pop %v3307
    %v3359 = vmul.f32 1.0, %v3358
    %v3360 = vrcp.pop %v3308
    %v3361 = vmul.f32 1.0, %v3360
    %v3362 = vrcp.pop %v3309
    %v3363 = vmul.f32 1.0, %v3362
    %v3364 = vrcp.pop %v3310
    %v3365 = vmul.f32 1.0, %v3364
    %v3366 = vrcp.pop %v3311
    %v3367 = vmul.f32 1.0, %v3366
    %v3368 = vrcp.pop %v3312
    %v3369 = vmul.f32 1.0, %v3368
    %v3370 = vrcp.pop %v3313
    %v3371 = vmul.f32 1.0, %v3370
    %v3372 = vrcp.pop %v3314
    %v3373 = vmul.f32 1.0, %v3372
    %v3374 = vrcp.pop %v3315
    %v3375 = vmul.f32 1.0, %v3374
    %v3376 = vrcp.pop %v3316
    %v3377 = vmul.f32 1.0, %v3376
    %v3378 = vrcp.pop %v3317
    %v3379 = vmul.f32 1.0, %v3378
    %v3380 = vrcp.pop %v3318
    %v3381 = vmul.f32 1.0, %v3380
    %v3382 = vrcp.pop %v3319
    %v3383 = vmul.f32 1.0, %v3382
    %v3384 = vmul.f32 %v3321, 1.0614054
    %v3385 = vmul.f32 %v3323, 1.0614054
    %v3386 = vmul.f32 %v3325, 1.0614054
    %v3387 = vmul.f32 %v3327, 1.0614054
    %v3388 = vmul.f32 %v3329, 1.0614054
    %v3389 = vmul.f32 %v3331, 1.0614054
    %v3390 = vmul.f32 %v3333, 1.0614054
    %v3391 = vmul.f32 %v3335, 1.0614054
    %v3392 = vmul.f32 %v3337, 1.0614054
    %v3393 = vmul.f32 %v3339, 1.0614054
    %v3394 = vmul.f32 %v3341, 1.0614054
    %v3395 = vmul.f32 %v3343, 1.0614054
    %v3396 = vmul.f32 %v3345, 1.0614054
    %v3397 = vmul.f32 %v3347, 1.0614054
    %v3398 = vmul.f32 %v3349, 1.0614054
    %v3399 = vmul.f32 %v3351, 1.0614054
    %v3400 = vmul.f32 %v3353, 1.0614054
    %v3401 = vmul.f32 %v3355, 1.0614054
    %v3402 = vmul.f32 %v3357, 1.0614054
    %v3403 = vmul.f32 %v3359, 1.0614054
    %v3404 = vmul.f32 %v3361, 1.0614054
    %v3405 = vmul.f32 %v3363, 1.0614054
    %v3406 = vmul.f32 %v3365, 1.0614054
    %v3407 = vmul.f32 %v3367, 1.0614054
    %v3408 = vmul.f32 %v3369, 1.0614054
    %v3409 = vmul.f32 %v3371, 1.0614054
    %v3410 = vmul.f32 %v3373, 1.0614054
    %v3411 = vmul.f32 %v3375, 1.0614054
    %v3412 = vmul.f32 %v3377, 1.0614054
    %v3413 = vmul.f32 %v3379, 1.0614054
    %v3414 = vmul.f32 %v3381, 1.0614054
    %v3415 = vmul.f32 %v3383, 1.0614054
    %v3416 = vadd.f32 %v3384, -1.4531521
    %v3417 = vadd.f32 %v3385, -1.4531521
    %v3418 = vadd.f32 %v3386, -1.4531521
    %v3419 = vadd.f32 %v3387, -1.4531521
    %v3420 = vadd.f32 %v3388, -1.4531521
    %v3421 = vadd.f32 %v3389, -1.4531521
    %v3422 = vadd.f32 %v3390, -1.4531521
    %v3423 = vadd.f32 %v3391, -1.4531521
    %v3424 = vadd.f32 %v3392, -1.4531521
    %v3425 = vadd.f32 %v3393, -1.4531521
    %v3426 = vadd.f32 %v3394, -1.4531521
    %v3427 = vadd.f32 %v3395, -1.4531521
    %v3428 = vadd.f32 %v3396, -1.4531521
    %v3429 = vadd.f32 %v3397, -1.4531521
    %v3430 = vadd.f32 %v3398, -1.4531521
    %v3431 = vadd.f32 %v3399, -1.4531521
    %v3432 = vadd.f32 %v3400, -1.4531521
    %v3433 = vadd.f32 %v3401, -1.4531521
    %v3434 = vadd.f32 %v3402, -1.4531521
    %v3435 = vadd.f32 %v3403, -1.4531521
    %v3436 = vadd.f32 %v3404, -1.4531521
    %v3437 = vadd.f32 %v3405, -1.4531521
    %v3438 = vadd.f32 %v3406, -1.4531521
    %v3439 = vadd.f32 %v3407, -1.4531521
    %v3440 = vadd.f32 %v3408, -1.4531521
    %v3441 = vadd.f32 %v3409, -1.4531521
    %v3442 = vadd.f32 %v3410, -1.4531521
    %v3443 = vadd.f32 %v3411, -1.4531521
    %v3444 = vadd.f32 %v3412, -1.4531521
    %v3445 = vadd.f32 %v3413, -1.4531521
    %v3446 = vadd.f32 %v3414, -1.4531521
    %v3447 = vadd.f32 %v3415, -1.4531521
    %v3448 = vmul.f32 %v3416, %v3321
    %v3449 = vmul.f32 %v3417, %v3323
    %v3450 = vmul.f32 %v3418, %v3325
    %v3451 = vmul.f32 %v3419, %v3327
    %v3452 = vmul.f32 %v3420, %v3329
    %v3453 = vmul.f32 %v3421, %v3331
    %v3454 = vmul.f32 %v3422, %v3333
    %v3455 = vmul.f32 %v3423, %v3335
    %v3456 = vmul.f32 %v3424, %v3337
    %v3457 = vmul.f32 %v3425, %v3339
    %v3458 = vmul.f32 %v3426, %v3341
    %v3459 = vmul.f32 %v3427, %v3343
    %v3460 = vmul.f32 %v3428, %v3345
    %v3461 = vmul.f32 %v3429, %v3347
    %v3462 = vmul.f32 %v3430, %v3349
    %v3463 = vmul.f32 %v3431, %v3351
    %v3464 = vmul.f32 %v3432, %v3353
    %v3465 = vmul.f32 %v3433, %v3355
    %v3466 = vmul.f32 %v3434, %v3357
    %v3467 = vmul.f32 %v3435, %v3359
    %v3468 = vmul.f32 %v3436, %v3361
    %v3469 = vmul.f32 %v3437, %v3363
    %v3470 = vmul.f32 %v3438, %v3365
    %v3471 = vmul.f32 %v3439, %v3367
    %v3472 = vmul.f32 %v3440, %v3369
    %v3473 = vmul.f32 %v3441, %v3371
    %v3474 = vmul.f32 %v3442, %v3373
    %v3475 = vmul.f32 %v3443, %v3375
    %v3476 = vmul.f32 %v3444, %v3377
    %v3477 = vmul.f32 %v3445, %v3379
    %v3478 = vmul.f32 %v3446, %v3381
    %v3479 = vmul.f32 %v3447, %v3383
    %v3480 = vadd.f32 %v3448, 1.4214138
    %v3481 = vadd.f32 %v3449, 1.4214138
    %v3482 = vadd.f32 %v3450, 1.4214138
    %v3483 = vadd.f32 %v3451, 1.4214138
    %v3484 = vadd.f32 %v3452, 1.4214138
    %v3485 = vadd.f32 %v3453, 1.4214138
    %v3486 = vadd.f32 %v3454, 1.4214138
    %v3487 = vadd.f32 %v3455, 1.4214138
    %v3488 = vadd.f32 %v3456, 1.4214138
    %v3489 = vadd.f32 %v3457, 1.4214138
    %v3490 = vadd.f32 %v3458, 1.4214138
    %v3491 = vadd.f32 %v3459, 1.4214138
    %v3492 = vadd.f32 %v3460, 1.4214138
    %v3493 = vadd.f32 %v3461, 1.4214138
    %v3494 = vadd.f32 %v3462, 1.4214138
    %v3495 = vadd.f32 %v3463, 1.4214138
    %v3496 = vadd.f32 %v3464, 1.4214138
    %v3497 = vadd.f32 %v3465, 1.4214138
    %v3498 = vadd.f32 %v3466, 1.4214138
    %v3499 = vadd.f32 %v3467, 1.4214138
    %v3500 = vadd.f32 %v3468, 1.4214138
    %v3501 = vadd.f32 %v3469, 1.4214138
    %v3502 = vadd.f32 %v3470, 1.4214138
    %v3503 = vadd.f32 %v3471, 1.4214138
    %v3504 = vadd.f32 %v3472, 1.4214138
    %v3505 = vadd.f32 %v3473, 1.4214138
    %v3506 = vadd.f32 %v3474, 1.4214138
    %v3507 = vadd.f32 %v3475, 1.4214138
    %v3508 = vadd.f32 %v3476, 1.4214138
    %v3509 = vadd.f32 %v3477, 1.4214138
    %v3510 = vadd.f32 %v3478, 1.4214138
    %v3511 = vadd.f32 %v3479, 1.4214138
    %v3512 = vmul.f32 %v3480, %v3321
    %v3513 = vmul.f32 %v3481, %v3323
    %v3514 = vmul.f32 %v3482, %v3325
    %v3515 = vmul.f32 %v3483, %v3327
    %v3516 = vmul.f32 %v3484, %v3329
    %v3517 = vmul.f32 %v3485, %v3331
    %v3518 = vmul.f32 %v3486, %v3333
    %v3519 = vmul.f32 %v3487, %v3335
    %v3520 = vmul.f32 %v3488, %v3337
    %v3521 = vmul.f32 %v3489, %v3339
    %v3522 = vmul.f32 %v3490, %v3341
    %v3523 = vmul.f32 %v3491, %v3343
    %v3524 = vmul.f32 %v3492, %v3345
    %v3525 = vmul.f32 %v3493, %v3347
    %v3526 = vmul.f32 %v3494, %v3349
    %v3527 = vmul.f32 %v3495, %v3351
    %v3528 = vmul.f32 %v3496, %v3353
    %v3529 = vmul.f32 %v3497, %v3355
    %v3530 = vmul.f32 %v3498, %v3357
    %v3531 = vmul.f32 %v3499, %v3359
    %v3532 = vmul.f32 %v3500, %v3361
    %v3533 = vmul.f32 %v3501, %v3363
    %v3534 = vmul.f32 %v3502, %v3365
    %v3535 = vmul.f32 %v3503, %v3367
    %v3536 = vmul.f32 %v3504, %v3369
    %v3537 = vmul.f32 %v3505, %v3371
    %v3538 = vmul.f32 %v3506, %v3373
    %v3539 = vmul.f32 %v3507, %v3375
    %v3540 = vmul.f32 %v3508, %v3377
    %v3541 = vmul.f32 %v3509, %v3379
    %v3542 = vmul.f32 %v3510, %v3381
    %v3543 = vmul.f32 %v3511, %v3383
    %v3544 = vadd.f32 %v3512, -0.28449672
    %v3545 = vadd.f32 %v3513, -0.28449672
    %v3546 = vadd.f32 %v3514, -0.28449672
    %v3547 = vadd.f32 %v3515, -0.28449672
    %v3548 = vadd.f32 %v3516, -0.28449672
    %v3549 = vadd.f32 %v3517, -0.28449672
    %v3550 = vadd.f32 %v3518, -0.28449672
    %v3551 = vadd.f32 %v3519, -0.28449672
    %v3552 = vadd.f32 %v3520, -0.28449672
    %v3553 = vadd.f32 %v3521, -0.28449672
    %v3554 = vadd.f32 %v3522, -0.28449672
    %v3555 = vadd.f32 %v3523, -0.28449672
    %v3556 = vadd.f32 %v3524, -0.28449672
    %v3557 = vadd.f32 %v3525, -0.28449672
    %v3558 = vadd.f32 %v3526, -0.28449672
    %v3559 = vadd.f32 %v3527, -0.28449672
    %v3560 = vadd.f32 %v3528, -0.28449672
    %v3561 = vadd.f32 %v3529, -0.28449672
    %v3562 = vadd.f32 %v3530, -0.28449672
    %v3563 = vadd.f32 %v3531, -0.28449672
    %v3564 = vadd.f32 %v3532, -0.28449672
    %v3565 = vadd.f32 %v3533, -0.28449672
    %v3566 = vadd.f32 %v3534, -0.28449672
    %v3567 = vadd.f32 %v3535, -0.28449672
    %v3568 = vadd.f32 %v3536, -0.28449672
    %v3569 = vadd.f32 %v3537, -0.28449672
    %v3570 = vadd.f32 %v3538, -0.28449672
    %v3571 = vadd.f32 %v3539, -0.28449672
    %v3572 = vadd.f32 %v3540, -0.28449672
    %v3573 = vadd.f32 %v3541, -0.28449672
    %v3574 = vadd.f32 %v3542, -0.28449672
    %v3575 = vadd.f32 %v3543, -0.28449672
    %v3576 = vmul.f32 %v3544, %v3321
    %v3577 = vmul.f32 %v3545, %v3323
    %v3578 = vmul.f32 %v3546, %v3325
    %v3579 = vmul.f32 %v3547, %v3327
    %v3580 = vmul.f32 %v3548, %v3329
    %v3581 = vmul.f32 %v3549, %v3331
    %v3582 = vmul.f32 %v3550, %v3333
    %v3583 = vmul.f32 %v3551, %v3335
    %v3584 = vmul.f32 %v3552, %v3337
    %v3585 = vmul.f32 %v3553, %v3339
    %v3586 = vmul.f32 %v3554, %v3341
    %v3587 = vmul.f32 %v3555, %v3343
    %v3588 = vmul.f32 %v3556, %v3345
    %v3589 = vmul.f32 %v3557, %v3347
    %v3590 = vmul.f32 %v3558, %v3349
    %v3591 = vmul.f32 %v3559, %v3351
    %v3592 = vmul.f32 %v3560, %v3353
    %v3593 = vmul.f32 %v3561, %v3355
    %v3594 = vmul.f32 %v3562, %v3357
    %v3595 = vmul.f32 %v3563, %v3359
    %v3596 = vmul.f32 %v3564, %v3361
    %v3597 = vmul.f32 %v3565, %v3363
    %v3598 = vmul.f32 %v3566, %v3365
    %v3599 = vmul.f32 %v3567, %v3367
    %v3600 = vmul.f32 %v3568, %v3369
    %v3601 = vmul.f32 %v3569, %v3371
    %v3602 = vmul.f32 %v3570, %v3373
    %v3603 = vmul.f32 %v3571, %v3375
    %v3604 = vmul.f32 %v3572, %v3377
    %v3605 = vmul.f32 %v3573, %v3379
    %v3606 = vmul.f32 %v3574, %v3381
    %v3607 = vmul.f32 %v3575, %v3383
    %v3608 = vadd.f32 %v3576, 0.2548296
    %v3609 = vadd.f32 %v3577, 0.2548296
    %v3610 = vadd.f32 %v3578, 0.2548296
    %v3611 = vadd.f32 %v3579, 0.2548296
    %v3612 = vadd.f32 %v3580, 0.2548296
    %v3613 = vadd.f32 %v3581, 0.2548296
    %v3614 = vadd.f32 %v3582, 0.2548296
    %v3615 = vadd.f32 %v3583, 0.2548296
    %v3616 = vadd.f32 %v3584, 0.2548296
    %v3617 = vadd.f32 %v3585, 0.2548296
    %v3618 = vadd.f32 %v3586, 0.2548296
    %v3619 = vadd.f32 %v3587, 0.2548296
    %v3620 = vadd.f32 %v3588, 0.2548296
    %v3621 = vadd.f32 %v3589, 0.2548296
    %v3622 = vadd.f32 %v3590, 0.2548296
    %v3623 = vadd.f32 %v3591, 0.2548296
    %v3624 = vadd.f32 %v3592, 0.2548296
    %v3625 = vadd.f32 %v3593, 0.2548296
    %v3626 = vadd.f32 %v3594, 0.2548296
    %v3627 = vadd.f32 %v3595, 0.2548296
    %v3628 = vadd.f32 %v3596, 0.2548296
    %v3629 = vadd.f32 %v3597, 0.2548296
    %v3630 = vadd.f32 %v3598, 0.2548296
    %v3631 = vadd.f32 %v3599, 0.2548296
    %v3632 = vadd.f32 %v3600, 0.2548296
    %v3633 = vadd.f32 %v3601, 0.2548296
    %v3634 = vadd.f32 %v3602, 0.2548296
    %v3635 = vadd.f32 %v3603, 0.2548296
    %v3636 = vadd.f32 %v3604, 0.2548296
    %v3637 = vadd.f32 %v3605, 0.2548296
    %v3638 = vadd.f32 %v3606, 0.2548296
    %v3639 = vadd.f32 %v3607, 0.2548296
    %v3640 = vmul.f32 %v3608, %v3321
    %v3641 = vmul.f32 %v3609, %v3323
    %v3642 = vmul.f32 %v3610, %v3325
    %v3643 = vmul.f32 %v3611, %v3327
    %v3644 = vmul.f32 %v3612, %v3329
    %v3645 = vmul.f32 %v3613, %v3331
    %v3646 = vmul.f32 %v3614, %v3333
    %v3647 = vmul.f32 %v3615, %v3335
    %v3648 = vmul.f32 %v3616, %v3337
    %v3649 = vmul.f32 %v3617, %v3339
    %v3650 = vmul.f32 %v3618, %v3341
    %v3651 = vmul.f32 %v3619, %v3343
    %v3652 = vmul.f32 %v3620, %v3345
    %v3653 = vmul.f32 %v3621, %v3347
    %v3654 = vmul.f32 %v3622, %v3349
    %v3655 = vmul.f32 %v3623, %v3351
    %v3656 = vmul.f32 %v3624, %v3353
    %v3657 = vmul.f32 %v3625, %v3355
    %v3658 = vmul.f32 %v3626, %v3357
    %v3659 = vmul.f32 %v3627, %v3359
    %v3660 = vmul.f32 %v3628, %v3361
    %v3661 = vmul.f32 %v3629, %v3363
    %v3662 = vmul.f32 %v3630, %v3365
    %v3663 = vmul.f32 %v3631, %v3367
    %v3664 = vmul.f32 %v3632, %v3369
    %v3665 = vmul.f32 %v3633, %v3371
    %v3666 = vmul.f32 %v3634, %v3373
    %v3667 = vmul.f32 %v3635, %v3375
    %v3668 = vmul.f32 %v3636, %v3377
    %v3669 = vmul.f32 %v3637, %v3379
    %v3670 = vmul.f32 %v3638, %v3381
    %v3671 = vmul.f32 %v3639, %v3383
    %v3672 = vsub.f32 0.0, %v3224
    %v3673 = vsub.f32 0.0, %v3225
    %v3674 = vsub.f32 0.0, %v3226
    %v3675 = vsub.f32 0.0, %v3227
    %v3676 = vsub.f32 0.0, %v3228
    %v3677 = vsub.f32 0.0, %v3229
    %v3678 = vsub.f32 0.0, %v3230
    %v3679 = vsub.f32 0.0, %v3231
    %v3680 = vsub.f32 0.0, %v3232
    %v3681 = vsub.f32 0.0, %v3233
    %v3682 = vsub.f32 0.0, %v3234
    %v3683 = vsub.f32 0.0, %v3235
    %v3684 = vsub.f32 0.0, %v3236
    %v3685 = vsub.f32 0.0, %v3237
    %v3686 = vsub.f32 0.0, %v3238
    %v3687 = vsub.f32 0.0, %v3239
    %v3688 = vsub.f32 0.0, %v3240
    %v3689 = vsub.f32 0.0, %v3241
    %v3690 = vsub.f32 0.0, %v3242
    %v3691 = vsub.f32 0.0, %v3243
    %v3692 = vsub.f32 0.0, %v3244
    %v3693 = vsub.f32 0.0, %v3245
    %v3694 = vsub.f32 0.0, %v3246
    %v3695 = vsub.f32 0.0, %v3247
    %v3696 = vsub.f32 0.0, %v3248
    %v3697 = vsub.f32 0.0, %v3249
    %v3698 = vsub.f32 0.0, %v3250
    %v3699 = vsub.f32 0.0, %v3251
    %v3700 = vsub.f32 0.0, %v3252
    %v3701 = vsub.f32 0.0, %v3253
    %v3702 = vsub.f32 0.0, %v3254
    %v3703 = vsub.f32 0.0, %v3255
    %v3704 = vmul.f32 %v3672, %v3224
    %v3705 = vmul.f32 %v3673, %v3225
    %v3706 = vmul.f32 %v3674, %v3226
    %v3707 = vmul.f32 %v3675, %v3227
    %v3708 = vmul.f32 %v3676, %v3228
    %v3709 = vmul.f32 %v3677, %v3229
    %v3710 = vmul.f32 %v3678, %v3230
    %v3711 = vmul.f32 %v3679, %v3231
    %v3712 = vmul.f32 %v3680, %v3232
    %v3713 = vmul.f32 %v3681, %v3233
    %v3714 = vmul.f32 %v3682, %v3234
    %v3715 = vmul.f32 %v3683, %v3235
    %v3716 = vmul.f32 %v3684, %v3236
    %v3717 = vmul.f32 %v3685, %v3237
    %v3718 = vmul.f32 %v3686, %v3238
    %v3719 = vmul.f32 %v3687, %v3239
    %v3720 = vmul.f32 %v3688, %v3240
    %v3721 = vmul.f32 %v3689, %v3241
    %v3722 = vmul.f32 %v3690, %v3242
    %v3723 = vmul.f32 %v3691, %v3243
    %v3724 = vmul.f32 %v3692, %v3244
    %v3725 = vmul.f32 %v3693, %v3245
    %v3726 = vmul.f32 %v3694, %v3246
    %v3727 = vmul.f32 %v3695, %v3247
    %v3728 = vmul.f32 %v3696, %v3248
    %v3729 = vmul.f32 %v3697, %v3249
    %v3730 = vmul.f32 %v3698, %v3250
    %v3731 = vmul.f32 %v3699, %v3251
    %v3732 = vmul.f32 %v3700, %v3252
    %v3733 = vmul.f32 %v3701, %v3253
    %v3734 = vmul.f32 %v3702, %v3254
    %v3735 = vmul.f32 %v3703, %v3255
    %v3736 = vmul.f32 %v3704, 1.442695
    %v3737 = vpow.pop %v3736
    %v3738 = vmul.f32 %v3705, 1.442695
    %v3739 = vpow.pop %v3738
    %v3740 = vmul.f32 %v3706, 1.442695
    %v3741 = vpow.pop %v3740
    %v3742 = vmul.f32 %v3707, 1.442695
    %v3743 = vpow.pop %v3742
    %v3744 = vmul.f32 %v3708, 1.442695
    %v3745 = vpow.pop %v3744
    %v3746 = vmul.f32 %v3709, 1.442695
    %v3747 = vpow.pop %v3746
    %v3748 = vmul.f32 %v3710, 1.442695
    %v3749 = vpow.pop %v3748
    %v3750 = vmul.f32 %v3711, 1.442695
    %v3751 = vpow.pop %v3750
    %v3752 = vmul.f32 %v3712, 1.442695
    %v3753 = vpow.pop %v3752
    %v3754 = vmul.f32 %v3713, 1.442695
    %v3755 = vpow.pop %v3754
    %v3756 = vmul.f32 %v3714, 1.442695
    %v3757 = vpow.pop %v3756
    %v3758 = vmul.f32 %v3715, 1.442695
    %v3759 = vpow.pop %v3758
    %v3760 = vmul.f32 %v3716, 1.442695
    %v3761 = vpow.pop %v3760
    %v3762 = vmul.f32 %v3717, 1.442695
    %v3763 = vpow.pop %v3762
    %v3764 = vmul.f32 %v3718, 1.442695
    %v3765 = vpow.pop %v3764
    %v3766 = vmul.f32 %v3719, 1.442695
    %v3767 = vpow.pop %v3766
    %v3768 = vmul.f32 %v3720, 1.442695
    %v3769 = vpow.pop %v3768
    %v3770 = vmul.f32 %v3721, 1.442695
    %v3771 = vpow.pop %v3770
    %v3772 = vmul.f32 %v3722, 1.442695
    %v3773 = vpow.pop %v3772
    %v3774 = vmul.f32 %v3723, 1.442695
    %v3775 = vpow.pop %v3774
    %v3776 = vmul.f32 %v3724, 1.442695
    %v3777 = vpow.pop %v3776
    %v3778 = vmul.f32 %v3725, 1.442695
    %v3779 = vpow.pop %v3778
    %v3780 = vmul.f32 %v3726, 1.442695
    %v3781 = vpow.pop %v3780
    %v3782 = vmul.f32 %v3727, 1.442695
    %v3783 = vpow.pop %v3782
    %v3784 = vmul.f32 %v3728, 1.442695
    %v3785 = vpow.pop %v3784
    %v3786 = vmul.f32 %v3729, 1.442695
    %v3787 = vpow.pop %v3786
    %v3788 = vmul.f32 %v3730, 1.442695
    %v3789 = vpow.pop %v3788
    %v3790 = vmul.f32 %v3731, 1.442695
    %v3791 = vpow.pop %v3790
    %v3792 = vmul.f32 %v3732, 1.442695
    %v3793 = vpow.pop %v3792
    %v3794 = vmul.f32 %v3733, 1.442695
    %v3795 = vpow.pop %v3794
    %v3796 = vmul.f32 %v3734, 1.442695
    %v3797 = vpow.pop %v3796
    %v3798 = vmul.f32 %v3735, 1.442695
    %v3799 = vpow.pop %v3798
    %v3800 = vmul.f32 %v3640, %v3737
    %v3801 = vmul.f32 %v3641, %v3739
    %v3802 = vmul.f32 %v3642, %v3741
    %v3803 = vmul.f32 %v3643, %v3743
    %v3804 = vmul.f32 %v3644, %v3745
    %v3805 = vmul.f32 %v3645, %v3747
    %v3806 = vmul.f32 %v3646, %v3749
    %v3807 = vmul.f32 %v3647, %v3751
    %v3808 = vmul.f32 %v3648, %v3753
    %v3809 = vmul.f32 %v3649, %v3755
    %v3810 = vmul.f32 %v3650, %v3757
    %v3811 = vmul.f32 %v3651, %v3759
    %v3812 = vmul.f32 %v3652, %v3761
    %v3813 = vmul.f32 %v3653, %v3763
    %v3814 = vmul.f32 %v3654, %v3765
    %v3815 = vmul.f32 %v3655, %v3767
    %v3816 = vmul.f32 %v3656, %v3769
    %v3817 = vmul.f32 %v3657, %v3771
    %v3818 = vmul.f32 %v3658, %v3773
    %v3819 = vmul.f32 %v3659, %v3775
    %v3820 = vmul.f32 %v3660, %v3777
    %v3821 = vmul.f32 %v3661, %v3779
    %v3822 = vmul.f32 %v3662, %v3781
    %v3823 = vmul.f32 %v3663, %v3783
    %v3824 = vmul.f32 %v3664, %v3785
    %v3825 = vmul.f32 %v3665, %v3787
    %v3826 = vmul.f32 %v3666, %v3789
    %v3827 = vmul.f32 %v3667, %v3791
    %v3828 = vmul.f32 %v3668, %v3793
    %v3829 = vmul.f32 %v3669, %v3795
    %v3830 = vmul.f32 %v3670, %v3797
    %v3831 = vmul.f32 %v3671, %v3799
    %v3832 = vsub.f32 1.0, %v3800
    %v3833 = vsub.f32 1.0, %v3801
    %v3834 = vsub.f32 1.0, %v3802
    %v3835 = vsub.f32 1.0, %v3803
    %v3836 = vsub.f32 1.0, %v3804
    %v3837 = vsub.f32 1.0, %v3805
    %v3838 = vsub.f32 1.0, %v3806
    %v3839 = vsub.f32 1.0, %v3807
    %v3840 = vsub.f32 1.0, %v3808
    %v3841 = vsub.f32 1.0, %v3809
    %v3842 = vsub.f32 1.0, %v3810
    %v3843 = vsub.f32 1.0, %v3811
    %v3844 = vsub.f32 1.0, %v3812
    %v3845 = vsub.f32 1.0, %v3813
    %v3846 = vsub.f32 1.0, %v3814
    %v3847 = vsub.f32 1.0, %v3815
    %v3848 = vsub.f32 1.0, %v3816
    %v3849 = vsub.f32 1.0, %v3817
    %v3850 = vsub.f32 1.0, %v3818
    %v3851 = vsub.f32 1.0, %v3819
    %v3852 = vsub.f32 1.0, %v3820
    %v3853 = vsub.f32 1.0, %v3821
    %v3854 = vsub.f32 1.0, %v3822
    %v3855 = vsub.f32 1.0, %v3823
    %v3856 = vsub.f32 1.0, %v3824
    %v3857 = vsub.f32 1.0, %v3825
    %v3858 = vsub.f32 1.0, %v3826
    %v3859 = vsub.f32 1.0, %v3827
    %v3860 = vsub.f32 1.0, %v3828
    %v3861 = vsub.f32 1.0, %v3829
    %v3862 = vsub.f32 1.0, %v3830
    %v3863 = vsub.f32 1.0, %v3831
    %v3864 = vmul.f32 %v3192, %v3832
    %v3865 = vmul.f32 %v3193, %v3833
    %v3866 = vmul.f32 %v3194, %v3834
    %v3867 = vmul.f32 %v3195, %v3835
    %v3868 = vmul.f32 %v3196, %v3836
    %v3869 = vmul.f32 %v3197, %v3837
    %v3870 = vmul.f32 %v3198, %v3838
    %v3871 = vmul.f32 %v3199, %v3839
    %v3872 = vmul.f32 %v3200, %v3840
    %v3873 = vmul.f32 %v3201, %v3841
    %v3874 = vmul.f32 %v3202, %v3842
    %v3875 = vmul.f32 %v3203, %v3843
    %v3876 = vmul.f32 %v3204, %v3844
    %v3877 = vmul.f32 %v3205, %v3845
    %v3878 = vmul.f32 %v3206, %v3846
    %v3879 = vmul.f32 %v3207, %v3847
    %v3880 = vmul.f32 %v3208, %v3848
    %v3881 = vmul.f32 %v3209, %v3849
    %v3882 = vmul.f32 %v3210, %v3850
    %v3883 = vmul.f32 %v3211, %v3851
    %v3884 = vmul.f32 %v3212, %v3852
    %v3885 = vmul.f32 %v3213, %v3853
    %v3886 = vmul.f32 %v3214, %v3854
    %v3887 = vmul.f32 %v3215, %v3855
    %v3888 = vmul.f32 %v3216, %v3856
    %v3889 = vmul.f32 %v3217, %v3857
    %v3890 = vmul.f32 %v3218, %v3858
    %v3891 = vmul.f32 %v3219, %v3859
    %v3892 = vmul.f32 %v3220, %v3860
    %v3893 = vmul.f32 %v3221, %v3861
    %v3894 = vmul.f32 %v3222, %v3862
    %v3895 = vmul.f32 %v3223, %v3863
    %v3896 = vadd.f32 %v3864, 1.0
    %v3897 = vadd.f32 %v3865, 1.0
    %v3898 = vadd.f32 %v3866, 1.0
    %v3899 = vadd.f32 %v3867, 1.0
    %v3900 = vadd.f32 %v3868, 1.0
    %v3901 = vadd.f32 %v3869, 1.0
    %v3902 = vadd.f32 %v3870, 1.0
    %v3903 = vadd.f32 %v3871, 1.0
    %v3904 = vadd.f32 %v3872, 1.0
    %v3905 = vadd.f32 %v3873, 1.0
    %v3906 = vadd.f32 %v3874, 1.0
    %v3907 = vadd.f32 %v3875, 1.0
    %v3908 = vadd.f32 %v3876, 1.0
    %v3909 = vadd.f32 %v3877, 1.0
    %v3910 = vadd.f32 %v3878, 1.0
    %v3911 = vadd.f32 %v3879, 1.0
    %v3912 = vadd.f32 %v3880, 1.0
    %v3913 = vadd.f32 %v3881, 1.0
    %v3914 = vadd.f32 %v3882, 1.0
    %v3915 = vadd.f32 %v3883, 1.0
    %v3916 = vadd.f32 %v3884, 1.0
    %v3917 = vadd.f32 %v3885, 1.0
    %v3918 = vadd.f32 %v3886, 1.0
    %v3919 = vadd.f32 %v3887, 1.0
    %v3920 = vadd.f32 %v3888, 1.0
    %v3921 = vadd.f32 %v3889, 1.0
    %v3922 = vadd.f32 %v3890, 1.0
    %v3923 = vadd.f32 %v3891, 1.0
    %v3924 = vadd.f32 %v3892, 1.0
    %v3925 = vadd.f32 %v3893, 1.0
    %v3926 = vadd.f32 %v3894, 1.0
    %v3927 = vadd.f32 %v3895, 1.0
    %v3928 = vmul.f32 %v3096, %v3896
    %v3929 = vmul.f32 %v3097, %v3897
    %v3930 = vmul.f32 %v3098, %v3898
    %v3931 = vmul.f32 %v3099, %v3899
    %v3932 = vmul.f32 %v3100, %v3900
    %v3933 = vmul.f32 %v3101, %v3901
    %v3934 = vmul.f32 %v3102, %v3902
    %v3935 = vmul.f32 %v3103, %v3903
    %v3936 = vmul.f32 %v3104, %v3904
    %v3937 = vmul.f32 %v3105, %v3905
    %v3938 = vmul.f32 %v3106, %v3906
    %v3939 = vmul.f32 %v3107, %v3907
    %v3940 = vmul.f32 %v3108, %v3908
    %v3941 = vmul.f32 %v3109, %v3909
    %v3942 = vmul.f32 %v3110, %v3910
    %v3943 = vmul.f32 %v3111, %v3911
    %v3944 = vmul.f32 %v3112, %v3912
    %v3945 = vmul.f32 %v3113, %v3913
    %v3946 = vmul.f32 %v3114, %v3914
    %v3947 = vmul.f32 %v3115, %v3915
    %v3948 = vmul.f32 %v3116, %v3916
    %v3949 = vmul.f32 %v3117, %v3917
    %v3950 = vmul.f32 %v3118, %v3918
    %v3951 = vmul.f32 %v3119, %v3919
    %v3952 = vmul.f32 %v3120, %v3920
    %v3953 = vmul.f32 %v3121, %v3921
    %v3954 = vmul.f32 %v3122, %v3922
    %v3955 = vmul.f32 %v3123, %v3923
    %v3956 = vmul.f32 %v3124, %v3924
    %v3957 = vmul.f32 %v3125, %v3925
    %v3958 = vmul.f32 %v3126, %v3926
    %v3959 = vmul.f32 %v3127, %v3927
    %v3961 = vlaneseq
    %v3962 = vshrl.u32 %v3961, 7
    %v3963 = vsub.s32 0, %v3962
    %v3964 = vrot.slane %v1315, %v3963
    %3966 = vmatprep.subr.mxu0 0.0
    %3967 = vmatpush1.msra.mxu0 %v1059
    %3968 = vmatprep.subr.mxu0 0.0
    %3969 = vmatpush1.msra.mxu0 %v1060
    %3970 = vmatprep.subr.mxu0 0.0
    %3971 = vmatpush1.msra.mxu0 %v1061
    %3972 = vmatprep.subr.mxu0 0.0
    %3973 = vmatpush1.msra.mxu0 %v1062
    %3974 = vmatprep.subr.mxu0 0.0
    %3975 = vmatpush1.msra.mxu0 %v1063
    %3976 = vmatprep.subr.mxu0 0.0
    %3977 = vmatpush1.msra.mxu0 %v1064
    %3978 = vmatprep.subr.mxu0 0.0
    %3979 = vmatpush1.msra.mxu0 %v1065
    %3980 = vmatprep.subr.mxu0 0.0
    %3981 = vmatpush1.msra.mxu0 %v1066
    %3982 = vmatprep.subr.mxu0 0.0
    %3983 = vmatpush1.msra.mxu0 %v1067
    %3984 = vmatprep.subr.mxu0 0.0
    %3985 = vmatpush1.msra.mxu0 %v1068
    %3986 = vmatprep.subr.mxu0 0.0
    %3987 = vmatpush1.msra.mxu0 %v1069
    %3988 = vmatprep.subr.mxu0 0.0
    %3989 = vmatpush1.msra.mxu0 %v1070
    %3990 = vmatprep.subr.mxu0 0.0
    %3991 = vmatpush1.msra.mxu0 %v1071
    %3992 = vmatprep.subr.mxu0 0.0
    %3993 = vmatpush1.msra.mxu0 %v1072
    %3994 = vmatprep.subr.mxu0 0.0
    %3995 = vmatpush1.msra.mxu0 %v1073
    %3996 = vmatprep.subr.mxu0 0.0
    %3997 = vmatpush1.msra.mxu0 %v1074
    %3998 = vmatprep.subr.mxu0 0.0
    %3999 = vmatpush1.msra.mxu0 %v1075
    %4000 = vmatprep.subr.mxu0 0.0
    %4001 = vmatpush1.msra.mxu0 %v1076
    %4002 = vmatprep.subr.mxu0 0.0
    %4003 = vmatpush1.msra.mxu0 %v1077
    %4004 = vmatprep.subr.mxu0 0.0
    %4005 = vmatpush1.msra.mxu0 %v1078
    %4006 = vmatprep.subr.mxu0 0.0
    %4007 = vmatpush1.msra.mxu0 %v1079
    %4008 = vmatprep.subr.mxu0 0.0
    %4009 = vmatpush1.msra.mxu0 %v1080
    %4010 = vmatprep.subr.mxu0 0.0
    %4011 = vmatpush1.msra.mxu0 %v1081
    %4012 = vmatprep.subr.mxu0 0.0
    %4013 = vmatpush1.msra.mxu0 %v1082
    %4014 = vmatprep.subr.mxu0 0.0
    %4015 = vmatpush1.msra.mxu0 %v1083
    %4016 = vmatprep.subr.mxu0 0.0
    %4017 = vmatpush1.msra.mxu0 %v1084
    %4018 = vmatprep.subr.mxu0 0.0
    %4019 = vmatpush1.msra.mxu0 %v1085
    %4020 = vmatprep.subr.mxu0 0.0
    %4021 = vmatpush1.msra.mxu0 %v1086
    %4022 = vmatprep.subr.mxu0 0.0
    %4023 = vmatpush1.msra.mxu0 %v1087
    %4024 = vmatprep.subr.mxu0 0.0
    %4025 = vmatpush1.msra.mxu0 %v1088
    %4026 = vmatprep.subr.mxu0 0.0
    %4027 = vmatpush1.msra.mxu0 %v1089
    %4028 = vmatprep.subr.mxu0 0.0
    %4029 = vmatpush1.msra.mxu0 %v1090
    %4030 = vmatprep.mubr.f32.mxu0 %v3929
    %4031 = vmatmul.mubr.f32.gmra.mrb[0].mxu0 %v3928
    %v4032 = vpop.f32.mrb[0].mxu0
    %v4033 = vadd.f32 %v3964, %v4032
    %v4034 = vpop.f32.mrb[0].mxu0
    %4035 = vmatprep.mubr.f32.mxu0 %v3945
    %4036 = vmatmul.mubr.f32.gmra.mrb[0].mxu0 %v3944
    %v4037 = vpop.f32.mrb[0].mxu0
    %v4038 = vadd.f32 %v3964, %v4037
    %v4039 = vpop.f32.mrb[0].mxu0
    %4040 = vdwg.mxu0
    %4041 = vmatprep.subr.mxu0 0.0
    %4042 = vmatpush1.msra.mxu0 %v1091
    %4043 = vmatprep.subr.mxu0 0.0
    %4044 = vmatpush1.msra.mxu0 %v1092
    %4045 = vmatprep.subr.mxu0 0.0
    %4046 = vmatpush1.msra.mxu0 %v1093
    %4047 = vmatprep.subr.mxu0 0.0
    %4048 = vmatpush1.msra.mxu0 %v1094
    %4049 = vmatprep.subr.mxu0 0.0
    %4050 = vmatpush1.msra.mxu0 %v1095
    %4051 = vmatprep.subr.mxu0 0.0
    %4052 = vmatpush1.msra.mxu0 %v1096
    %4053 = vmatprep.subr.mxu0 0.0
    %4054 = vmatpush1.msra.mxu0 %v1097
    %4055 = vmatprep.subr.mxu0 0.0
    %4056 = vmatpush1.msra.mxu0 %v1098
    %4057 = vmatprep.subr.mxu0 0.0
    %4058 = vmatpush1.msra.mxu0 %v1099
    %4059 = vmatprep.subr.mxu0 0.0
    %4060 = vmatpush1.msra.mxu0 %v1100
    %4061 = vmatprep.subr.mxu0 0.0
    %4062 = vmatpush1.msra.mxu0 %v1101
    %4063 = vmatprep.subr.mxu0 0.0
    %4064 = vmatpush1.msra.mxu0 %v1102
    %4065 = vmatprep.subr.mxu0 0.0
    %4066 = vmatpush1.msra.mxu0 %v1103
    %4067 = vmatprep.subr.mxu0 0.0
    %4068 = vmatpush1.msra.mxu0 %v1104
    %4069 = vmatprep.subr.mxu0 0.0
    %4070 = vmatpush1.msra.mxu0 %v1105
    %4071 = vmatprep.subr.mxu0 0.0
    %4072 = vmatpush1.msra.mxu0 %v1106
    %4073 = vmatprep.subr.mxu0 0.0
    %4074 = vmatpush1.msra.mxu0 %v1107
    %4075 = vmatprep.subr.mxu0 0.0
    %4076 = vmatpush1.msra.mxu0 %v1108
    %4077 = vmatprep.subr.mxu0 0.0
    %4078 = vmatpush1.msra.mxu0 %v1109
    %4079 = vmatprep.subr.mxu0 0.0
    %4080 = vmatpush1.msra.mxu0 %v1110
    %4081 = vmatprep.subr.mxu0 0.0
    %4082 = vmatpush1.msra.mxu0 %v1111
    %4083 = vmatprep.subr.mxu0 0.0
    %4084 = vmatpush1.msra.mxu0 %v1112
    %4085 = vmatprep.subr.mxu0 0.0
    %4086 = vmatpush1.msra.mxu0 %v1113
    %4087 = vmatprep.subr.mxu0 0.0
    %4088 = vmatpush1.msra.mxu0 %v1114
    %4089 = vmatprep.subr.mxu0 0.0
    %4090 = vmatpush1.msra.mxu0 %v1115
    %4091 = vmatprep.subr.mxu0 0.0
    %4092 = vmatpush1.msra.mxu0 %v1116
    %4093 = vmatprep.subr.mxu0 0.0
    %4094 = vmatpush1.msra.mxu0 %v1117
    %4095 = vmatprep.subr.mxu0 0.0
    %4096 = vmatpush1.msra.mxu0 %v1118
    %4097 = vmatprep.subr.mxu0 0.0
    %4098 = vmatpush1.msra.mxu0 %v1119
    %4099 = vmatprep.subr.mxu0 0.0
    %4100 = vmatpush1.msra.mxu0 %v1120
    %4101 = vmatprep.subr.mxu0 0.0
    %4102 = vmatpush1.msra.mxu0 %v1121
    %4103 = vmatprep.subr.mxu0 0.0
    %4104 = vmatpush1.msra.mxu0 %v1122
    %4105 = vmatprep.mubr.f32.mxu0 %v3931
    %4106 = vmatmul.mubr.f32.gmra.mrb[0].mxu0 %v3930
    %v4107 = vpop.f32.mrb[0].mxu0
    %v4108 = vadd.f32 %v4033, %v4107
    %v4109 = vpop.f32.mrb[0].mxu0
    %4110 = vmatprep.mubr.f32.mxu0 %v3947
    %4111 = vmatmul.mubr.f32.gmra.mrb[0].mxu0 %v3946
    %v4112 = vpop.f32.mrb[0].mxu0
    %v4113 = vadd.f32 %v4038, %v4112
    %v4114 = vpop.f32.mrb[0].mxu0
    %4115 = vdwg.mxu0
    %4116 = vmatprep.subr.mxu0 0.0
    %4117 = vmatpush1.msra.mxu0 %v1123
    %4118 = vmatprep.subr.mxu0 0.0
    %4119 = vmatpush1.msra.mxu0 %v1124
    %4120 = vmatprep.subr.mxu0 0.0
    %4121 = vmatpush1.msra.mxu0 %v1125
    %4122 = vmatprep.subr.mxu0 0.0
    %4123 = vmatpush1.msra.mxu0 %v1126
    %4124 = vmatprep.subr.mxu0 0.0
    %4125 = vmatpush1.msra.mxu0 %v1127
    %4126 = vmatprep.subr.mxu0 0.0
    %4127 = vmatpush1.msra.mxu0 %v1128
    %4128 = vmatprep.subr.mxu0 0.0
    %4129 = vmatpush1.msra.mxu0 %v1129
    %4130 = vmatprep.subr.mxu0 0.0
    %4131 = vmatpush1.msra.mxu0 %v1130
    %4132 = vmatprep.subr.mxu0 0.0
    %4133 = vmatpush1.msra.mxu0 %v1131
    %4134 = vmatprep.subr.mxu0 0.0
    %4135 = vmatpush1.msra.mxu0 %v1132
    %4136 = vmatprep.subr.mxu0 0.0
    %4137 = vmatpush1.msra.mxu0 %v1133
    %4138 = vmatprep.subr.mxu0 0.0
    %4139 = vmatpush1.msra.mxu0 %v1134
    %4140 = vmatprep.subr.mxu0 0.0
    %4141 = vmatpush1.msra.mxu0 %v1135
    %4142 = vmatprep.subr.mxu0 0.0
    %4143 = vmatpush1.msra.mxu0 %v1136
    %4144 = vmatprep.subr.mxu0 0.0
    %4145 = vmatpush1.msra.mxu0 %v1137
    %4146 = vmatprep.subr.mxu0 0.0
    %4147 = vmatpush1.msra.mxu0 %v1138
    %4148 = vmatprep.subr.mxu0 0.0
    %4149 = vmatpush1.msra.mxu0 %v1139
    %4150 = vmatprep.subr.mxu0 0.0
    %4151 = vmatpush1.msra.mxu0 %v1140
    %4152 = vmatprep.subr.mxu0 0.0
    %4153 = vmatpush1.msra.mxu0 %v1141
    %4154 = vmatprep.subr.mxu0 0.0
    %4155 = vmatpush1.msra.mxu0 %v1142
    %4156 = vmatprep.subr.mxu0 0.0
    %4157 = vmatpush1.msra.mxu0 %v1143
    %4158 = vmatprep.subr.mxu0 0.0
    %4159 = vmatpush1.msra.mxu0 %v1144
    %4160 = vmatprep.subr.mxu0 0.0
    %4161 = vmatpush1.msra.mxu0 %v1145
    %4162 = vmatprep.subr.mxu0 0.0
    %4163 = vmatpush1.msra.mxu0 %v1146
    %4164 = vmatprep.subr.mxu0 0.0
    %4165 = vmatpush1.msra.mxu0 %v1147
    %4166 = vmatprep.subr.mxu0 0.0
    %4167 = vmatpush1.msra.mxu0 %v1148
    %4168 = vmatprep.subr.mxu0 0.0
    %4169 = vmatpush1.msra.mxu0 %v1149
    %4170 = vmatprep.subr.mxu0 0.0
    %4171 = vmatpush1.msra.mxu0 %v1150
    %4172 = vmatprep.subr.mxu0 0.0
    %4173 = vmatpush1.msra.mxu0 %v1151
    %4174 = vmatprep.subr.mxu0 0.0
    %4175 = vmatpush1.msra.mxu0 %v1152
    %4176 = vmatprep.subr.mxu0 0.0
    %4177 = vmatpush1.msra.mxu0 %v1153
    %4178 = vmatprep.subr.mxu0 0.0
    %4179 = vmatpush1.msra.mxu0 %v1154
    %4180 = vmatprep.mubr.f32.mxu0 %v3933
    %4181 = vmatmul.mubr.f32.gmra.mrb[0].mxu0 %v3932
    %v4182 = vpop.f32.mrb[0].mxu0
    %v4183 = vadd.f32 %v4108, %v4182
    %v4184 = vpop.f32.mrb[0].mxu0
    %4185 = vmatprep.mubr.f32.mxu0 %v3949
    %4186 = vmatmul.mubr.f32.gmra.mrb[0].mxu0 %v3948
    %v4187 = vpop.f32.mrb[0].mxu0
    %v4188 = vadd.f32 %v4113, %v4187
    %v4189 = vpop.f32.mrb[0].mxu0
    %4190 = vdwg.mxu0
    %4191 = vmatprep.subr.mxu0 0.0
    %4192 = vmatpush1.msra.mxu0 %v1155
    %4193 = vmatprep.subr.mxu0 0.0
    %4194 = vmatpush1.msra.mxu0 %v1156
    %4195 = vmatprep.subr.mxu0 0.0
    %4196 = vmatpush1.msra.mxu0 %v1157
    %4197 = vmatprep.subr.mxu0 0.0
    %4198 = vmatpush1.msra.mxu0 %v1158
    %4199 = vmatprep.subr.mxu0 0.0
    %4200 = vmatpush1.msra.mxu0 %v1159
    %4201 = vmatprep.subr.mxu0 0.0
    %4202 = vmatpush1.msra.mxu0 %v1160
    %4203 = vmatprep.subr.mxu0 0.0
    %4204 = vmatpush1.msra.mxu0 %v1161
    %4205 = vmatprep.subr.mxu0 0.0
    %4206 = vmatpush1.msra.mxu0 %v1162
    %4207 = vmatprep.subr.mxu0 0.0
    %4208 = vmatpush1.msra.mxu0 %v1163
    %4209 = vmatprep.subr.mxu0 0.0
    %4210 = vmatpush1.msra.mxu0 %v1164
    %4211 = vmatprep.subr.mxu0 0.0
    %4212 = vmatpush1.msra.mxu0 %v1165
    %4213 = vmatprep.subr.mxu0 0.0
    %4214 = vmatpush1.msra.mxu0 %v1166
    %4215 = vmatprep.subr.mxu0 0.0
    %4216 = vmatpush1.msra.mxu0 %v1167
    %4217 = vmatprep.subr.mxu0 0.0
    %4218 = vmatpush1.msra.mxu0 %v1168
    %4219 = vmatprep.subr.mxu0 0.0
    %4220 = vmatpush1.msra.mxu0 %v1169
    %4221 = vmatprep.subr.mxu0 0.0
    %4222 = vmatpush1.msra.mxu0 %v1170
    %4223 = vmatprep.subr.mxu0 0.0
    %4224 = vmatpush1.msra.mxu0 %v1171
    %4225 = vmatprep.subr.mxu0 0.0
    %4226 = vmatpush1.msra.mxu0 %v1172
    %4227 = vmatprep.subr.mxu0 0.0
    %4228 = vmatpush1.msra.mxu0 %v1173
    %4229 = vmatprep.subr.mxu0 0.0
    %4230 = vmatpush1.msra.mxu0 %v1174
    %4231 = vmatprep.subr.mxu0 0.0
    %4232 = vmatpush1.msra.mxu0 %v1175
    %4233 = vmatprep.subr.mxu0 0.0
    %4234 = vmatpush1.msra.mxu0 %v1176
    %4235 = vmatprep.subr.mxu0 0.0
    %4236 = vmatpush1.msra.mxu0 %v1177
    %4237 = vmatprep.subr.mxu0 0.0
    %4238 = vmatpush1.msra.mxu0 %v1178
    %4239 = vmatprep.subr.mxu0 0.0
    %4240 = vmatpush1.msra.mxu0 %v1179
    %4241 = vmatprep.subr.mxu0 0.0
    %4242 = vmatpush1.msra.mxu0 %v1180
    %4243 = vmatprep.subr.mxu0 0.0
    %4244 = vmatpush1.msra.mxu0 %v1181
    %4245 = vmatprep.subr.mxu0 0.0
    %4246 = vmatpush1.msra.mxu0 %v1182
    %4247 = vmatprep.subr.mxu0 0.0
    %4248 = vmatpush1.msra.mxu0 %v1183
    %4249 = vmatprep.subr.mxu0 0.0
    %4250 = vmatpush1.msra.mxu0 %v1184
    %4251 = vmatprep.subr.mxu0 0.0
    %4252 = vmatpush1.msra.mxu0 %v1185
    %4253 = vmatprep.subr.mxu0 0.0
    %4254 = vmatpush1.msra.mxu0 %v1186
    %4255 = vmatprep.mubr.f32.mxu0 %v3935
    %4256 = vmatmul.mubr.f32.gmra.mrb[0].mxu0 %v3934
    %v4257 = vpop.f32.mrb[0].mxu0
    %v4258 = vadd.f32 %v4183, %v4257
    %v4259 = vpop.f32.mrb[0].mxu0
    %4260 = vmatprep.mubr.f32.mxu0 %v3951
    %4261 = vmatmul.mubr.f32.gmra.mrb[0].mxu0 %v3950
    %v4262 = vpop.f32.mrb[0].mxu0
    %v4263 = vadd.f32 %v4188, %v4262
    %v4264 = vpop.f32.mrb[0].mxu0
    %4265 = vdwg.mxu0
    %4266 = vmatprep.subr.mxu0 0.0
    %4267 = vmatpush1.msra.mxu0 %v1187
    %4268 = vmatprep.subr.mxu0 0.0
    %4269 = vmatpush1.msra.mxu0 %v1188
    %4270 = vmatprep.subr.mxu0 0.0
    %4271 = vmatpush1.msra.mxu0 %v1189
    %4272 = vmatprep.subr.mxu0 0.0
    %4273 = vmatpush1.msra.mxu0 %v1190
    %4274 = vmatprep.subr.mxu0 0.0
    %4275 = vmatpush1.msra.mxu0 %v1191
    %4276 = vmatprep.subr.mxu0 0.0
    %4277 = vmatpush1.msra.mxu0 %v1192
    %4278 = vmatprep.subr.mxu0 0.0
    %4279 = vmatpush1.msra.mxu0 %v1193
    %4280 = vmatprep.subr.mxu0 0.0
    %4281 = vmatpush1.msra.mxu0 %v1194
    %4282 = vmatprep.subr.mxu0 0.0
    %4283 = vmatpush1.msra.mxu0 %v1195
    %4284 = vmatprep.subr.mxu0 0.0
    %4285 = vmatpush1.msra.mxu0 %v1196
    %4286 = vmatprep.subr.mxu0 0.0
    %4287 = vmatpush1.msra.mxu0 %v1197
    %4288 = vmatprep.subr.mxu0 0.0
    %4289 = vmatpush1.msra.mxu0 %v1198
    %4290 = vmatprep.subr.mxu0 0.0
    %4291 = vmatpush1.msra.mxu0 %v1199
    %4292 = vmatprep.subr.mxu0 0.0
    %4293 = vmatpush1.msra.mxu0 %v1200
    %4294 = vmatprep.subr.mxu0 0.0
    %4295 = vmatpush1.msra.mxu0 %v1201
    %4296 = vmatprep.subr.mxu0 0.0
    %4297 = vmatpush1.msra.mxu0 %v1202
    %4298 = vmatprep.subr.mxu0 0.0
    %4299 = vmatpush1.msra.mxu0 %v1203
    %4300 = vmatprep.subr.mxu0 0.0
    %4301 = vmatpush1.msra.mxu0 %v1204
    %4302 = vmatprep.subr.mxu0 0.0
    %4303 = vmatpush1.msra.mxu0 %v1205
    %4304 = vmatprep.subr.mxu0 0.0
    %4305 = vmatpush1.msra.mxu0 %v1206
    %4306 = vmatprep.subr.mxu0 0.0
    %4307 = vmatpush1.msra.mxu0 %v1207
    %4308 = vmatprep.subr.mxu0 0.0
    %4309 = vmatpush1.msra.mxu0 %v1208
    %4310 = vmatprep.subr.mxu0 0.0
    %4311 = vmatpush1.msra.mxu0 %v1209
    %4312 = vmatprep.subr.mxu0 0.0
    %4313 = vmatpush1.msra.mxu0 %v1210
    %4314 = vmatprep.subr.mxu0 0.0
    %4315 = vmatpush1.msra.mxu0 %v1211
    %4316 = vmatprep.subr.mxu0 0.0
    %4317 = vmatpush1.msra.mxu0 %v1212
    %4318 = vmatprep.subr.mxu0 0.0
    %4319 = vmatpush1.msra.mxu0 %v1213
    %4320 = vmatprep.subr.mxu0 0.0
    %4321 = vmatpush1.msra.mxu0 %v1214
    %4322 = vmatprep.subr.mxu0 0.0
    %4323 = vmatpush1.msra.mxu0 %v1215
    %4324 = vmatprep.subr.mxu0 0.0
    %4325 = vmatpush1.msra.mxu0 %v1216
    %4326 = vmatprep.subr.mxu0 0.0
    %4327 = vmatpush1.msra.mxu0 %v1217
    %4328 = vmatprep.subr.mxu0 0.0
    %4329 = vmatpush1.msra.mxu0 %v1218
    %4330 = vmatprep.mubr.f32.mxu0 %v3937
    %4331 = vmatmul.mubr.f32.gmra.mrb[0].mxu0 %v3936
    %v4332 = vpop.f32.mrb[0].mxu0
    %v4333 = vadd.f32 %v4258, %v4332
    %v4334 = vpop.f32.mrb[0].mxu0
    %4335 = vmatprep.mubr.f32.mxu0 %v3953
    %4336 = vmatmul.mubr.f32.gmra.mrb[0].mxu0 %v3952
    %v4337 = vpop.f32.mrb[0].mxu0
    %v4338 = vadd.f32 %v4263, %v4337
    %v4339 = vpop.f32.mrb[0].mxu0
    %4340 = vdwg.mxu0
    %4341 = vmatprep.subr.mxu0 0.0
    %4342 = vmatpush1.msra.mxu0 %v1219
    %4343 = vmatprep.subr.mxu0 0.0
    %4344 = vmatpush1.msra.mxu0 %v1220
    %4345 = vmatprep.subr.mxu0 0.0
    %4346 = vmatpush1.msra.mxu0 %v1221
    %4347 = vmatprep.subr.mxu0 0.0
    %4348 = vmatpush1.msra.mxu0 %v1222
    %4349 = vmatprep.subr.mxu0 0.0
    %4350 = vmatpush1.msra.mxu0 %v1223
    %4351 = vmatprep.subr.mxu0 0.0
    %4352 = vmatpush1.msra.mxu0 %v1224
    %4353 = vmatprep.subr.mxu0 0.0
    %4354 = vmatpush1.msra.mxu0 %v1225
    %4355 = vmatprep.subr.mxu0 0.0
    %4356 = vmatpush1.msra.mxu0 %v1226
    %4357 = vmatprep.subr.mxu0 0.0
    %4358 = vmatpush1.msra.mxu0 %v1227
    %4359 = vmatprep.subr.mxu0 0.0
    %4360 = vmatpush1.msra.mxu0 %v1228
    %4361 = vmatprep.subr.mxu0 0.0
    %4362 = vmatpush1.msra.mxu0 %v1229
    %4363 = vmatprep.subr.mxu0 0.0
    %4364 = vmatpush1.msra.mxu0 %v1230
    %4365 = vmatprep.subr.mxu0 0.0
    %4366 = vmatpush1.msra.mxu0 %v1231
    %4367 = vmatprep.subr.mxu0 0.0
    %4368 = vmatpush1.msra.mxu0 %v1232
    %4369 = vmatprep.subr.mxu0 0.0
    %4370 = vmatpush1.msra.mxu0 %v1233
    %4371 = vmatprep.subr.mxu0 0.0
    %4372 = vmatpush1.msra.mxu0 %v1234
    %4373 = vmatprep.subr.mxu0 0.0
    %4374 = vmatpush1.msra.mxu0 %v1235
    %4375 = vmatprep.subr.mxu0 0.0
    %4376 = vmatpush1.msra.mxu0 %v1236
    %4377 = vmatprep.subr.mxu0 0.0
    %4378 = vmatpush1.msra.mxu0 %v1237
    %4379 = vmatprep.subr.mxu0 0.0
    %4380 = vmatpush1.msra.mxu0 %v1238
    %4381 = vmatprep.subr.mxu0 0.0
    %4382 = vmatpush1.msra.mxu0 %v1239
    %4383 = vmatprep.subr.mxu0 0.0
    %4384 = vmatpush1.msra.mxu0 %v1240
    %4385 = vmatprep.subr.mxu0 0.0
    %4386 = vmatpush1.msra.mxu0 %v1241
    %4387 = vmatprep.subr.mxu0 0.0
    %4388 = vmatpush1.msra.mxu0 %v1242
    %4389 = vmatprep.subr.mxu0 0.0
    %4390 = vmatpush1.msra.mxu0 %v1243
    %4391 = vmatprep.subr.mxu0 0.0
    %4392 = vmatpush1.msra.mxu0 %v1244
    %4393 = vmatprep.subr.mxu0 0.0
    %4394 = vmatpush1.msra.mxu0 %v1245
    %4395 = vmatprep.subr.mxu0 0.0
    %4396 = vmatpush1.msra.mxu0 %v1246
    %4397 = vmatprep.subr.mxu0 0.0
    %4398 = vmatpush1.msra.mxu0 %v1247
    %4399 = vmatprep.subr.mxu0 0.0
    %4400 = vmatpush1.msra.mxu0 %v1248
    %4401 = vmatprep.subr.mxu0 0.0
    %4402 = vmatpush1.msra.mxu0 %v1249
    %4403 = vmatprep.subr.mxu0 0.0
    %4404 = vmatpush1.msra.mxu0 %v1250
    %4405 = vmatprep.mubr.f32.mxu0 %v3939
    %4406 = vmatmul.mubr.f32.gmra.mrb[0].mxu0 %v3938
    %v4407 = vpop.f32.mrb[0].mxu0
    %v4408 = vadd.f32 %v4333, %v4407
    %v4409 = vpop.f32.mrb[0].mxu0
    %4410 = vmatprep.mubr.f32.mxu0 %v3955
    %4411 = vmatmul.mubr.f32.gmra.mrb[0].mxu0 %v3954
    %v4412 = vpop.f32.mrb[0].mxu0
    %v4413 = vadd.f32 %v4338, %v4412
    %v4414 = vpop.f32.mrb[0].mxu0
    %4415 = vdwg.mxu0
    %4416 = vmatprep.subr.mxu0 0.0
    %4417 = vmatpush1.msra.mxu0 %v1251
    %4418 = vmatprep.subr.mxu0 0.0
    %4419 = vmatpush1.msra.mxu0 %v1252
    %4420 = vmatprep.subr.mxu0 0.0
    %4421 = vmatpush1.msra.mxu0 %v1253
    %4422 = vmatprep.subr.mxu0 0.0
    %4423 = vmatpush1.msra.mxu0 %v1254
    %4424 = vmatprep.subr.mxu0 0.0
    %4425 = vmatpush1.msra.mxu0 %v1255
    %4426 = vmatprep.subr.mxu0 0.0
    %4427 = vmatpush1.msra.mxu0 %v1256
    %4428 = vmatprep.subr.mxu0 0.0
    %4429 = vmatpush1.msra.mxu0 %v1257
    %4430 = vmatprep.subr.mxu0 0.0
    %4431 = vmatpush1.msra.mxu0 %v1258
    %4432 = vmatprep.subr.mxu0 0.0
    %4433 = vmatpush1.msra.mxu0 %v1259
    %4434 = vmatprep.subr.mxu0 0.0
    %4435 = vmatpush1.msra.mxu0 %v1260
    %4436 = vmatprep.subr.mxu0 0.0
    %4437 = vmatpush1.msra.mxu0 %v1261
    %4438 = vmatprep.subr.mxu0 0.0
    %4439 = vmatpush1.msra.mxu0 %v1262
    %4440 = vmatprep.subr.mxu0 0.0
    %4441 = vmatpush1.msra.mxu0 %v1263
    %4442 = vmatprep.subr.mxu0 0.0
    %4443 = vmatpush1.msra.mxu0 %v1264
    %4444 = vmatprep.subr.mxu0 0.0
    %4445 = vmatpush1.msra.mxu0 %v1265
    %4446 = vmatprep.subr.mxu0 0.0
    %4447 = vmatpush1.msra.mxu0 %v1266
    %4448 = vmatprep.subr.mxu0 0.0
    %4449 = vmatpush1.msra.mxu0 %v1267
    %4450 = vmatprep.subr.mxu0 0.0
    %4451 = vmatpush1.msra.mxu0 %v1268
    %4452 = vmatprep.subr.mxu0 0.0
    %4453 = vmatpush1.msra.mxu0 %v1269
    %4454 = vmatprep.subr.mxu0 0.0
    %4455 = vmatpush1.msra.mxu0 %v1270
    %4456 = vmatprep.subr.mxu0 0.0
    %4457 = vmatpush1.msra.mxu0 %v1271
    %4458 = vmatprep.subr.mxu0 0.0
    %4459 = vmatpush1.msra.mxu0 %v1272
    %4460 = vmatprep.subr.mxu0 0.0
    %4461 = vmatpush1.msra.mxu0 %v1273
    %4462 = vmatprep.subr.mxu0 0.0
    %4463 = vmatpush1.msra.mxu0 %v1274
    %4464 = vmatprep.subr.mxu0 0.0
    %4465 = vmatpush1.msra.mxu0 %v1275
    %4466 = vmatprep.subr.mxu0 0.0
    %4467 = vmatpush1.msra.mxu0 %v1276
    %4468 = vmatprep.subr.mxu0 0.0
    %4469 = vmatpush1.msra.mxu0 %v1277
    %4470 = vmatprep.subr.mxu0 0.0
    %4471 = vmatpush1.msra.mxu0 %v1278
    %4472 = vmatprep.subr.mxu0 0.0
    %4473 = vmatpush1.msra.mxu0 %v1279
    %4474 = vmatprep.subr.mxu0 0.0
    %4475 = vmatpush1.msra.mxu0 %v1280
    %4476 = vmatprep.subr.mxu0 0.0
    %4477 = vmatpush1.msra.mxu0 %v1281
    %4478 = vmatprep.subr.mxu0 0.0
    %4479 = vmatpush1.msra.mxu0 %v1282
    %4480 = vmatprep.mubr.f32.mxu0 %v3941
    %4481 = vmatmul.mubr.f32.gmra.mrb[0].mxu0 %v3940
    %v4482 = vpop.f32.mrb[0].mxu0
    %v4483 = vadd.f32 %v4408, %v4482
    %v4484 = vpop.f32.mrb[0].mxu0
    %4485 = vmatprep.mubr.f32.mxu0 %v3957
    %4486 = vmatmul.mubr.f32.gmra.mrb[0].mxu0 %v3956
    %v4487 = vpop.f32.mrb[0].mxu0
    %v4488 = vadd.f32 %v4413, %v4487
    %v4489 = vpop.f32.mrb[0].mxu0
    %4490 = vdwg.mxu0
    %4491 = vmatprep.subr.mxu0 0.0
    %4492 = vmatpush1.msra.mxu0 %v1283
    %4493 = vmatprep.subr.mxu0 0.0
    %4494 = vmatpush1.msra.mxu0 %v1284
    %4495 = vmatprep.subr.mxu0 0.0
    %4496 = vmatpush1.msra.mxu0 %v1285
    %4497 = vmatprep.subr.mxu0 0.0
    %4498 = vmatpush1.msra.mxu0 %v1286
    %4499 = vmatprep.subr.mxu0 0.0
    %4500 = vmatpush1.msra.mxu0 %v1287
    %4501 = vmatprep.subr.mxu0 0.0
    %4502 = vmatpush1.msra.mxu0 %v1288
    %4503 = vmatprep.subr.mxu0 0.0
    %4504 = vmatpush1.msra.mxu0 %v1289
    %4505 = vmatprep.subr.mxu0 0.0
    %4506 = vmatpush1.msra.mxu0 %v1290
    %4507 = vmatprep.subr.mxu0 0.0
    %4508 = vmatpush1.msra.mxu0 %v1291
    %4509 = vmatprep.subr.mxu0 0.0
    %4510 = vmatpush1.msra.mxu0 %v1292
    %4511 = vmatprep.subr.mxu0 0.0
    %4512 = vmatpush1.msra.mxu0 %v1293
    %4513 = vmatprep.subr.mxu0 0.0
    %4514 = vmatpush1.msra.mxu0 %v1294
    %4515 = vmatprep.subr.mxu0 0.0
    %4516 = vmatpush1.msra.mxu0 %v1295
    %4517 = vmatprep.subr.mxu0 0.0
    %4518 = vmatpush1.msra.mxu0 %v1296
    %4519 = vmatprep.subr.mxu0 0.0
    %4520 = vmatpush1.msra.mxu0 %v1297
    %4521 = vmatprep.subr.mxu0 0.0
    %4522 = vmatpush1.msra.mxu0 %v1298
    %4523 = vmatprep.subr.mxu0 0.0
    %4524 = vmatpush1.msra.mxu0 %v1299
    %4525 = vmatprep.subr.mxu0 0.0
    %4526 = vmatpush1.msra.mxu0 %v1300
    %4527 = vmatprep.subr.mxu0 0.0
    %4528 = vmatpush1.msra.mxu0 %v1301
    %4529 = vmatprep.subr.mxu0 0.0
    %4530 = vmatpush1.msra.mxu0 %v1302
    %4531 = vmatprep.subr.mxu0 0.0
    %4532 = vmatpush1.msra.mxu0 %v1303
    %4533 = vmatprep.subr.mxu0 0.0
    %4534 = vmatpush1.msra.mxu0 %v1304
    %4535 = vmatprep.subr.mxu0 0.0
    %4536 = vmatpush1.msra.mxu0 %v1305
    %4537 = vmatprep.subr.mxu0 0.0
    %4538 = vmatpush1.msra.mxu0 %v1306
    %4539 = vmatprep.subr.mxu0 0.0
    %4540 = vmatpush1.msra.mxu0 %v1307
    %4541 = vmatprep.subr.mxu0 0.0
    %4542 = vmatpush1.msra.mxu0 %v1308
    %4543 = vmatprep.subr.mxu0 0.0
    %4544 = vmatpush1.msra.mxu0 %v1309
    %4545 = vmatprep.subr.mxu0 0.0
    %4546 = vmatpush1.msra.mxu0 %v1310
    %4547 = vmatprep.subr.mxu0 0.0
    %4548 = vmatpush1.msra.mxu0 %v1311
    %4549 = vmatprep.subr.mxu0 0.0
    %4550 = vmatpush1.msra.mxu0 %v1312
    %4551 = vmatprep.subr.mxu0 0.0
    %4552 = vmatpush1.msra.mxu0 %v1313
    %4553 = vmatprep.subr.mxu0 0.0
    %4554 = vmatpush1.msra.mxu0 %v1314
    %4555 = vmatprep.mubr.f32.mxu0 %v3943
    %4556 = vmatmul.mubr.f32.gmra.mrb[0].mxu0 %v3942
    %v4557 = vpop.f32.mrb[0].mxu0
    %v4558 = vadd.f32 %v4483, %v4557
    %v4559 = vpop.f32.mrb[0].mxu0
    %4560 = vmatprep.mubr.f32.mxu0 %v3959
    %4561 = vmatmul.mubr.f32.gmra.mrb[0].mxu0 %v3958
    %v4562 = vpop.f32.mrb[0].mxu0
    %v4563 = vadd.f32 %v4488, %v4562
    %v4564 = vpop.f32.mrb[0].mxu0
    %4565 = vdwg.mxu0
    %v4566 = vadd.f32 %v2390, %v4558
    %v4567 = vadd.f32 %v2391, %v4563
    %v4568 = vsel %vm1324, %v4566, 0.0
    %4569 = vadd.xlane.f32.xlu0 %v4568
    %v4570 = vpop.xlane.xlu0 %4569
    %v4571 = vsel %vm2351, %v4567, 0.0
    %4572 = vadd.xlane.f32.xlu0 %v4571
    %v4573 = vpop.xlane.xlu0 %4572
    %v4574 = vmul.f32 %v4570, %v2355
    %v4575 = vmul.f32 %v4573, %v2355
    %v4576 = vsub.f32 %v4566, %v4574
    %v4577 = vsub.f32 %v4567, %v4575
    %v4578 = vmul.f32 %v4576, %v4576
    %v4579 = vmul.f32 %v4577, %v4577
    %v4580 = vsel %vm1324, %v4578, 0.0
    %4581 = vadd.xlane.f32.xlu0 %v4580
    %v4582 = vpop.xlane.xlu0 %4581
    %v4583 = vsel %vm2351, %v4579, 0.0
    %4584 = vadd.xlane.f32.xlu0 %v4583
    %v4585 = vpop.xlane.xlu0 %4584
    %v4586 = vmul.f32 %v4582, %v2355
    %v4587 = vmul.f32 %v4585, %v2355
    %v4588 = vadd.f32 %v4586, 1e-05
    %v4589 = vadd.f32 %v4587, 1e-05
    %v4590 = vrsqrt.pop %v4588
    %v4591 = vrsqrt.pop %v4589
    %v4592 = vmul.f32 %v4576, %v4590
    %v4593 = vmul.f32 %v4577, %v4591
    %v4595 = vlaneseq
    %v4596 = vshrl.u32 %v4595, 7
    %v4597 = vsub.s32 0, %v4596
    %v4598 = vrot.slane %v1316, %v4597
    %v4600 = vmul.f32 %v4592, %v4598
    %v4601 = vmul.f32 %v4593, %v4598
    %v4603 = vlaneseq
    %v4604 = vshrl.u32 %v4603, 7
    %v4605 = vsub.s32 0, %v4604
    %v4606 = vrot.slane %v1317, %v4605
    %v4608 = vadd.f32 %v4600, %v4606
    %v4609 = vadd.f32 %v4601, %v4606
    %s4610 = scalar_lea.vmem %s12, 32
    %v4611 = vld [vmem:[%s4610] sm:$0xff]
    %v4612 = vld [vmem:[%s4610 + $0x8] sm:$0xff]
    %v4613 = vld [vmem:[%s4610 + $0x10] sm:$0xff]
    %v4614 = vld [vmem:[%s4610 + $0x18] sm:$0xff]
    %s4615 = scalar_lea.vmem %s13, 1
    %v4616 = vld [vmem:[%s4615] sm:$0x1]
    %s4617 = scalar_lea.vmem %s14, 32
    %v4618 = vld [vmem:[%s4617] sm:$0xff]
    %v4619 = vld [vmem:[%s4617 + $0x8] sm:$0xff]
    %v4620 = vld [vmem:[%s4617 + $0x10] sm:$0xff]
    %v4621 = vld [vmem:[%s4617 + $0x18] sm:$0xff]
    %s4622 = scalar_lea.vmem %s15, 1
    %v4623 = vld [vmem:[%s4622] sm:$0x1]
    %s4624 = scalar_lea.vmem %s16, 1
    %v4625 = vld [vmem:[%s4624] sm:$0x1]
    %s4626 = scalar_lea.vmem %s17, 1
    %v4627 = vld [vmem:[%s4626] sm:$0x1]
    %s4628 = scalar_lea.vmem %s18, 512
    %v4629 = vld [vmem:[%s4628] sm:$0xff]
    %v4630 = vld [vmem:[%s4628 + $0x8] sm:$0xff]
    %v4631 = vld [vmem:[%s4628 + $0x10] sm:$0xff]
    %v4632 = vld [vmem:[%s4628 + $0x18] sm:$0xff]
    %v4633 = vld [vmem:[%s4628 + $0x20] sm:$0xff]
    %v4634 = vld [vmem:[%s4628 + $0x28] sm:$0xff]
    %v4635 = vld [vmem:[%s4628 + $0x30] sm:$0xff]
    %v4636 = vld [vmem:[%s4628 + $0x38] sm:$0xff]
    %v4637 = vld [vmem:[%s4628 + $0x40] sm:$0xff]
    %v4638 = vld [vmem:[%s4628 + $0x48] sm:$0xff]
    %v4639 = vld [vmem:[%s4628 + $0x50] sm:$0xff]
    %v4640 = vld [vmem:[%s4628 + $0x58] sm:$0xff]
    %v4641 = vld [vmem:[%s4628 + $0x60] sm:$0xff]
    %v4642 = vld [vmem:[%s4628 + $0x68] sm:$0xff]
    %v4643 = vld [vmem:[%s4628 + $0x70] sm:$0xff]
    %v4644 = vld [vmem:[%s4628 + $0x78] sm:$0xff]
    %v4645 = vld [vmem:[%s4628 + $0x80] sm:$0xff]
    %v4646 = vld [vmem:[%s4628 + $0x88] sm:$0xff]
    %v4647 = vld [vmem:[%s4628 + $0x90] sm:$0xff]
    %v4648 = vld [vmem:[%s4628 + $0x98] sm:$0xff]
    %v4649 = vld [vmem:[%s4628 + $0xa0] sm:$0xff]
    %v4650 = vld [vmem:[%s4628 + $0xa8] sm:$0xff]
    %v4651 = vld [vmem:[%s4628 + $0xb0] sm:$0xff]
    %v4652 = vld [vmem:[%s4628 + $0xb8] sm:$0xff]
    %v4653 = vld [vmem:[%s4628 + $0xc0] sm:$0xff]
    %v4654 = vld [vmem:[%s4628 + $0xc8] sm:$0xff]
    %v4655 = vld [vmem:[%s4628 + $0xd0] sm:$0xff]
    %v4656 = vld [vmem:[%s4628 + $0xd8] sm:$0xff]
    %v4657 = vld [vmem:[%s4628 + $0xe0] sm:$0xff]
    %v4658 = vld [vmem:[%s4628 + $0xe8] sm:$0xff]
    %v4659 = vld [vmem:[%s4628 + $0xf0] sm:$0xff]
    %v4660 = vld [vmem:[%s4628 + $0xf8] sm:$0xff]
    %v4661 = vld [vmem:[%s4628 + $0x100] sm:$0xff]
    %v4662 = vld [vmem:[%s4628 + $0x108] sm:$0xff]
    %v4663 = vld [vmem:[%s4628 + $0x110] sm:$0xff]
    %v4664 = vld [vmem:[%s4628 + $0x118] sm:$0xff]
    %v4665 = vld [vmem:[%s4628 + $0x120] sm:$0xff]
    %v4666 = vld [vmem:[%s4628 + $0x128] sm:$0xff]
    %v4667 = vld [vmem:[%s4628 + $0x130] sm:$0xff]
    %v4668 = vld [vmem:[%s4628 + $0x138] sm:$0xff]
    %v4669 = vld [vmem:[%s4628 + $0x140] sm:$0xff]
    %v4670 = vld [vmem:[%s4628 + $0x148] sm:$0xff]
    %v4671 = vld [vmem:[%s4628 + $0x150] sm:$0xff]
    %v4672 = vld [vmem:[%s4628 + $0x158] sm:$0xff]
    %v4673 = vld [vmem:[%s4628 + $0x160] sm:$0xff]
    %v4674 = vld [vmem:[%s4628 + $0x168] sm:$0xff]
    %v4675 = vld [vmem:[%s4628 + $0x170] sm:$0xff]
    %v4676 = vld [vmem:[%s4628 + $0x178] sm:$0xff]
    %v4677 = vld [vmem:[%s4628 + $0x180] sm:$0xff]
    %v4678 = vld [vmem:[%s4628 + $0x188] sm:$0xff]
    %v4679 = vld [vmem:[%s4628 + $0x190] sm:$0xff]
    %v4680 = vld [vmem:[%s4628 + $0x198] sm:$0xff]
    %v4681 = vld [vmem:[%s4628 + $0x1a0] sm:$0xff]
    %v4682 = vld [vmem:[%s4628 + $0x1a8] sm:$0xff]
    %v4683 = vld [vmem:[%s4628 + $0x1b0] sm:$0xff]
    %v4684 = vld [vmem:[%s4628 + $0x1b8] sm:$0xff]
    %v4685 = vld [vmem:[%s4628 + $0x1c0] sm:$0xff]
    %v4686 = vld [vmem:[%s4628 + $0x1c8] sm:$0xff]
    %v4687 = vld [vmem:[%s4628 + $0x1d0] sm:$0xff]
    %v4688 = vld [vmem:[%s4628 + $0x1d8] sm:$0xff]
    %v4689 = vld [vmem:[%s4628 + $0x1e0] sm:$0xff]
    %v4690 = vld [vmem:[%s4628 + $0x1e8] sm:$0xff]
    %v4691 = vld [vmem:[%s4628 + $0x1f0] sm:$0xff]
    %v4692 = vld [vmem:[%s4628 + $0x1f8] sm:$0xff]
    %s4693 = scalar_lea.vmem %s19, 16
    %v4694 = vld [vmem:[%s4693] sm:$0xff]
    %v4695 = vld [vmem:[%s4693 + $0x8] sm:$0xff]
    %s4696 = scalar_lea.vmem %s20, 2048
    %v4697 = vld [vmem:[%s4696] sm:$0xff]
    %v4698 = vld [vmem:[%s4696 + $0x8] sm:$0xff]
    %v4699 = vld [vmem:[%s4696 + $0x10] sm:$0xff]
    %v4700 = vld [vmem:[%s4696 + $0x18] sm:$0xff]
    %v4701 = vld [vmem:[%s4696 + $0x20] sm:$0xff]
    %v4702 = vld [vmem:[%s4696 + $0x28] sm:$0xff]
    %v4703 = vld [vmem:[%s4696 + $0x30] sm:$0xff]
    %v4704 = vld [vmem:[%s4696 + $0x38] sm:$0xff]
    %v4705 = vld [vmem:[%s4696 + $0x40] sm:$0xff]
    %v4706 = vld [vmem:[%s4696 + $0x48] sm:$0xff]
    %v4707 = vld [vmem:[%s4696 + $0x50] sm:$0xff]
    %v4708 = vld [vmem:[%s4696 + $0x58] sm:$0xff]
    %v4709 = vld [vmem:[%s4696 + $0x60] sm:$0xff]
    %v4710 = vld [vmem:[%s4696 + $0x68] sm:$0xff]
    %v4711 = vld [vmem:[%s4696 + $0x70] sm:$0xff]
    %v4712 = vld [vmem:[%s4696 + $0x78] sm:$0xff]
    %v4713 = vld [vmem:[%s4696 + $0x80] sm:$0xff]
    %v4714 = vld [vmem:[%s4696 + $0x88] sm:$0xff]
    %v4715 = vld [vmem:[%s4696 + $0x90] sm:$0xff]
    %v4716 = vld [vmem:[%s4696 + $0x98] sm:$0xff]
    %v4717 = vld [vmem:[%s4696 + $0xa0] sm:$0xff]
    %v4718 = vld [vmem:[%s4696 + $0xa8] sm:$0xff]
    %v4719 = vld [vmem:[%s4696 + $0xb0] sm:$0xff]
    %v4720 = vld [vmem:[%s4696 + $0xb8] sm:$0xff]
    %v4721 = vld [vmem:[%s4696 + $0xc0] sm:$0xff]
    %v4722 = vld [vmem:[%s4696 + $0xc8] sm:$0xff]
    %v4723 = vld [vmem:[%s4696 + $0xd0] sm:$0xff]
    %v4724 = vld [vmem:[%s4696 + $0xd8] sm:$0xff]
    %v4725 = vld [vmem:[%s4696 + $0xe0] sm:$0xff]
    %v4726 = vld [vmem:[%s4696 + $0xe8] sm:$0xff]
    %v4727 = vld [vmem:[%s4696 + $0xf0] sm:$0xff]
    %v4728 = vld [vmem:[%s4696 + $0xf8] sm:$0xff]
    %v4729 = vld [vmem:[%s4696 + $0x100] sm:$0xff]
    %v4730 = vld [vmem:[%s4696 + $0x108] sm:$0xff]
    %v4731 = vld [vmem:[%s4696 + $0x110] sm:$0xff]
    %v4732 = vld [vmem:[%s4696 + $0x118] sm:$0xff]
    %v4733 = vld [vmem:[%s4696 + $0x120] sm:$0xff]
    %v4734 = vld [vmem:[%s4696 + $0x128] sm:$0xff]
    %v4735 = vld [vmem:[%s4696 + $0x130] sm:$0xff]
    %v4736 = vld [vmem:[%s4696 + $0x138] sm:$0xff]
    %v4737 = vld [vmem:[%s4696 + $0x140] sm:$0xff]
    %v4738 = vld [vmem:[%s4696 + $0x148] sm:$0xff]
    %v4739 = vld [vmem:[%s4696 + $0x150] sm:$0xff]
    %v4740 = vld [vmem:[%s4696 + $0x158] sm:$0xff]
    %v4741 = vld [vmem:[%s4696 + $0x160] sm:$0xff]
    %v4742 = vld [vmem:[%s4696 + $0x168] sm:$0xff]
    %v4743 = vld [vmem:[%s4696 + $0x170] sm:$0xff]
    %v4744 = vld [vmem:[%s4696 + $0x178] sm:$0xff]
    %v4745 = vld [vmem:[%s4696 + $0x180] sm:$0xff]
    %v4746 = vld [vmem:[%s4696 + $0x188] sm:$0xff]
    %v4747 = vld [vmem:[%s4696 + $0x190] sm:$0xff]
    %v4748 = vld [vmem:[%s4696 + $0x198] sm:$0xff]
    %v4749 = vld [vmem:[%s4696 + $0x1a0] sm:$0xff]
    %v4750 = vld [vmem:[%s4696 + $0x1a8] sm:$0xff]
    %v4751 = vld [vmem:[%s4696 + $0x1b0] sm:$0xff]
    %v4752 = vld [vmem:[%s4696 + $0x1b8] sm:$0xff]
    %v4753 = vld [vmem:[%s4696 + $0x1c0] sm:$0xff]
    %v4754 = vld [vmem:[%s4696 + $0x1c8] sm:$0xff]
    %v4755 = vld [vmem:[%s4696 + $0x1d0] sm:$0xff]
    %v4756 = vld [vmem:[%s4696 + $0x1d8] sm:$0xff]
    %v4757 = vld [vmem:[%s4696 + $0x1e0] sm:$0xff]
    %v4758 = vld [vmem:[%s4696 + $0x1e8] sm:$0xff]
    %v4759 = vld [vmem:[%s4696 + $0x1f0] sm:$0xff]
    %v4760 = vld [vmem:[%s4696 + $0x1f8] sm:$0xff]
    %v4761 = vld [vmem:[%s4696 + $0x200] sm:$0xff]
    %v4762 = vld [vmem:[%s4696 + $0x208] sm:$0xff]
    %v4763 = vld [vmem:[%s4696 + $0x210] sm:$0xff]
    %v4764 = vld [vmem:[%s4696 + $0x218] sm:$0xff]
    %v4765 = vld [vmem:[%s4696 + $0x220] sm:$0xff]
    %v4766 = vld [vmem:[%s4696 + $0x228] sm:$0xff]
    %v4767 = vld [vmem:[%s4696 + $0x230] sm:$0xff]
    %v4768 = vld [vmem:[%s4696 + $0x238] sm:$0xff]
    %v4769 = vld [vmem:[%s4696 + $0x240] sm:$0xff]
    %v4770 = vld [vmem:[%s4696 + $0x248] sm:$0xff]
    %v4771 = vld [vmem:[%s4696 + $0x250] sm:$0xff]
    %v4772 = vld [vmem:[%s4696 + $0x258] sm:$0xff]
    %v4773 = vld [vmem:[%s4696 + $0x260] sm:$0xff]
    %v4774 = vld [vmem:[%s4696 + $0x268] sm:$0xff]
    %v4775 = vld [vmem:[%s4696 + $0x270] sm:$0xff]
    %v4776 = vld [vmem:[%s4696 + $0x278] sm:$0xff]
    %v4777 = vld [vmem:[%s4696 + $0x280] sm:$0xff]
    %v4778 = vld [vmem:[%s4696 + $0x288] sm:$0xff]
    %v4779 = vld [vmem:[%s4696 + $0x290] sm:$0xff]
    %v4780 = vld [vmem:[%s4696 + $0x298] sm:$0xff]
    %v4781 = vld [vmem:[%s4696 + $0x2a0] sm:$0xff]
    %v4782 = vld [vmem:[%s4696 + $0x2a8] sm:$0xff]
    %v4783 = vld [vmem:[%s4696 + $0x2b0] sm:$0xff]
    %v4784 = vld [vmem:[%s4696 + $0x2b8] sm:$0xff]
    %v4785 = vld [vmem:[%s4696 + $0x2c0] sm:$0xff]
    %v4786 = vld [vmem:[%s4696 + $0x2c8] sm:$0xff]
    %v4787 = vld [vmem:[%s4696 + $0x2d0] sm:$0xff]
    %v4788 = vld [vmem:[%s4696 + $0x2d8] sm:$0xff]
    %v4789 = vld [vmem:[%s4696 + $0x2e0] sm:$0xff]
    %v4790 = vld [vmem:[%s4696 + $0x2e8] sm:$0xff]
    %v4791 = vld [vmem:[%s4696 + $0x2f0] sm:$0xff]
    %v4792 = vld [vmem:[%s4696 + $0x2f8] sm:$0xff]
    %v4793 = vld [vmem:[%s4696 + $0x300] sm:$0xff]
    %v4794 = vld [vmem:[%s4696 + $0x308] sm:$0xff]
    %v4795 = vld [vmem:[%s4696 + $0x310] sm:$0xff]
    %v4796 = vld [vmem:[%s4696 + $0x318] sm:$0xff]
    %v4797 = vld [vmem:[%s4696 + $0x320] sm:$0xff]
    %v4798 = vld [vmem:[%s4696 + $0x328] sm:$0xff]
    %v4799 = vld [vmem:[%s4696 + $0x330] sm:$0xff]
    %v4800 = vld [vmem:[%s4696 + $0x338] sm:$0xff]
    %v4801 = vld [vmem:[%s4696 + $0x340] sm:$0xff]
    %v4802 = vld [vmem:[%s4696 + $0x348] sm:$0xff]
    %v4803 = vld [vmem:[%s4696 + $0x350] sm:$0xff]
    %v4804 = vld [vmem:[%s4696 + $0x358] sm:$0xff]
    %v4805 = vld [vmem:[%s4696 + $0x360] sm:$0xff]
    %v4806 = vld [vmem:[%s4696 + $0x368] sm:$0xff]
    %v4807 = vld [vmem:[%s4696 + $0x370] sm:$0xff]
    %v4808 = vld [vmem:[%s4696 + $0x378] sm:$0xff]
    %v4809 = vld [vmem:[%s4696 + $0x380] sm:$0xff]
    %v4810 = vld [vmem:[%s4696 + $0x388] sm:$0xff]
    %v4811 = vld [vmem:[%s4696 + $0x390] sm:$0xff]
    %v4812 = vld [vmem:[%s4696 + $0x398] sm:$0xff]
    %v4813 = vld [vmem:[%s4696 + $0x3a0] sm:$0xff]
    %v4814 = vld [vmem:[%s4696 + $0x3a8] sm:$0xff]
    %v4815 = vld [vmem:[%s4696 + $0x3b0] sm:$0xff]
    %v4816 = vld [vmem:[%s4696 + $0x3b8] sm:$0xff]
    %v4817 = vld [vmem:[%s4696 + $0x3c0] sm:$0xff]
    %v4818 = vld [vmem:[%s4696 + $0x3c8] sm:$0xff]
    %v4819 = vld [vmem:[%s4696 + $0x3d0] sm:$0xff]
    %v4820 = vld [vmem:[%s4696 + $0x3d8] sm:$0xff]
    %v4821 = vld [vmem:[%s4696 + $0x3e0] sm:$0xff]
    %v4822 = vld [vmem:[%s4696 + $0x3e8] sm:$0xff]
    %v4823 = vld [vmem:[%s4696 + $0x3f0] sm:$0xff]
    %v4824 = vld [vmem:[%s4696 + $0x3f8] sm:$0xff]
    %v4825 = vld [vmem:[%s4696 + $0x400] sm:$0xff]
    %v4826 = vld [vmem:[%s4696 + $0x408] sm:$0xff]
    %v4827 = vld [vmem:[%s4696 + $0x410] sm:$0xff]
    %v4828 = vld [vmem:[%s4696 + $0x418] sm:$0xff]
    %v4829 = vld [vmem:[%s4696 + $0x420] sm:$0xff]
    %v4830 = vld [vmem:[%s4696 + $0x428] sm:$0xff]
    %v4831 = vld [vmem:[%s4696 + $0x430] sm:$0xff]
    %v4832 = vld [vmem:[%s4696 + $0x438] sm:$0xff]
    %v4833 = vld [vmem:[%s4696 + $0x440] sm:$0xff]
    %v4834 = vld [vmem:[%s4696 + $0x448] sm:$0xff]
    %v4835 = vld [vmem:[%s4696 + $0x450] sm:$0xff]
    %v4836 = vld [vmem:[%s4696 + $0x458] sm:$0xff]
    %v4837 = vld [vmem:[%s4696 + $0x460] sm:$0xff]
    %v4838 = vld [vmem:[%s4696 + $0x468] sm:$0xff]
    %v4839 = vld [vmem:[%s4696 + $0x470] sm:$0xff]
    %v4840 = vld [vmem:[%s4696 + $0x478] sm:$0xff]
    %v4841 = vld [vmem:[%s4696 + $0x480] sm:$0xff]
    %v4842 = vld [vmem:[%s4696 + $0x488] sm:$0xff]
    %v4843 = vld [vmem:[%s4696 + $0x490] sm:$0xff]
    %v4844 = vld [vmem:[%s4696 + $0x498] sm:$0xff]
    %v4845 = vld [vmem:[%s4696 + $0x4a0] sm:$0xff]
    %v4846 = vld [vmem:[%s4696 + $0x4a8] sm:$0xff]
    %v4847 = vld [vmem:[%s4696 + $0x4b0] sm:$0xff]
    %v4848 = vld [vmem:[%s4696 + $0x4b8] sm:$0xff]
    %v4849 = vld [vmem:[%s4696 + $0x4c0] sm:$0xff]
    %v4850 = vld [vmem:[%s4696 + $0x4c8] sm:$0xff]
    %v4851 = vld [vmem:[%s4696 + $0x4d0] sm:$0xff]
    %v4852 = vld [vmem:[%s4696 + $0x4d8] sm:$0xff]
    %v4853 = vld [vmem:[%s4696 + $0x4e0] sm:$0xff]
    %v4854 = vld [vmem:[%s4696 + $0x4e8] sm:$0xff]
    %v4855 = vld [vmem:[%s4696 + $0x4f0] sm:$0xff]
    %v4856 = vld [vmem:[%s4696 + $0x4f8] sm:$0xff]
    %v4857 = vld [vmem:[%s4696 + $0x500] sm:$0xff]
    %v4858 = vld [vmem:[%s4696 + $0x508] sm:$0xff]
    %v4859 = vld [vmem:[%s4696 + $0x510] sm:$0xff]
    %v4860 = vld [vmem:[%s4696 + $0x518] sm:$0xff]
    %v4861 = vld [vmem:[%s4696 + $0x520] sm:$0xff]
    %v4862 = vld [vmem:[%s4696 + $0x528] sm:$0xff]
    %v4863 = vld [vmem:[%s4696 + $0x530] sm:$0xff]
    %v4864 = vld [vmem:[%s4696 + $0x538] sm:$0xff]
    %v4865 = vld [vmem:[%s4696 + $0x540] sm:$0xff]
    %v4866 = vld [vmem:[%s4696 + $0x548] sm:$0xff]
    %v4867 = vld [vmem:[%s4696 + $0x550] sm:$0xff]
    %v4868 = vld [vmem:[%s4696 + $0x558] sm:$0xff]
    %v4869 = vld [vmem:[%s4696 + $0x560] sm:$0xff]
    %v4870 = vld [vmem:[%s4696 + $0x568] sm:$0xff]
    %v4871 = vld [vmem:[%s4696 + $0x570] sm:$0xff]
    %v4872 = vld [vmem:[%s4696 + $0x578] sm:$0xff]
    %v4873 = vld [vmem:[%s4696 + $0x580] sm:$0xff]
    %v4874 = vld [vmem:[%s4696 + $0x588] sm:$0xff]
    %v4875 = vld [vmem:[%s4696 + $0x590] sm:$0xff]
    %v4876 = vld [vmem:[%s4696 + $0x598] sm:$0xff]
    %v4877 = vld [vmem:[%s4696 + $0x5a0] sm:$0xff]
    %v4878 = vld [vmem:[%s4696 + $0x5a8] sm:$0xff]
    %v4879 = vld [vmem:[%s4696 + $0x5b0] sm:$0xff]
    %v4880 = vld [vmem:[%s4696 + $0x5b8] sm:$0xff]
    %v4881 = vld [vmem:[%s4696 + $0x5c0] sm:$0xff]
    %v4882 = vld [vmem:[%s4696 + $0x5c8] sm:$0xff]
    %v4883 = vld [vmem:[%s4696 + $0x5d0] sm:$0xff]
    %v4884 = vld [vmem:[%s4696 + $0x5d8] sm:$0xff]
    %v4885 = vld [vmem:[%s4696 + $0x5e0] sm:$0xff]
    %v4886 = vld [vmem:[%s4696 + $0x5e8] sm:$0xff]
    %v4887 = vld [vmem:[%s4696 + $0x5f0] sm:$0xff]
    %v4888 = vld [vmem:[%s4696 + $0x5f8] sm:$0xff]
    %v4889 = vld [vmem:[%s4696 + $0x600] sm:$0xff]
    %v4890 = vld [vmem:[%s4696 + $0x608] sm:$0xff]
    %v4891 = vld [vmem:[%s4696 + $0x610] sm:$0xff]
    %v4892 = vld [vmem:[%s4696 + $0x618] sm:$0xff]
    %v4893 = vld [vmem:[%s4696 + $0x620] sm:$0xff]
    %v4894 = vld [vmem:[%s4696 + $0x628] sm:$0xff]
    %v4895 = vld [vmem:[%s4696 + $0x630] sm:$0xff]
    %v4896 = vld [vmem:[%s4696 + $0x638] sm:$0xff]
    %v4897 = vld [vmem:[%s4696 + $0x640] sm:$0xff]
    %v4898 = vld [vmem:[%s4696 + $0x648] sm:$0xff]
    %v4899 = vld [vmem:[%s4696 + $0x650] sm:$0xff]
    %v4900 = vld [vmem:[%s4696 + $0x658] sm:$0xff]
    %v4901 = vld [vmem:[%s4696 + $0x660] sm:$0xff]
    %v4902 = vld [vmem:[%s4696 + $0x668] sm:$0xff]
    %v4903 = vld [vmem:[%s4696 + $0x670] sm:$0xff]
    %v4904 = vld [vmem:[%s4696 + $0x678] sm:$0xff]
    %v4905 = vld [vmem:[%s4696 + $0x680] sm:$0xff]
    %v4906 = vld [vmem:[%s4696 + $0x688] sm:$0xff]
    %v4907 = vld [vmem:[%s4696 + $0x690] sm:$0xff]
    %v4908 = vld [vmem:[%s4696 + $0x698] sm:$0xff]
    %v4909 = vld [vmem:[%s4696 + $0x6a0] sm:$0xff]
    %v4910 = vld [vmem:[%s4696 + $0x6a8] sm:$0xff]
    %v4911 = vld [vmem:[%s4696 + $0x6b0] sm:$0xff]
    %v4912 = vld [vmem:[%s4696 + $0x6b8] sm:$0xff]
    %v4913 = vld [vmem:[%s4696 + $0x6c0] sm:$0xff]
    %v4914 = vld [vmem:[%s4696 + $0x6c8] sm:$0xff]
    %v4915 = vld [vmem:[%s4696 + $0x6d0] sm:$0xff]
    %v4916 = vld [vmem:[%s4696 + $0x6d8] sm:$0xff]
    %v4917 = vld [vmem:[%s4696 + $0x6e0] sm:$0xff]
    %v4918 = vld [vmem:[%s4696 + $0x6e8] sm:$0xff]
    %v4919 = vld [vmem:[%s4696 + $0x6f0] sm:$0xff]
    %v4920 = vld [vmem:[%s4696 + $0x6f8] sm:$0xff]
    %v4921 = vld [vmem:[%s4696 + $0x700] sm:$0xff]
    %v4922 = vld [vmem:[%s4696 + $0x708] sm:$0xff]
    %v4923 = vld [vmem:[%s4696 + $0x710] sm:$0xff]
    %v4924 = vld [vmem:[%s4696 + $0x718] sm:$0xff]
    %v4925 = vld [vmem:[%s4696 + $0x720] sm:$0xff]
    %v4926 = vld [vmem:[%s4696 + $0x728] sm:$0xff]
    %v4927 = vld [vmem:[%s4696 + $0x730] sm:$0xff]
    %v4928 = vld [vmem:[%s4696 + $0x738] sm:$0xff]
    %v4929 = vld [vmem:[%s4696 + $0x740] sm:$0xff]
    %v4930 = vld [vmem:[%s4696 + $0x748] sm:$0xff]
    %v4931 = vld [vmem:[%s4696 + $0x750] sm:$0xff]
    %v4932 = vld [vmem:[%s4696 + $0x758] sm:$0xff]
    %v4933 = vld [vmem:[%s4696 + $0x760] sm:$0xff]
    %v4934 = vld [vmem:[%s4696 + $0x768] sm:$0xff]
    %v4935 = vld [vmem:[%s4696 + $0x770] sm:$0xff]
    %v4936 = vld [vmem:[%s4696 + $0x778] sm:$0xff]
    %v4937 = vld [vmem:[%s4696 + $0x780] sm:$0xff]
    %v4938 = vld [vmem:[%s4696 + $0x788] sm:$0xff]
    %v4939 = vld [vmem:[%s4696 + $0x790] sm:$0xff]
    %v4940 = vld [vmem:[%s4696 + $0x798] sm:$0xff]
    %v4941 = vld [vmem:[%s4696 + $0x7a0] sm:$0xff]
    %v4942 = vld [vmem:[%s4696 + $0x7a8] sm:$0xff]
    %v4943 = vld [vmem:[%s4696 + $0x7b0] sm:$0xff]
    %v4944 = vld [vmem:[%s4696 + $0x7b8] sm:$0xff]
    %v4945 = vld [vmem:[%s4696 + $0x7c0] sm:$0xff]
    %v4946 = vld [vmem:[%s4696 + $0x7c8] sm:$0xff]
    %v4947 = vld [vmem:[%s4696 + $0x7d0] sm:$0xff]
    %v4948 = vld [vmem:[%s4696 + $0x7d8] sm:$0xff]
    %v4949 = vld [vmem:[%s4696 + $0x7e0] sm:$0xff]
    %v4950 = vld [vmem:[%s4696 + $0x7e8] sm:$0xff]
    %v4951 = vld [vmem:[%s4696 + $0x7f0] sm:$0xff]
    %v4952 = vld [vmem:[%s4696 + $0x7f8] sm:$0xff]
    %s4953 = scalar_lea.vmem %s21, 1
    %v4954 = vld [vmem:[%s4953] sm:$0x1]
    %s4955 = scalar_lea.vmem %s22, 1
    %v4956 = vld [vmem:[%s4955] sm:$0x1]
    %s4957 = scalar_lea.vmem %s23, 1
    %v4958 = vld [vmem:[%s4957] sm:$0x1]
    %v4960 = vlaneseq
    %v4961 = vshrl.u32 %v4960, 7
    %v4962 = vsub.s32 0, %v4961
    %v4963 = vrot.slane %v4616, %v4962
    %v4966 = vsel %vm1324, %v4608, 0
    %v4969 = vsel %vm1324, %v4609, 0
    %4971 = vmatprep.subr.mxu0 0.0
    %4972 = vmatpush1.msra.mxu0 %v4611
    %4973 = vmatprep.subr.mxu0 0.0
    %4974 = vmatpush1.msra.mxu0 %v4612
    %4975 = vmatprep.subr.mxu0 0.0
    %4976 = vmatpush1.msra.mxu0 %v4613
    %4977 = vmatprep.subr.mxu0 0.0
    %4978 = vmatpush1.msra.mxu0 %v4614
    %4979 = vmatprep.subr.mxu0 0.0
    %4980 = vmatpush1.msra.mxu0 0.0
    %4981 = vmatprep.subr.mxu0 0.0
    %4982 = vmatpush1.msra.mxu0 0.0
    %4983 = vmatprep.subr.mxu0 0.0
    %4984 = vmatpush1.msra.mxu0 0.0
    %4985 = vmatprep.subr.mxu0 0.0
    %4986 = vmatpush1.msra.mxu0 0.0
    %4987 = vmatprep.subr.mxu0 0.0
    %4988 = vmatpush1.msra.mxu0 0.0
    %4989 = vmatprep.subr.mxu0 0.0
    %4990 = vmatpush1.msra.mxu0 0.0
    %4991 = vmatprep.subr.mxu0 0.0
    %4992 = vmatpush1.msra.mxu0 0.0
    %4993 = vmatprep.subr.mxu0 0.0
    %4994 = vmatpush1.msra.mxu0 0.0
    %4995 = vmatprep.subr.mxu0 0.0
    %4996 = vmatpush1.msra.mxu0 0.0
    %4997 = vmatprep.subr.mxu0 0.0
    %4998 = vmatpush1.msra.mxu0 0.0
    %4999 = vmatprep.subr.mxu0 0.0
    %5000 = vmatpush1.msra.mxu0 0.0
    %5001 = vmatprep.subr.mxu0 0.0
    %5002 = vmatpush1.msra.mxu0 0.0
    %5003 = vmatprep.subr.mxu0 0.0
    %5004 = vmatpush1.msra.mxu0 0.0
    %5005 = vmatprep.subr.mxu0 0.0
    %5006 = vmatpush1.msra.mxu0 0.0
    %5007 = vmatprep.subr.mxu0 0.0
    %5008 = vmatpush1.msra.mxu0 0.0
    %5009 = vmatprep.subr.mxu0 0.0
    %5010 = vmatpush1.msra.mxu0 0.0
    %5011 = vmatprep.subr.mxu0 0.0
    %5012 = vmatpush1.msra.mxu0 0.0
    %5013 = vmatprep.subr.mxu0 0.0
    %5014 = vmatpush1.msra.mxu0 0.0
    %5015 = vmatprep.subr.mxu0 0.0
    %5016 = vmatpush1.msra.mxu0 0.0
    %5017 = vmatprep.subr.mxu0 0.0
    %5018 = vmatpush1.msra.mxu0 0.0
    %5019 = vmatprep.subr.mxu0 0.0
    %5020 = vmatpush1.msra.mxu0 0.0
    %5021 = vmatprep.subr.mxu0 0.0
    %5022 = vmatpush1.msra.mxu0 0.0
    %5023 = vmatprep.subr.mxu0 0.0
    %5024 = vmatpush1.msra.mxu0 0.0
    %5025 = vmatprep.subr.mxu0 0.0
    %5026 = vmatpush1.msra.mxu0 0.0
    %5027 = vmatprep.subr.mxu0 0.0
    %5028 = vmatpush1.msra.mxu0 0.0
    %5029 = vmatprep.subr.mxu0 0.0
    %5030 = vmatpush1.msra.mxu0 0.0
    %5031 = vmatprep.subr.mxu0 0.0
    %5032 = vmatpush1.msra.mxu0 0.0
    %5033 = vmatprep.subr.mxu0 0.0
    %5034 = vmatpush1.msra.mxu0 0.0
    %5035 = vmatprep.mubr.f32.mxu0 0.0
    %5036 = vmatmul.mubr.f32.gmra.mrb[0].mxu0 %v4966
    %v5037 = vpop.f32.mrb[0].mxu0
    %v5038 = vadd.f32 %v4963, %v5037
    %v5039 = vpop.f32.mrb[0].mxu0
    %5040 = vmatprep.mubr.f32.mxu0 0.0
    %5041 = vmatmul.mubr.f32.gmra.mrb[0].mxu0 %v4969
    %v5042 = vpop.f32.mrb[0].mxu0
    %v5043 = vadd.f32 %v4963, %v5042
    %v5044 = vpop.f32.mrb[0].mxu0
    %5045 = vdwg.mxu0
    %5048 = vrot.lane.b32.xlu0 %v5038, 96
    %v5049 = vpop.permute.xlu0 %5048
    %5050 = vrot.lane.b32.xlu0 %v5043, 96
    %v5051 = vpop.permute.xlu0 %5050
    %v5052 = vsel %vm1411, %v5038, 0
    %v5054 = vsel %vm1411, %v5043, 0
    %v5056 = vsel %vm1411, %v5049, 0
    %v5058 = vsel %vm1411, %v5051, 0
    %5060 = vmatprep.subr.mxu0 0.0
    %5061 = vmatpush1.xpose.msra.mxu0 %v5056
    %5062 = vmatprep.subr.mxu0 0.0
    %5063 = vmatpush1.xpose.msra.mxu0 %v5058
    %5064 = vmatprep.subr.mxu0 0.0
    %5065 = vmatpush1.xpose.msra.mxu0 0.0
    %5066 = vmatprep.subr.mxu0 0.0
    %5067 = vmatpush1.xpose.msra.mxu0 0.0
    %5068 = vmatprep.subr.mxu0 0.0
    %5069 = vmatpush1.xpose.msra.mxu0 0.0
    %5070 = vmatprep.subr.mxu0 0.0
    %5071 = vmatpush1.xpose.msra.mxu0 0.0
    %5072 = vmatprep.subr.mxu0 0.0
    %5073 = vmatpush1.xpose.msra.mxu0 0.0
    %5074 = vmatprep.subr.mxu0 0.0
    %5075 = vmatpush1.xpose.msra.mxu0 0.0
    %5076 = vmatprep.subr.mxu0 0.0
    %5077 = vmatpush1.xpose.msra.mxu0 0.0
    %5078 = vmatprep.subr.mxu0 0.0
    %5079 = vmatpush1.xpose.msra.mxu0 0.0
    %5080 = vmatprep.subr.mxu0 0.0
    %5081 = vmatpush1.xpose.msra.mxu0 0.0
    %5082 = vmatprep.subr.mxu0 0.0
    %5083 = vmatpush1.xpose.msra.mxu0 0.0
    %5084 = vmatprep.subr.mxu0 0.0
    %5085 = vmatpush1.xpose.msra.mxu0 0.0
    %5086 = vmatprep.subr.mxu0 0.0
    %5087 = vmatpush1.xpose.msra.mxu0 0.0
    %5088 = vmatprep.subr.mxu0 0.0
    %5089 = vmatpush1.xpose.msra.mxu0 0.0
    %5090 = vmatprep.subr.mxu0 0.0
    %5091 = vmatpush1.xpose.msra.mxu0 0.0
    %5092 = vmatprep.subr.mxu0 0.0
    %5093 = vmatpush1.xpose.msra.mxu0 0.0
    %5094 = vmatprep.subr.mxu0 0.0
    %5095 = vmatpush1.xpose.msra.mxu0 0.0
    %5096 = vmatprep.subr.mxu0 0.0
    %5097 = vmatpush1.xpose.msra.mxu0 0.0
    %5098 = vmatprep.subr.mxu0 0.0
    %5099 = vmatpush1.xpose.msra.mxu0 0.0
    %5100 = vmatprep.subr.mxu0 0.0
    %5101 = vmatpush1.xpose.msra.mxu0 0.0
    %5102 = vmatprep.subr.mxu0 0.0
    %5103 = vmatpush1.xpose.msra.mxu0 0.0
    %5104 = vmatprep.subr.mxu0 0.0
    %5105 = vmatpush1.xpose.msra.mxu0 0.0
    %5106 = vmatprep.subr.mxu0 0.0
    %5107 = vmatpush1.xpose.msra.mxu0 0.0
    %5108 = vmatprep.subr.mxu0 0.0
    %5109 = vmatpush1.xpose.msra.mxu0 0.0
    %5110 = vmatprep.subr.mxu0 0.0
    %5111 = vmatpush1.xpose.msra.mxu0 0.0
    %5112 = vmatprep.subr.mxu0 0.0
    %5113 = vmatpush1.xpose.msra.mxu0 0.0
    %5114 = vmatprep.subr.mxu0 0.0
    %5115 = vmatpush1.xpose.msra.mxu0 0.0
    %5116 = vmatprep.subr.mxu0 0.0
    %5117 = vmatpush1.xpose.msra.mxu0 0.0
    %5118 = vmatprep.subr.mxu0 0.0
    %5119 = vmatpush1.xpose.msra.mxu0 0.0
    %5120 = vmatprep.subr.mxu0 0.0
    %5121 = vmatpush1.xpose.msra.mxu0 0.0
    %5122 = vmatprep.subr.mxu0 0.0
    %5123 = vmatpush1.xpose.msra.mxu0 0.0
    %5124 = vmatprep.mubr.f32.mxu0 0.0
    %5125 = vmatmul.mubr.f32.gmra.mrb[0].mxu0 %v5052
    %v5126 = vpop.f32.mrb[0].mxu0
    %v5127 = vadd.f32 0.0, %v5126
    %v5128 = vpop.f32.mrb[0].mxu0
    %5129 = vmatprep.mubr.f32.mxu0 0.0
    %5130 = vmatmul.mubr.f32.gmra.mrb[0].mxu0 %v5054
    %v5131 = vpop.f32.mrb[0].mxu0
    %v5132 = vadd.f32 0.0, %v5131
    %v5133 = vpop.f32.mrb[0].mxu0
    %5134 = vdwg.mxu0
    %v5135 = vmul.f32 %v5127, 0.35355338
    %v5136 = vmul.f32 %v5132, 0.35355338
    %v5137 = vadd.f32 %v5135, %v979
    %v5138 = vadd.f32 %v5136, %v980
    %v5139 = vsel %vm1499, %v5137, -inf
    %5140 = vmax.xlane.f32.xlu0 %v5139
    %v5141 = vpop.xlane.xlu0 %5140
    %v5142 = vsel %vm1503, %v5138, -inf
    %5143 = vmax.xlane.f32.xlu0 %v5142
    %v5144 = vpop.xlane.xlu0 %5143
    %v5145 = vsub.f32 %v5137, %v5141
    %v5146 = vsub.f32 %v5138, %v5144
    %v5147 = vmul.f32 %v5145, 1.442695
    %v5148 = vpow.pop %v5147
    %v5149 = vmul.f32 %v5146, 1.442695
    %v5150 = vpow.pop %v5149
    %v5151 = vsel %vm1499, %v5148, 0.0
    %5152 = vadd.xlane.f32.xlu0 %v5151
    %v5153 = vpop.xlane.xlu0 %5152
    %v5154 = vsel %vm1503, %v5150, 0.0
    %5155 = vadd.xlane.f32.xlu0 %v5154
    %v5156 = vpop.xlane.xlu0 %5155
    %v5157 = vrcp.pop %v5153
    %v5158 = vrcp.pop %v5156
    %v5159 = vmul.f32 %v5148, %v5157
    %v5160 = vmul.f32 %v5150, %v5158
    %5161 = vrot.lane.b32.xlu0 %v5038, 64
    %v5162 = vpop.permute.xlu0 %5161
    %5163 = vrot.lane.b32.xlu0 %v5043, 64
    %v5164 = vpop.permute.xlu0 %5163
    %v5167 = vsel %vm1499, %v5159, 0
    %v5170 = vsel %vm1499, %v5160, 0
    %v5172 = vsel %vm1534, %v5164, 0
    %5174 = vmatprep.subr.mxu0 0.0
    %5175 = vmatpush1.msra.mxu0 %v5162
    %5176 = vmatprep.subr.mxu0 0.0
    %5177 = vmatpush1.msra.mxu0 %v5172
    %5178 = vmatprep.subr.mxu0 0.0
    %5179 = vmatpush1.msra.mxu0 0.0
    %5180 = vmatprep.subr.mxu0 0.0
    %5181 = vmatpush1.msra.mxu0 0.0
    %5182 = vmatprep.subr.mxu0 0.0
    %5183 = vmatpush1.msra.mxu0 0.0
    %5184 = vmatprep.subr.mxu0 0.0
    %5185 = vmatpush1.msra.mxu0 0.0
    %5186 = vmatprep.subr.mxu0 0.0
    %5187 = vmatpush1.msra.mxu0 0.0
    %5188 = vmatprep.subr.mxu0 0.0
    %5189 = vmatpush1.msra.mxu0 0.0
    %5190 = vmatprep.subr.mxu0 0.0
    %5191 = vmatpush1.msra.mxu0 0.0
    %5192 = vmatprep.subr.mxu0 0.0
    %5193 = vmatpush1.msra.mxu0 0.0
    %5194 = vmatprep.subr.mxu0 0.0
    %5195 = vmatpush1.msra.mxu0 0.0
    %5196 = vmatprep.subr.mxu0 0.0
    %5197 = vmatpush1.msra.mxu0 0.0
    %5198 = vmatprep.subr.mxu0 0.0
    %5199 = vmatpush1.msra.mxu0 0.0
    %5200 = vmatprep.subr.mxu0 0.0
    %5201 = vmatpush1.msra.mxu0 0.0
    %5202 = vmatprep.subr.mxu0 0.0
    %5203 = vmatpush1.msra.mxu0 0.0
    %5204 = vmatprep.subr.mxu0 0.0
    %5205 = vmatpush1.msra.mxu0 0.0
    %5206 = vmatprep.subr.mxu0 0.0
    %5207 = vmatpush1.msra.mxu0 0.0
    %5208 = vmatprep.subr.mxu0 0.0
    %5209 = vmatpush1.msra.mxu0 0.0
    %5210 = vmatprep.subr.mxu0 0.0
    %5211 = vmatpush1.msra.mxu0 0.0
    %5212 = vmatprep.subr.mxu0 0.0
    %5213 = vmatpush1.msra.mxu0 0.0
    %5214 = vmatprep.subr.mxu0 0.0
    %5215 = vmatpush1.msra.mxu0 0.0
    %5216 = vmatprep.subr.mxu0 0.0
    %5217 = vmatpush1.msra.mxu0 0.0
    %5218 = vmatprep.subr.mxu0 0.0
    %5219 = vmatpush1.msra.mxu0 0.0
    %5220 = vmatprep.subr.mxu0 0.0
    %5221 = vmatpush1.msra.mxu0 0.0
    %5222 = vmatprep.subr.mxu0 0.0
    %5223 = vmatpush1.msra.mxu0 0.0
    %5224 = vmatprep.subr.mxu0 0.0
    %5225 = vmatpush1.msra.mxu0 0.0
    %5226 = vmatprep.subr.mxu0 0.0
    %5227 = vmatpush1.msra.mxu0 0.0
    %5228 = vmatprep.subr.mxu0 0.0
    %5229 = vmatpush1.msra.mxu0 0.0
    %5230 = vmatprep.subr.mxu0 0.0
    %5231 = vmatpush1.msra.mxu0 0.0
    %5232 = vmatprep.subr.mxu0 0.0
    %5233 = vmatpush1.msra.mxu0 0.0
    %5234 = vmatprep.subr.mxu0 0.0
    %5235 = vmatpush1.msra.mxu0 0.0
    %5236 = vmatprep.subr.mxu0 0.0
    %5237 = vmatpush1.msra.mxu0 0.0
    %5238 = vmatprep.mubr.f32.mxu0 0.0
    %5239 = vmatmul.mubr.f32.gmra.mrb[0].mxu0 %v5167
    %v5240 = vpop.f32.mrb[0].mxu0
    %v5241 = vadd.f32 0.0, %v5240
    %v5242 = vpop.f32.mrb[0].mxu0
    %5243 = vmatprep.mubr.f32.mxu0 0.0
    %5244 = vmatmul.mubr.f32.gmra.mrb[0].mxu0 %v5170
    %v5245 = vpop.f32.mrb[0].mxu0
    %v5246 = vadd.f32 0.0, %v5245
    %v5247 = vpop.f32.mrb[0].mxu0
    %5248 = vdwg.mxu0
    %5249 = vrot.lane.b32.xlu0 %v5038, 120
    %v5250 = vpop.permute.xlu0 %5249
    %5251 = vrot.lane.b32.xlu0 %v5043, 120
    %v5252 = vpop.permute.xlu0 %5251
    %5253 = vrot.lane.b32.xlu0 %v5038, 88
    %v5254 = vpop.permute.xlu0 %5253
    %5255 = vrot.lane.b32.xlu0 %v5043, 88
    %v5256 = vpop.permute.xlu0 %5255
    %v5257 = vsel %vm1411, %v5250, 0
    %v5259 = vsel %vm1411, %v5252, 0
    %v5261 = vsel %vm1411, %v5254, 0
    %v5263 = vsel %vm1411, %v5256, 0
    %5265 = vmatprep.subr.mxu0 0.0
    %5266 = vmatpush1.xpose.msra.mxu0 %v5261
    %5267 = vmatprep.subr.mxu0 0.0
    %5268 = vmatpush1.xpose.msra.mxu0 %v5263
    %5269 = vmatprep.subr.mxu0 0.0
    %5270 = vmatpush1.xpose.msra.mxu0 0.0
    %5271 = vmatprep.subr.mxu0 0.0
    %5272 = vmatpush1.xpose.msra.mxu0 0.0
    %5273 = vmatprep.subr.mxu0 0.0
    %5274 = vmatpush1.xpose.msra.mxu0 0.0
    %5275 = vmatprep.subr.mxu0 0.0
    %5276 = vmatpush1.xpose.msra.mxu0 0.0
    %5277 = vmatprep.subr.mxu0 0.0
    %5278 = vmatpush1.xpose.msra.mxu0 0.0
    %5279 = vmatprep.subr.mxu0 0.0
    %5280 = vmatpush1.xpose.msra.mxu0 0.0
    %5281 = vmatprep.subr.mxu0 0.0
    %5282 = vmatpush1.xpose.msra.mxu0 0.0
    %5283 = vmatprep.subr.mxu0 0.0
    %5284 = vmatpush1.xpose.msra.mxu0 0.0
    %5285 = vmatprep.subr.mxu0 0.0
    %5286 = vmatpush1.xpose.msra.mxu0 0.0
    %5287 = vmatprep.subr.mxu0 0.0
    %5288 = vmatpush1.xpose.msra.mxu0 0.0
    %5289 = vmatprep.subr.mxu0 0.0
    %5290 = vmatpush1.xpose.msra.mxu0 0.0
    %5291 = vmatprep.subr.mxu0 0.0
    %5292 = vmatpush1.xpose.msra.mxu0 0.0
    %5293 = vmatprep.subr.mxu0 0.0
    %5294 = vmatpush1.xpose.msra.mxu0 0.0
    %5295 = vmatprep.subr.mxu0 0.0
    %5296 = vmatpush1.xpose.msra.mxu0 0.0
    %5297 = vmatprep.subr.mxu0 0.0
    %5298 = vmatpush1.xpose.msra.mxu0 0.0
    %5299 = vmatprep.subr.mxu0 0.0
    %5300 = vmatpush1.xpose.msra.mxu0 0.0
    %5301 = vmatprep.subr.mxu0 0.0
    %5302 = vmatpush1.xpose.msra.mxu0 0.0
    %5303 = vmatprep.subr.mxu0 0.0
    %5304 = vmatpush1.xpose.msra.mxu0 0.0
    %5305 = vmatprep.subr.mxu0 0.0
    %5306 = vmatpush1.xpose.msra.mxu0 0.0
    %5307 = vmatprep.subr.mxu0 0.0
    %5308 = vmatpush1.xpose.msra.mxu0 0.0
    %5309 = vmatprep.subr.mxu0 0.0
    %5310 = vmatpush1.xpose.msra.mxu0 0.0
    %5311 = vmatprep.subr.mxu0 0.0
    %5312 = vmatpush1.xpose.msra.mxu0 0.0
    %5313 = vmatprep.subr.mxu0 0.0
    %5314 = vmatpush1.xpose.msra.mxu0 0.0
    %5315 = vmatprep.subr.mxu0 0.0
    %5316 = vmatpush1.xpose.msra.mxu0 0.0
    %5317 = vmatprep.subr.mxu0 0.0
    %5318 = vmatpush1.xpose.msra.mxu0 0.0
    %5319 = vmatprep.subr.mxu0 0.0
    %5320 = vmatpush1.xpose.msra.mxu0 0.0
    %5321 = vmatprep.subr.mxu0 0.0
    %5322 = vmatpush1.xpose.msra.mxu0 0.0
    %5323 = vmatprep.subr.mxu0 0.0
    %5324 = vmatpush1.xpose.msra.mxu0 0.0
    %5325 = vmatprep.subr.mxu0 0.0
    %5326 = vmatpush1.xpose.msra.mxu0 0.0
    %5327 = vmatprep.subr.mxu0 0.0
    %5328 = vmatpush1.xpose.msra.mxu0 0.0
    %5329 = vmatprep.mubr.f32.mxu0 0.0
    %5330 = vmatmul.mubr.f32.gmra.mrb[0].mxu0 %v5257
    %v5331 = vpop.f32.mrb[0].mxu0
    %v5332 = vadd.f32 0.0, %v5331
    %v5333 = vpop.f32.mrb[0].mxu0
    %5334 = vmatprep.mubr.f32.mxu0 0.0
    %5335 = vmatmul.mubr.f32.gmra.mrb[0].mxu0 %v5259
    %v5336 = vpop.f32.mrb[0].mxu0
    %v5337 = vadd.f32 0.0, %v5336
    %v5338 = vpop.f32.mrb[0].mxu0
    %5339 = vdwg.mxu0
    %v5340 = vmul.f32 %v5332, 0.35355338
    %v5341 = vmul.f32 %v5337, 0.35355338
    %v5342 = vadd.f32 %v5340, %v979
    %v5343 = vadd.f32 %v5341, %v980
    %v5344 = vsel %vm1499, %v5342, -inf
    %5345 = vmax.xlane.f32.xlu0 %v5344
    %v5346 = vpop.xlane.xlu0 %5345
    %v5347 = vsel %vm1503, %v5343, -inf
    %5348 = vmax.xlane.f32.xlu0 %v5347
    %v5349 = vpop.xlane.xlu0 %5348
    %v5350 = vsub.f32 %v5342, %v5346
    %v5351 = vsub.f32 %v5343, %v5349
    %v5352 = vmul.f32 %v5350, 1.442695
    %v5353 = vpow.pop %v5352
    %v5354 = vmul.f32 %v5351, 1.442695
    %v5355 = vpow.pop %v5354
    %v5356 = vsel %vm1499, %v5353, 0.0
    %5357 = vadd.xlane.f32.xlu0 %v5356
    %v5358 = vpop.xlane.xlu0 %5357
    %v5359 = vsel %vm1503, %v5355, 0.0
    %5360 = vadd.xlane.f32.xlu0 %v5359
    %v5361 = vpop.xlane.xlu0 %5360
    %v5362 = vrcp.pop %v5358
    %v5363 = vrcp.pop %v5361
    %v5364 = vmul.f32 %v5353, %v5362
    %v5365 = vmul.f32 %v5355, %v5363
    %5366 = vrot.lane.b32.xlu0 %v5038, 56
    %v5367 = vpop.permute.xlu0 %5366
    %5368 = vrot.lane.b32.xlu0 %v5043, 56
    %v5369 = vpop.permute.xlu0 %5368
    %v5372 = vsel %vm1499, %v5364, 0
    %v5375 = vsel %vm1499, %v5365, 0
    %v5377 = vsel %vm1534, %v5369, 0
    %5379 = vmatprep.subr.mxu0 0.0
    %5380 = vmatpush1.msra.mxu0 %v5367
    %5381 = vmatprep.subr.mxu0 0.0
    %5382 = vmatpush1.msra.mxu0 %v5377
    %5383 = vmatprep.subr.mxu0 0.0
    %5384 = vmatpush1.msra.mxu0 0.0
    %5385 = vmatprep.subr.mxu0 0.0
    %5386 = vmatpush1.msra.mxu0 0.0
    %5387 = vmatprep.subr.mxu0 0.0
    %5388 = vmatpush1.msra.mxu0 0.0
    %5389 = vmatprep.subr.mxu0 0.0
    %5390 = vmatpush1.msra.mxu0 0.0
    %5391 = vmatprep.subr.mxu0 0.0
    %5392 = vmatpush1.msra.mxu0 0.0
    %5393 = vmatprep.subr.mxu0 0.0
    %5394 = vmatpush1.msra.mxu0 0.0
    %5395 = vmatprep.subr.mxu0 0.0
    %5396 = vmatpush1.msra.mxu0 0.0
    %5397 = vmatprep.subr.mxu0 0.0
    %5398 = vmatpush1.msra.mxu0 0.0
    %5399 = vmatprep.subr.mxu0 0.0
    %5400 = vmatpush1.msra.mxu0 0.0
    %5401 = vmatprep.subr.mxu0 0.0
    %5402 = vmatpush1.msra.mxu0 0.0
    %5403 = vmatprep.subr.mxu0 0.0
    %5404 = vmatpush1.msra.mxu0 0.0
    %5405 = vmatprep.subr.mxu0 0.0
    %5406 = vmatpush1.msra.mxu0 0.0
    %5407 = vmatprep.subr.mxu0 0.0
    %5408 = vmatpush1.msra.mxu0 0.0
    %5409 = vmatprep.subr.mxu0 0.0
    %5410 = vmatpush1.msra.mxu0 0.0
    %5411 = vmatprep.subr.mxu0 0.0
    %5412 = vmatpush1.msra.mxu0 0.0
    %5413 = vmatprep.subr.mxu0 0.0
    %5414 = vmatpush1.msra.mxu0 0.0
    %5415 = vmatprep.subr.mxu0 0.0
    %5416 = vmatpush1.msra.mxu0 0.0
    %5417 = vmatprep.subr.mxu0 0.0
    %5418 = vmatpush1.msra.mxu0 0.0
    %5419 = vmatprep.subr.mxu0 0.0
    %5420 = vmatpush1.msra.mxu0 0.0
    %5421 = vmatprep.subr.mxu0 0.0
    %5422 = vmatpush1.msra.mxu0 0.0
    %5423 = vmatprep.subr.mxu0 0.0
    %5424 = vmatpush1.msra.mxu0 0.0
    %5425 = vmatprep.subr.mxu0 0.0
    %5426 = vmatpush1.msra.mxu0 0.0
    %5427 = vmatprep.subr.mxu0 0.0
    %5428 = vmatpush1.msra.mxu0 0.0
    %5429 = vmatprep.subr.mxu0 0.0
    %5430 = vmatpush1.msra.mxu0 0.0
    %5431 = vmatprep.subr.mxu0 0.0
    %5432 = vmatpush1.msra.mxu0 0.0
    %5433 = vmatprep.subr.mxu0 0.0
    %5434 = vmatpush1.msra.mxu0 0.0
    %5435 = vmatprep.subr.mxu0 0.0
    %5436 = vmatpush1.msra.mxu0 0.0
    %5437 = vmatprep.subr.mxu0 0.0
    %5438 = vmatpush1.msra.mxu0 0.0
    %5439 = vmatprep.subr.mxu0 0.0
    %5440 = vmatpush1.msra.mxu0 0.0
    %5441 = vmatprep.subr.mxu0 0.0
    %5442 = vmatpush1.msra.mxu0 0.0
    %5443 = vmatprep.mubr.f32.mxu0 0.0
    %5444 = vmatmul.mubr.f32.gmra.mrb[0].mxu0 %v5372
    %v5445 = vpop.f32.mrb[0].mxu0
    %v5446 = vadd.f32 0.0, %v5445
    %v5447 = vpop.f32.mrb[0].mxu0
    %5448 = vmatprep.mubr.f32.mxu0 0.0
    %5449 = vmatmul.mubr.f32.gmra.mrb[0].mxu0 %v5375
    %v5450 = vpop.f32.mrb[0].mxu0
    %v5451 = vadd.f32 0.0, %v5450
    %v5452 = vpop.f32.mrb[0].mxu0
    %5453 = vdwg.mxu0
    %5454 = vrot.lane.b32.xlu0 %v5038, 112
    %v5455 = vpop.permute.xlu0 %5454
    %5456 = vrot.lane.b32.xlu0 %v5043, 112
    %v5457 = vpop.permute.xlu0 %5456
    %5458 = vrot.lane.b32.xlu0 %v5038, 80
    %v5459 = vpop.permute.xlu0 %5458
    %5460 = vrot.lane.b32.xlu0 %v5043, 80
    %v5461 = vpop.permute.xlu0 %5460
    %v5462 = vsel %vm1411, %v5455, 0
    %v5464 = vsel %vm1411, %v5457, 0
    %v5466 = vsel %vm1411, %v5459, 0
    %v5468 = vsel %vm1411, %v5461, 0
    %5470 = vmatprep.subr.mxu0 0.0
    %5471 = vmatpush1.xpose.msra.mxu0 %v5466
    %5472 = vmatprep.subr.mxu0 0.0
    %5473 = vmatpush1.xpose.msra.mxu0 %v5468
    %5474 = vmatprep.subr.mxu0 0.0
    %5475 = vmatpush1.xpose.msra.mxu0 0.0
    %5476 = vmatprep.subr.mxu0 0.0
    %5477 = vmatpush1.xpose.msra.mxu0 0.0
    %5478 = vmatprep.subr.mxu0 0.0
    %5479 = vmatpush1.xpose.msra.mxu0 0.0
    %5480 = vmatprep.subr.mxu0 0.0
    %5481 = vmatpush1.xpose.msra.mxu0 0.0
    %5482 = vmatprep.subr.mxu0 0.0
    %5483 = vmatpush1.xpose.msra.mxu0 0.0
    %5484 = vmatprep.subr.mxu0 0.0
    %5485 = vmatpush1.xpose.msra.mxu0 0.0
    %5486 = vmatprep.subr.mxu0 0.0
    %5487 = vmatpush1.xpose.msra.mxu0 0.0
    %5488 = vmatprep.subr.mxu0 0.0
    %5489 = vmatpush1.xpose.msra.mxu0 0.0
    %5490 = vmatprep.subr.mxu0 0.0
    %5491 = vmatpush1.xpose.msra.mxu0 0.0
    %5492 = vmatprep.subr.mxu0 0.0
    %5493 = vmatpush1.xpose.msra.mxu0 0.0
    %5494 = vmatprep.subr.mxu0 0.0
    %5495 = vmatpush1.xpose.msra.mxu0 0.0
    %5496 = vmatprep.subr.mxu0 0.0
    %5497 = vmatpush1.xpose.msra.mxu0 0.0
    %5498 = vmatprep.subr.mxu0 0.0
    %5499 = vmatpush1.xpose.msra.mxu0 0.0
    %5500 = vmatprep.subr.mxu0 0.0
    %5501 = vmatpush1.xpose.msra.mxu0 0.0
    %5502 = vmatprep.subr.mxu0 0.0
    %5503 = vmatpush1.xpose.msra.mxu0 0.0
    %5504 = vmatprep.subr.mxu0 0.0
    %5505 = vmatpush1.xpose.msra.mxu0 0.0
    %5506 = vmatprep.subr.mxu0 0.0
    %5507 = vmatpush1.xpose.msra.mxu0 0.0
    %5508 = vmatprep.subr.mxu0 0.0
    %5509 = vmatpush1.xpose.msra.mxu0 0.0
    %5510 = vmatprep.subr.mxu0 0.0
    %5511 = vmatpush1.xpose.msra.mxu0 0.0
    %5512 = vmatprep.subr.mxu0 0.0
    %5513 = vmatpush1.xpose.msra.mxu0 0.0
    %5514 = vmatprep.subr.mxu0 0.0
    %5515 = vmatpush1.xpose.msra.mxu0 0.0
    %5516 = vmatprep.subr.mxu0 0.0
    %5517 = vmatpush1.xpose.msra.mxu0 0.0
    %5518 = vmatprep.subr.mxu0 0.0
    %5519 = vmatpush1.xpose.msra.mxu0 0.0
    %5520 = vmatprep.subr.mxu0 0.0
    %5521 = vmatpush1.xpose.msra.mxu0 0.0
    %5522 = vmatprep.subr.mxu0 0.0
    %5523 = vmatpush1.xpose.msra.mxu0 0.0
    %5524 = vmatprep.subr.mxu0 0.0
    %5525 = vmatpush1.xpose.msra.mxu0 0.0
    %5526 = vmatprep.subr.mxu0 0.0
    %5527 = vmatpush1.xpose.msra.mxu0 0.0
    %5528 = vmatprep.subr.mxu0 0.0
    %5529 = vmatpush1.xpose.msra.mxu0 0.0
    %5530 = vmatprep.subr.mxu0 0.0
    %5531 = vmatpush1.xpose.msra.mxu0 0.0
    %5532 = vmatprep.subr.mxu0 0.0
    %5533 = vmatpush1.xpose.msra.mxu0 0.0
    %5534 = vmatprep.mubr.f32.mxu0 0.0
    %5535 = vmatmul.mubr.f32.gmra.mrb[0].mxu0 %v5462
    %v5536 = vpop.f32.mrb[0].mxu0
    %v5537 = vadd.f32 0.0, %v5536
    %v5538 = vpop.f32.mrb[0].mxu0
    %5539 = vmatprep.mubr.f32.mxu0 0.0
    %5540 = vmatmul.mubr.f32.gmra.mrb[0].mxu0 %v5464
    %v5541 = vpop.f32.mrb[0].mxu0
    %v5542 = vadd.f32 0.0, %v5541
    %v5543 = vpop.f32.mrb[0].mxu0
    %5544 = vdwg.mxu0
    %v5545 = vmul.f32 %v5537, 0.35355338
    %v5546 = vmul.f32 %v5542, 0.35355338
    %v5547 = vadd.f32 %v5545, %v979
    %v5548 = vadd.f32 %v5546, %v980
    %v5549 = vsel %vm1499, %v5547, -inf
    %5550 = vmax.xlane.f32.xlu0 %v5549
    %v5551 = vpop.xlane.xlu0 %5550
    %v5552 = vsel %vm1503, %v5548, -inf
    %5553 = vmax.xlane.f32.xlu0 %v5552
    %v5554 = vpop.xlane.xlu0 %5553
    %v5555 = vsub.f32 %v5547, %v5551
    %v5556 = vsub.f32 %v5548, %v5554
    %v5557 = vmul.f32 %v5555, 1.442695
    %v5558 = vpow.pop %v5557
    %v5559 = vmul.f32 %v5556, 1.442695
    %v5560 = vpow.pop %v5559
    %v5561 = vsel %vm1499, %v5558, 0.0
    %5562 = vadd.xlane.f32.xlu0 %v5561
    %v5563 = vpop.xlane.xlu0 %5562
    %v5564 = vsel %vm1503, %v5560, 0.0
    %5565 = vadd.xlane.f32.xlu0 %v5564
    %v5566 = vpop.xlane.xlu0 %5565
    %v5567 = vrcp.pop %v5563
    %v5568 = vrcp.pop %v5566
    %v5569 = vmul.f32 %v5558, %v5567
    %v5570 = vmul.f32 %v5560, %v5568
    %5571 = vrot.lane.b32.xlu0 %v5038, 48
    %v5572 = vpop.permute.xlu0 %5571
    %5573 = vrot.lane.b32.xlu0 %v5043, 48
    %v5574 = vpop.permute.xlu0 %5573
    %v5577 = vsel %vm1499, %v5569, 0
    %v5580 = vsel %vm1499, %v5570, 0
    %v5582 = vsel %vm1534, %v5574, 0
    %5584 = vmatprep.subr.mxu0 0.0
    %5585 = vmatpush1.msra.mxu0 %v5572
    %5586 = vmatprep.subr.mxu0 0.0
    %5587 = vmatpush1.msra.mxu0 %v5582
    %5588 = vmatprep.subr.mxu0 0.0
    %5589 = vmatpush1.msra.mxu0 0.0
    %5590 = vmatprep.subr.mxu0 0.0
    %5591 = vmatpush1.msra.mxu0 0.0
    %5592 = vmatprep.subr.mxu0 0.0
    %5593 = vmatpush1.msra.mxu0 0.0
    %5594 = vmatprep.subr.mxu0 0.0
    %5595 = vmatpush1.msra.mxu0 0.0
    %5596 = vmatprep.subr.mxu0 0.0
    %5597 = vmatpush1.msra.mxu0 0.0
    %5598 = vmatprep.subr.mxu0 0.0
    %5599 = vmatpush1.msra.mxu0 0.0
    %5600 = vmatprep.subr.mxu0 0.0
    %5601 = vmatpush1.msra.mxu0 0.0
    %5602 = vmatprep.subr.mxu0 0.0
    %5603 = vmatpush1.msra.mxu0 0.0
    %5604 = vmatprep.subr.mxu0 0.0
    %5605 = vmatpush1.msra.mxu0 0.0
    %5606 = vmatprep.subr.mxu0 0.0
    %5607 = vmatpush1.msra.mxu0 0.0
    %5608 = vmatprep.subr.mxu0 0.0
    %5609 = vmatpush1.msra.mxu0 0.0
    %5610 = vmatprep.subr.mxu0 0.0
    %5611 = vmatpush1.msra.mxu0 0.0
    %5612 = vmatprep.subr.mxu0 0.0
    %5613 = vmatpush1.msra.mxu0 0.0
    %5614 = vmatprep.subr.mxu0 0.0
    %5615 = vmatpush1.msra.mxu0 0.0
    %5616 = vmatprep.subr.mxu0 0.0
    %5617 = vmatpush1.msra.mxu0 0.0
    %5618 = vmatprep.subr.mxu0 0.0
    %5619 = vmatpush1.msra.mxu0 0.0
    %5620 = vmatprep.subr.mxu0 0.0
    %5621 = vmatpush1.msra.mxu0 0.0
    %5622 = vmatprep.subr.mxu0 0.0
    %5623 = vmatpush1.msra.mxu0 0.0
    %5624 = vmatprep.subr.mxu0 0.0
    %5625 = vmatpush1.msra.mxu0 0.0
    %5626 = vmatprep.subr.mxu0 0.0
    %5627 = vmatpush1.msra.mxu0 0.0
    %5628 = vmatprep.subr.mxu0 0.0
    %5629 = vmatpush1.msra.mxu0 0.0
    %5630 = vmatprep.subr.mxu0 0.0
    %5631 = vmatpush1.msra.mxu0 0.0
    %5632 = vmatprep.subr.mxu0 0.0
    %5633 = vmatpush1.msra.mxu0 0.0
    %5634 = vmatprep.subr.mxu0 0.0
    %5635 = vmatpush1.msra.mxu0 0.0
    %5636 = vmatprep.subr.mxu0 0.0
    %5637 = vmatpush1.msra.mxu0 0.0
    %5638 = vmatprep.subr.mxu0 0.0
    %5639 = vmatpush1.msra.mxu0 0.0
    %5640 = vmatprep.subr.mxu0 0.0
    %5641 = vmatpush1.msra.mxu0 0.0
    %5642 = vmatprep.subr.mxu0 0.0
    %5643 = vmatpush1.msra.mxu0 0.0
    %5644 = vmatprep.subr.mxu0 0.0
    %5645 = vmatpush1.msra.mxu0 0.0
    %5646 = vmatprep.subr.mxu0 0.0
    %5647 = vmatpush1.msra.mxu0 0.0
    %5648 = vmatprep.mubr.f32.mxu0 0.0
    %5649 = vmatmul.mubr.f32.gmra.mrb[0].mxu0 %v5577
    %v5650 = vpop.f32.mrb[0].mxu0
    %v5651 = vadd.f32 0.0, %v5650
    %v5652 = vpop.f32.mrb[0].mxu0
    %5653 = vmatprep.mubr.f32.mxu0 0.0
    %5654 = vmatmul.mubr.f32.gmra.mrb[0].mxu0 %v5580
    %v5655 = vpop.f32.mrb[0].mxu0
    %v5656 = vadd.f32 0.0, %v5655
    %v5657 = vpop.f32.mrb[0].mxu0
    %5658 = vdwg.mxu0
    %5659 = vrot.lane.b32.xlu0 %v5038, 104
    %v5660 = vpop.permute.xlu0 %5659
    %5661 = vrot.lane.b32.xlu0 %v5043, 104
    %v5662 = vpop.permute.xlu0 %5661
    %5663 = vrot.lane.b32.xlu0 %v5038, 72
    %v5664 = vpop.permute.xlu0 %5663
    %5665 = vrot.lane.b32.xlu0 %v5043, 72
    %v5666 = vpop.permute.xlu0 %5665
    %v5667 = vsel %vm1411, %v5660, 0
    %v5669 = vsel %vm1411, %v5662, 0
    %v5671 = vsel %vm1411, %v5664, 0
    %v5673 = vsel %vm1411, %v5666, 0
    %5675 = vmatprep.subr.mxu0 0.0
    %5676 = vmatpush1.xpose.msra.mxu0 %v5671
    %5677 = vmatprep.subr.mxu0 0.0
    %5678 = vmatpush1.xpose.msra.mxu0 %v5673
    %5679 = vmatprep.subr.mxu0 0.0
    %5680 = vmatpush1.xpose.msra.mxu0 0.0
    %5681 = vmatprep.subr.mxu0 0.0
    %5682 = vmatpush1.xpose.msra.mxu0 0.0
    %5683 = vmatprep.subr.mxu0 0.0
    %5684 = vmatpush1.xpose.msra.mxu0 0.0
    %5685 = vmatprep.subr.mxu0 0.0
    %5686 = vmatpush1.xpose.msra.mxu0 0.0
    %5687 = vmatprep.subr.mxu0 0.0
    %5688 = vmatpush1.xpose.msra.mxu0 0.0
    %5689 = vmatprep.subr.mxu0 0.0
    %5690 = vmatpush1.xpose.msra.mxu0 0.0
    %5691 = vmatprep.subr.mxu0 0.0
    %5692 = vmatpush1.xpose.msra.mxu0 0.0
    %5693 = vmatprep.subr.mxu0 0.0
    %5694 = vmatpush1.xpose.msra.mxu0 0.0
    %5695 = vmatprep.subr.mxu0 0.0
    %5696 = vmatpush1.xpose.msra.mxu0 0.0
    %5697 = vmatprep.subr.mxu0 0.0
    %5698 = vmatpush1.xpose.msra.mxu0 0.0
    %5699 = vmatprep.subr.mxu0 0.0
    %5700 = vmatpush1.xpose.msra.mxu0 0.0
    %5701 = vmatprep.subr.mxu0 0.0
    %5702 = vmatpush1.xpose.msra.mxu0 0.0
    %5703 = vmatprep.subr.mxu0 0.0
    %5704 = vmatpush1.xpose.msra.mxu0 0.0
    %5705 = vmatprep.subr.mxu0 0.0
    %5706 = vmatpush1.xpose.msra.mxu0 0.0
    %5707 = vmatprep.subr.mxu0 0.0
    %5708 = vmatpush1.xpose.msra.mxu0 0.0
    %5709 = vmatprep.subr.mxu0 0.0
    %5710 = vmatpush1.xpose.msra.mxu0 0.0
    %5711 = vmatprep.subr.mxu0 0.0
    %5712 = vmatpush1.xpose.msra.mxu0 0.0
    %5713 = vmatprep.subr.mxu0 0.0
    %5714 = vmatpush1.xpose.msra.mxu0 0.0
    %5715 = vmatprep.subr.mxu0 0.0
    %5716 = vmatpush1.xpose.msra.mxu0 0.0
    %5717 = vmatprep.subr.mxu0 0.0
    %5718 = vmatpush1.xpose.msra.mxu0 0.0
    %5719 = vmatprep.subr.mxu0 0.0
    %5720 = vmatpush1.xpose.msra.mxu0 0.0
    %5721 = vmatprep.subr.mxu0 0.0
    %5722 = vmatpush1.xpose.msra.mxu0 0.0
    %5723 = vmatprep.subr.mxu0 0.0
    %5724 = vmatpush1.xpose.msra.mxu0 0.0
    %5725 = vmatprep.subr.mxu0 0.0
    %5726 = vmatpush1.xpose.msra.mxu0 0.0
    %5727 = vmatprep.subr.mxu0 0.0
    %5728 = vmatpush1.xpose.msra.mxu0 0.0
    %5729 = vmatprep.subr.mxu0 0.0
    %5730 = vmatpush1.xpose.msra.mxu0 0.0
    %5731 = vmatprep.subr.mxu0 0.0
    %5732 = vmatpush1.xpose.msra.mxu0 0.0
    %5733 = vmatprep.subr.mxu0 0.0
    %5734 = vmatpush1.xpose.msra.mxu0 0.0
    %5735 = vmatprep.subr.mxu0 0.0
    %5736 = vmatpush1.xpose.msra.mxu0 0.0
    %5737 = vmatprep.subr.mxu0 0.0
    %5738 = vmatpush1.xpose.msra.mxu0 0.0
    %5739 = vmatprep.mubr.f32.mxu0 0.0
    %5740 = vmatmul.mubr.f32.gmra.mrb[0].mxu0 %v5667
    %v5741 = vpop.f32.mrb[0].mxu0
    %v5742 = vadd.f32 0.0, %v5741
    %v5743 = vpop.f32.mrb[0].mxu0
    %5744 = vmatprep.mubr.f32.mxu0 0.0
    %5745 = vmatmul.mubr.f32.gmra.mrb[0].mxu0 %v5669
    %v5746 = vpop.f32.mrb[0].mxu0
    %v5747 = vadd.f32 0.0, %v5746
    %v5748 = vpop.f32.mrb[0].mxu0
    %5749 = vdwg.mxu0
    %v5750 = vmul.f32 %v5742, 0.35355338
    %v5751 = vmul.f32 %v5747, 0.35355338
    %v5752 = vadd.f32 %v5750, %v979
    %v5753 = vadd.f32 %v5751, %v980
    %v5754 = vsel %vm1499, %v5752, -inf
    %5755 = vmax.xlane.f32.xlu0 %v5754
    %v5756 = vpop.xlane.xlu0 %5755
    %v5757 = vsel %vm1503, %v5753, -inf
    %5758 = vmax.xlane.f32.xlu0 %v5757
    %v5759 = vpop.xlane.xlu0 %5758
    %v5760 = vsub.f32 %v5752, %v5756
    %v5761 = vsub.f32 %v5753, %v5759
    %v5762 = vmul.f32 %v5760, 1.442695
    %v5763 = vpow.pop %v5762
    %v5764 = vmul.f32 %v5761, 1.442695
    %v5765 = vpow.pop %v5764
    %v5766 = vsel %vm1499, %v5763, 0.0
    %5767 = vadd.xlane.f32.xlu0 %v5766
    %v5768 = vpop.xlane.xlu0 %5767
    %v5769 = vsel %vm1503, %v5765, 0.0
    %5770 = vadd.xlane.f32.xlu0 %v5769
    %v5771 = vpop.xlane.xlu0 %5770
    %v5772 = vrcp.pop %v5768
    %v5773 = vrcp.pop %v5771
    %v5774 = vmul.f32 %v5763, %v5772
    %v5775 = vmul.f32 %v5765, %v5773
    %5776 = vrot.lane.b32.xlu0 %v5038, 40
    %v5777 = vpop.permute.xlu0 %5776
    %5778 = vrot.lane.b32.xlu0 %v5043, 40
    %v5779 = vpop.permute.xlu0 %5778
    %v5782 = vsel %vm1499, %v5774, 0
    %v5785 = vsel %vm1499, %v5775, 0
    %v5787 = vsel %vm1534, %v5779, 0
    %5789 = vmatprep.subr.mxu0 0.0
    %5790 = vmatpush1.msra.mxu0 %v5777
    %5791 = vmatprep.subr.mxu0 0.0
    %5792 = vmatpush1.msra.mxu0 %v5787
    %5793 = vmatprep.subr.mxu0 0.0
    %5794 = vmatpush1.msra.mxu0 0.0
    %5795 = vmatprep.subr.mxu0 0.0
    %5796 = vmatpush1.msra.mxu0 0.0
    %5797 = vmatprep.subr.mxu0 0.0
    %5798 = vmatpush1.msra.mxu0 0.0
    %5799 = vmatprep.subr.mxu0 0.0
    %5800 = vmatpush1.msra.mxu0 0.0
    %5801 = vmatprep.subr.mxu0 0.0
    %5802 = vmatpush1.msra.mxu0 0.0
    %5803 = vmatprep.subr.mxu0 0.0
    %5804 = vmatpush1.msra.mxu0 0.0
    %5805 = vmatprep.subr.mxu0 0.0
    %5806 = vmatpush1.msra.mxu0 0.0
    %5807 = vmatprep.subr.mxu0 0.0
    %5808 = vmatpush1.msra.mxu0 0.0
    %5809 = vmatprep.subr.mxu0 0.0
    %5810 = vmatpush1.msra.mxu0 0.0
    %5811 = vmatprep.subr.mxu0 0.0
    %5812 = vmatpush1.msra.mxu0 0.0
    %5813 = vmatprep.subr.mxu0 0.0
    %5814 = vmatpush1.msra.mxu0 0.0
    %5815 = vmatprep.subr.mxu0 0.0
    %5816 = vmatpush1.msra.mxu0 0.0
    %5817 = vmatprep.subr.mxu0 0.0
    %5818 = vmatpush1.msra.mxu0 0.0
    %5819 = vmatprep.subr.mxu0 0.0
    %5820 = vmatpush1.msra.mxu0 0.0
    %5821 = vmatprep.subr.mxu0 0.0
    %5822 = vmatpush1.msra.mxu0 0.0
    %5823 = vmatprep.subr.mxu0 0.0
    %5824 = vmatpush1.msra.mxu0 0.0
    %5825 = vmatprep.subr.mxu0 0.0
    %5826 = vmatpush1.msra.mxu0 0.0
    %5827 = vmatprep.subr.mxu0 0.0
    %5828 = vmatpush1.msra.mxu0 0.0
    %5829 = vmatprep.subr.mxu0 0.0
    %5830 = vmatpush1.msra.mxu0 0.0
    %5831 = vmatprep.subr.mxu0 0.0
    %5832 = vmatpush1.msra.mxu0 0.0
    %5833 = vmatprep.subr.mxu0 0.0
    %5834 = vmatpush1.msra.mxu0 0.0
    %5835 = vmatprep.subr.mxu0 0.0
    %5836 = vmatpush1.msra.mxu0 0.0
    %5837 = vmatprep.subr.mxu0 0.0
    %5838 = vmatpush1.msra.mxu0 0.0
    %5839 = vmatprep.subr.mxu0 0.0
    %5840 = vmatpush1.msra.mxu0 0.0
    %5841 = vmatprep.subr.mxu0 0.0
    %5842 = vmatpush1.msra.mxu0 0.0
    %5843 = vmatprep.subr.mxu0 0.0
    %5844 = vmatpush1.msra.mxu0 0.0
    %5845 = vmatprep.subr.mxu0 0.0
    %5846 = vmatpush1.msra.mxu0 0.0
    %5847 = vmatprep.subr.mxu0 0.0
    %5848 = vmatpush1.msra.mxu0 0.0
    %5849 = vmatprep.subr.mxu0 0.0
    %5850 = vmatpush1.msra.mxu0 0.0
    %5851 = vmatprep.subr.mxu0 0.0
    %5852 = vmatpush1.msra.mxu0 0.0
    %5853 = vmatprep.mubr.f32.mxu0 0.0
    %5854 = vmatmul.mubr.f32.gmra.mrb[0].mxu0 %v5782
    %v5855 = vpop.f32.mrb[0].mxu0
    %v5856 = vadd.f32 0.0, %v5855
    %v5857 = vpop.f32.mrb[0].mxu0
    %5858 = vmatprep.mubr.f32.mxu0 0.0
    %5859 = vmatmul.mubr.f32.gmra.mrb[0].mxu0 %v5785
    %v5860 = vpop.f32.mrb[0].mxu0
    %v5861 = vadd.f32 0.0, %v5860
    %v5862 = vpop.f32.mrb[0].mxu0
    %5863 = vdwg.mxu0
    %5866 = vrot.lane.b32.xlu0 %v5446, 8
    %v5867 = vpop.permute.xlu0 %5866
    %5868 = vrot.lane.b32.xlu0 %v5451, 8
    %v5869 = vpop.permute.xlu0 %5868
    %5874 = vrot.lane.b32.xlu0 %v5651, 16
    %v5875 = vpop.permute.xlu0 %5874
    %5876 = vrot.lane.b32.xlu0 %v5656, 16
    %v5877 = vpop.permute.xlu0 %5876
    %5882 = vrot.lane.b32.xlu0 %v5856, 24
    %v5883 = vpop.permute.xlu0 %5882
    %5884 = vrot.lane.b32.xlu0 %v5861, 24
    %v5885 = vpop.permute.xlu0 %5884
    %v5888 = vsel %vm1411, %v5241, %v5867
    %v5889 = vsel %vm1411, %v5246, %v5869
    %v5890 = vsel %vm2253, %v5888, %v5875
    %v5891 = vsel %vm2253, %v5889, %v5877
    %v5892 = vsel %vm2256, %v5890, %v5883
    %v5893 = vsel %vm2256, %v5891, %v5885
    %v5895 = vlaneseq
    %v5896 = vshrl.u32 %v5895, 7
    %v5897 = vsub.s32 0, %v5896
    %v5898 = vrot.slane %v4623, %v5897
    %v5901 = vsel %vm1324, %v5892, 0
    %v5904 = vsel %vm1324, %v5893, 0
    %5906 = vmatprep.subr.mxu0 0.0
    %5907 = vmatpush1.msra.mxu0 %v4618
    %5908 = vmatprep.subr.mxu0 0.0
    %5909 = vmatpush1.msra.mxu0 %v4619
    %5910 = vmatprep.subr.mxu0 0.0
    %5911 = vmatpush1.msra.mxu0 %v4620
    %5912 = vmatprep.subr.mxu0 0.0
    %5913 = vmatpush1.msra.mxu0 %v4621
    %5914 = vmatprep.subr.mxu0 0.0
    %5915 = vmatpush1.msra.mxu0 0.0
    %5916 = vmatprep.subr.mxu0 0.0
    %5917 = vmatpush1.msra.mxu0 0.0
    %5918 = vmatprep.subr.mxu0 0.0
    %5919 = vmatpush1.msra.mxu0 0.0
    %5920 = vmatprep.subr.mxu0 0.0
    %5921 = vmatpush1.msra.mxu0 0.0
    %5922 = vmatprep.subr.mxu0 0.0
    %5923 = vmatpush1.msra.mxu0 0.0
    %5924 = vmatprep.subr.mxu0 0.0
    %5925 = vmatpush1.msra.mxu0 0.0
    %5926 = vmatprep.subr.mxu0 0.0
    %5927 = vmatpush1.msra.mxu0 0.0
    %5928 = vmatprep.subr.mxu0 0.0
    %5929 = vmatpush1.msra.mxu0 0.0
    %5930 = vmatprep.subr.mxu0 0.0
    %5931 = vmatpush1.msra.mxu0 0.0
    %5932 = vmatprep.subr.mxu0 0.0
    %5933 = vmatpush1.msra.mxu0 0.0
    %5934 = vmatprep.subr.mxu0 0.0
    %5935 = vmatpush1.msra.mxu0 0.0
    %5936 = vmatprep.subr.mxu0 0.0
    %5937 = vmatpush1.msra.mxu0 0.0
    %5938 = vmatprep.subr.mxu0 0.0
    %5939 = vmatpush1.msra.mxu0 0.0
    %5940 = vmatprep.subr.mxu0 0.0
    %5941 = vmatpush1.msra.mxu0 0.0
    %5942 = vmatprep.subr.mxu0 0.0
    %5943 = vmatpush1.msra.mxu0 0.0
    %5944 = vmatprep.subr.mxu0 0.0
    %5945 = vmatpush1.msra.mxu0 0.0
    %5946 = vmatprep.subr.mxu0 0.0
    %5947 = vmatpush1.msra.mxu0 0.0
    %5948 = vmatprep.subr.mxu0 0.0
    %5949 = vmatpush1.msra.mxu0 0.0
    %5950 = vmatprep.subr.mxu0 0.0
    %5951 = vmatpush1.msra.mxu0 0.0
    %5952 = vmatprep.subr.mxu0 0.0
    %5953 = vmatpush1.msra.mxu0 0.0
    %5954 = vmatprep.subr.mxu0 0.0
    %5955 = vmatpush1.msra.mxu0 0.0
    %5956 = vmatprep.subr.mxu0 0.0
    %5957 = vmatpush1.msra.mxu0 0.0
    %5958 = vmatprep.subr.mxu0 0.0
    %5959 = vmatpush1.msra.mxu0 0.0
    %5960 = vmatprep.subr.mxu0 0.0
    %5961 = vmatpush1.msra.mxu0 0.0
    %5962 = vmatprep.subr.mxu0 0.0
    %5963 = vmatpush1.msra.mxu0 0.0
    %5964 = vmatprep.subr.mxu0 0.0
    %5965 = vmatpush1.msra.mxu0 0.0
    %5966 = vmatprep.subr.mxu0 0.0
    %5967 = vmatpush1.msra.mxu0 0.0
    %5968 = vmatprep.subr.mxu0 0.0
    %5969 = vmatpush1.msra.mxu0 0.0
    %5970 = vmatprep.mubr.f32.mxu0 0.0
    %5971 = vmatmul.mubr.f32.gmra.mrb[0].mxu0 %v5901
    %v5972 = vpop.f32.mrb[0].mxu0
    %v5973 = vadd.f32 %v5898, %v5972
    %v5974 = vpop.f32.mrb[0].mxu0
    %5975 = vmatprep.mubr.f32.mxu0 0.0
    %5976 = vmatmul.mubr.f32.gmra.mrb[0].mxu0 %v5904
    %v5977 = vpop.f32.mrb[0].mxu0
    %v5978 = vadd.f32 %v5898, %v5977
    %v5979 = vpop.f32.mrb[0].mxu0
    %5980 = vdwg.mxu0
    %v5981 = vadd.f32 %v4608, %v5973
    %v5982 = vadd.f32 %v4609, %v5978
    %v5983 = vsel %vm1324, %v5981, 0.0
    %5984 = vadd.xlane.f32.xlu0 %v5983
    %v5985 = vpop.xlane.xlu0 %5984
    %v5986 = vsel %vm2351, %v5982, 0.0
    %5987 = vadd.xlane.f32.xlu0 %v5986
    %v5988 = vpop.xlane.xlu0 %5987
    %v5989 = vmul.f32 %v5985, %v2355
    %v5990 = vmul.f32 %v5988, %v2355
    %v5991 = vsub.f32 %v5981, %v5989
    %v5992 = vsub.f32 %v5982, %v5990
    %v5993 = vmul.f32 %v5991, %v5991
    %v5994 = vmul.f32 %v5992, %v5992
    %v5995 = vsel %vm1324, %v5993, 0.0
    %5996 = vadd.xlane.f32.xlu0 %v5995
    %v5997 = vpop.xlane.xlu0 %5996
    %v5998 = vsel %vm2351, %v5994, 0.0
    %5999 = vadd.xlane.f32.xlu0 %v5998
    %v6000 = vpop.xlane.xlu0 %5999
    %v6001 = vmul.f32 %v5997, %v2355
    %v6002 = vmul.f32 %v6000, %v2355
    %v6003 = vadd.f32 %v6001, 1e-05
    %v6004 = vadd.f32 %v6002, 1e-05
    %v6005 = vrsqrt.pop %v6003
    %v6006 = vrsqrt.pop %v6004
    %v6007 = vmul.f32 %v5991, %v6005
    %v6008 = vmul.f32 %v5992, %v6006
    %v6010 = vlaneseq
    %v6011 = vshrl.u32 %v6010, 7
    %v6012 = vsub.s32 0, %v6011
    %v6013 = vrot.slane %v4625, %v6012
    %v6015 = vmul.f32 %v6007, %v6013
    %v6016 = vmul.f32 %v6008, %v6013
    %v6018 = vlaneseq
    %v6019 = vshrl.u32 %v6018, 7
    %v6020 = vsub.s32 0, %v6019
    %v6021 = vrot.slane %v4627, %v6020
    %v6023 = vadd.f32 %v6015, %v6021
    %v6024 = vadd.f32 %v6016, %v6021
    %v6027 = vlaneseq
    %v6028 = vshrl.u32 %v6027, 7
    %v6029 = vsub.s32 0, %v6028
    %v6030 = vrot.slane %v4694, %v6029
    %v6031 = vlaneseq
    %v6032 = vshrl.u32 %v6031, 7
    %v6033 = vsub.s32 1, %v6032
    %v6034 = vrot.slane %v4694, %v6033
    %v6035 = vlaneseq
    %v6036 = vshrl.u32 %v6035, 7
    %v6037 = vsub.s32 2, %v6036
    %v6038 = vrot.slane %v4694, %v6037
    %v6039 = vlaneseq
    %v6040 = vshrl.u32 %v6039, 7
    %v6041 = vsub.s32 3, %v6040
    %v6042 = vrot.slane %v4694, %v6041
    %v6043 = vlaneseq
    %v6044 = vshrl.u32 %v6043, 7
    %v6045 = vsub.s32 4, %v6044
    %v6046 = vrot.slane %v4694, %v6045
    %v6047 = vlaneseq
    %v6048 = vshrl.u32 %v6047, 7
    %v6049 = vsub.s32 5, %v6048
    %v6050 = vrot.slane %v4694, %v6049
    %v6051 = vlaneseq
    %v6052 = vshrl.u32 %v6051, 7
    %v6053 = vsub.s32 6, %v6052
    %v6054 = vrot.slane %v4694, %v6053
    %v6055 = vlaneseq
    %v6056 = vshrl.u32 %v6055, 7
    %v6057 = vsub.s32 7, %v6056
    %v6058 = vrot.slane %v4694, %v6057
    %v6059 = vlaneseq
    %v6060 = vshrl.u32 %v6059, 7
    %v6061 = vsub.s32 0, %v6060
    %v6062 = vrot.slane %v4695, %v6061
    %v6063 = vlaneseq
    %v6064 = vshrl.u32 %v6063, 7
    %v6065 = vsub.s32 1, %v6064
    %v6066 = vrot.slane %v4695, %v6065
    %v6067 = vlaneseq
    %v6068 = vshrl.u32 %v6067, 7
    %v6069 = vsub.s32 2, %v6068
    %v6070 = vrot.slane %v4695, %v6069
    %v6071 = vlaneseq
    %v6072 = vshrl.u32 %v6071, 7
    %v6073 = vsub.s32 3, %v6072
    %v6074 = vrot.slane %v4695, %v6073
    %v6075 = vlaneseq
    %v6076 = vshrl.u32 %v6075, 7
    %v6077 = vsub.s32 4, %v6076
    %v6078 = vrot.slane %v4695, %v6077
    %v6079 = vlaneseq
    %v6080 = vshrl.u32 %v6079, 7
    %v6081 = vsub.s32 5, %v6080
    %v6082 = vrot.slane %v4695, %v6081
    %v6083 = vlaneseq
    %v6084 = vshrl.u32 %v6083, 7
    %v6085 = vsub.s32 6, %v6084
    %v6086 = vrot.slane %v4695, %v6085
    %v6087 = vlaneseq
    %v6088 = vshrl.u32 %v6087, 7
    %v6089 = vsub.s32 7, %v6088
    %v6090 = vrot.slane %v4695, %v6089
    %v6108 = vsel %vm1324, %v6023, 0
    %v6111 = vsel %vm1324, %v6024, 0
    %6113 = vmatprep.subr.mxu0 %v4630
    %6114 = vmatpush1.msra.mxu0 %v4629
    %6115 = vmatprep.subr.mxu0 %v4646
    %6116 = vmatpush1.msra.mxu0 %v4645
    %6117 = vmatprep.subr.mxu0 %v4662
    %6118 = vmatpush1.msra.mxu0 %v4661
    %6119 = vmatprep.subr.mxu0 %v4678
    %6120 = vmatpush1.msra.mxu0 %v4677
    %6121 = vmatprep.subr.mxu0 0.0
    %6122 = vmatpush1.msra.mxu0 0.0
    %6123 = vmatprep.subr.mxu0 0.0
    %6124 = vmatpush1.msra.mxu0 0.0
    %6125 = vmatprep.subr.mxu0 0.0
    %6126 = vmatpush1.msra.mxu0 0.0
    %6127 = vmatprep.subr.mxu0 0.0
    %6128 = vmatpush1.msra.mxu0 0.0
    %6129 = vmatprep.subr.mxu0 0.0
    %6130 = vmatpush1.msra.mxu0 0.0
    %6131 = vmatprep.subr.mxu0 0.0
    %6132 = vmatpush1.msra.mxu0 0.0
    %6133 = vmatprep.subr.mxu0 0.0
    %6134 = vmatpush1.msra.mxu0 0.0
    %6135 = vmatprep.subr.mxu0 0.0
    %6136 = vmatpush1.msra.mxu0 0.0
    %6137 = vmatprep.subr.mxu0 0.0
    %6138 = vmatpush1.msra.mxu0 0.0
    %6139 = vmatprep.subr.mxu0 0.0
    %6140 = vmatpush1.msra.mxu0 0.0
    %6141 = vmatprep.subr.mxu0 0.0
    %6142 = vmatpush1.msra.mxu0 0.0
    %6143 = vmatprep.subr.mxu0 0.0
    %6144 = vmatpush1.msra.mxu0 0.0
    %6145 = vmatprep.subr.mxu0 0.0
    %6146 = vmatpush1.msra.mxu0 0.0
    %6147 = vmatprep.subr.mxu0 0.0
    %6148 = vmatpush1.msra.mxu0 0.0
    %6149 = vmatprep.subr.mxu0 0.0
    %6150 = vmatpush1.msra.mxu0 0.0
    %6151 = vmatprep.subr.mxu0 0.0
    %6152 = vmatpush1.msra.mxu0 0.0
    %6153 = vmatprep.subr.mxu0 0.0
    %6154 = vmatpush1.msra.mxu0 0.0
    %6155 = vmatprep.subr.mxu0 0.0
    %6156 = vmatpush1.msra.mxu0 0.0
    %6157 = vmatprep.subr.mxu0 0.0
    %6158 = vmatpush1.msra.mxu0 0.0
    %6159 = vmatprep.subr.mxu0 0.0
    %6160 = vmatpush1.msra.mxu0 0.0
    %6161 = vmatprep.subr.mxu0 0.0
    %6162 = vmatpush1.msra.mxu0 0.0
    %6163 = vmatprep.subr.mxu0 0.0
    %6164 = vmatpush1.msra.mxu0 0.0
    %6165 = vmatprep.subr.mxu0 0.0
    %6166 = vmatpush1.msra.mxu0 0.0
    %6167 = vmatprep.subr.mxu0 0.0
    %6168 = vmatpush1.msra.mxu0 0.0
    %6169 = vmatprep.subr.mxu0 0.0
    %6170 = vmatpush1.msra.mxu0 0.0
    %6171 = vmatprep.subr.mxu0 0.0
    %6172 = vmatpush1.msra.mxu0 0.0
    %6173 = vmatprep.subr.mxu0 0.0
    %6174 = vmatpush1.msra.mxu0 0.0
    %6175 = vmatprep.subr.mxu0 0.0
    %6176 = vmatpush1.msra.mxu0 0.0
    %6177 = vmatprep.mubr.f32.mxu0 0.0
    %6178 = vmatmul.mubr.f32.gmra.mrb[0].mxu0 %v6108
    %v6179 = vpop.f32.mrb[0].mxu0
    %v6180 = vadd.f32 %v6030, %v6179
    %v6181 = vpop.f32.mrb[0].mxu0
    %v6182 = vadd.f32 %v6034, %v6181
    %6183 = vmatprep.mubr.f32.mxu0 0.0
    %6184 = vmatmul.mubr.f32.gmra.mrb[0].mxu0 %v6111
    %v6185 = vpop.f32.mrb[0].mxu0
    %v6186 = vadd.f32 %v6030, %v6185
    %v6187 = vpop.f32.mrb[0].mxu0
    %v6188 = vadd.f32 %v6034, %v6187
    %6189 = vdwg.mxu0
    %6190 = vmatprep.subr.mxu0 %v4632
    %6191 = vmatpush1.msra.mxu0 %v4631
    %6192 = vmatprep.subr.mxu0 %v4648
    %6193 = vmatpush1.msra.mxu0 %v4647
    %6194 = vmatprep.subr.mxu0 %v4664
    %6195 = vmatpush1.msra.mxu0 %v4663
    %6196 = vmatprep.subr.mxu0 %v4680
    %6197 = vmatpush1.msra.mxu0 %v4679
    %6198 = vmatprep.subr.mxu0 0.0
    %6199 = vmatpush1.msra.mxu0 0.0
    %6200 = vmatprep.subr.mxu0 0.0
    %6201 = vmatpush1.msra.mxu0 0.0
    %6202 = vmatprep.subr.mxu0 0.0
    %6203 = vmatpush1.msra.mxu0 0.0
    %6204 = vmatprep.subr.mxu0 0.0
    %6205 = vmatpush1.msra.mxu0 0.0
    %6206 = vmatprep.subr.mxu0 0.0
    %6207 = vmatpush1.msra.mxu0 0.0
    %6208 = vmatprep.subr.mxu0 0.0
    %6209 = vmatpush1.msra.mxu0 0.0
    %6210 = vmatprep.subr.mxu0 0.0
    %6211 = vmatpush1.msra.mxu0 0.0
    %6212 = vmatprep.subr.mxu0 0.0
    %6213 = vmatpush1.msra.mxu0 0.0
    %6214 = vmatprep.subr.mxu0 0.0
    %6215 = vmatpush1.msra.mxu0 0.0
    %6216 = vmatprep.subr.mxu0 0.0
    %6217 = vmatpush1.msra.mxu0 0.0
    %6218 = vmatprep.subr.mxu0 0.0
    %6219 = vmatpush1.msra.mxu0 0.0
    %6220 = vmatprep.subr.mxu0 0.0
    %6221 = vmatpush1.msra.mxu0 0.0
    %6222 = vmatprep.subr.mxu0 0.0
    %6223 = vmatpush1.msra.mxu0 0.0
    %6224 = vmatprep.subr.mxu0 0.0
    %6225 = vmatpush1.msra.mxu0 0.0
    %6226 = vmatprep.subr.mxu0 0.0
    %6227 = vmatpush1.msra.mxu0 0.0
    %6228 = vmatprep.subr.mxu0 0.0
    %6229 = vmatpush1.msra.mxu0 0.0
    %6230 = vmatprep.subr.mxu0 0.0
    %6231 = vmatpush1.msra.mxu0 0.0
    %6232 = vmatprep.subr.mxu0 0.0
    %6233 = vmatpush1.msra.mxu0 0.0
    %6234 = vmatprep.subr.mxu0 0.0
    %6235 = vmatpush1.msra.mxu0 0.0
    %6236 = vmatprep.subr.mxu0 0.0
    %6237 = vmatpush1.msra.mxu0 0.0
    %6238 = vmatprep.subr.mxu0 0.0
    %6239 = vmatpush1.msra.mxu0 0.0
    %6240 = vmatprep.subr.mxu0 0.0
    %6241 = vmatpush1.msra.mxu0 0.0
    %6242 = vmatprep.subr.mxu0 0.0
    %6243 = vmatpush1.msra.mxu0 0.0
    %6244 = vmatprep.subr.mxu0 0.0
    %6245 = vmatpush1.msra.mxu0 0.0
    %6246 = vmatprep.subr.mxu0 0.0
    %6247 = vmatpush1.msra.mxu0 0.0
    %6248 = vmatprep.subr.mxu0 0.0
    %6249 = vmatpush1.msra.mxu0 0.0
    %6250 = vmatprep.subr.mxu0 0.0
    %6251 = vmatpush1.msra.mxu0 0.0
    %6252 = vmatprep.subr.mxu0 0.0
    %6253 = vmatpush1.msra.mxu0 0.0
    %6254 = vmatprep.mubr.f32.mxu0 0.0
    %6255 = vmatmul.mubr.f32.gmra.mrb[0].mxu0 %v6108
    %v6256 = vpop.f32.mrb[0].mxu0
    %v6257 = vadd.f32 %v6038, %v6256
    %v6258 = vpop.f32.mrb[0].mxu0
    %v6259 = vadd.f32 %v6042, %v6258
    %6260 = vmatprep.mubr.f32.mxu0 0.0
    %6261 = vmatmul.mubr.f32.gmra.mrb[0].mxu0 %v6111
    %v6262 = vpop.f32.mrb[0].mxu0
    %v6263 = vadd.f32 %v6038, %v6262
    %v6264 = vpop.f32.mrb[0].mxu0
    %v6265 = vadd.f32 %v6042, %v6264
    %6266 = vdwg.mxu0
    %6267 = vmatprep.subr.mxu0 %v4634
    %6268 = vmatpush1.msra.mxu0 %v4633
    %6269 = vmatprep.subr.mxu0 %v4650
    %6270 = vmatpush1.msra.mxu0 %v4649
    %6271 = vmatprep.subr.mxu0 %v4666
    %6272 = vmatpush1.msra.mxu0 %v4665
    %6273 = vmatprep.subr.mxu0 %v4682
    %6274 = vmatpush1.msra.mxu0 %v4681
    %6275 = vmatprep.subr.mxu0 0.0
    %6276 = vmatpush1.msra.mxu0 0.0
    %6277 = vmatprep.subr.mxu0 0.0
    %6278 = vmatpush1.msra.mxu0 0.0
    %6279 = vmatprep.subr.mxu0 0.0
    %6280 = vmatpush1.msra.mxu0 0.0
    %6281 = vmatprep.subr.mxu0 0.0
    %6282 = vmatpush1.msra.mxu0 0.0
    %6283 = vmatprep.subr.mxu0 0.0
    %6284 = vmatpush1.msra.mxu0 0.0
    %6285 = vmatprep.subr.mxu0 0.0
    %6286 = vmatpush1.msra.mxu0 0.0
    %6287 = vmatprep.subr.mxu0 0.0
    %6288 = vmatpush1.msra.mxu0 0.0
    %6289 = vmatprep.subr.mxu0 0.0
    %6290 = vmatpush1.msra.mxu0 0.0
    %6291 = vmatprep.subr.mxu0 0.0
    %6292 = vmatpush1.msra.mxu0 0.0
    %6293 = vmatprep.subr.mxu0 0.0
    %6294 = vmatpush1.msra.mxu0 0.0
    %6295 = vmatprep.subr.mxu0 0.0
    %6296 = vmatpush1.msra.mxu0 0.0
    %6297 = vmatprep.subr.mxu0 0.0
    %6298 = vmatpush1.msra.mxu0 0.0
    %6299 = vmatprep.subr.mxu0 0.0
    %6300 = vmatpush1.msra.mxu0 0.0
    %6301 = vmatprep.subr.mxu0 0.0
    %6302 = vmatpush1.msra.mxu0 0.0
    %6303 = vmatprep.subr.mxu0 0.0
    %6304 = vmatpush1.msra.mxu0 0.0
    %6305 = vmatprep.subr.mxu0 0.0
    %6306 = vmatpush1.msra.mxu0 0.0
    %6307 = vmatprep.subr.mxu0 0.0
    %6308 = vmatpush1.msra.mxu0 0.0
    %6309 = vmatprep.subr.mxu0 0.0
    %6310 = vmatpush1.msra.mxu0 0.0
    %6311 = vmatprep.subr.mxu0 0.0
    %6312 = vmatpush1.msra.mxu0 0.0
    %6313 = vmatprep.subr.mxu0 0.0
    %6314 = vmatpush1.msra.mxu0 0.0
    %6315 = vmatprep.subr.mxu0 0.0
    %6316 = vmatpush1.msra.mxu0 0.0
    %6317 = vmatprep.subr.mxu0 0.0
    %6318 = vmatpush1.msra.mxu0 0.0
    %6319 = vmatprep.subr.mxu0 0.0
    %6320 = vmatpush1.msra.mxu0 0.0
    %6321 = vmatprep.subr.mxu0 0.0
    %6322 = vmatpush1.msra.mxu0 0.0
    %6323 = vmatprep.subr.mxu0 0.0
    %6324 = vmatpush1.msra.mxu0 0.0
    %6325 = vmatprep.subr.mxu0 0.0
    %6326 = vmatpush1.msra.mxu0 0.0
    %6327 = vmatprep.subr.mxu0 0.0
    %6328 = vmatpush1.msra.mxu0 0.0
    %6329 = vmatprep.subr.mxu0 0.0
    %6330 = vmatpush1.msra.mxu0 0.0
    %6331 = vmatprep.mubr.f32.mxu0 0.0
    %6332 = vmatmul.mubr.f32.gmra.mrb[0].mxu0 %v6108
    %v6333 = vpop.f32.mrb[0].mxu0
    %v6334 = vadd.f32 %v6046, %v6333
    %v6335 = vpop.f32.mrb[0].mxu0
    %v6336 = vadd.f32 %v6050, %v6335
    %6337 = vmatprep.mubr.f32.mxu0 0.0
    %6338 = vmatmul.mubr.f32.gmra.mrb[0].mxu0 %v6111
    %v6339 = vpop.f32.mrb[0].mxu0
    %v6340 = vadd.f32 %v6046, %v6339
    %v6341 = vpop.f32.mrb[0].mxu0
    %v6342 = vadd.f32 %v6050, %v6341
    %6343 = vdwg.mxu0
    %6344 = vmatprep.subr.mxu0 %v4636
    %6345 = vmatpush1.msra.mxu0 %v4635
    %6346 = vmatprep.subr.mxu0 %v4652
    %6347 = vmatpush1.msra.mxu0 %v4651
    %6348 = vmatprep.subr.mxu0 %v4668
    %6349 = vmatpush1.msra.mxu0 %v4667
    %6350 = vmatprep.subr.mxu0 %v4684
    %6351 = vmatpush1.msra.mxu0 %v4683
    %6352 = vmatprep.subr.mxu0 0.0
    %6353 = vmatpush1.msra.mxu0 0.0
    %6354 = vmatprep.subr.mxu0 0.0
    %6355 = vmatpush1.msra.mxu0 0.0
    %6356 = vmatprep.subr.mxu0 0.0
    %6357 = vmatpush1.msra.mxu0 0.0
    %6358 = vmatprep.subr.mxu0 0.0
    %6359 = vmatpush1.msra.mxu0 0.0
    %6360 = vmatprep.subr.mxu0 0.0
    %6361 = vmatpush1.msra.mxu0 0.0
    %6362 = vmatprep.subr.mxu0 0.0
    %6363 = vmatpush1.msra.mxu0 0.0
    %6364 = vmatprep.subr.mxu0 0.0
    %6365 = vmatpush1.msra.mxu0 0.0
    %6366 = vmatprep.subr.mxu0 0.0
    %6367 = vmatpush1.msra.mxu0 0.0
    %6368 = vmatprep.subr.mxu0 0.0
    %6369 = vmatpush1.msra.mxu0 0.0
    %6370 = vmatprep.subr.mxu0 0.0
    %6371 = vmatpush1.msra.mxu0 0.0
    %6372 = vmatprep.subr.mxu0 0.0
    %6373 = vmatpush1.msra.mxu0 0.0
    %6374 = vmatprep.subr.mxu0 0.0
    %6375 = vmatpush1.msra.mxu0 0.0
    %6376 = vmatprep.subr.mxu0 0.0
    %6377 = vmatpush1.msra.mxu0 0.0
    %6378 = vmatprep.subr.mxu0 0.0
    %6379 = vmatpush1.msra.mxu0 0.0
    %6380 = vmatprep.subr.mxu0 0.0
    %6381 = vmatpush1.msra.mxu0 0.0
    %6382 = vmatprep.subr.mxu0 0.0
    %6383 = vmatpush1.msra.mxu0 0.0
    %6384 = vmatprep.subr.mxu0 0.0
    %6385 = vmatpush1.msra.mxu0 0.0
    %6386 = vmatprep.subr.mxu0 0.0
    %6387 = vmatpush1.msra.mxu0 0.0
    %6388 = vmatprep.subr.mxu0 0.0
    %6389 = vmatpush1.msra.mxu0 0.0
    %6390 = vmatprep.subr.mxu0 0.0
    %6391 = vmatpush1.msra.mxu0 0.0
    %6392 = vmatprep.subr.mxu0 0.0
    %6393 = vmatpush1.msra.mxu0 0.0
    %6394 = vmatprep.subr.mxu0 0.0
    %6395 = vmatpush1.msra.mxu0 0.0
    %6396 = vmatprep.subr.mxu0 0.0
    %6397 = vmatpush1.msra.mxu0 0.0
    %6398 = vmatprep.subr.mxu0 0.0
    %6399 = vmatpush1.msra.mxu0 0.0
    %6400 = vmatprep.subr.mxu0 0.0
    %6401 = vmatpush1.msra.mxu0 0.0
    %6402 = vmatprep.subr.mxu0 0.0
    %6403 = vmatpush1.msra.mxu0 0.0
    %6404 = vmatprep.subr.mxu0 0.0
    %6405 = vmatpush1.msra.mxu0 0.0
    %6406 = vmatprep.subr.mxu0 0.0
    %6407 = vmatpush1.msra.mxu0 0.0
    %6408 = vmatprep.mubr.f32.mxu0 0.0
    %6409 = vmatmul.mubr.f32.gmra.mrb[0].mxu0 %v6108
    %v6410 = vpop.f32.mrb[0].mxu0
    %v6411 = vadd.f32 %v6054, %v6410
    %v6412 = vpop.f32.mrb[0].mxu0
    %v6413 = vadd.f32 %v6058, %v6412
    %6414 = vmatprep.mubr.f32.mxu0 0.0
    %6415 = vmatmul.mubr.f32.gmra.mrb[0].mxu0 %v6111
    %v6416 = vpop.f32.mrb[0].mxu0
    %v6417 = vadd.f32 %v6054, %v6416
    %v6418 = vpop.f32.mrb[0].mxu0
    %v6419 = vadd.f32 %v6058, %v6418
    %6420 = vdwg.mxu0
    %6421 = vmatprep.subr.mxu0 %v4638
    %6422 = vmatpush1.msra.mxu0 %v4637
    %6423 = vmatprep.subr.mxu0 %v4654
    %6424 = vmatpush1.msra.mxu0 %v4653
    %6425 = vmatprep.subr.mxu0 %v4670
    %6426 = vmatpush1.msra.mxu0 %v4669
    %6427 = vmatprep.subr.mxu0 %v4686
    %6428 = vmatpush1.msra.mxu0 %v4685
    %6429 = vmatprep.subr.mxu0 0.0
    %6430 = vmatpush1.msra.mxu0 0.0
    %6431 = vmatprep.subr.mxu0 0.0
    %6432 = vmatpush1.msra.mxu0 0.0
    %6433 = vmatprep.subr.mxu0 0.0
    %6434 = vmatpush1.msra.mxu0 0.0
    %6435 = vmatprep.subr.mxu0 0.0
    %6436 = vmatpush1.msra.mxu0 0.0
    %6437 = vmatprep.subr.mxu0 0.0
    %6438 = vmatpush1.msra.mxu0 0.0
    %6439 = vmatprep.subr.mxu0 0.0
    %6440 = vmatpush1.msra.mxu0 0.0
    %6441 = vmatprep.subr.mxu0 0.0
    %6442 = vmatpush1.msra.mxu0 0.0
    %6443 = vmatprep.subr.mxu0 0.0
    %6444 = vmatpush1.msra.mxu0 0.0
    %6445 = vmatprep.subr.mxu0 0.0
    %6446 = vmatpush1.msra.mxu0 0.0
    %6447 = vmatprep.subr.mxu0 0.0
    %6448 = vmatpush1.msra.mxu0 0.0
    %6449 = vmatprep.subr.mxu0 0.0
    %6450 = vmatpush1.msra.mxu0 0.0
    %6451 = vmatprep.subr.mxu0 0.0
    %6452 = vmatpush1.msra.mxu0 0.0
    %6453 = vmatprep.subr.mxu0 0.0
    %6454 = vmatpush1.msra.mxu0 0.0
    %6455 = vmatprep.subr.mxu0 0.0
    %6456 = vmatpush1.msra.mxu0 0.0
    %6457 = vmatprep.subr.mxu0 0.0
    %6458 = vmatpush1.msra.mxu0 0.0
    %6459 = vmatprep.subr.mxu0 0.0
    %6460 = vmatpush1.msra.mxu0 0.0
    %6461 = vmatprep.subr.mxu0 0.0
    %6462 = vmatpush1.msra.mxu0 0.0
    %6463 = vmatprep.subr.mxu0 0.0
    %6464 = vmatpush1.msra.mxu0 0.0
    %6465 = vmatprep.subr.mxu0 0.0
    %6466 = vmatpush1.msra.mxu0 0.0
    %6467 = vmatprep.subr.mxu0 0.0
    %6468 = vmatpush1.msra.mxu0 0.0
    %6469 = vmatprep.subr.mxu0 0.0
    %6470 = vmatpush1.msra.mxu0 0.0
    %6471 = vmatprep.subr.mxu0 0.0
    %6472 = vmatpush1.msra.mxu0 0.0
    %6473 = vmatprep.subr.mxu0 0.0
    %6474 = vmatpush1.msra.mxu0 0.0
    %6475 = vmatprep.subr.mxu0 0.0
    %6476 = vmatpush1.msra.mxu0 0.0
    %6477 = vmatprep.subr.mxu0 0.0
    %6478 = vmatpush1.msra.mxu0 0.0
    %6479 = vmatprep.subr.mxu0 0.0
    %6480 = vmatpush1.msra.mxu0 0.0
    %6481 = vmatprep.subr.mxu0 0.0
    %6482 = vmatpush1.msra.mxu0 0.0
    %6483 = vmatprep.subr.mxu0 0.0
    %6484 = vmatpush1.msra.mxu0 0.0
    %6485 = vmatprep.mubr.f32.mxu0 0.0
    %6486 = vmatmul.mubr.f32.gmra.mrb[0].mxu0 %v6108
    %v6487 = vpop.f32.mrb[0].mxu0
    %v6488 = vadd.f32 %v6062, %v6487
    %v6489 = vpop.f32.mrb[0].mxu0
    %v6490 = vadd.f32 %v6066, %v6489
    %6491 = vmatprep.mubr.f32.mxu0 0.0
    %6492 = vmatmul.mubr.f32.gmra.mrb[0].mxu0 %v6111
    %v6493 = vpop.f32.mrb[0].mxu0
    %v6494 = vadd.f32 %v6062, %v6493
    %v6495 = vpop.f32.mrb[0].mxu0
    %v6496 = vadd.f32 %v6066, %v6495
    %6497 = vdwg.mxu0
    %6498 = vmatprep.subr.mxu0 %v4640
    %6499 = vmatpush1.msra.mxu0 %v4639
    %6500 = vmatprep.subr.mxu0 %v4656
    %6501 = vmatpush1.msra.mxu0 %v4655
    %6502 = vmatprep.subr.mxu0 %v4672
    %6503 = vmatpush1.msra.mxu0 %v4671
    %6504 = vmatprep.subr.mxu0 %v4688
    %6505 = vmatpush1.msra.mxu0 %v4687
    %6506 = vmatprep.subr.mxu0 0.0
    %6507 = vmatpush1.msra.mxu0 0.0
    %6508 = vmatprep.subr.mxu0 0.0
    %6509 = vmatpush1.msra.mxu0 0.0
    %6510 = vmatprep.subr.mxu0 0.0
    %6511 = vmatpush1.msra.mxu0 0.0
    %6512 = vmatprep.subr.mxu0 0.0
    %6513 = vmatpush1.msra.mxu0 0.0
    %6514 = vmatprep.subr.mxu0 0.0
    %6515 = vmatpush1.msra.mxu0 0.0
    %6516 = vmatprep.subr.mxu0 0.0
    %6517 = vmatpush1.msra.mxu0 0.0
    %6518 = vmatprep.subr.mxu0 0.0
    %6519 = vmatpush1.msra.mxu0 0.0
    %6520 = vmatprep.subr.mxu0 0.0
    %6521 = vmatpush1.msra.mxu0 0.0
    %6522 = vmatprep.subr.mxu0 0.0
    %6523 = vmatpush1.msra.mxu0 0.0
    %6524 = vmatprep.subr.mxu0 0.0
    %6525 = vmatpush1.msra.mxu0 0.0
    %6526 = vmatprep.subr.mxu0 0.0
    %6527 = vmatpush1.msra.mxu0 0.0
    %6528 = vmatprep.subr.mxu0 0.0
    %6529 = vmatpush1.msra.mxu0 0.0
    %6530 = vmatprep.subr.mxu0 0.0
    %6531 = vmatpush1.msra.mxu0 0.0
    %6532 = vmatprep.subr.mxu0 0.0
    %6533 = vmatpush1.msra.mxu0 0.0
    %6534 = vmatprep.subr.mxu0 0.0
    %6535 = vmatpush1.msra.mxu0 0.0
    %6536 = vmatprep.subr.mxu0 0.0
    %6537 = vmatpush1.msra.mxu0 0.0
    %6538 = vmatprep.subr.mxu0 0.0
    %6539 = vmatpush1.msra.mxu0 0.0
    %6540 = vmatprep.subr.mxu0 0.0
    %6541 = vmatpush1.msra.mxu0 0.0
    %6542 = vmatprep.subr.mxu0 0.0
    %6543 = vmatpush1.msra.mxu0 0.0
    %6544 = vmatprep.subr.mxu0 0.0
    %6545 = vmatpush1.msra.mxu0 0.0
    %6546 = vmatprep.subr.mxu0 0.0
    %6547 = vmatpush1.msra.mxu0 0.0
    %6548 = vmatprep.subr.mxu0 0.0
    %6549 = vmatpush1.msra.mxu0 0.0
    %6550 = vmatprep.subr.mxu0 0.0
    %6551 = vmatpush1.msra.mxu0 0.0
    %6552 = vmatprep.subr.mxu0 0.0
    %6553 = vmatpush1.msra.mxu0 0.0
    %6554 = vmatprep.subr.mxu0 0.0
    %6555 = vmatpush1.msra.mxu0 0.0
    %6556 = vmatprep.subr.mxu0 0.0
    %6557 = vmatpush1.msra.mxu0 0.0
    %6558 = vmatprep.subr.mxu0 0.0
    %6559 = vmatpush1.msra.mxu0 0.0
    %6560 = vmatprep.subr.mxu0 0.0
    %6561 = vmatpush1.msra.mxu0 0.0
    %6562 = vmatprep.mubr.f32.mxu0 0.0
    %6563 = vmatmul.mubr.f32.gmra.mrb[0].mxu0 %v6108
    %v6564 = vpop.f32.mrb[0].mxu0
    %v6565 = vadd.f32 %v6070, %v6564
    %v6566 = vpop.f32.mrb[0].mxu0
    %v6567 = vadd.f32 %v6074, %v6566
    %6568 = vmatprep.mubr.f32.mxu0 0.0
    %6569 = vmatmul.mubr.f32.gmra.mrb[0].mxu0 %v6111
    %v6570 = vpop.f32.mrb[0].mxu0
    %v6571 = vadd.f32 %v6070, %v6570
    %v6572 = vpop.f32.mrb[0].mxu0
    %v6573 = vadd.f32 %v6074, %v6572
    %6574 = vdwg.mxu0
    %6575 = vmatprep.subr.mxu0 %v4642
    %6576 = vmatpush1.msra.mxu0 %v4641
    %6577 = vmatprep.subr.mxu0 %v4658
    %6578 = vmatpush1.msra.mxu0 %v4657
    %6579 = vmatprep.subr.mxu0 %v4674
    %6580 = vmatpush1.msra.mxu0 %v4673
    %6581 = vmatprep.subr.mxu0 %v4690
    %6582 = vmatpush1.msra.mxu0 %v4689
    %6583 = vmatprep.subr.mxu0 0.0
    %6584 = vmatpush1.msra.mxu0 0.0
    %6585 = vmatprep.subr.mxu0 0.0
    %6586 = vmatpush1.msra.mxu0 0.0
    %6587 = vmatprep.subr.mxu0 0.0
    %6588 = vmatpush1.msra.mxu0 0.0
    %6589 = vmatprep.subr.mxu0 0.0
    %6590 = vmatpush1.msra.mxu0 0.0
    %6591 = vmatprep.subr.mxu0 0.0
    %6592 = vmatpush1.msra.mxu0 0.0
    %6593 = vmatprep.subr.mxu0 0.0
    %6594 = vmatpush1.msra.mxu0 0.0
    %6595 = vmatprep.subr.mxu0 0.0
    %6596 = vmatpush1.msra.mxu0 0.0
    %6597 = vmatprep.subr.mxu0 0.0
    %6598 = vmatpush1.msra.mxu0 0.0
    %6599 = vmatprep.subr.mxu0 0.0
    %6600 = vmatpush1.msra.mxu0 0.0
    %6601 = vmatprep.subr.mxu0 0.0
    %6602 = vmatpush1.msra.mxu0 0.0
    %6603 = vmatprep.subr.mxu0 0.0
    %6604 = vmatpush1.msra.mxu0 0.0
    %6605 = vmatprep.subr.mxu0 0.0
    %6606 = vmatpush1.msra.mxu0 0.0
    %6607 = vmatprep.subr.mxu0 0.0
    %6608 = vmatpush1.msra.mxu0 0.0
    %6609 = vmatprep.subr.mxu0 0.0
    %6610 = vmatpush1.msra.mxu0 0.0
    %6611 = vmatprep.subr.mxu0 0.0
    %6612 = vmatpush1.msra.mxu0 0.0
    %6613 = vmatprep.subr.mxu0 0.0
    %6614 = vmatpush1.msra.mxu0 0.0
    %6615 = vmatprep.subr.mxu0 0.0
    %6616 = vmatpush1.msra.mxu0 0.0
    %6617 = vmatprep.subr.mxu0 0.0
    %6618 = vmatpush1.msra.mxu0 0.0
    %6619 = vmatprep.subr.mxu0 0.0
    %6620 = vmatpush1.msra.mxu0 0.0
    %6621 = vmatprep.subr.mxu0 0.0
    %6622 = vmatpush1.msra.mxu0 0.0
    %6623 = vmatprep.subr.mxu0 0.0
    %6624 = vmatpush1.msra.mxu0 0.0
    %6625 = vmatprep.subr.mxu0 0.0
    %6626 = vmatpush1.msra.mxu0 0.0
    %6627 = vmatprep.subr.mxu0 0.0
    %6628 = vmatpush1.msra.mxu0 0.0
    %6629 = vmatprep.subr.mxu0 0.0
    %6630 = vmatpush1.msra.mxu0 0.0
    %6631 = vmatprep.subr.mxu0 0.0
    %6632 = vmatpush1.msra.mxu0 0.0
    %6633 = vmatprep.subr.mxu0 0.0
    %6634 = vmatpush1.msra.mxu0 0.0
    %6635 = vmatprep.subr.mxu0 0.0
    %6636 = vmatpush1.msra.mxu0 0.0
    %6637 = vmatprep.subr.mxu0 0.0
    %6638 = vmatpush1.msra.mxu0 0.0
    %6639 = vmatprep.mubr.f32.mxu0 0.0
    %6640 = vmatmul.mubr.f32.gmra.mrb[0].mxu0 %v6108
    %v6641 = vpop.f32.mrb[0].mxu0
    %v6642 = vadd.f32 %v6078, %v6641
    %v6643 = vpop.f32.mrb[0].mxu0
    %v6644 = vadd.f32 %v6082, %v6643
    %6645 = vmatprep.mubr.f32.mxu0 0.0
    %6646 = vmatmul.mubr.f32.gmra.mrb[0].mxu0 %v6111
    %v6647 = vpop.f32.mrb[0].mxu0
    %v6648 = vadd.f32 %v6078, %v6647
    %v6649 = vpop.f32.mrb[0].mxu0
    %v6650 = vadd.f32 %v6082, %v6649
    %6651 = vdwg.mxu0
    %6652 = vmatprep.subr.mxu0 %v4644
    %6653 = vmatpush1.msra.mxu0 %v4643
    %6654 = vmatprep.subr.mxu0 %v4660
    %6655 = vmatpush1.msra.mxu0 %v4659
    %6656 = vmatprep.subr.mxu0 %v4676
    %6657 = vmatpush1.msra.mxu0 %v4675
    %6658 = vmatprep.subr.mxu0 %v4692
    %6659 = vmatpush1.msra.mxu0 %v4691
    %6660 = vmatprep.subr.mxu0 0.0
    %6661 = vmatpush1.msra.mxu0 0.0
    %6662 = vmatprep.subr.mxu0 0.0
    %6663 = vmatpush1.msra.mxu0 0.0
    %6664 = vmatprep.subr.mxu0 0.0
    %6665 = vmatpush1.msra.mxu0 0.0
    %6666 = vmatprep.subr.mxu0 0.0
    %6667 = vmatpush1.msra.mxu0 0.0
    %6668 = vmatprep.subr.mxu0 0.0
    %6669 = vmatpush1.msra.mxu0 0.0
    %6670 = vmatprep.subr.mxu0 0.0
    %6671 = vmatpush1.msra.mxu0 0.0
    %6672 = vmatprep.subr.mxu0 0.0
    %6673 = vmatpush1.msra.mxu0 0.0
    %6674 = vmatprep.subr.mxu0 0.0
    %6675 = vmatpush1.msra.mxu0 0.0
    %6676 = vmatprep.subr.mxu0 0.0
    %6677 = vmatpush1.msra.mxu0 0.0
    %6678 = vmatprep.subr.mxu0 0.0
    %6679 = vmatpush1.msra.mxu0 0.0
    %6680 = vmatprep.subr.mxu0 0.0
    %6681 = vmatpush1.msra.mxu0 0.0
    %6682 = vmatprep.subr.mxu0 0.0
    %6683 = vmatpush1.msra.mxu0 0.0
    %6684 = vmatprep.subr.mxu0 0.0
    %6685 = vmatpush1.msra.mxu0 0.0
    %6686 = vmatprep.subr.mxu0 0.0
    %6687 = vmatpush1.msra.mxu0 0.0
    %6688 = vmatprep.subr.mxu0 0.0
    %6689 = vmatpush1.msra.mxu0 0.0
    %6690 = vmatprep.subr.mxu0 0.0
    %6691 = vmatpush1.msra.mxu0 0.0
    %6692 = vmatprep.subr.mxu0 0.0
    %6693 = vmatpush1.msra.mxu0 0.0
    %6694 = vmatprep.subr.mxu0 0.0
    %6695 = vmatpush1.msra.mxu0 0.0
    %6696 = vmatprep.subr.mxu0 0.0
    %6697 = vmatpush1.msra.mxu0 0.0
    %6698 = vmatprep.subr.mxu0 0.0
    %6699 = vmatpush1.msra.mxu0 0.0
    %6700 = vmatprep.subr.mxu0 0.0
    %6701 = vmatpush1.msra.mxu0 0.0
    %6702 = vmatprep.subr.mxu0 0.0
    %6703 = vmatpush1.msra.mxu0 0.0
    %6704 = vmatprep.subr.mxu0 0.0
    %6705 = vmatpush1.msra.mxu0 0.0
    %6706 = vmatprep.subr.mxu0 0.0
    %6707 = vmatpush1.msra.mxu0 0.0
    %6708 = vmatprep.subr.mxu0 0.0
    %6709 = vmatpush1.msra.mxu0 0.0
    %6710 = vmatprep.subr.mxu0 0.0
    %6711 = vmatpush1.msra.mxu0 0.0
    %6712 = vmatprep.subr.mxu0 0.0
    %6713 = vmatpush1.msra.mxu0 0.0
    %6714 = vmatprep.subr.mxu0 0.0
    %6715 = vmatpush1.msra.mxu0 0.0
    %6716 = vmatprep.mubr.f32.mxu0 0.0
    %6717 = vmatmul.mubr.f32.gmra.mrb[0].mxu0 %v6108
    %v6718 = vpop.f32.mrb[0].mxu0
    %v6719 = vadd.f32 %v6086, %v6718
    %v6720 = vpop.f32.mrb[0].mxu0
    %v6721 = vadd.f32 %v6090, %v6720
    %6722 = vmatprep.mubr.f32.mxu0 0.0
    %6723 = vmatmul.mubr.f32.gmra.mrb[0].mxu0 %v6111
    %v6724 = vpop.f32.mrb[0].mxu0
    %v6725 = vadd.f32 %v6086, %v6724
    %v6726 = vpop.f32.mrb[0].mxu0
    %v6727 = vadd.f32 %v6090, %v6726
    %6728 = vdwg.mxu0
    %v6729 = vmul.f32 %v6180, 0.5
    %v6730 = vmul.f32 %v6182, 0.5
    %v6731 = vmul.f32 %v6257, 0.5
    %v6732 = vmul.f32 %v6259, 0.5
    %v6733 = vmul.f32 %v6334, 0.5
    %v6734 = vmul.f32 %v6336, 0.5
    %v6735 = vmul.f32 %v6411, 0.5
    %v6736 = vmul.f32 %v6413, 0.5
    %v6737 = vmul.f32 %v6488, 0.5
    %v6738 = vmul.f32 %v6490, 0.5
    %v6739 = vmul.f32 %v6565, 0.5
    %v6740 = vmul.f32 %v6567, 0.5
    %v6741 = vmul.f32 %v6642, 0.5
    %v6742 = vmul.f32 %v6644, 0.5
    %v6743 = vmul.f32 %v6719, 0.5
    %v6744 = vmul.f32 %v6721, 0.5
    %v6745 = vmul.f32 %v6186, 0.5
    %v6746 = vmul.f32 %v6188, 0.5
    %v6747 = vmul.f32 %v6263, 0.5
    %v6748 = vmul.f32 %v6265, 0.5
    %v6749 = vmul.f32 %v6340, 0.5
    %v6750 = vmul.f32 %v6342, 0.5
    %v6751 = vmul.f32 %v6417, 0.5
    %v6752 = vmul.f32 %v6419, 0.5
    %v6753 = vmul.f32 %v6494, 0.5
    %v6754 = vmul.f32 %v6496, 0.5
    %v6755 = vmul.f32 %v6571, 0.5
    %v6756 = vmul.f32 %v6573, 0.5
    %v6757 = vmul.f32 %v6648, 0.5
    %v6758 = vmul.f32 %v6650, 0.5
    %v6759 = vmul.f32 %v6725, 0.5
    %v6760 = vmul.f32 %v6727, 0.5
    %v6761 = vmul.f32 %v6180, 0.70710677
    %v6762 = vmul.f32 %v6182, 0.70710677
    %v6763 = vmul.f32 %v6257, 0.70710677
    %v6764 = vmul.f32 %v6259, 0.70710677
    %v6765 = vmul.f32 %v6334, 0.70710677
    %v6766 = vmul.f32 %v6336, 0.70710677
    %v6767 = vmul.f32 %v6411, 0.70710677
    %v6768 = vmul.f32 %v6413, 0.70710677
    %v6769 = vmul.f32 %v6488, 0.70710677
    %v6770 = vmul.f32 %v6490, 0.70710677
    %v6771 = vmul.f32 %v6565, 0.70710677
    %v6772 = vmul.f32 %v6567, 0.70710677
    %v6773 = vmul.f32 %v6642, 0.70710677
    %v6774 = vmul.f32 %v6644, 0.70710677
    %v6775 = vmul.f32 %v6719, 0.70710677
    %v6776 = vmul.f32 %v6721, 0.70710677
    %v6777 = vmul.f32 %v6186, 0.70710677
    %v6778 = vmul.f32 %v6188, 0.70710677
    %v6779 = vmul.f32 %v6263, 0.70710677
    %v6780 = vmul.f32 %v6265, 0.70710677
    %v6781 = vmul.f32 %v6340, 0.70710677
    %v6782 = vmul.f32 %v6342, 0.70710677
    %v6783 = vmul.f32 %v6417, 0.70710677
    %v6784 = vmul.f32 %v6419, 0.70710677
    %v6785 = vmul.f32 %v6494, 0.70710677
    %v6786 = vmul.f32 %v6496, 0.70710677
    %v6787 = vmul.f32 %v6571, 0.70710677
    %v6788 = vmul.f32 %v6573, 0.70710677
    %v6789 = vmul.f32 %v6648, 0.70710677
    %v6790 = vmul.f32 %v6650, 0.70710677
    %v6791 = vmul.f32 %v6725, 0.70710677
    %v6792 = vmul.f32 %v6727, 0.70710677
    %vm6793 = vcmp.ge.f32.partialorder %v6761, 0.0
    %vm6794 = vcmp.ge.f32.partialorder %v6762, 0.0
    %vm6795 = vcmp.ge.f32.partialorder %v6763, 0.0
    %vm6796 = vcmp.ge.f32.partialorder %v6764, 0.0
    %vm6797 = vcmp.ge.f32.partialorder %v6765, 0.0
    %vm6798 = vcmp.ge.f32.partialorder %v6766, 0.0
    %vm6799 = vcmp.ge.f32.partialorder %v6767, 0.0
    %vm6800 = vcmp.ge.f32.partialorder %v6768, 0.0
    %vm6801 = vcmp.ge.f32.partialorder %v6769, 0.0
    %vm6802 = vcmp.ge.f32.partialorder %v6770, 0.0
    %vm6803 = vcmp.ge.f32.partialorder %v6771, 0.0
    %vm6804 = vcmp.ge.f32.partialorder %v6772, 0.0
    %vm6805 = vcmp.ge.f32.partialorder %v6773, 0.0
    %vm6806 = vcmp.ge.f32.partialorder %v6774, 0.0
    %vm6807 = vcmp.ge.f32.partialorder %v6775, 0.0
    %vm6808 = vcmp.ge.f32.partialorder %v6776, 0.0
    %vm6809 = vcmp.ge.f32.partialorder %v6777, 0.0
    %vm6810 = vcmp.ge.f32.partialorder %v6778, 0.0
    %vm6811 = vcmp.ge.f32.partialorder %v6779, 0.0
    %vm6812 = vcmp.ge.f32.partialorder %v6780, 0.0
    %vm6813 = vcmp.ge.f32.partialorder %v6781, 0.0
    %vm6814 = vcmp.ge.f32.partialorder %v6782, 0.0
    %vm6815 = vcmp.ge.f32.partialorder %v6783, 0.0
    %vm6816 = vcmp.ge.f32.partialorder %v6784, 0.0
    %vm6817 = vcmp.ge.f32.partialorder %v6785, 0.0
    %vm6818 = vcmp.ge.f32.partialorder %v6786, 0.0
    %vm6819 = vcmp.ge.f32.partialorder %v6787, 0.0
    %vm6820 = vcmp.ge.f32.partialorder %v6788, 0.0
    %vm6821 = vcmp.ge.f32.partialorder %v6789, 0.0
    %vm6822 = vcmp.ge.f32.partialorder %v6790, 0.0
    %vm6823 = vcmp.ge.f32.partialorder %v6791, 0.0
    %vm6824 = vcmp.ge.f32.partialorder %v6792, 0.0
    %v6825 = vsel %vm6793, 1.0, -1.0
    %v6826 = vsel %vm6794, 1.0, -1.0
    %v6827 = vsel %vm6795, 1.0, -1.0
    %v6828 = vsel %vm6796, 1.0, -1.0
    %v6829 = vsel %vm6797, 1.0, -1.0
    %v6830 = vsel %vm6798, 1.0, -1.0
    %v6831 = vsel %vm6799, 1.0, -1.0
    %v6832 = vsel %vm6800, 1.0, -1.0
    %v6833 = vsel %vm6801, 1.0, -1.0
    %v6834 = vsel %vm6802, 1.0, -1.0
    %v6835 = vsel %vm6803, 1.0, -1.0
    %v6836 = vsel %vm6804, 1.0, -1.0
    %v6837 = vsel %vm6805, 1.0, -1.0
    %v6838 = vsel %vm6806, 1.0, -1.0
    %v6839 = vsel %vm6807, 1.0, -1.0
    %v6840 = vsel %vm6808, 1.0, -1.0
    %v6841 = vsel %vm6809, 1.0, -1.0
    %v6842 = vsel %vm6810, 1.0, -1.0
    %v6843 = vsel %vm6811, 1.0, -1.0
    %v6844 = vsel %vm6812, 1.0, -1.0
    %v6845 = vsel %vm6813, 1.0, -1.0
    %v6846 = vsel %vm6814, 1.0, -1.0
    %v6847 = vsel %vm6815, 1.0, -1.0
    %v6848 = vsel %vm6816, 1.0, -1.0
    %v6849 = vsel %vm6817, 1.0, -1.0
    %v6850 = vsel %vm6818, 1.0, -1.0
    %v6851 = vsel %vm6819, 1.0, -1.0
    %v6852 = vsel %vm6820, 1.0, -1.0
    %v6853 = vsel %vm6821, 1.0, -1.0
    %v6854 = vsel %vm6822, 1.0, -1.0
    %v6855 = vsel %vm6823, 1.0, -1.0
    %v6856 = vsel %vm6824, 1.0, -1.0
    %v6857 = vand.u32 2147483647, %v6761
    %v6858 = vand.u32 2147483647, %v6762
    %v6859 = vand.u32 2147483647, %v6763
    %v6860 = vand.u32 2147483647, %v6764
    %v6861 = vand.u32 2147483647, %v6765
    %v6862 = vand.u32 2147483647, %v6766
    %v6863 = vand.u32 2147483647, %v6767
    %v6864 = vand.u32 2147483647, %v6768
    %v6865 = vand.u32 2147483647, %v6769
    %v6866 = vand.u32 2147483647, %v6770
    %v6867 = vand.u32 2147483647, %v6771
    %v6868 = vand.u32 2147483647, %v6772
    %v6869 = vand.u32 2147483647, %v6773
    %v6870 = vand.u32 2147483647, %v6774
    %v6871 = vand.u32 2147483647, %v6775
    %v6872 = vand.u32 2147483647, %v6776
    %v6873 = vand.u32 2147483647, %v6777
    %v6874 = vand.u32 2147483647, %v6778
    %v6875 = vand.u32 2147483647, %v6779
    %v6876 = vand.u32 2147483647, %v6780
    %v6877 = vand.u32 2147483647, %v6781
    %v6878 = vand.u32 2147483647, %v6782
    %v6879 = vand.u32 2147483647, %v6783
    %v6880 = vand.u32 2147483647, %v6784
    %v6881 = vand.u32 2147483647, %v6785
    %v6882 = vand.u32 2147483647, %v6786
    %v6883 = vand.u32 2147483647, %v6787
    %v6884 = vand.u32 2147483647, %v6788
    %v6885 = vand.u32 2147483647, %v6789
    %v6886 = vand.u32 2147483647, %v6790
    %v6887 = vand.u32 2147483647, %v6791
    %v6888 = vand.u32 2147483647, %v6792
    %v6889 = vmul.f32 %v6857, 0.3275911
    %v6890 = vmul.f32 %v6858, 0.3275911
    %v6891 = vmul.f32 %v6859, 0.3275911
    %v6892 = vmul.f32 %v6860, 0.3275911
    %v6893 = vmul.f32 %v6861, 0.3275911
    %v6894 = vmul.f32 %v6862, 0.3275911
    %v6895 = vmul.f32 %v6863, 0.3275911
    %v6896 = vmul.f32 %v6864, 0.3275911
    %v6897 = vmul.f32 %v6865, 0.3275911
    %v6898 = vmul.f32 %v6866, 0.3275911
    %v6899 = vmul.f32 %v6867, 0.3275911
    %v6900 = vmul.f32 %v6868, 0.3275911
    %v6901 = vmul.f32 %v6869, 0.3275911
    %v6902 = vmul.f32 %v6870, 0.3275911
    %v6903 = vmul.f32 %v6871, 0.3275911
    %v6904 = vmul.f32 %v6872, 0.3275911
    %v6905 = vmul.f32 %v6873, 0.3275911
    %v6906 = vmul.f32 %v6874, 0.3275911
    %v6907 = vmul.f32 %v6875, 0.3275911
    %v6908 = vmul.f32 %v6876, 0.3275911
    %v6909 = vmul.f32 %v6877, 0.3275911
    %v6910 = vmul.f32 %v6878, 0.3275911
    %v6911 = vmul.f32 %v6879, 0.3275911
    %v6912 = vmul.f32 %v6880, 0.3275911
    %v6913 = vmul.f32 %v6881, 0.3275911
    %v6914 = vmul.f32 %v6882, 0.3275911
    %v6915 = vmul.f32 %v6883, 0.3275911
    %v6916 = vmul.f32 %v6884, 0.3275911
    %v6917 = vmul.f32 %v6885, 0.3275911
    %v6918 = vmul.f32 %v6886, 0.3275911
    %v6919 = vmul.f32 %v6887, 0.3275911
    %v6920 = vmul.f32 %v6888, 0.3275911
    %v6921 = vadd.f32 %v6889, 1.0
    %v6922 = vadd.f32 %v6890, 1.0
    %v6923 = vadd.f32 %v6891, 1.0
    %v6924 = vadd.f32 %v6892, 1.0
    %v6925 = vadd.f32 %v6893, 1.0
    %v6926 = vadd.f32 %v6894, 1.0
    %v6927 = vadd.f32 %v6895, 1.0
    %v6928 = vadd.f32 %v6896, 1.0
    %v6929 = vadd.f32 %v6897, 1.0
    %v6930 = vadd.f32 %v6898, 1.0
    %v6931 = vadd.f32 %v6899, 1.0
    %v6932 = vadd.f32 %v6900, 1.0
    %v6933 = vadd.f32 %v6901, 1.0
    %v6934 = vadd.f32 %v6902, 1.0
    %v6935 = vadd.f32 %v6903, 1.0
    %v6936 = vadd.f32 %v6904, 1.0
    %v6937 = vadd.f32 %v6905, 1.0
    %v6938 = vadd.f32 %v6906, 1.0
    %v6939 = vadd.f32 %v6907, 1.0
    %v6940 = vadd.f32 %v6908, 1.0
    %v6941 = vadd.f32 %v6909, 1.0
    %v6942 = vadd.f32 %v6910, 1.0
    %v6943 = vadd.f32 %v6911, 1.0
    %v6944 = vadd.f32 %v6912, 1.0
    %v6945 = vadd.f32 %v6913, 1.0
    %v6946 = vadd.f32 %v6914, 1.0
    %v6947 = vadd.f32 %v6915, 1.0
    %v6948 = vadd.f32 %v6916, 1.0
    %v6949 = vadd.f32 %v6917, 1.0
    %v6950 = vadd.f32 %v6918, 1.0
    %v6951 = vadd.f32 %v6919, 1.0
    %v6952 = vadd.f32 %v6920, 1.0
    %v6953 = vrcp.pop %v6921
    %v6954 = vmul.f32 1.0, %v6953
    %v6955 = vrcp.pop %v6922
    %v6956 = vmul.f32 1.0, %v6955
    %v6957 = vrcp.pop %v6923
    %v6958 = vmul.f32 1.0, %v6957
    %v6959 = vrcp.pop %v6924
    %v6960 = vmul.f32 1.0, %v6959
    %v6961 = vrcp.pop %v6925
    %v6962 = vmul.f32 1.0, %v6961
    %v6963 = vrcp.pop %v6926
    %v6964 = vmul.f32 1.0, %v6963
    %v6965 = vrcp.pop %v6927
    %v6966 = vmul.f32 1.0, %v6965
    %v6967 = vrcp.pop %v6928
    %v6968 = vmul.f32 1.0, %v6967
    %v6969 = vrcp.pop %v6929
    %v6970 = vmul.f32 1.0, %v6969
    %v6971 = vrcp.pop %v6930
    %v6972 = vmul.f32 1.0, %v6971
    %v6973 = vrcp.pop %v6931
    %v6974 = vmul.f32 1.0, %v6973
    %v6975 = vrcp.pop %v6932
    %v6976 = vmul.f32 1.0, %v6975
    %v6977 = vrcp.pop %v6933
    %v6978 = vmul.f32 1.0, %v6977
    %v6979 = vrcp.pop %v6934
    %v6980 = vmul.f32 1.0, %v6979
    %v6981 = vrcp.pop %v6935
    %v6982 = vmul.f32 1.0, %v6981
    %v6983 = vrcp.pop %v6936
    %v6984 = vmul.f32 1.0, %v6983
    %v6985 = vrcp.pop %v6937
    %v6986 = vmul.f32 1.0, %v6985
    %v6987 = vrcp.pop %v6938
    %v6988 = vmul.f32 1.0, %v6987
    %v6989 = vrcp.pop %v6939
    %v6990 = vmul.f32 1.0, %v6989
    %v6991 = vrcp.pop %v6940
    %v6992 = vmul.f32 1.0, %v6991
    %v6993 = vrcp.pop %v6941
    %v6994 = vmul.f32 1.0, %v6993
    %v6995 = vrcp.pop %v6942
    %v6996 = vmul.f32 1.0, %v6995
    %v6997 = vrcp.pop %v6943
    %v6998 = vmul.f32 1.0, %v6997
    %v6999 = vrcp.pop %v6944
    %v7000 = vmul.f32 1.0, %v6999
    %v7001 = vrcp.pop %v6945
    %v7002 = vmul.f32 1.0, %v7001
    %v7003 = vrcp.pop %v6946
    %v7004 = vmul.f32 1.0, %v7003
    %v7005 = vrcp.pop %v6947
    %v7006 = vmul.f32 1.0, %v7005
    %v7007 = vrcp.pop %v6948
    %v7008 = vmul.f32 1.0, %v7007
    %v7009 = vrcp.pop %v6949
    %v7010 = vmul.f32 1.0, %v7009
    %v7011 = vrcp.pop %v6950
    %v7012 = vmul.f32 1.0, %v7011
    %v7013 = vrcp.pop %v6951
    %v7014 = vmul.f32 1.0, %v7013
    %v7015 = vrcp.pop %v6952
    %v7016 = vmul.f32 1.0, %v7015
    %v7017 = vmul.f32 %v6954, 1.0614054
    %v7018 = vmul.f32 %v6956, 1.0614054
    %v7019 = vmul.f32 %v6958, 1.0614054
    %v7020 = vmul.f32 %v6960, 1.0614054
    %v7021 = vmul.f32 %v6962, 1.0614054
    %v7022 = vmul.f32 %v6964, 1.0614054
    %v7023 = vmul.f32 %v6966, 1.0614054
    %v7024 = vmul.f32 %v6968, 1.0614054
    %v7025 = vmul.f32 %v6970, 1.0614054
    %v7026 = vmul.f32 %v6972, 1.0614054
    %v7027 = vmul.f32 %v6974, 1.0614054
    %v7028 = vmul.f32 %v6976, 1.0614054
    %v7029 = vmul.f32 %v6978, 1.0614054
    %v7030 = vmul.f32 %v6980, 1.0614054
    %v7031 = vmul.f32 %v6982, 1.0614054
    %v7032 = vmul.f32 %v6984, 1.0614054
    %v7033 = vmul.f32 %v6986, 1.0614054
    %v7034 = vmul.f32 %v6988, 1.0614054
    %v7035 = vmul.f32 %v6990, 1.0614054
    %v7036 = vmul.f32 %v6992, 1.0614054
    %v7037 = vmul.f32 %v6994, 1.0614054
    %v7038 = vmul.f32 %v6996, 1.0614054
    %v7039 = vmul.f32 %v6998, 1.0614054
    %v7040 = vmul.f32 %v7000, 1.0614054
    %v7041 = vmul.f32 %v7002, 1.0614054
    %v7042 = vmul.f32 %v7004, 1.0614054
    %v7043 = vmul.f32 %v7006, 1.0614054
    %v7044 = vmul.f32 %v7008, 1.0614054
    %v7045 = vmul.f32 %v7010, 1.0614054
    %v7046 = vmul.f32 %v7012, 1.0614054
    %v7047 = vmul.f32 %v7014, 1.0614054
    %v7048 = vmul.f32 %v7016, 1.0614054
    %v7049 = vadd.f32 %v7017, -1.4531521
    %v7050 = vadd.f32 %v7018, -1.4531521
    %v7051 = vadd.f32 %v7019, -1.4531521
    %v7052 = vadd.f32 %v7020, -1.4531521
    %v7053 = vadd.f32 %v7021, -1.4531521
    %v7054 = vadd.f32 %v7022, -1.4531521
    %v7055 = vadd.f32 %v7023, -1.4531521
    %v7056 = vadd.f32 %v7024, -1.4531521
    %v7057 = vadd.f32 %v7025, -1.4531521
    %v7058 = vadd.f32 %v7026, -1.4531521
    %v7059 = vadd.f32 %v7027, -1.4531521
    %v7060 = vadd.f32 %v7028, -1.4531521
    %v7061 = vadd.f32 %v7029, -1.4531521
    %v7062 = vadd.f32 %v7030, -1.4531521
    %v7063 = vadd.f32 %v7031, -1.4531521
    %v7064 = vadd.f32 %v7032, -1.4531521
    %v7065 = vadd.f32 %v7033, -1.4531521
    %v7066 = vadd.f32 %v7034, -1.4531521
    %v7067 = vadd.f32 %v7035, -1.4531521
    %v7068 = vadd.f32 %v7036, -1.4531521
    %v7069 = vadd.f32 %v7037, -1.4531521
    %v7070 = vadd.f32 %v7038, -1.4531521
    %v7071 = vadd.f32 %v7039, -1.4531521
    %v7072 = vadd.f32 %v7040, -1.4531521
    %v7073 = vadd.f32 %v7041, -1.4531521
    %v7074 = vadd.f32 %v7042, -1.4531521
    %v7075 = vadd.f32 %v7043, -1.4531521
    %v7076 = vadd.f32 %v7044, -1.4531521
    %v7077 = vadd.f32 %v7045, -1.4531521
    %v7078 = vadd.f32 %v7046, -1.4531521
    %v7079 = vadd.f32 %v7047, -1.4531521
    %v7080 = vadd.f32 %v7048, -1.4531521
    %v7081 = vmul.f32 %v7049, %v6954
    %v7082 = vmul.f32 %v7050, %v6956
    %v7083 = vmul.f32 %v7051, %v6958
    %v7084 = vmul.f32 %v7052, %v6960
    %v7085 = vmul.f32 %v7053, %v6962
    %v7086 = vmul.f32 %v7054, %v6964
    %v7087 = vmul.f32 %v7055, %v6966
    %v7088 = vmul.f32 %v7056, %v6968
    %v7089 = vmul.f32 %v7057, %v6970
    %v7090 = vmul.f32 %v7058, %v6972
    %v7091 = vmul.f32 %v7059, %v6974
    %v7092 = vmul.f32 %v7060, %v6976
    %v7093 = vmul.f32 %v7061, %v6978
    %v7094 = vmul.f32 %v7062, %v6980
    %v7095 = vmul.f32 %v7063, %v6982
    %v7096 = vmul.f32 %v7064, %v6984
    %v7097 = vmul.f32 %v7065, %v6986
    %v7098 = vmul.f32 %v7066, %v6988
    %v7099 = vmul.f32 %v7067, %v6990
    %v7100 = vmul.f32 %v7068, %v6992
    %v7101 = vmul.f32 %v7069, %v6994
    %v7102 = vmul.f32 %v7070, %v6996
    %v7103 = vmul.f32 %v7071, %v6998
    %v7104 = vmul.f32 %v7072, %v7000
    %v7105 = vmul.f32 %v7073, %v7002
    %v7106 = vmul.f32 %v7074, %v7004
    %v7107 = vmul.f32 %v7075, %v7006
    %v7108 = vmul.f32 %v7076, %v7008
    %v7109 = vmul.f32 %v7077, %v7010
    %v7110 = vmul.f32 %v7078, %v7012
    %v7111 = vmul.f32 %v7079, %v7014
    %v7112 = vmul.f32 %v7080, %v7016
    %v7113 = vadd.f32 %v7081, 1.4214138
    %v7114 = vadd.f32 %v7082, 1.4214138
    %v7115 = vadd.f32 %v7083, 1.4214138
    %v7116 = vadd.f32 %v7084, 1.4214138
    %v7117 = vadd.f32 %v7085, 1.4214138
    %v7118 = vadd.f32 %v7086, 1.4214138
    %v7119 = vadd.f32 %v7087, 1.4214138
    %v7120 = vadd.f32 %v7088, 1.4214138
    %v7121 = vadd.f32 %v7089, 1.4214138
    %v7122 = vadd.f32 %v7090, 1.4214138
    %v7123 = vadd.f32 %v7091, 1.4214138
    %v7124 = vadd.f32 %v7092, 1.4214138
    %v7125 = vadd.f32 %v7093, 1.4214138
    %v7126 = vadd.f32 %v7094, 1.4214138
    %v7127 = vadd.f32 %v7095, 1.4214138
    %v7128 = vadd.f32 %v7096, 1.4214138
    %v7129 = vadd.f32 %v7097, 1.4214138
    %v7130 = vadd.f32 %v7098, 1.4214138
    %v7131 = vadd.f32 %v7099, 1.4214138
    %v7132 = vadd.f32 %v7100, 1.4214138
    %v7133 = vadd.f32 %v7101, 1.4214138
    %v7134 = vadd.f32 %v7102, 1.4214138
    %v7135 = vadd.f32 %v7103, 1.4214138
    %v7136 = vadd.f32 %v7104, 1.4214138
    %v7137 = vadd.f32 %v7105, 1.4214138
    %v7138 = vadd.f32 %v7106, 1.4214138
    %v7139 = vadd.f32 %v7107, 1.4214138
    %v7140 = vadd.f32 %v7108, 1.4214138
    %v7141 = vadd.f32 %v7109, 1.4214138
    %v7142 = vadd.f32 %v7110, 1.4214138
    %v7143 = vadd.f32 %v7111, 1.4214138
    %v7144 = vadd.f32 %v7112, 1.4214138
    %v7145 = vmul.f32 %v7113, %v6954
    %v7146 = vmul.f32 %v7114, %v6956
    %v7147 = vmul.f32 %v7115, %v6958
    %v7148 = vmul.f32 %v7116, %v6960
    %v7149 = vmul.f32 %v7117, %v6962
    %v7150 = vmul.f32 %v7118, %v6964
    %v7151 = vmul.f32 %v7119, %v6966
    %v7152 = vmul.f32 %v7120, %v6968
    %v7153 = vmul.f32 %v7121, %v6970
    %v7154 = vmul.f32 %v7122, %v6972
    %v7155 = vmul.f32 %v7123, %v6974
    %v7156 = vmul.f32 %v7124, %v6976
    %v7157 = vmul.f32 %v7125, %v6978
    %v7158 = vmul.f32 %v7126, %v6980
    %v7159 = vmul.f32 %v7127, %v6982
    %v7160 = vmul.f32 %v7128, %v6984
    %v7161 = vmul.f32 %v7129, %v6986
    %v7162 = vmul.f32 %v7130, %v6988
    %v7163 = vmul.f32 %v7131, %v6990
    %v7164 = vmul.f32 %v7132, %v6992
    %v7165 = vmul.f32 %v7133, %v6994
    %v7166 = vmul.f32 %v7134, %v6996
    %v7167 = vmul.f32 %v7135, %v6998
    %v7168 = vmul.f32 %v7136, %v7000
    %v7169 = vmul.f32 %v7137, %v7002
    %v7170 = vmul.f32 %v7138, %v7004
    %v7171 = vmul.f32 %v7139, %v7006
    %v7172 = vmul.f32 %v7140, %v7008
    %v7173 = vmul.f32 %v7141, %v7010
    %v7174 = vmul.f32 %v7142, %v7012
    %v7175 = vmul.f32 %v7143, %v7014
    %v7176 = vmul.f32 %v7144, %v7016
    %v7177 = vadd.f32 %v7145, -0.28449672
    %v7178 = vadd.f32 %v7146, -0.28449672
    %v7179 = vadd.f32 %v7147, -0.28449672
    %v7180 = vadd.f32 %v7148, -0.28449672
    %v7181 = vadd.f32 %v7149, -0.28449672
    %v7182 = vadd.f32 %v7150, -0.28449672
    %v7183 = vadd.f32 %v7151, -0.28449672
    %v7184 = vadd.f32 %v7152, -0.28449672
    %v7185 = vadd.f32 %v7153, -0.28449672
    %v7186 = vadd.f32 %v7154, -0.28449672
    %v7187 = vadd.f32 %v7155, -0.28449672
    %v7188 = vadd.f32 %v7156, -0.28449672
    %v7189 = vadd.f32 %v7157, -0.28449672
    %v7190 = vadd.f32 %v7158, -0.28449672
    %v7191 = vadd.f32 %v7159, -0.28449672
    %v7192 = vadd.f32 %v7160, -0.28449672
    %v7193 = vadd.f32 %v7161, -0.28449672
    %v7194 = vadd.f32 %v7162, -0.28449672
    %v7195 = vadd.f32 %v7163, -0.28449672
    %v7196 = vadd.f32 %v7164, -0.28449672
    %v7197 = vadd.f32 %v7165, -0.28449672
    %v7198 = vadd.f32 %v7166, -0.28449672
    %v7199 = vadd.f32 %v7167, -0.28449672
    %v7200 = vadd.f32 %v7168, -0.28449672
    %v7201 = vadd.f32 %v7169, -0.28449672
    %v7202 = vadd.f32 %v7170, -0.28449672
    %v7203 = vadd.f32 %v7171, -0.28449672
    %v7204 = vadd.f32 %v7172, -0.28449672
    %v7205 = vadd.f32 %v7173, -0.28449672
    %v7206 = vadd.f32 %v7174, -0.28449672
    %v7207 = vadd.f32 %v7175, -0.28449672
    %v7208 = vadd.f32 %v7176, -0.28449672
    %v7209 = vmul.f32 %v7177, %v6954
    %v7210 = vmul.f32 %v7178, %v6956
    %v7211 = vmul.f32 %v7179, %v6958
    %v7212 = vmul.f32 %v7180, %v6960
    %v7213 = vmul.f32 %v7181, %v6962
    %v7214 = vmul.f32 %v7182, %v6964
    %v7215 = vmul.f32 %v7183, %v6966
    %v7216 = vmul.f32 %v7184, %v6968
    %v7217 = vmul.f32 %v7185, %v6970
    %v7218 = vmul.f32 %v7186, %v6972
    %v7219 = vmul.f32 %v7187, %v6974
    %v7220 = vmul.f32 %v7188, %v6976
    %v7221 = vmul.f32 %v7189, %v6978
    %v7222 = vmul.f32 %v7190, %v6980
    %v7223 = vmul.f32 %v7191, %v6982
    %v7224 = vmul.f32 %v7192, %v6984
    %v7225 = vmul.f32 %v7193, %v6986
    %v7226 = vmul.f32 %v7194, %v6988
    %v7227 = vmul.f32 %v7195, %v6990
    %v7228 = vmul.f32 %v7196, %v6992
    %v7229 = vmul.f32 %v7197, %v6994
    %v7230 = vmul.f32 %v7198, %v6996
    %v7231 = vmul.f32 %v7199, %v6998
    %v7232 = vmul.f32 %v7200, %v7000
    %v7233 = vmul.f32 %v7201, %v7002
    %v7234 = vmul.f32 %v7202, %v7004
    %v7235 = vmul.f32 %v7203, %v7006
    %v7236 = vmul.f32 %v7204, %v7008
    %v7237 = vmul.f32 %v7205, %v7010
    %v7238 = vmul.f32 %v7206, %v7012
    %v7239 = vmul.f32 %v7207, %v7014
    %v7240 = vmul.f32 %v7208, %v7016
    %v7241 = vadd.f32 %v7209, 0.2548296
    %v7242 = vadd.f32 %v7210, 0.2548296
    %v7243 = vadd.f32 %v7211, 0.2548296
    %v7244 = vadd.f32 %v7212, 0.2548296
    %v7245 = vadd.f32 %v7213, 0.2548296
    %v7246 = vadd.f32 %v7214, 0.2548296
    %v7247 = vadd.f32 %v7215, 0.2548296
    %v7248 = vadd.f32 %v7216, 0.2548296
    %v7249 = vadd.f32 %v7217, 0.2548296
    %v7250 = vadd.f32 %v7218, 0.2548296
    %v7251 = vadd.f32 %v7219, 0.2548296
    %v7252 = vadd.f32 %v7220, 0.2548296
    %v7253 = vadd.f32 %v7221, 0.2548296
    %v7254 = vadd.f32 %v7222, 0.2548296
    %v7255 = vadd.f32 %v7223, 0.2548296
    %v7256 = vadd.f32 %v7224, 0.2548296
    %v7257 = vadd.f32 %v7225, 0.2548296
    %v7258 = vadd.f32 %v7226, 0.2548296
    %v7259 = vadd.f32 %v7227, 0.2548296
    %v7260 = vadd.f32 %v7228, 0.2548296
    %v7261 = vadd.f32 %v7229, 0.2548296
    %v7262 = vadd.f32 %v7230, 0.2548296
    %v7263 = vadd.f32 %v7231, 0.2548296
    %v7264 = vadd.f32 %v7232, 0.2548296
    %v7265 = vadd.f32 %v7233, 0.2548296
    %v7266 = vadd.f32 %v7234, 0.2548296
    %v7267 = vadd.f32 %v7235, 0.2548296
    %v7268 = vadd.f32 %v7236, 0.2548296
    %v7269 = vadd.f32 %v7237, 0.2548296
    %v7270 = vadd.f32 %v7238, 0.2548296
    %v7271 = vadd.f32 %v7239, 0.2548296
    %v7272 = vadd.f32 %v7240, 0.2548296
    %v7273 = vmul.f32 %v7241, %v6954
    %v7274 = vmul.f32 %v7242, %v6956
    %v7275 = vmul.f32 %v7243, %v6958
    %v7276 = vmul.f32 %v7244, %v6960
    %v7277 = vmul.f32 %v7245, %v6962
    %v7278 = vmul.f32 %v7246, %v6964
    %v7279 = vmul.f32 %v7247, %v6966
    %v7280 = vmul.f32 %v7248, %v6968
    %v7281 = vmul.f32 %v7249, %v6970
    %v7282 = vmul.f32 %v7250, %v6972
    %v7283 = vmul.f32 %v7251, %v6974
    %v7284 = vmul.f32 %v7252, %v6976
    %v7285 = vmul.f32 %v7253, %v6978
    %v7286 = vmul.f32 %v7254, %v6980
    %v7287 = vmul.f32 %v7255, %v6982
    %v7288 = vmul.f32 %v7256, %v6984
    %v7289 = vmul.f32 %v7257, %v6986
    %v7290 = vmul.f32 %v7258, %v6988
    %v7291 = vmul.f32 %v7259, %v6990
    %v7292 = vmul.f32 %v7260, %v6992
    %v7293 = vmul.f32 %v7261, %v6994
    %v7294 = vmul.f32 %v7262, %v6996
    %v7295 = vmul.f32 %v7263, %v6998
    %v7296 = vmul.f32 %v7264, %v7000
    %v7297 = vmul.f32 %v7265, %v7002
    %v7298 = vmul.f32 %v7266, %v7004
    %v7299 = vmul.f32 %v7267, %v7006
    %v7300 = vmul.f32 %v7268, %v7008
    %v7301 = vmul.f32 %v7269, %v7010
    %v7302 = vmul.f32 %v7270, %v7012
    %v7303 = vmul.f32 %v7271, %v7014
    %v7304 = vmul.f32 %v7272, %v7016
    %v7305 = vsub.f32 0.0, %v6857
    %v7306 = vsub.f32 0.0, %v6858
    %v7307 = vsub.f32 0.0, %v6859
    %v7308 = vsub.f32 0.0, %v6860
    %v7309 = vsub.f32 0.0, %v6861
    %v7310 = vsub.f32 0.0, %v6862
    %v7311 = vsub.f32 0.0, %v6863
    %v7312 = vsub.f32 0.0, %v6864
    %v7313 = vsub.f32 0.0, %v6865
    %v7314 = vsub.f32 0.0, %v6866
    %v7315 = vsub.f32 0.0, %v6867
    %v7316 = vsub.f32 0.0, %v6868
    %v7317 = vsub.f32 0.0, %v6869
    %v7318 = vsub.f32 0.0, %v6870
    %v7319 = vsub.f32 0.0, %v6871
    %v7320 = vsub.f32 0.0, %v6872
    %v7321 = vsub.f32 0.0, %v6873
    %v7322 = vsub.f32 0.0, %v6874
    %v7323 = vsub.f32 0.0, %v6875
    %v7324 = vsub.f32 0.0, %v6876
    %v7325 = vsub.f32 0.0, %v6877
    %v7326 = vsub.f32 0.0, %v6878
    %v7327 = vsub.f32 0.0, %v6879
    %v7328 = vsub.f32 0.0, %v6880
    %v7329 = vsub.f32 0.0, %v6881
    %v7330 = vsub.f32 0.0, %v6882
    %v7331 = vsub.f32 0.0, %v6883
    %v7332 = vsub.f32 0.0, %v6884
    %v7333 = vsub.f32 0.0, %v6885
    %v7334 = vsub.f32 0.0, %v6886
    %v7335 = vsub.f32 0.0, %v6887
    %v7336 = vsub.f32 0.0, %v6888
    %v7337 = vmul.f32 %v7305, %v6857
    %v7338 = vmul.f32 %v7306, %v6858
    %v7339 = vmul.f32 %v7307, %v6859
    %v7340 = vmul.f32 %v7308, %v6860
    %v7341 = vmul.f32 %v7309, %v6861
    %v7342 = vmul.f32 %v7310, %v6862
    %v7343 = vmul.f32 %v7311, %v6863
    %v7344 = vmul.f32 %v7312, %v6864
    %v7345 = vmul.f32 %v7313, %v6865
    %v7346 = vmul.f32 %v7314, %v6866
    %v7347 = vmul.f32 %v7315, %v6867
    %v7348 = vmul.f32 %v7316, %v6868
    %v7349 = vmul.f32 %v7317, %v6869
    %v7350 = vmul.f32 %v7318, %v6870
    %v7351 = vmul.f32 %v7319, %v6871
    %v7352 = vmul.f32 %v7320, %v6872
    %v7353 = vmul.f32 %v7321, %v6873
    %v7354 = vmul.f32 %v7322, %v6874
    %v7355 = vmul.f32 %v7323, %v6875
    %v7356 = vmul.f32 %v7324, %v6876
    %v7357 = vmul.f32 %v7325, %v6877
    %v7358 = vmul.f32 %v7326, %v6878
    %v7359 = vmul.f32 %v7327, %v6879
    %v7360 = vmul.f32 %v7328, %v6880
    %v7361 = vmul.f32 %v7329, %v6881
    %v7362 = vmul.f32 %v7330, %v6882
    %v7363 = vmul.f32 %v7331, %v6883
    %v7364 = vmul.f32 %v7332, %v6884
    %v7365 = vmul.f32 %v7333, %v6885
    %v7366 = vmul.f32 %v7334, %v6886
    %v7367 = vmul.f32 %v7335, %v6887
    %v7368 = vmul.f32 %v7336, %v6888
    %v7369 = vmul.f32 %v7337, 1.442695
    %v7370 = vpow.pop %v7369
    %v7371 = vmul.f32 %v7338, 1.442695
    %v7372 = vpow.pop %v7371
    %v7373 = vmul.f32 %v7339, 1.442695
    %v7374 = vpow.pop %v7373
    %v7375 = vmul.f32 %v7340, 1.442695
    %v7376 = vpow.pop %v7375
    %v7377 = vmul.f32 %v7341, 1.442695
    %v7378 = vpow.pop %v7377
    %v7379 = vmul.f32 %v7342, 1.442695
    %v7380 = vpow.pop %v7379
    %v7381 = vmul.f32 %v7343, 1.442695
    %v7382 = vpow.pop %v7381
    %v7383 = vmul.f32 %v7344, 1.442695
    %v7384 = vpow.pop %v7383
    %v7385 = vmul.f32 %v7345, 1.442695
    %v7386 = vpow.pop %v7385
    %v7387 = vmul.f32 %v7346, 1.442695
    %v7388 = vpow.pop %v7387
    %v7389 = vmul.f32 %v7347, 1.442695
    %v7390 = vpow.pop %v7389
    %v7391 = vmul.f32 %v7348, 1.442695
    %v7392 = vpow.pop %v7391
    %v7393 = vmul.f32 %v7349, 1.442695
    %v7394 = vpow.pop %v7393
    %v7395 = vmul.f32 %v7350, 1.442695
    %v7396 = vpow.pop %v7395
    %v7397 = vmul.f32 %v7351, 1.442695
    %v7398 = vpow.pop %v7397
    %v7399 = vmul.f32 %v7352, 1.442695
    %v7400 = vpow.pop %v7399
    %v7401 = vmul.f32 %v7353, 1.442695
    %v7402 = vpow.pop %v7401
    %v7403 = vmul.f32 %v7354, 1.442695
    %v7404 = vpow.pop %v7403
    %v7405 = vmul.f32 %v7355, 1.442695
    %v7406 = vpow.pop %v7405
    %v7407 = vmul.f32 %v7356, 1.442695
    %v7408 = vpow.pop %v7407
    %v7409 = vmul.f32 %v7357, 1.442695
    %v7410 = vpow.pop %v7409
    %v7411 = vmul.f32 %v7358, 1.442695
    %v7412 = vpow.pop %v7411
    %v7413 = vmul.f32 %v7359, 1.442695
    %v7414 = vpow.pop %v7413
    %v7415 = vmul.f32 %v7360, 1.442695
    %v7416 = vpow.pop %v7415
    %v7417 = vmul.f32 %v7361, 1.442695
    %v7418 = vpow.pop %v7417
    %v7419 = vmul.f32 %v7362, 1.442695
    %v7420 = vpow.pop %v7419
    %v7421 = vmul.f32 %v7363, 1.442695
    %v7422 = vpow.pop %v7421
    %v7423 = vmul.f32 %v7364, 1.442695
    %v7424 = vpow.pop %v7423
    %v7425 = vmul.f32 %v7365, 1.442695
    %v7426 = vpow.pop %v7425
    %v7427 = vmul.f32 %v7366, 1.442695
    %v7428 = vpow.pop %v7427
    %v7429 = vmul.f32 %v7367, 1.442695
    %v7430 = vpow.pop %v7429
    %v7431 = vmul.f32 %v7368, 1.442695
    %v7432 = vpow.pop %v7431
    %v7433 = vmul.f32 %v7273, %v7370
    %v7434 = vmul.f32 %v7274, %v7372
    %v7435 = vmul.f32 %v7275, %v7374
    %v7436 = vmul.f32 %v7276, %v7376
    %v7437 = vmul.f32 %v7277, %v7378
    %v7438 = vmul.f32 %v7278, %v7380
    %v7439 = vmul.f32 %v7279, %v7382
    %v7440 = vmul.f32 %v7280, %v7384
    %v7441 = vmul.f32 %v7281, %v7386
    %v7442 = vmul.f32 %v7282, %v7388
    %v7443 = vmul.f32 %v7283, %v7390
    %v7444 = vmul.f32 %v7284, %v7392
    %v7445 = vmul.f32 %v7285, %v7394
    %v7446 = vmul.f32 %v7286, %v7396
    %v7447 = vmul.f32 %v7287, %v7398
    %v7448 = vmul.f32 %v7288, %v7400
    %v7449 = vmul.f32 %v7289, %v7402
    %v7450 = vmul.f32 %v7290, %v7404
    %v7451 = vmul.f32 %v7291, %v7406
    %v7452 = vmul.f32 %v7292, %v7408
    %v7453 = vmul.f32 %v7293, %v7410
    %v7454 = vmul.f32 %v7294, %v7412
    %v7455 = vmul.f32 %v7295, %v7414
    %v7456 = vmul.f32 %v7296, %v7416
    %v7457 = vmul.f32 %v7297, %v7418
    %v7458 = vmul.f32 %v7298, %v7420
    %v7459 = vmul.f32 %v7299, %v7422
    %v7460 = vmul.f32 %v7300, %v7424
    %v7461 = vmul.f32 %v7301, %v7426
    %v7462 = vmul.f32 %v7302, %v7428
    %v7463 = vmul.f32 %v7303, %v7430
    %v7464 = vmul.f32 %v7304, %v7432
    %v7465 = vsub.f32 1.0, %v7433
    %v7466 = vsub.f32 1.0, %v7434
    %v7467 = vsub.f32 1.0, %v7435
    %v7468 = vsub.f32 1.0, %v7436
    %v7469 = vsub.f32 1.0, %v7437
    %v7470 = vsub.f32 1.0, %v7438
    %v7471 = vsub.f32 1.0, %v7439
    %v7472 = vsub.f32 1.0, %v7440
    %v7473 = vsub.f32 1.0, %v7441
    %v7474 = vsub.f32 1.0, %v7442
    %v7475 = vsub.f32 1.0, %v7443
    %v7476 = vsub.f32 1.0, %v7444
    %v7477 = vsub.f32 1.0, %v7445
    %v7478 = vsub.f32 1.0, %v7446
    %v7479 = vsub.f32 1.0, %v7447
    %v7480 = vsub.f32 1.0, %v7448
    %v7481 = vsub.f32 1.0, %v7449
    %v7482 = vsub.f32 1.0, %v7450
    %v7483 = vsub.f32 1.0, %v7451
    %v7484 = vsub.f32 1.0, %v7452
    %v7485 = vsub.f32 1.0, %v7453
    %v7486 = vsub.f32 1.0, %v7454
    %v7487 = vsub.f32 1.0, %v7455
    %v7488 = vsub.f32 1.0, %v7456
    %v7489 = vsub.f32 1.0, %v7457
    %v7490 = vsub.f32 1.0, %v7458
    %v7491 = vsub.f32 1.0, %v7459
    %v7492 = vsub.f32 1.0, %v7460
    %v7493 = vsub.f32 1.0, %v7461
    %v7494 = vsub.f32 1.0, %v7462
    %v7495 = vsub.f32 1.0, %v7463
    %v7496 = vsub.f32 1.0, %v7464
    %v7497 = vmul.f32 %v6825, %v7465
    %v7498 = vmul.f32 %v6826, %v7466
    %v7499 = vmul.f32 %v6827, %v7467
    %v7500 = vmul.f32 %v6828, %v7468
    %v7501 = vmul.f32 %v6829, %v7469
    %v7502 = vmul.f32 %v6830, %v7470
    %v7503 = vmul.f32 %v6831, %v7471
    %v7504 = vmul.f32 %v6832, %v7472
    %v7505 = vmul.f32 %v6833, %v7473
    %v7506 = vmul.f32 %v6834, %v7474
    %v7507 = vmul.f32 %v6835, %v7475
    %v7508 = vmul.f32 %v6836, %v7476
    %v7509 = vmul.f32 %v6837, %v7477
    %v7510 = vmul.f32 %v6838, %v7478
    %v7511 = vmul.f32 %v6839, %v7479
    %v7512 = vmul.f32 %v6840, %v7480
    %v7513 = vmul.f32 %v6841, %v7481
    %v7514 = vmul.f32 %v6842, %v7482
    %v7515 = vmul.f32 %v6843, %v7483
    %v7516 = vmul.f32 %v6844, %v7484
    %v7517 = vmul.f32 %v6845, %v7485
    %v7518 = vmul.f32 %v6846, %v7486
    %v7519 = vmul.f32 %v6847, %v7487
    %v7520 = vmul.f32 %v6848, %v7488
    %v7521 = vmul.f32 %v6849, %v7489
    %v7522 = vmul.f32 %v6850, %v7490
    %v7523 = vmul.f32 %v6851, %v7491
    %v7524 = vmul.f32 %v6852, %v7492
    %v7525 = vmul.f32 %v6853, %v7493
    %v7526 = vmul.f32 %v6854, %v7494
    %v7527 = vmul.f32 %v6855, %v7495
    %v7528 = vmul.f32 %v6856, %v7496
    %v7529 = vadd.f32 %v7497, 1.0
    %v7530 = vadd.f32 %v7498, 1.0
    %v7531 = vadd.f32 %v7499, 1.0
    %v7532 = vadd.f32 %v7500, 1.0
    %v7533 = vadd.f32 %v7501, 1.0
    %v7534 = vadd.f32 %v7502, 1.0
    %v7535 = vadd.f32 %v7503, 1.0
    %v7536 = vadd.f32 %v7504, 1.0
    %v7537 = vadd.f32 %v7505, 1.0
    %v7538 = vadd.f32 %v7506, 1.0
    %v7539 = vadd.f32 %v7507, 1.0
    %v7540 = vadd.f32 %v7508, 1.0
    %v7541 = vadd.f32 %v7509, 1.0
    %v7542 = vadd.f32 %v7510, 1.0
    %v7543 = vadd.f32 %v7511, 1.0
    %v7544 = vadd.f32 %v7512, 1.0
    %v7545 = vadd.f32 %v7513, 1.0
    %v7546 = vadd.f32 %v7514, 1.0
    %v7547 = vadd.f32 %v7515, 1.0
    %v7548 = vadd.f32 %v7516, 1.0
    %v7549 = vadd.f32 %v7517, 1.0
    %v7550 = vadd.f32 %v7518, 1.0
    %v7551 = vadd.f32 %v7519, 1.0
    %v7552 = vadd.f32 %v7520, 1.0
    %v7553 = vadd.f32 %v7521, 1.0
    %v7554 = vadd.f32 %v7522, 1.0
    %v7555 = vadd.f32 %v7523, 1.0
    %v7556 = vadd.f32 %v7524, 1.0
    %v7557 = vadd.f32 %v7525, 1.0
    %v7558 = vadd.f32 %v7526, 1.0
    %v7559 = vadd.f32 %v7527, 1.0
    %v7560 = vadd.f32 %v7528, 1.0
    %v7561 = vmul.f32 %v6729, %v7529
    %v7562 = vmul.f32 %v6730, %v7530
    %v7563 = vmul.f32 %v6731, %v7531
    %v7564 = vmul.f32 %v6732, %v7532
    %v7565 = vmul.f32 %v6733, %v7533
    %v7566 = vmul.f32 %v6734, %v7534
    %v7567 = vmul.f32 %v6735, %v7535
    %v7568 = vmul.f32 %v6736, %v7536
    %v7569 = vmul.f32 %v6737, %v7537
    %v7570 = vmul.f32 %v6738, %v7538
    %v7571 = vmul.f32 %v6739, %v7539
    %v7572 = vmul.f32 %v6740, %v7540
    %v7573 = vmul.f32 %v6741, %v7541
    %v7574 = vmul.f32 %v6742, %v7542
    %v7575 = vmul.f32 %v6743, %v7543
    %v7576 = vmul.f32 %v6744, %v7544
    %v7577 = vmul.f32 %v6745, %v7545
    %v7578 = vmul.f32 %v6746, %v7546
    %v7579 = vmul.f32 %v6747, %v7547
    %v7580 = vmul.f32 %v6748, %v7548
    %v7581 = vmul.f32 %v6749, %v7549
    %v7582 = vmul.f32 %v6750, %v7550
    %v7583 = vmul.f32 %v6751, %v7551
    %v7584 = vmul.f32 %v6752, %v7552
    %v7585 = vmul.f32 %v6753, %v7553
    %v7586 = vmul.f32 %v6754, %v7554
    %v7587 = vmul.f32 %v6755, %v7555
    %v7588 = vmul.f32 %v6756, %v7556
    %v7589 = vmul.f32 %v6757, %v7557
    %v7590 = vmul.f32 %v6758, %v7558
    %v7591 = vmul.f32 %v6759, %v7559
    %v7592 = vmul.f32 %v6760, %v7560
    %v7594 = vlaneseq
    %v7595 = vshrl.u32 %v7594, 7
    %v7596 = vsub.s32 0, %v7595
    %v7597 = vrot.slane %v4954, %v7596
    %7599 = vmatprep.subr.mxu0 0.0
    %7600 = vmatpush1.msra.mxu0 %v4697
    %7601 = vmatprep.subr.mxu0 0.0
    %7602 = vmatpush1.msra.mxu0 %v4698
    %7603 = vmatprep.subr.mxu0 0.0
    %7604 = vmatpush1.msra.mxu0 %v4699
    %7605 = vmatprep.subr.mxu0 0.0
    %7606 = vmatpush1.msra.mxu0 %v4700
    %7607 = vmatprep.subr.mxu0 0.0
    %7608 = vmatpush1.msra.mxu0 %v4701
    %7609 = vmatprep.subr.mxu0 0.0
    %7610 = vmatpush1.msra.mxu0 %v4702
    %7611 = vmatprep.subr.mxu0 0.0
    %7612 = vmatpush1.msra.mxu0 %v4703
    %7613 = vmatprep.subr.mxu0 0.0
    %7614 = vmatpush1.msra.mxu0 %v4704
    %7615 = vmatprep.subr.mxu0 0.0
    %7616 = vmatpush1.msra.mxu0 %v4705
    %7617 = vmatprep.subr.mxu0 0.0
    %7618 = vmatpush1.msra.mxu0 %v4706
    %7619 = vmatprep.subr.mxu0 0.0
    %7620 = vmatpush1.msra.mxu0 %v4707
    %7621 = vmatprep.subr.mxu0 0.0
    %7622 = vmatpush1.msra.mxu0 %v4708
    %7623 = vmatprep.subr.mxu0 0.0
    %7624 = vmatpush1.msra.mxu0 %v4709
    %7625 = vmatprep.subr.mxu0 0.0
    %7626 = vmatpush1.msra.mxu0 %v4710
    %7627 = vmatprep.subr.mxu0 0.0
    %7628 = vmatpush1.msra.mxu0 %v4711
    %7629 = vmatprep.subr.mxu0 0.0
    %7630 = vmatpush1.msra.mxu0 %v4712
    %7631 = vmatprep.subr.mxu0 0.0
    %7632 = vmatpush1.msra.mxu0 %v4713
    %7633 = vmatprep.subr.mxu0 0.0
    %7634 = vmatpush1.msra.mxu0 %v4714
    %7635 = vmatprep.subr.mxu0 0.0
    %7636 = vmatpush1.msra.mxu0 %v4715
    %7637 = vmatprep.subr.mxu0 0.0
    %7638 = vmatpush1.msra.mxu0 %v4716
    %7639 = vmatprep.subr.mxu0 0.0
    %7640 = vmatpush1.msra.mxu0 %v4717
    %7641 = vmatprep.subr.mxu0 0.0
    %7642 = vmatpush1.msra.mxu0 %v4718
    %7643 = vmatprep.subr.mxu0 0.0
    %7644 = vmatpush1.msra.mxu0 %v4719
    %7645 = vmatprep.subr.mxu0 0.0
    %7646 = vmatpush1.msra.mxu0 %v4720
    %7647 = vmatprep.subr.mxu0 0.0
    %7648 = vmatpush1.msra.mxu0 %v4721
    %7649 = vmatprep.subr.mxu0 0.0
    %7650 = vmatpush1.msra.mxu0 %v4722
    %7651 = vmatprep.subr.mxu0 0.0
    %7652 = vmatpush1.msra.mxu0 %v4723
    %7653 = vmatprep.subr.mxu0 0.0
    %7654 = vmatpush1.msra.mxu0 %v4724
    %7655 = vmatprep.subr.mxu0 0.0
    %7656 = vmatpush1.msra.mxu0 %v4725
    %7657 = vmatprep.subr.mxu0 0.0
    %7658 = vmatpush1.msra.mxu0 %v4726
    %7659 = vmatprep.subr.mxu0 0.0
    %7660 = vmatpush1.msra.mxu0 %v4727
    %7661 = vmatprep.subr.mxu0 0.0
    %7662 = vmatpush1.msra.mxu0 %v4728
    %7663 = vmatprep.mubr.f32.mxu0 %v7562
    %7664 = vmatmul.mubr.f32.gmra.mrb[0].mxu0 %v7561
    %v7665 = vpop.f32.mrb[0].mxu0
    %v7666 = vadd.f32 %v7597, %v7665
    %v7667 = vpop.f32.mrb[0].mxu0
    %7668 = vmatprep.mubr.f32.mxu0 %v7578
    %7669 = vmatmul.mubr.f32.gmra.mrb[0].mxu0 %v7577
    %v7670 = vpop.f32.mrb[0].mxu0
    %v7671 = vpop.f32.mrb[0].mxu0
    %7672 = vdwg.mxu0
    %7673 = vmatprep.subr.mxu0 0.0
    %7674 = vmatpush1.msra.mxu0 %v4729
    %7675 = vmatprep.subr.mxu0 0.0
    %7676 = vmatpush1.msra.mxu0 %v4730
    %7677 = vmatprep.subr.mxu0 0.0
    %7678 = vmatpush1.msra.mxu0 %v4731
    %7679 = vmatprep.subr.mxu0 0.0
    %7680 = vmatpush1.msra.mxu0 %v4732
    %7681 = vmatprep.subr.mxu0 0.0
    %7682 = vmatpush1.msra.mxu0 %v4733
    %7683 = vmatprep.subr.mxu0 0.0
    %7684 = vmatpush1.msra.mxu0 %v4734
    %7685 = vmatprep.subr.mxu0 0.0
    %7686 = vmatpush1.msra.mxu0 %v4735
    %7687 = vmatprep.subr.mxu0 0.0
    %7688 = vmatpush1.msra.mxu0 %v4736
    %7689 = vmatprep.subr.mxu0 0.0
    %7690 = vmatpush1.msra.mxu0 %v4737
    %7691 = vmatprep.subr.mxu0 0.0
    %7692 = vmatpush1.msra.mxu0 %v4738
    %7693 = vmatprep.subr.mxu0 0.0
    %7694 = vmatpush1.msra.mxu0 %v4739
    %7695 = vmatprep.subr.mxu0 0.0
    %7696 = vmatpush1.msra.mxu0 %v4740
    %7697 = vmatprep.subr.mxu0 0.0
    %7698 = vmatpush1.msra.mxu0 %v4741
    %7699 = vmatprep.subr.mxu0 0.0
    %7700 = vmatpush1.msra.mxu0 %v4742
    %7701 = vmatprep.subr.mxu0 0.0
    %7702 = vmatpush1.msra.mxu0 %v4743
    %7703 = vmatprep.subr.mxu0 0.0
    %7704 = vmatpush1.msra.mxu0 %v4744
    %7705 = vmatprep.subr.mxu0 0.0
    %7706 = vmatpush1.msra.mxu0 %v4745
    %7707 = vmatprep.subr.mxu0 0.0
    %7708 = vmatpush1.msra.mxu0 %v4746
    %7709 = vmatprep.subr.mxu0 0.0
    %7710 = vmatpush1.msra.mxu0 %v4747
    %7711 = vmatprep.subr.mxu0 0.0
    %7712 = vmatpush1.msra.mxu0 %v4748
    %7713 = vmatprep.subr.mxu0 0.0
    %7714 = vmatpush1.msra.mxu0 %v4749
    %7715 = vmatprep.subr.mxu0 0.0
    %7716 = vmatpush1.msra.mxu0 %v4750
    %7717 = vmatprep.subr.mxu0 0.0
    %7718 = vmatpush1.msra.mxu0 %v4751
    %7719 = vmatprep.subr.mxu0 0.0
    %7720 = vmatpush1.msra.mxu0 %v4752
    %7721 = vmatprep.subr.mxu0 0.0
    %7722 = vmatpush1.msra.mxu0 %v4753
    %7723 = vmatprep.subr.mxu0 0.0
    %7724 = vmatpush1.msra.mxu0 %v4754
    %7725 = vmatprep.subr.mxu0 0.0
    %7726 = vmatpush1.msra.mxu0 %v4755
    %7727 = vmatprep.subr.mxu0 0.0
    %7728 = vmatpush1.msra.mxu0 %v4756
    %7729 = vmatprep.subr.mxu0 0.0
    %7730 = vmatpush1.msra.mxu0 %v4757
    %7731 = vmatprep.subr.mxu0 0.0
    %7732 = vmatpush1.msra.mxu0 %v4758
    %7733 = vmatprep.subr.mxu0 0.0
    %7734 = vmatpush1.msra.mxu0 %v4759
    %7735 = vmatprep.subr.mxu0 0.0
    %7736 = vmatpush1.msra.mxu0 %v4760
    %7737 = vmatprep.mubr.f32.mxu0 %v7564
    %7738 = vmatmul.mubr.f32.gmra.mrb[0].mxu0 %v7563
    %v7739 = vpop.f32.mrb[0].mxu0
    %v7740 = vadd.f32 %v7666, %v7739
    %v7741 = vpop.f32.mrb[0].mxu0
    %7742 = vmatprep.mubr.f32.mxu0 %v7580
    %7743 = vmatmul.mubr.f32.gmra.mrb[0].mxu0 %v7579
    %v7744 = vpop.f32.mrb[0].mxu0
    %v7745 = vpop.f32.mrb[0].mxu0
    %7746 = vdwg.mxu0
    %7747 = vmatprep.subr.mxu0 0.0
    %7748 = vmatpush1.msra.mxu0 %v4761
    %7749 = vmatprep.subr.mxu0 0.0
    %7750 = vmatpush1.msra.mxu0 %v4762
    %7751 = vmatprep.subr.mxu0 0.0
    %7752 = vmatpush1.msra.mxu0 %v4763
    %7753 = vmatprep.subr.mxu0 0.0
    %7754 = vmatpush1.msra.mxu0 %v4764
    %7755 = vmatprep.subr.mxu0 0.0
    %7756 = vmatpush1.msra.mxu0 %v4765
    %7757 = vmatprep.subr.mxu0 0.0
    %7758 = vmatpush1.msra.mxu0 %v4766
    %7759 = vmatprep.subr.mxu0 0.0
    %7760 = vmatpush1.msra.mxu0 %v4767
    %7761 = vmatprep.subr.mxu0 0.0
    %7762 = vmatpush1.msra.mxu0 %v4768
    %7763 = vmatprep.subr.mxu0 0.0
    %7764 = vmatpush1.msra.mxu0 %v4769
    %7765 = vmatprep.subr.mxu0 0.0
    %7766 = vmatpush1.msra.mxu0 %v4770
    %7767 = vmatprep.subr.mxu0 0.0
    %7768 = vmatpush1.msra.mxu0 %v4771
    %7769 = vmatprep.subr.mxu0 0.0
    %7770 = vmatpush1.msra.mxu0 %v4772
    %7771 = vmatprep.subr.mxu0 0.0
    %7772 = vmatpush1.msra.mxu0 %v4773
    %7773 = vmatprep.subr.mxu0 0.0
    %7774 = vmatpush1.msra.mxu0 %v4774
    %7775 = vmatprep.subr.mxu0 0.0
    %7776 = vmatpush1.msra.mxu0 %v4775
    %7777 = vmatprep.subr.mxu0 0.0
    %7778 = vmatpush1.msra.mxu0 %v4776
    %7779 = vmatprep.subr.mxu0 0.0
    %7780 = vmatpush1.msra.mxu0 %v4777
    %7781 = vmatprep.subr.mxu0 0.0
    %7782 = vmatpush1.msra.mxu0 %v4778
    %7783 = vmatprep.subr.mxu0 0.0
    %7784 = vmatpush1.msra.mxu0 %v4779
    %7785 = vmatprep.subr.mxu0 0.0
    %7786 = vmatpush1.msra.mxu0 %v4780
    %7787 = vmatprep.subr.mxu0 0.0
    %7788 = vmatpush1.msra.mxu0 %v4781
    %7789 = vmatprep.subr.mxu0 0.0
    %7790 = vmatpush1.msra.mxu0 %v4782
    %7791 = vmatprep.subr.mxu0 0.0
    %7792 = vmatpush1.msra.mxu0 %v4783
    %7793 = vmatprep.subr.mxu0 0.0
    %7794 = vmatpush1.msra.mxu0 %v4784
    %7795 = vmatprep.subr.mxu0 0.0
    %7796 = vmatpush1.msra.mxu0 %v4785
    %7797 = vmatprep.subr.mxu0 0.0
    %7798 = vmatpush1.msra.mxu0 %v4786
    %7799 = vmatprep.subr.mxu0 0.0
    %7800 = vmatpush1.msra.mxu0 %v4787
    %7801 = vmatprep.subr.mxu0 0.0
    %7802 = vmatpush1.msra.mxu0 %v4788
    %7803 = vmatprep.subr.mxu0 0.0
    %7804 = vmatpush1.msra.mxu0 %v4789
    %7805 = vmatprep.subr.mxu0 0.0
    %7806 = vmatpush1.msra.mxu0 %v4790
    %7807 = vmatprep.subr.mxu0 0.0
    %7808 = vmatpush1.msra.mxu0 %v4791
    %7809 = vmatprep.subr.mxu0 0.0
    %7810 = vmatpush1.msra.mxu0 %v4792
    %7811 = vmatprep.mubr.f32.mxu0 %v7566
    %7812 = vmatmul.mubr.f32.gmra.mrb[0].mxu0 %v7565
    %v7813 = vpop.f32.mrb[0].mxu0
    %v7814 = vadd.f32 %v7740, %v7813
    %v7815 = vpop.f32.mrb[0].mxu0
    %7816 = vmatprep.mubr.f32.mxu0 %v7582
    %7817 = vmatmul.mubr.f32.gmra.mrb[0].mxu0 %v7581
    %v7818 = vpop.f32.mrb[0].mxu0
    %v7819 = vpop.f32.mrb[0].mxu0
    %7820 = vdwg.mxu0
    %7821 = vmatprep.subr.mxu0 0.0
    %7822 = vmatpush1.msra.mxu0 %v4793
    %7823 = vmatprep.subr.mxu0 0.0
    %7824 = vmatpush1.msra.mxu0 %v4794
    %7825 = vmatprep.subr.mxu0 0.0
    %7826 = vmatpush1.msra.mxu0 %v4795
    %7827 = vmatprep.subr.mxu0 0.0
    %7828 = vmatpush1.msra.mxu0 %v4796
    %7829 = vmatprep.subr.mxu0 0.0
    %7830 = vmatpush1.msra.mxu0 %v4797
    %7831 = vmatprep.subr.mxu0 0.0
    %7832 = vmatpush1.msra.mxu0 %v4798
    %7833 = vmatprep.subr.mxu0 0.0
    %7834 = vmatpush1.msra.mxu0 %v4799
    %7835 = vmatprep.subr.mxu0 0.0
    %7836 = vmatpush1.msra.mxu0 %v4800
    %7837 = vmatprep.subr.mxu0 0.0
    %7838 = vmatpush1.msra.mxu0 %v4801
    %7839 = vmatprep.subr.mxu0 0.0
    %7840 = vmatpush1.msra.mxu0 %v4802
    %7841 = vmatprep.subr.mxu0 0.0
    %7842 = vmatpush1.msra.mxu0 %v4803
    %7843 = vmatprep.subr.mxu0 0.0
    %7844 = vmatpush1.msra.mxu0 %v4804
    %7845 = vmatprep.subr.mxu0 0.0
    %7846 = vmatpush1.msra.mxu0 %v4805
    %7847 = vmatprep.subr.mxu0 0.0
    %7848 = vmatpush1.msra.mxu0 %v4806
    %7849 = vmatprep.subr.mxu0 0.0
    %7850 = vmatpush1.msra.mxu0 %v4807
    %7851 = vmatprep.subr.mxu0 0.0
    %7852 = vmatpush1.msra.mxu0 %v4808
    %7853 = vmatprep.subr.mxu0 0.0
    %7854 = vmatpush1.msra.mxu0 %v4809
    %7855 = vmatprep.subr.mxu0 0.0
    %7856 = vmatpush1.msra.mxu0 %v4810
    %7857 = vmatprep.subr.mxu0 0.0
    %7858 = vmatpush1.msra.mxu0 %v4811
    %7859 = vmatprep.subr.mxu0 0.0
    %7860 = vmatpush1.msra.mxu0 %v4812
    %7861 = vmatprep.subr.mxu0 0.0
    %7862 = vmatpush1.msra.mxu0 %v4813
    %7863 = vmatprep.subr.mxu0 0.0
    %7864 = vmatpush1.msra.mxu0 %v4814
    %7865 = vmatprep.subr.mxu0 0.0
    %7866 = vmatpush1.msra.mxu0 %v4815
    %7867 = vmatprep.subr.mxu0 0.0
    %7868 = vmatpush1.msra.mxu0 %v4816
    %7869 = vmatprep.subr.mxu0 0.0
    %7870 = vmatpush1.msra.mxu0 %v4817
    %7871 = vmatprep.subr.mxu0 0.0
    %7872 = vmatpush1.msra.mxu0 %v4818
    %7873 = vmatprep.subr.mxu0 0.0
    %7874 = vmatpush1.msra.mxu0 %v4819
    %7875 = vmatprep.subr.mxu0 0.0
    %7876 = vmatpush1.msra.mxu0 %v4820
    %7877 = vmatprep.subr.mxu0 0.0
    %7878 = vmatpush1.msra.mxu0 %v4821
    %7879 = vmatprep.subr.mxu0 0.0
    %7880 = vmatpush1.msra.mxu0 %v4822
    %7881 = vmatprep.subr.mxu0 0.0
    %7882 = vmatpush1.msra.mxu0 %v4823
    %7883 = vmatprep.subr.mxu0 0.0
    %7884 = vmatpush1.msra.mxu0 %v4824
    %7885 = vmatprep.mubr.f32.mxu0 %v7568
    %7886 = vmatmul.mubr.f32.gmra.mrb[0].mxu0 %v7567
    %v7887 = vpop.f32.mrb[0].mxu0
    %v7888 = vadd.f32 %v7814, %v7887
    %v7889 = vpop.f32.mrb[0].mxu0
    %7890 = vmatprep.mubr.f32.mxu0 %v7584
    %7891 = vmatmul.mubr.f32.gmra.mrb[0].mxu0 %v7583
    %v7892 = vpop.f32.mrb[0].mxu0
    %v7893 = vpop.f32.mrb[0].mxu0
    %7894 = vdwg.mxu0
    %7895 = vmatprep.subr.mxu0 0.0
    %7896 = vmatpush1.msra.mxu0 %v4825
    %7897 = vmatprep.subr.mxu0 0.0
    %7898 = vmatpush1.msra.mxu0 %v4826
    %7899 = vmatprep.subr.mxu0 0.0
    %7900 = vmatpush1.msra.mxu0 %v4827
    %7901 = vmatprep.subr.mxu0 0.0
    %7902 = vmatpush1.msra.mxu0 %v4828
    %7903 = vmatprep.subr.mxu0 0.0
    %7904 = vmatpush1.msra.mxu0 %v4829
    %7905 = vmatprep.subr.mxu0 0.0
    %7906 = vmatpush1.msra.mxu0 %v4830
    %7907 = vmatprep.subr.mxu0 0.0
    %7908 = vmatpush1.msra.mxu0 %v4831
    %7909 = vmatprep.subr.mxu0 0.0
    %7910 = vmatpush1.msra.mxu0 %v4832
    %7911 = vmatprep.subr.mxu0 0.0
    %7912 = vmatpush1.msra.mxu0 %v4833
    %7913 = vmatprep.subr.mxu0 0.0
    %7914 = vmatpush1.msra.mxu0 %v4834
    %7915 = vmatprep.subr.mxu0 0.0
    %7916 = vmatpush1.msra.mxu0 %v4835
    %7917 = vmatprep.subr.mxu0 0.0
    %7918 = vmatpush1.msra.mxu0 %v4836
    %7919 = vmatprep.subr.mxu0 0.0
    %7920 = vmatpush1.msra.mxu0 %v4837
    %7921 = vmatprep.subr.mxu0 0.0
    %7922 = vmatpush1.msra.mxu0 %v4838
    %7923 = vmatprep.subr.mxu0 0.0
    %7924 = vmatpush1.msra.mxu0 %v4839
    %7925 = vmatprep.subr.mxu0 0.0
    %7926 = vmatpush1.msra.mxu0 %v4840
    %7927 = vmatprep.subr.mxu0 0.0
    %7928 = vmatpush1.msra.mxu0 %v4841
    %7929 = vmatprep.subr.mxu0 0.0
    %7930 = vmatpush1.msra.mxu0 %v4842
    %7931 = vmatprep.subr.mxu0 0.0
    %7932 = vmatpush1.msra.mxu0 %v4843
    %7933 = vmatprep.subr.mxu0 0.0
    %7934 = vmatpush1.msra.mxu0 %v4844
    %7935 = vmatprep.subr.mxu0 0.0
    %7936 = vmatpush1.msra.mxu0 %v4845
    %7937 = vmatprep.subr.mxu0 0.0
    %7938 = vmatpush1.msra.mxu0 %v4846
    %7939 = vmatprep.subr.mxu0 0.0
    %7940 = vmatpush1.msra.mxu0 %v4847
    %7941 = vmatprep.subr.mxu0 0.0
    %7942 = vmatpush1.msra.mxu0 %v4848
    %7943 = vmatprep.subr.mxu0 0.0
    %7944 = vmatpush1.msra.mxu0 %v4849
    %7945 = vmatprep.subr.mxu0 0.0
    %7946 = vmatpush1.msra.mxu0 %v4850
    %7947 = vmatprep.subr.mxu0 0.0
    %7948 = vmatpush1.msra.mxu0 %v4851
    %7949 = vmatprep.subr.mxu0 0.0
    %7950 = vmatpush1.msra.mxu0 %v4852
    %7951 = vmatprep.subr.mxu0 0.0
    %7952 = vmatpush1.msra.mxu0 %v4853
    %7953 = vmatprep.subr.mxu0 0.0
    %7954 = vmatpush1.msra.mxu0 %v4854
    %7955 = vmatprep.subr.mxu0 0.0
    %7956 = vmatpush1.msra.mxu0 %v4855
    %7957 = vmatprep.subr.mxu0 0.0
    %7958 = vmatpush1.msra.mxu0 %v4856
    %7959 = vmatprep.mubr.f32.mxu0 %v7570
    %7960 = vmatmul.mubr.f32.gmra.mrb[0].mxu0 %v7569
    %v7961 = vpop.f32.mrb[0].mxu0
    %v7962 = vadd.f32 %v7888, %v7961
    %v7963 = vpop.f32.mrb[0].mxu0
    %7964 = vmatprep.mubr.f32.mxu0 %v7586
    %7965 = vmatmul.mubr.f32.gmra.mrb[0].mxu0 %v7585
    %v7966 = vpop.f32.mrb[0].mxu0
    %v7967 = vpop.f32.mrb[0].mxu0
    %7968 = vdwg.mxu0
    %7969 = vmatprep.subr.mxu0 0.0
    %7970 = vmatpush1.msra.mxu0 %v4857
    %7971 = vmatprep.subr.mxu0 0.0
    %7972 = vmatpush1.msra.mxu0 %v4858
    %7973 = vmatprep.subr.mxu0 0.0
    %7974 = vmatpush1.msra.mxu0 %v4859
    %7975 = vmatprep.subr.mxu0 0.0
    %7976 = vmatpush1.msra.mxu0 %v4860
    %7977 = vmatprep.subr.mxu0 0.0
    %7978 = vmatpush1.msra.mxu0 %v4861
    %7979 = vmatprep.subr.mxu0 0.0
    %7980 = vmatpush1.msra.mxu0 %v4862
    %7981 = vmatprep.subr.mxu0 0.0
    %7982 = vmatpush1.msra.mxu0 %v4863
    %7983 = vmatprep.subr.mxu0 0.0
    %7984 = vmatpush1.msra.mxu0 %v4864
    %7985 = vmatprep.subr.mxu0 0.0
    %7986 = vmatpush1.msra.mxu0 %v4865
    %7987 = vmatprep.subr.mxu0 0.0
    %7988 = vmatpush1.msra.mxu0 %v4866
    %7989 = vmatprep.subr.mxu0 0.0
    %7990 = vmatpush1.msra.mxu0 %v4867
    %7991 = vmatprep.subr.mxu0 0.0
    %7992 = vmatpush1.msra.mxu0 %v4868
    %7993 = vmatprep.subr.mxu0 0.0
    %7994 = vmatpush1.msra.mxu0 %v4869
    %7995 = vmatprep.subr.mxu0 0.0
    %7996 = vmatpush1.msra.mxu0 %v4870
    %7997 = vmatprep.subr.mxu0 0.0
    %7998 = vmatpush1.msra.mxu0 %v4871
    %7999 = vmatprep.subr.mxu0 0.0
    %8000 = vmatpush1.msra.mxu0 %v4872
    %8001 = vmatprep.subr.mxu0 0.0
    %8002 = vmatpush1.msra.mxu0 %v4873
    %8003 = vmatprep.subr.mxu0 0.0
    %8004 = vmatpush1.msra.mxu0 %v4874
    %8005 = vmatprep.subr.mxu0 0.0
    %8006 = vmatpush1.msra.mxu0 %v4875
    %8007 = vmatprep.subr.mxu0 0.0
    %8008 = vmatpush1.msra.mxu0 %v4876
    %8009 = vmatprep.subr.mxu0 0.0
    %8010 = vmatpush1.msra.mxu0 %v4877
    %8011 = vmatprep.subr.mxu0 0.0
    %8012 = vmatpush1.msra.mxu0 %v4878
    %8013 = vmatprep.subr.mxu0 0.0
    %8014 = vmatpush1.msra.mxu0 %v4879
    %8015 = vmatprep.subr.mxu0 0.0
    %8016 = vmatpush1.msra.mxu0 %v4880
    %8017 = vmatprep.subr.mxu0 0.0
    %8018 = vmatpush1.msra.mxu0 %v4881
    %8019 = vmatprep.subr.mxu0 0.0
    %8020 = vmatpush1.msra.mxu0 %v4882
    %8021 = vmatprep.subr.mxu0 0.0
    %8022 = vmatpush1.msra.mxu0 %v4883
    %8023 = vmatprep.subr.mxu0 0.0
    %8024 = vmatpush1.msra.mxu0 %v4884
    %8025 = vmatprep.subr.mxu0 0.0
    %8026 = vmatpush1.msra.mxu0 %v4885
    %8027 = vmatprep.subr.mxu0 0.0
    %8028 = vmatpush1.msra.mxu0 %v4886
    %8029 = vmatprep.subr.mxu0 0.0
    %8030 = vmatpush1.msra.mxu0 %v4887
    %8031 = vmatprep.subr.mxu0 0.0
    %8032 = vmatpush1.msra.mxu0 %v4888
    %8033 = vmatprep.mubr.f32.mxu0 %v7572
    %8034 = vmatmul.mubr.f32.gmra.mrb[0].mxu0 %v7571
    %v8035 = vpop.f32.mrb[0].mxu0
    %v8036 = vadd.f32 %v7962, %v8035
    %v8037 = vpop.f32.mrb[0].mxu0
    %8038 = vmatprep.mubr.f32.mxu0 %v7588
    %8039 = vmatmul.mubr.f32.gmra.mrb[0].mxu0 %v7587
    %v8040 = vpop.f32.mrb[0].mxu0
    %v8041 = vpop.f32.mrb[0].mxu0
    %8042 = vdwg.mxu0
    %8043 = vmatprep.subr.mxu0 0.0
    %8044 = vmatpush1.msra.mxu0 %v4889
    %8045 = vmatprep.subr.mxu0 0.0
    %8046 = vmatpush1.msra.mxu0 %v4890
    %8047 = vmatprep.subr.mxu0 0.0
    %8048 = vmatpush1.msra.mxu0 %v4891
    %8049 = vmatprep.subr.mxu0 0.0
    %8050 = vmatpush1.msra.mxu0 %v4892
    %8051 = vmatprep.subr.mxu0 0.0
    %8052 = vmatpush1.msra.mxu0 %v4893
    %8053 = vmatprep.subr.mxu0 0.0
    %8054 = vmatpush1.msra.mxu0 %v4894
    %8055 = vmatprep.subr.mxu0 0.0
    %8056 = vmatpush1.msra.mxu0 %v4895
    %8057 = vmatprep.subr.mxu0 0.0
    %8058 = vmatpush1.msra.mxu0 %v4896
    %8059 = vmatprep.subr.mxu0 0.0
    %8060 = vmatpush1.msra.mxu0 %v4897
    %8061 = vmatprep.subr.mxu0 0.0
    %8062 = vmatpush1.msra.mxu0 %v4898
    %8063 = vmatprep.subr.mxu0 0.0
    %8064 = vmatpush1.msra.mxu0 %v4899
    %8065 = vmatprep.subr.mxu0 0.0
    %8066 = vmatpush1.msra.mxu0 %v4900
    %8067 = vmatprep.subr.mxu0 0.0
    %8068 = vmatpush1.msra.mxu0 %v4901
    %8069 = vmatprep.subr.mxu0 0.0
    %8070 = vmatpush1.msra.mxu0 %v4902
    %8071 = vmatprep.subr.mxu0 0.0
    %8072 = vmatpush1.msra.mxu0 %v4903
    %8073 = vmatprep.subr.mxu0 0.0
    %8074 = vmatpush1.msra.mxu0 %v4904
    %8075 = vmatprep.subr.mxu0 0.0
    %8076 = vmatpush1.msra.mxu0 %v4905
    %8077 = vmatprep.subr.mxu0 0.0
    %8078 = vmatpush1.msra.mxu0 %v4906
    %8079 = vmatprep.subr.mxu0 0.0
    %8080 = vmatpush1.msra.mxu0 %v4907
    %8081 = vmatprep.subr.mxu0 0.0
    %8082 = vmatpush1.msra.mxu0 %v4908
    %8083 = vmatprep.subr.mxu0 0.0
    %8084 = vmatpush1.msra.mxu0 %v4909
    %8085 = vmatprep.subr.mxu0 0.0
    %8086 = vmatpush1.msra.mxu0 %v4910
    %8087 = vmatprep.subr.mxu0 0.0
    %8088 = vmatpush1.msra.mxu0 %v4911
    %8089 = vmatprep.subr.mxu0 0.0
    %8090 = vmatpush1.msra.mxu0 %v4912
    %8091 = vmatprep.subr.mxu0 0.0
    %8092 = vmatpush1.msra.mxu0 %v4913
    %8093 = vmatprep.subr.mxu0 0.0
    %8094 = vmatpush1.msra.mxu0 %v4914
    %8095 = vmatprep.subr.mxu0 0.0
    %8096 = vmatpush1.msra.mxu0 %v4915
    %8097 = vmatprep.subr.mxu0 0.0
    %8098 = vmatpush1.msra.mxu0 %v4916
    %8099 = vmatprep.subr.mxu0 0.0
    %8100 = vmatpush1.msra.mxu0 %v4917
    %8101 = vmatprep.subr.mxu0 0.0
    %8102 = vmatpush1.msra.mxu0 %v4918
    %8103 = vmatprep.subr.mxu0 0.0
    %8104 = vmatpush1.msra.mxu0 %v4919
    %8105 = vmatprep.subr.mxu0 0.0
    %8106 = vmatpush1.msra.mxu0 %v4920
    %8107 = vmatprep.mubr.f32.mxu0 %v7574
    %8108 = vmatmul.mubr.f32.gmra.mrb[0].mxu0 %v7573
    %v8109 = vpop.f32.mrb[0].mxu0
    %v8110 = vadd.f32 %v8036, %v8109
    %v8111 = vpop.f32.mrb[0].mxu0
    %8112 = vmatprep.mubr.f32.mxu0 %v7590
    %8113 = vmatmul.mubr.f32.gmra.mrb[0].mxu0 %v7589
    %v8114 = vpop.f32.mrb[0].mxu0
    %v8115 = vpop.f32.mrb[0].mxu0
    %8116 = vdwg.mxu0
    %8117 = vmatprep.subr.mxu0 0.0
    %8118 = vmatpush1.msra.mxu0 %v4921
    %8119 = vmatprep.subr.mxu0 0.0
    %8120 = vmatpush1.msra.mxu0 %v4922
    %8121 = vmatprep.subr.mxu0 0.0
    %8122 = vmatpush1.msra.mxu0 %v4923
    %8123 = vmatprep.subr.mxu0 0.0
    %8124 = vmatpush1.msra.mxu0 %v4924
    %8125 = vmatprep.subr.mxu0 0.0
    %8126 = vmatpush1.msra.mxu0 %v4925
    %8127 = vmatprep.subr.mxu0 0.0
    %8128 = vmatpush1.msra.mxu0 %v4926
    %8129 = vmatprep.subr.mxu0 0.0
    %8130 = vmatpush1.msra.mxu0 %v4927
    %8131 = vmatprep.subr.mxu0 0.0
    %8132 = vmatpush1.msra.mxu0 %v4928
    %8133 = vmatprep.subr.mxu0 0.0
    %8134 = vmatpush1.msra.mxu0 %v4929
    %8135 = vmatprep.subr.mxu0 0.0
    %8136 = vmatpush1.msra.mxu0 %v4930
    %8137 = vmatprep.subr.mxu0 0.0
    %8138 = vmatpush1.msra.mxu0 %v4931
    %8139 = vmatprep.subr.mxu0 0.0
    %8140 = vmatpush1.msra.mxu0 %v4932
    %8141 = vmatprep.subr.mxu0 0.0
    %8142 = vmatpush1.msra.mxu0 %v4933
    %8143 = vmatprep.subr.mxu0 0.0
    %8144 = vmatpush1.msra.mxu0 %v4934
    %8145 = vmatprep.subr.mxu0 0.0
    %8146 = vmatpush1.msra.mxu0 %v4935
    %8147 = vmatprep.subr.mxu0 0.0
    %8148 = vmatpush1.msra.mxu0 %v4936
    %8149 = vmatprep.subr.mxu0 0.0
    %8150 = vmatpush1.msra.mxu0 %v4937
    %8151 = vmatprep.subr.mxu0 0.0
    %8152 = vmatpush1.msra.mxu0 %v4938
    %8153 = vmatprep.subr.mxu0 0.0
    %8154 = vmatpush1.msra.mxu0 %v4939
    %8155 = vmatprep.subr.mxu0 0.0
    %8156 = vmatpush1.msra.mxu0 %v4940
    %8157 = vmatprep.subr.mxu0 0.0
    %8158 = vmatpush1.msra.mxu0 %v4941
    %8159 = vmatprep.subr.mxu0 0.0
    %8160 = vmatpush1.msra.mxu0 %v4942
    %8161 = vmatprep.subr.mxu0 0.0
    %8162 = vmatpush1.msra.mxu0 %v4943
    %8163 = vmatprep.subr.mxu0 0.0
    %8164 = vmatpush1.msra.mxu0 %v4944
    %8165 = vmatprep.subr.mxu0 0.0
    %8166 = vmatpush1.msra.mxu0 %v4945
    %8167 = vmatprep.subr.mxu0 0.0
    %8168 = vmatpush1.msra.mxu0 %v4946
    %8169 = vmatprep.subr.mxu0 0.0
    %8170 = vmatpush1.msra.mxu0 %v4947
    %8171 = vmatprep.subr.mxu0 0.0
    %8172 = vmatpush1.msra.mxu0 %v4948
    %8173 = vmatprep.subr.mxu0 0.0
    %8174 = vmatpush1.msra.mxu0 %v4949
    %8175 = vmatprep.subr.mxu0 0.0
    %8176 = vmatpush1.msra.mxu0 %v4950
    %8177 = vmatprep.subr.mxu0 0.0
    %8178 = vmatpush1.msra.mxu0 %v4951
    %8179 = vmatprep.subr.mxu0 0.0
    %8180 = vmatpush1.msra.mxu0 %v4952
    %8181 = vmatprep.mubr.f32.mxu0 %v7576
    %8182 = vmatmul.mubr.f32.gmra.mrb[0].mxu0 %v7575
    %v8183 = vpop.f32.mrb[0].mxu0
    %v8184 = vadd.f32 %v8110, %v8183
    %v8185 = vpop.f32.mrb[0].mxu0
    %8186 = vmatprep.mubr.f32.mxu0 %v7592
    %8187 = vmatmul.mubr.f32.gmra.mrb[0].mxu0 %v7591
    %v8188 = vpop.f32.mrb[0].mxu0
    %v8189 = vpop.f32.mrb[0].mxu0
    %8190 = vdwg.mxu0
    %v8191 = vadd.f32 %v6023, %v8184
    %v8192 = vsel %vm1324, %v8191, 0.0
    %8193 = vadd.xlane.f32.xlu0 %v8192
    %v8194 = vpop.xlane.xlu0 %8193
    %v8195 = vmul.f32 %v8194, %v2355
    %v8196 = vsub.f32 %v8191, %v8195
    %v8197 = vmul.f32 %v8196, %v8196
    %v8198 = vsel %vm1324, %v8197, 0.0
    %8199 = vadd.xlane.f32.xlu0 %v8198
    %v8200 = vpop.xlane.xlu0 %8199
    %v8201 = vmul.f32 %v8200, %v2355
    %v8202 = vadd.f32 %v8201, 1e-05
    %v8203 = vrsqrt.pop %v8202
    %v8204 = vmul.f32 %v8196, %v8203
    %v8206 = vlaneseq
    %v8207 = vshrl.u32 %v8206, 7
    %v8208 = vsub.s32 0, %v8207
    %v8209 = vrot.slane %v4956, %v8208
    %v8211 = vmul.f32 %v8204, %v8209
    %v8213 = vlaneseq
    %v8214 = vshrl.u32 %v8213, 7
    %v8215 = vsub.s32 0, %v8214
    %v8216 = vrot.slane %v4958, %v8215
    %v8218 = vadd.f32 %v8211, %v8216
    %v8220 = vrot.slane %v8218, 4
    %v8222 = vsel %vm973, %v8218, %v8220
    %v8223 = vld [vmem:[%s24] sm:$0x1]
    %v8224 = vld [vmem:[%s25] sm:$0x1]
    %v8225 = vsel %vm2351, %v8222, 0.0
    %8226 = vadd.xlane.f32.xlu0 %v8225
    %v8227 = vpop.xlane.xlu0 %8226
    %v8228 = vmul.f32 %v8227, %v2355
    %v8229 = vsub.f32 %v8222, %v8228
    %v8230 = vmul.f32 %v8229, %v8229
    %v8231 = vsel %vm2351, %v8230, 0.0
    %8232 = vadd.xlane.f32.xlu0 %v8231
    %v8233 = vpop.xlane.xlu0 %8232
    %v8234 = vmul.f32 %v8233, %v2355
    %v8235 = vadd.f32 %v8234, 1e-05
    %v8236 = vrsqrt.pop %v8235
    %v8237 = vmul.f32 %v8229, %v8236
    %v8239 = vlaneseq
    %v8240 = vshrl.u32 %v8239, 7
    %v8241 = vsub.s32 0, %v8240
    %v8242 = vrot.slane %v8223, %v8241
    %v8244 = vmul.f32 %v8237, %v8242
    %v8246 = vlaneseq
    %v8247 = vshrl.u32 %v8246, 7
    %v8248 = vsub.s32 0, %v8247
    %v8249 = vrot.slane %v8224, %v8248
    %v8251 = vadd.f32 %v8244, %v8249
    %v8252 = vld [vmem:[%s26] sm:$0xff]
    %v8253 = vld [vmem:[%s26 + $0x8] sm:$0xff]
    %v8254 = vld [vmem:[%s26 + $0x10] sm:$0xff]
    %v8255 = vld [vmem:[%s26 + $0x18] sm:$0xff]
    %v8256 = vld [vmem:[%s27] sm:$0x1]
    %v8258 = vlaneseq
    %v8259 = vshrl.u32 %v8258, 7
    %v8260 = vsub.s32 0, %v8259
    %v8261 = vrot.slane %v8256, %v8260
    %v8264 = vsel %vm1324, %v8251, 0
    %8266 = vmatprep.subr.mxu0 0.0
    %8267 = vmatpush1.msra.mxu0 %v8252
    %8268 = vmatprep.subr.mxu0 0.0
    %8269 = vmatpush1.msra.mxu0 %v8253
    %8270 = vmatprep.subr.mxu0 0.0
    %8271 = vmatpush1.msra.mxu0 %v8254
    %8272 = vmatprep.subr.mxu0 0.0
    %8273 = vmatpush1.msra.mxu0 %v8255
    %8274 = vmatprep.subr.mxu0 0.0
    %8275 = vmatpush1.msra.mxu0 0.0
    %8276 = vmatprep.subr.mxu0 0.0
    %8277 = vmatpush1.msra.mxu0 0.0
    %8278 = vmatprep.subr.mxu0 0.0
    %8279 = vmatpush1.msra.mxu0 0.0
    %8280 = vmatprep.subr.mxu0 0.0
    %8281 = vmatpush1.msra.mxu0 0.0
    %8282 = vmatprep.subr.mxu0 0.0
    %8283 = vmatpush1.msra.mxu0 0.0
    %8284 = vmatprep.subr.mxu0 0.0
    %8285 = vmatpush1.msra.mxu0 0.0
    %8286 = vmatprep.subr.mxu0 0.0
    %8287 = vmatpush1.msra.mxu0 0.0
    %8288 = vmatprep.subr.mxu0 0.0
    %8289 = vmatpush1.msra.mxu0 0.0
    %8290 = vmatprep.subr.mxu0 0.0
    %8291 = vmatpush1.msra.mxu0 0.0
    %8292 = vmatprep.subr.mxu0 0.0
    %8293 = vmatpush1.msra.mxu0 0.0
    %8294 = vmatprep.subr.mxu0 0.0
    %8295 = vmatpush1.msra.mxu0 0.0
    %8296 = vmatprep.subr.mxu0 0.0
    %8297 = vmatpush1.msra.mxu0 0.0
    %8298 = vmatprep.subr.mxu0 0.0
    %8299 = vmatpush1.msra.mxu0 0.0
    %8300 = vmatprep.subr.mxu0 0.0
    %8301 = vmatpush1.msra.mxu0 0.0
    %8302 = vmatprep.subr.mxu0 0.0
    %8303 = vmatpush1.msra.mxu0 0.0
    %8304 = vmatprep.subr.mxu0 0.0
    %8305 = vmatpush1.msra.mxu0 0.0
    %8306 = vmatprep.subr.mxu0 0.0
    %8307 = vmatpush1.msra.mxu0 0.0
    %8308 = vmatprep.subr.mxu0 0.0
    %8309 = vmatpush1.msra.mxu0 0.0
    %8310 = vmatprep.subr.mxu0 0.0
    %8311 = vmatpush1.msra.mxu0 0.0
    %8312 = vmatprep.subr.mxu0 0.0
    %8313 = vmatpush1.msra.mxu0 0.0
    %8314 = vmatprep.subr.mxu0 0.0
    %8315 = vmatpush1.msra.mxu0 0.0
    %8316 = vmatprep.subr.mxu0 0.0
    %8317 = vmatpush1.msra.mxu0 0.0
    %8318 = vmatprep.subr.mxu0 0.0
    %8319 = vmatpush1.msra.mxu0 0.0
    %8320 = vmatprep.subr.mxu0 0.0
    %8321 = vmatpush1.msra.mxu0 0.0
    %8322 = vmatprep.subr.mxu0 0.0
    %8323 = vmatpush1.msra.mxu0 0.0
    %8324 = vmatprep.subr.mxu0 0.0
    %8325 = vmatpush1.msra.mxu0 0.0
    %8326 = vmatprep.subr.mxu0 0.0
    %8327 = vmatpush1.msra.mxu0 0.0
    %8328 = vmatprep.subr.mxu0 0.0
    %8329 = vmatpush1.msra.mxu0 0.0
    %8330 = vmatprep.mubr.f32.mxu0 0.0
    %8331 = vmatmul.mubr.f32.gmra.mrb[0].mxu0 %v8264
    %v8332 = vpop.f32.mrb[0].mxu0
    %v8333 = vadd.f32 %v8261, %v8332
    %v8334 = vpop.f32.mrb[0].mxu0
    %8335 = vdwg.mxu0
    %8336 = vst [vmem:[#allocation2] sm:$0x3] %v8333
    // Predicated region
    $region114: #{tpu_custom_call.1} parent=1 // pred_check
      _
    $region115: #{tpu_custom_call.1} parent=1 // pred_check_branch
      %8338 = sbr.rel (0) target = $region117
    $region116: #{tpu_custom_call.1} parent=1 // pred_region
      %s8340 = ssub.s32 32, 32
      %8341 = vsyncadd [#allocation3], %s8340
      %s8343 = sshll.u32 [#allocation2], 4
      %s8344 = int_to_ptr.vmem [resolvable:$true] %s8343
      %8346 = dma.vmem_to_hbm [thread:$0]  %s8344, 32, %s28, [#allocation3]
    $region117: #{tpu_custom_call.1} parent=1 // pred_fallthru
      _
    // Predicated region
    $region118: #{tpu_custom_call.1} parent=1 // pred_check
      _
    $region119: #{tpu_custom_call.1} parent=1 // pred_check_branch
      %8348 = sbr.rel (0) target = $region121
    $region120: #{tpu_custom_call.1} parent=1 // pred_region
      %8349 = dma.done [#allocation3], 32
    $region121: #{tpu_custom_call.1} parent=1 // pred_fallthru
      _
    %8350 = vsyncpa [#allocation3], 1

</llo_original>
